<compile_context>
chip_gen: v6e
topology: v6e:2x2x1
jax: 0.10.0
libtpu: 0.0.40
codegen_flags: <defaults>
</compile_context>

<pallas_src>
import functools

import numpy as np
import jax
import jax.numpy as jnp
from jax.experimental import pallas as pl
from jax.experimental.pallas import tpu as pltpu

_BF16 = jnp.bfloat16
_ROW_VMEM_BYTES = 32 * 1024 * 1024
_ATTN_VMEM_BYTES = 48 * 1024 * 1024


# ----------------------------------------------------------------------------
# Geometry helpers (pure numpy glue, mirrors the PyTorch module __init__)
# ----------------------------------------------------------------------------
def generate_grid(height: int, width: int):
    xs = np.linspace(0.0, 1.0, width, dtype=np.float32)
    ys = np.linspace(0.0, 1.0, height, dtype=np.float32)
    gx, gy = np.meshgrid(xs, ys)                       # 'xy' indexing -> (h, w)
    indices = np.stack([gx, gy], 0)                    # (2, h, w)
    indices = np.concatenate(
        [indices, np.ones((1, height, width), np.float32)], 0)  # (3, h, w)
    return indices[None]                               # (1, 3, h, w)


def get_view_matrix(h=200, w=200, h_meters=100.0, w_meters=100.0, offset=0.0):
    sh = h / h_meters
    sw = w / w_meters
    return [[0.0, -sw, w / 2.0],
            [-sh, 0.0, h * offset + h / 2.0],
            [0.0, 0.0, 1.0]]


def make_bev_grid(bev_height, bev_width, h_meters, w_meters, offset, n_decoder):
    h = bev_height // (2 ** n_decoder)
    w = bev_width // (2 ** n_decoder)
    grid = generate_grid(h, w)[0].copy()               # (3, h, w)
    grid[0] = bev_width * grid[0]
    grid[1] = bev_height * grid[1]
    V = np.array(get_view_matrix(bev_height, bev_width, h_meters, w_meters, offset),
                 dtype=np.float32)
    V_inv = np.linalg.inv(V)
    grid = V_inv @ grid.reshape(3, -1)
    grid = grid.reshape(3, h, w)
    return jnp.asarray(grid, jnp.float32)


# ----------------------------------------------------------------------------
# Small helpers
# ----------------------------------------------------------------------------
def _round_up(x, m):
    return (x + m - 1) // m * m


def _pick_block(rows, target=1024):
    """Row-tile size: `target` when possible, else rows rounded up to a sublane mult."""
    if rows >= target:
        return target
    return _round_up(max(rows, 8), 8)


def _row_params():
    return pltpu.CompilerParams(dimension_semantics=("parallel",),
                                vmem_limit_bytes=_ROW_VMEM_BYTES)


def _layernorm(x, gamma, beta, eps=1e-5):
    mu = jnp.mean(x, axis=-1, keepdims=True)
    var = jnp.mean((x - mu) ** 2, axis=-1, keepdims=True)
    return (x - mu) * jax.lax.rsqrt(var + eps) * gamma + beta


# ----------------------------------------------------------------------------
# Kernel 1: fused key/value path (one read of the feature rows)
#   key = to_k(LN(img_embed + conv1x1(relu(bn(feat)))))
#   val = to_v(LN(conv1x1(relu(bn(feat)))))
# ----------------------------------------------------------------------------
def _kv_kernel(feat_ref, img_ref,
               fp_sc_ref, fp_sh_ref, fp_w_ref,
               fl_sc_ref, fl_sh_ref, fl_w_ref,
               kg_ref, kbt_ref, kw_ref, kbias_ref,
               vg_ref, vbt_ref, vw_ref, vbias_ref,
               k_out_ref, v_out_ref):
    f = feat_ref[...].astype(jnp.float32)

    # key branch: BN(eval) + ReLU + 1x1 conv + image positional embedding + LN + Linear
    xk = jnp.maximum(f * fp_sc_ref[...] + fp_sh_ref[...], 0.0)
    key = jnp.dot(xk.astype(_BF16), fp_w_ref[...], preferred_element_type=jnp.float32)
    key = key + img_ref[...].astype(jnp.float32)
    key = _layernorm(key, kg_ref[...], kbt_ref[...])
    k_out = jnp.dot(key.astype(_BF16), kw_ref[...], preferred_element_type=jnp.float32)
    k_out_ref[...] = (k_out + kbias_ref[...]).astype(k_out_ref.dtype)

    # value branch: BN(eval) + ReLU + 1x1 conv + LN + Linear
    xv = jnp.maximum(f * fl_sc_ref[...] + fl_sh_ref[...], 0.0)
    val = jnp.dot(xv.astype(_BF16), fl_w_ref[...], preferred_element_type=jnp.float32)
    val = _layernorm(val, vg_ref[...], vbt_ref[...])
    v_out = jnp.dot(val.astype(_BF16), vw_ref[...], preferred_element_type=jnp.float32)
    v_out_ref[...] = (v_out + vbias_ref[...]).astype(v_out_ref.dtype)


def fused_key_value(feat_rows, img_rows, p, block_target=1024):
    rows, feat_dim = feat_rows.shape
    dim = img_rows.shape[1]
    hd = p['k_w'].shape[1]
    block = _pick_block(rows, block_target)
    grid = (pl.cdiv(rows, block),)                     # partial last block is masked

    def row(c):
        return pl.BlockSpec((block, c), lambda i: (i, 0))

    def rep(r, c):
        return pl.BlockSpec((r, c), lambda i: (0, 0))

    k_rows, v_rows = pl.pallas_call(
        _kv_kernel,
        out_shape=(jax.ShapeDtypeStruct((rows, hd), _BF16),
                   jax.ShapeDtypeStruct((rows, hd), _BF16)),
        grid=grid,
        in_specs=[row(feat_dim), row(dim),
                  rep(1, feat_dim), rep(1, feat_dim), rep(feat_dim, dim),
                  rep(1, feat_dim), rep(1, feat_dim), rep(feat_dim, dim),
                  rep(1, dim), rep(1, dim), rep(dim, hd), rep(1, hd),
                  rep(1, dim), rep(1, dim), rep(dim, hd), rep(1, hd)],
        out_specs=(pl.BlockSpec((block, hd), lambda i: (i, 0)),
                   pl.BlockSpec((block, hd), lambda i: (i, 0))),
        compiler_params=_row_params(),
    )(feat_rows.astype(_BF16), img_rows.astype(_BF16),
      p['fp_bn_scale'].reshape(1, feat_dim), p['fp_bn_shift'].reshape(1, feat_dim),
      p['fp_w'].astype(_BF16),
      p['fl_bn_scale'].reshape(1, feat_dim), p['fl_bn_shift'].reshape(1, feat_dim),
      p['fl_w'].astype(_BF16),
      p['k_ln_g'].reshape(1, dim), p['k_ln_b'].reshape(1, dim),
      p['k_w'].astype(_BF16), p['k_b'].reshape(1, hd),
      p['v_ln_g'].reshape(1, dim), p['v_ln_b'].reshape(1, dim),
      p['v_w'].astype(_BF16), p['v_b'].reshape(1, hd))
    return k_rows, v_rows


# ----------------------------------------------------------------------------
# Kernel 2: LayerNorm + Linear (to_q), row-tiled
# ----------------------------------------------------------------------------
def _ln_linear_kernel(x_ref, g_ref, b_ref, w_ref, bias_ref, o_ref):
    x = x_ref[...].astype(jnp.float32)
    xn = _layernorm(x, g_ref[...], b_ref[...])
    y = jnp.dot(xn.astype(_BF16), w_ref[...], preferred_element_type=jnp.float32)
    o_ref[...] = (y + bias_ref[...]).astype(o_ref.dtype)


def ln_linear(x_rows, gamma, beta, w, bias, out_dtype=_BF16, block_target=1024):
    rows, din = x_rows.shape
    dout = w.shape[1]
    block = _pick_block(rows, block_target)
    grid = (pl.cdiv(rows, block),)
    out = pl.pallas_call(
        _ln_linear_kernel,
        out_shape=jax.ShapeDtypeStruct((rows, dout), out_dtype),
        grid=grid,
        in_specs=[pl.BlockSpec((block, din), lambda i: (i, 0)),
                  pl.BlockSpec((1, din), lambda i: (0, 0)),
                  pl.BlockSpec((1, din), lambda i: (0, 0)),
                  pl.BlockSpec((din, dout), lambda i: (0, 0)),
                  pl.BlockSpec((1, dout), lambda i: (0, 0))],
        out_specs=pl.BlockSpec((block, dout), lambda i: (i, 0)),
        compiler_params=_row_params(),
    )(x_rows.astype(_BF16), gamma.reshape(1, din), beta.reshape(1, din),
      w.astype(_BF16), bias.reshape(1, dout))
    return out


# ----------------------------------------------------------------------------
# Kernel 3: multi-camera cross attention
#   grid = (batch, heads, q_tiles), all parallel; q/k/v presented head-major
#   (b, heads, n_cams, seq, dim_head) so no lane-slicing of heads in the kernel.
#   Per step: one camera-batched QK^T dot_general, exact softmax over the joint
#   (camera, key) axis for this Q-tile, one camera-batched PV dot_general.
#   att is written in the module's 'b Q (n K)' layout via per-camera lane slabs.
# ----------------------------------------------------------------------------
def _attn_kernel(q_ref, k_ref, v_ref, o_ref, att_ref, *, n_cams, kv_len):
    qh = q_ref[0, 0].astype(_BF16)                    # (n, TQ, dh) -- scale pre-folded
    kh = k_ref[0, 0].astype(_BF16)                    # (n, K, dh)
    vh = v_ref[0, 0].astype(_BF16)                    # (n, K, dh)

    # Camera-batched QK^T: (n, TQ, dh) x (n, K, dh) -> (n, TQ, K), f32 accumulation.
    dots = jax.lax.dot_general(qh, kh, (((2,), (2,)), ((0,), (0,))),
                               preferred_element_type=jnp.float32)

    # Exact softmax over the joint (camera, key) axis (f32 stats).
    mx = jnp.max(dots, axis=2, keepdims=True)         # (n, TQ, 1)
    mx = jnp.max(mx, axis=0, keepdims=True)           # (1, TQ, 1)
    e = jnp.exp(dots - mx)                            # (n, TQ, K)
    denom = jnp.sum(e, axis=2, keepdims=True)
    denom = jnp.sum(denom, axis=0, keepdims=True)     # (1, TQ, 1)
    att = e * (1.0 / denom)                           # exact reciprocal: rows sum to 1

    # a = att @ v, batched over cameras, summed over cameras.
    av = jax.lax.dot_general(att.astype(_BF16), vh, (((2,), (1,)), ((0,), (0,))),
                             preferred_element_type=jnp.float32)   # (n, TQ, dh)
    o_ref[0, 0] = jnp.sum(av, axis=0).astype(o_ref.dtype)

    # Store attention weights in 'b Q (n K)' layout with static per-camera lane slabs.
    for c in range(n_cams):
        att_ref[0, 0, :, c * kv_len:(c + 1) * kv_len] = att[c].astype(att_ref.dtype)


def cross_attention_pallas(qh, kh, vh, *, att_dtype=_BF16, q_tile=128):
    b, heads, n, Q, dh = qh.shape
    K = kh.shape[3]
    nK = n * K
    tq = q_tile if Q >= q_tile else _round_up(max(Q, 8), 8)
    grid = (b, heads, pl.cdiv(Q, tq))
    kernel = functools.partial(_attn_kernel, n_cams=n, kv_len=K)
    a, att = pl.pallas_call(
        kernel,
        out_shape=(jax.ShapeDtypeStruct((b, heads, Q, dh), _BF16),
                   jax.ShapeDtypeStruct((b, heads, Q, nK), att_dtype)),
        grid=grid,
        in_specs=[
            pl.BlockSpec((1, 1, n, tq, dh), lambda bi, hi, qi: (bi, hi, 0, qi, 0)),
            # k/v blocks ignore qi -> stay resident in VMEM across Q-tiles of a head.
            pl.BlockSpec((1, 1, n, K, dh), lambda bi, hi, qi: (bi, hi, 0, 0, 0)),
            pl.BlockSpec((1, 1, n, K, dh), lambda bi, hi, qi: (bi, hi, 0, 0, 0)),
        ],
        out_specs=(pl.BlockSpec((1, 1, tq, dh), lambda bi, hi, qi: (bi, hi, qi, 0)),
                   pl.BlockSpec((1, 1, tq, nK), lambda bi, hi, qi: (bi, hi, qi, 0))),
        compiler_params=pltpu.CompilerParams(
            dimension_semantics=("parallel", "parallel", "parallel"),
            vmem_limit_bytes=_ATTN_VMEM_BYTES),
    )(qh, kh, vh)
    return a, att


# ----------------------------------------------------------------------------
# Kernel 4: proj + skip + prenorm + MLP(GELU) + residual + postnorm
#   purely row-wise -> row-tiled over (b*Q) rows
# ----------------------------------------------------------------------------
def _ffn_kernel(a_ref, skip_ref, pw_ref, pb_ref, g1_ref, be1_ref,
                w1_ref, b1_ref, w2_ref, b2_ref, g2_ref, be2_ref, o_ref, *, use_skip):
    a = a_ref[...].astype(_BF16)
    z = jnp.dot(a, pw_ref[...], preferred_element_type=jnp.float32) + pb_ref[...]
    if use_skip:
        z = z + skip_ref[...].astype(jnp.float32)
    z = _layernorm(z, g1_ref[...], be1_ref[...])
    h = jnp.dot(z.astype(_BF16), w1_ref[...],
                preferred_element_type=jnp.float32) + b1_ref[...]
    # TODO(synk): PyTorch nn.GELU default is exact erf GELU; erf lowering on Mosaic is
    # not guaranteed, so the tanh approximation is used (max abs error ~1e-3).
    h = 0.5 * h * (1.0 + jnp.tanh(0.7978845608028654 * (h + 0.044715 * h * h * h)))
    z = z + (jnp.dot(h.astype(_BF16), w2_ref[...],
                     preferred_element_type=jnp.float32) + b2_ref[...])
    z = _layernorm(z, g2_ref[...], be2_ref[...])
    o_ref[...] = z.astype(o_ref.dtype)


def ffn_pallas(a_rows, skip_rows, p, use_skip, block_target=1024):
    rows, hd = a_rows.shape
    dim = p['proj_w'].shape[1]
    d2 = 2 * dim
    block = _pick_block(rows, block_target)
    grid = (pl.cdiv(rows, block),)
    kernel = functools.partial(_ffn_kernel, use_skip=use_skip)
    out = pl.pallas_call(
        kernel,
        out_shape=jax.ShapeDtypeStruct((rows, dim), jnp.float32),
        grid=grid,
        in_specs=[pl.BlockSpec((block, hd), lambda i: (i, 0)),
                  pl.BlockSpec((block, dim), lambda i: (i, 0)),
                  pl.BlockSpec((hd, dim), lambda i: (0, 0)),
                  pl.BlockSpec((1, dim), lambda i: (0, 0)),
                  pl.BlockSpec((1, dim), lambda i: (0, 0)),
                  pl.BlockSpec((1, dim), lambda i: (0, 0)),
                  pl.BlockSpec((dim, d2), lambda i: (0, 0)),
                  pl.BlockSpec((1, d2), lambda i: (0, 0)),
                  pl.BlockSpec((d2, dim), lambda i: (0, 0)),
                  pl.BlockSpec((1, dim), lambda i: (0, 0)),
                  pl.BlockSpec((1, dim), lambda i: (0, 0)),
                  pl.BlockSpec((1, dim), lambda i: (0, 0))],
        out_specs=pl.BlockSpec((block, dim), lambda i: (i, 0)),
        compiler_params=_row_params(),
    )(a_rows.astype(_BF16), skip_rows.astype(_BF16),
      p['proj_w'].astype(_BF16), p['proj_b'].reshape(1, dim),
      p['pre_g'].reshape(1, dim), p['pre_b'].reshape(1, dim),
      p['mlp_w1'].astype(_BF16), p['mlp_b1'].reshape(1, d2),
      p['mlp_w2'].astype(_BF16), p['mlp_b2'].reshape(1, dim),
      p['post_g'].reshape(1, dim), p['post_b'].reshape(1, dim))
    return out


# ----------------------------------------------------------------------------
# Full CrossViewAttention forward
# ----------------------------------------------------------------------------
def cross_view_attention(params, x, bev_grid, feature, i_inv, e_inv, image_plane,
                         *, heads, dim_head, skip=True, att_dtype=_BF16):
    b, n, feat_dim, h, w = feature.shape
    dim = x.shape[1]
    Hq, Wq = x.shape[2], x.shape[3]
    bn = b * n
    hw = h * w
    HW = Hq * Wq
    hd = heads * dim_head

    # --- tiny geometry matmuls (K = 2/4 contractions): plain XLA, fused with the
    #     surrounding normalize / subtract glue; not worth a Pallas launch.
    c_flat = e_inv[..., -1].reshape(bn, 4)                        # (bn, 4)
    c_embed = c_flat @ params['cam_w']                            # (bn, dim)

    pixel_flat = image_plane.reshape(1, 1, 3, hw)
    cam = jnp.matmul(i_inv, pixel_flat)                           # (b, n, 3, hw)
    cam = jnp.concatenate(
        [cam, jnp.ones((b, n, 1, hw), cam.dtype)], axis=2)        # (b, n, 4, hw)
    d = jnp.matmul(e_inv, cam)                                    # (b, n, 4, hw)
    d_rows = d.transpose(0, 1, 3, 2).reshape(bn, hw, 4)
    d_embed = d_rows @ params['img_w']                            # (bn, hw, dim)
    img_embed = d_embed - c_embed[:, None, :]
    img_embed = img_embed / (jnp.linalg.norm(img_embed, axis=-1, keepdims=True) + 1e-7)

    world_rows = bev_grid[:2].reshape(2, HW).T                    # (HW, 2)
    w_embed = world_rows @ params['bev_w'] + params['bev_b']      # (HW, dim)
    bev_embed = w_embed[None, :, :] - c_embed[:, None, :]         # (bn, HW, dim)
    bev_embed = bev_embed / (jnp.linalg.norm(bev_embed, axis=-1, keepdims=True) + 1e-7)
    query_pos = bev_embed.reshape(b, n, HW, dim)

    # --- fused key/value path: one pass over the feature rows produces both k and v
    feat_rows = feature.transpose(0, 1, 3, 4, 2).reshape(bn * hw, feat_dim)
    k_rows, v_rows = fused_key_value(feat_rows, img_embed.reshape(bn * hw, dim), params)

    # --- query path (softmax scale folded into the f32 projection weights)
    scale = dim_head ** -0.5
    x_rows = x.transpose(0, 2, 3, 1).reshape(b, HW, dim)          # 'b d H W -> b (H W) d'
    query = (query_pos + x_rows[:, None]).reshape(bn * HW, dim)
    q_rows = ln_linear(query, params['q_ln_g'], params['q_ln_b'],
                       params['q_w'] * scale, params['q_b'] * scale)  # (bn*HW, hd) bf16

    # --- head-major operand layout for the attention kernel (bf16, small tensors):
    #     avoids sub-128-lane head slices inside the hot kernel.
    qh = q_rows.reshape(b, n, HW, heads, dim_head).transpose(0, 3, 1, 2, 4)
    kh = k_rows.reshape(b, n, hw, heads, dim_head).transpose(0, 3, 1, 2, 4)
    vh = v_rows.reshape(b, n, hw, heads, dim_head).transpose(0, 3, 1, 2, 4)

    a, att = cross_attention_pallas(qh, kh, vh, att_dtype=att_dtype)
    # a: (b, heads, HW, dim_head)   att: (b, heads, HW, n*hw)

    # '(b m) Q d -> b Q (m d)' (small tensor; XLA transpose)
    a_rows = a.transpose(0, 2, 1, 3).reshape(b * HW, hd)

    z_rows = ffn_pallas(a_rows, x_rows.reshape(b * HW, dim),
                        params, use_skip=skip)                    # (b*HW, dim) f32
    z = z_rows.reshape(b, HW, dim).transpose(0, 2, 1).reshape(b, dim, Hq, Wq)
    att = att.reshape(b * heads, HW, n * hw)
    return z, att


# ----------------------------------------------------------------------------
# Deterministic parameter init (synthetic; shapes follow module __init__)
# ----------------------------------------------------------------------------
def init_params(key, feat_dim, dim, heads, dim_head, qkv_bias=True):
    ks = jax.random.split(key, 40)
    idx = [0]

    def nxt():
        i = idx[0]
        idx[0] += 1
        return ks[i]

    def w(shape, s=0.05):
        return s * jax.random.normal(nxt(), shape, jnp.float32)

    hd = heads * dim_head
    p = {}
    p['cam_w'] = w((4, dim))                  # Conv2d(4, dim, 1, bias=False)
    p['img_w'] = w((4, dim))                  # Conv2d(4, dim, 1, bias=False)
    p['bev_w'] = w((2, dim))                  # Conv2d(2, dim, 1)
    p['bev_b'] = w((dim,), 0.02)

    eps = 1e-5
    for pre in ('fp', 'fl'):                  # feature_proj / feature_linear
        gamma = 1.0 + 0.1 * jax.random.normal(nxt(), (feat_dim,), jnp.float32)
        beta = 0.1 * jax.random.normal(nxt(), (feat_dim,), jnp.float32)
        p[f'{pre}_bn_scale'] = gamma / jnp.sqrt(1.0 + eps)   # eval-mode BN fold
        p[f'{pre}_bn_shift'] = beta
        p[f'{pre}_w'] = w((feat_dim, dim))

    for name in ('q', 'k', 'v'):
        p[f'{name}_ln_g'] = 1.0 + 0.1 * jax.random.normal(nxt(), (dim,), jnp.float32)
        p[f'{name}_ln_b'] = 0.1 * jax.random.normal(nxt(), (dim,), jnp.float32)
        p[f'{name}_w'] = w((dim, hd))
        p[f'{name}_b'] = (0.02 * jax.random.normal(nxt(), (hd,), jnp.float32)
                          if qkv_bias else jnp.zeros((hd,), jnp.float32))

    p['proj_w'] = w((hd, dim))
    p['proj_b'] = w((dim,), 0.02)
    p['pre_g'] = 1.0 + 0.1 * jax.random.normal(nxt(), (dim,), jnp.float32)
    p['pre_b'] = 0.1 * jax.random.normal(nxt(), (dim,), jnp.float32)
    p['mlp_w1'] = w((dim, 2 * dim))
    p['mlp_b1'] = w((2 * dim,), 0.02)
    p['mlp_w2'] = w((2 * dim, dim))
    p['mlp_b2'] = w((dim,), 0.02)
    p['post_g'] = 1.0 + 0.1 * jax.random.normal(nxt(), (dim,), jnp.float32)
    p['post_b'] = 0.1 * jax.random.normal(nxt(), (dim,), jnp.float32)
    return p


# ----------------------------------------------------------------------------
# Main
# ----------------------------------------------------------------------------
if __name__ == "__main__":
    # Small shapes consistent with the module's forward.
    b, n = 2, 2
    feat_dim = 8
    feat_height, feat_width = 8, 8
    dim = 32
    heads, dim_head = 4, 8
    image_height, image_width = 32, 32
    bev_height, bev_width = 64, 64
    n_decoder_blocks = 3                      # -> BEV query grid 8 x 8
    qkv_bias = True
    skip = True

    Hq = bev_height // (2 ** n_decoder_blocks)
    Wq = bev_width // (2 ** n_decoder_blocks)

    # image_plane buffer (1, 1, 3, h, w) scaled by image size
    image_plane_np = generate_grid(feat_height, feat_width)[None].copy()
    image_plane_np[:, :, 0] *= image_width
    image_plane_np[:, :, 1] *= image_height
    image_plane = jnp.asarray(image_plane_np, jnp.float32)

    bev_grid = make_bev_grid(bev_height, bev_width, 100.0, 100.0, 0.0, n_decoder_blocks)

    key = jax.random.PRNGKey(0)
    kp, kx, kf, ki, ke = jax.random.split(key, 5)
    params = init_params(kp, feat_dim, dim, heads, dim_head, qkv_bias=qkv_bias)

    x = 0.1 * jax.random.normal(kx, (b, dim, Hq, Wq), jnp.float32)
    feature = 0.1 * jax.random.normal(kf, (b, n, feat_dim, feat_height, feat_width),
                                      jnp.float32)
    i_inv = jnp.eye(3, dtype=jnp.float32)[None, None] + \
        0.05 * jax.random.normal(ki, (b, n, 3, 3), jnp.float32)
    e_inv = jnp.eye(4, dtype=jnp.float32)[None, None] + \
        0.05 * jax.random.normal(ke, (b, n, 4, 4), jnp.float32)

    fwd = jax.jit(functools.partial(cross_view_attention,
                                    heads=heads, dim_head=dim_head, skip=skip))
    z, att = fwd(params, x, bev_grid, feature, i_inv, e_inv, image_plane)
    jax.block_until_ready((z, att))

    assert z.shape == (b, dim, Hq, Wq)
    assert att.shape == (b * heads, Hq * Wq, n * feat_height * feat_width)
    assert bool(jnp.all(jnp.isfinite(z))) and bool(jnp.all(jnp.isfinite(att)))
    print("KERNEL_OK")
</pallas_src>

<mosaic_0001>
module attributes {stable_mosaic.version = 11 : i64} {
  func.func @_kv_kernel(%arg0: i32, %arg1: memref<256x8xbf16, #tpu.memory_space<vmem>>, %arg2: memref<256x32xbf16, #tpu.memory_space<vmem>>, %arg3: memref<1x8xf32, #tpu.memory_space<vmem>>, %arg4: memref<1x8xf32, #tpu.memory_space<vmem>>, %arg5: memref<8x32xbf16, #tpu.memory_space<vmem>>, %arg6: memref<1x8xf32, #tpu.memory_space<vmem>>, %arg7: memref<1x8xf32, #tpu.memory_space<vmem>>, %arg8: memref<8x32xbf16, #tpu.memory_space<vmem>>, %arg9: memref<1x32xf32, #tpu.memory_space<vmem>>, %arg10: memref<1x32xf32, #tpu.memory_space<vmem>>, %arg11: memref<32x32xbf16, #tpu.memory_space<vmem>>, %arg12: memref<1x32xf32, #tpu.memory_space<vmem>>, %arg13: memref<1x32xf32, #tpu.memory_space<vmem>>, %arg14: memref<1x32xf32, #tpu.memory_space<vmem>>, %arg15: memref<32x32xbf16, #tpu.memory_space<vmem>>, %arg16: memref<1x32xf32, #tpu.memory_space<vmem>>, %arg17: memref<256x32xbf16, #tpu.memory_space<vmem>>, %arg18: memref<256x32xbf16, #tpu.memory_space<vmem>>) attributes {dimension_semantics = [#tpu.dimension_semantics<parallel>], iteration_bounds = array<i64: 1>, scalar_prefetch = 0 : i64, scratch_operands = 0 : i64, tpu.core_type = #tpu.core_type<tc>, window_params = [{transform_indices = @transform_0, window_bounds = array<i64: 256, 8>}, {transform_indices = @transform_1, window_bounds = array<i64: 256, 32>}, {pipeline_mode = #tpu.pipeline_mode<synchronous>, transform_indices = @transform_2, window_bounds = array<i64: 1, 8>}, {pipeline_mode = #tpu.pipeline_mode<synchronous>, transform_indices = @transform_3, window_bounds = array<i64: 1, 8>}, {pipeline_mode = #tpu.pipeline_mode<synchronous>, transform_indices = @transform_4, window_bounds = array<i64: 8, 32>}, {pipeline_mode = #tpu.pipeline_mode<synchronous>, transform_indices = @transform_5, window_bounds = array<i64: 1, 8>}, {pipeline_mode = #tpu.pipeline_mode<synchronous>, transform_indices = @transform_6, window_bounds = array<i64: 1, 8>}, {pipeline_mode = #tpu.pipeline_mode<synchronous>, transform_indices = @transform_7, window_bounds = array<i64: 8, 32>}, {pipeline_mode = #tpu.pipeline_mode<synchronous>, transform_indices = @transform_8, window_bounds = array<i64: 1, 32>}, {pipeline_mode = #tpu.pipeline_mode<synchronous>, transform_indices = @transform_9, window_bounds = array<i64: 1, 32>}, {pipeline_mode = #tpu.pipeline_mode<synchronous>, transform_indices = @transform_10, window_bounds = array<i64: 32, 32>}, {pipeline_mode = #tpu.pipeline_mode<synchronous>, transform_indices = @transform_11, window_bounds = array<i64: 1, 32>}, {pipeline_mode = #tpu.pipeline_mode<synchronous>, transform_indices = @transform_12, window_bounds = array<i64: 1, 32>}, {pipeline_mode = #tpu.pipeline_mode<synchronous>, transform_indices = @transform_13, window_bounds = array<i64: 1, 32>}, {pipeline_mode = #tpu.pipeline_mode<synchronous>, transform_indices = @transform_14, window_bounds = array<i64: 32, 32>}, {pipeline_mode = #tpu.pipeline_mode<synchronous>, transform_indices = @transform_15, window_bounds = array<i64: 1, 32>}, {transform_indices = @transform_16, window_bounds = array<i64: 256, 32>}, {transform_indices = @transform_17, window_bounds = array<i64: 256, 32>}]} {
    %c0 = arith.constant 0 : index
    %c0_0 = arith.constant 0 : index
    %0 = vector.load %arg1[%c0, %c0_0] : memref<256x8xbf16, #tpu.memory_space<vmem>>, vector<256x8xbf16>
    %1 = arith.extf %0 : vector<256x8xbf16> to vector<256x8xf32>
    %c0_1 = arith.constant 0 : index
    %c0_2 = arith.constant 0 : index
    %2 = vector.load %arg3[%c0_1, %c0_2] : memref<1x8xf32, #tpu.memory_space<vmem>>, vector<1x8xf32>
    %3 = vector.broadcast %2 : vector<1x8xf32> to vector<256x8xf32>
    %4 = arith.mulf %1, %3 : vector<256x8xf32>
    %c0_3 = arith.constant 0 : index
    %c0_4 = arith.constant 0 : index
    %5 = vector.load %arg4[%c0_3, %c0_4] : memref<1x8xf32, #tpu.memory_space<vmem>>, vector<1x8xf32>
    %6 = vector.broadcast %5 : vector<1x8xf32> to vector<256x8xf32>
    %7 = arith.addf %4, %6 : vector<256x8xf32>
    %cst = arith.constant 0.000000e+00 : f32
    %8 = vector.broadcast %cst : f32 to vector<256x8xf32>
    %9 = arith.maximumf %7, %8 : vector<256x8xf32>
    %10 = arith.truncf %9 : vector<256x8xf32> to vector<256x8xbf16>
    %c0_5 = arith.constant 0 : index
    %c0_6 = arith.constant 0 : index
    %11 = vector.load %arg5[%c0_5, %c0_6] : memref<8x32xbf16, #tpu.memory_space<vmem>>, vector<8x32xbf16>
    %cst_7 = arith.constant dense<0.000000e+00> : vector<256x32xf32>
    %12 = tpu.matmul %10, %11, %cst_7 {dimension_numbers = #tpu.dot_dimension_numbers<[1], [0], [0], [1], [0, 0, 1, 1], [], []>} : vector<256x8xbf16>, vector<8x32xbf16>, vector<256x32xf32> -> vector<256x32xf32>
    %c0_8 = arith.constant 0 : index
    %c0_9 = arith.constant 0 : index
    %13 = vector.load %arg2[%c0_8, %c0_9] : memref<256x32xbf16, #tpu.memory_space<vmem>>, vector<256x32xbf16>
    %14 = arith.extf %13 : vector<256x32xbf16> to vector<256x32xf32>
    %15 = arith.addf %12, %14 : vector<256x32xf32>
    %c0_10 = arith.constant 0 : index
    %c0_11 = arith.constant 0 : index
    %16 = vector.load %arg9[%c0_10, %c0_11] : memref<1x32xf32, #tpu.memory_space<vmem>>, vector<1x32xf32>
    %c0_12 = arith.constant 0 : index
    %c0_13 = arith.constant 0 : index
    %17 = vector.load %arg10[%c0_12, %c0_13] : memref<1x32xf32, #tpu.memory_space<vmem>>, vector<1x32xf32>
    %cst_14 = arith.constant dense<0.000000e+00> : vector<256xf32>
    %18 = vector.multi_reduction <add>, %15, %cst_14 [1] : vector<256x32xf32> to vector<256xf32>
    %19 = vector.shape_cast %18 : vector<256xf32> to vector<256x1xf32>
    %cst_15 = arith.constant 3.200000e+01 : f32
    %20 = vector.broadcast %cst_15 : f32 to vector<256x1xf32>
    %21 = arith.divf %19, %20 : vector<256x1xf32>
    %22 = vector.broadcast %21 : vector<256x1xf32> to vector<256x32xf32>
    %23 = arith.subf %15, %22 : vector<256x32xf32>
    %24 = arith.mulf %23, %23 : vector<256x32xf32>
    %cst_16 = arith.constant dense<0.000000e+00> : vector<256xf32>
    %25 = vector.multi_reduction <add>, %24, %cst_16 [1] : vector<256x32xf32> to vector<256xf32>
    %26 = vector.shape_cast %25 : vector<256xf32> to vector<256x1xf32>
    %cst_17 = arith.constant 3.200000e+01 : f32
    %27 = vector.broadcast %cst_17 : f32 to vector<256x1xf32>
    %28 = arith.divf %26, %27 : vector<256x1xf32>
    %29 = vector.broadcast %21 : vector<256x1xf32> to vector<256x32xf32>
    %30 = arith.subf %15, %29 : vector<256x32xf32>
    %cst_18 = arith.constant 9.99999974E-6 : f32
    %31 = vector.broadcast %cst_18 : f32 to vector<256x1xf32>
    %32 = arith.addf %28, %31 : vector<256x1xf32>
    %33 = math.rsqrt %32 : vector<256x1xf32>
    %34 = vector.broadcast %33 : vector<256x1xf32> to vector<256x32xf32>
    %35 = arith.mulf %30, %34 : vector<256x32xf32>
    %36 = vector.broadcast %16 : vector<1x32xf32> to vector<256x32xf32>
    %37 = arith.mulf %35, %36 : vector<256x32xf32>
    %38 = vector.broadcast %17 : vector<1x32xf32> to vector<256x32xf32>
    %39 = arith.addf %37, %38 : vector<256x32xf32>
    %40 = arith.truncf %39 : vector<256x32xf32> to vector<256x32xbf16>
    %c0_19 = arith.constant 0 : index
    %c0_20 = arith.constant 0 : index
    %41 = vector.load %arg11[%c0_19, %c0_20] : memref<32x32xbf16, #tpu.memory_space<vmem>>, vector<32x32xbf16>
    %cst_21 = arith.constant dense<0.000000e+00> : vector<256x32xf32>
    %42 = tpu.matmul %40, %41, %cst_21 {dimension_numbers = #tpu.dot_dimension_numbers<[1], [0], [0], [1], [0, 0, 1, 1], [], []>} : vector<256x32xbf16>, vector<32x32xbf16>, vector<256x32xf32> -> vector<256x32xf32>
    %c0_22 = arith.constant 0 : index
    %c0_23 = arith.constant 0 : index
    %43 = vector.load %arg12[%c0_22, %c0_23] : memref<1x32xf32, #tpu.memory_space<vmem>>, vector<1x32xf32>
    %44 = vector.broadcast %43 : vector<1x32xf32> to vector<256x32xf32>
    %45 = arith.addf %42, %44 : vector<256x32xf32>
    %46 = arith.truncf %45 : vector<256x32xf32> to vector<256x32xbf16>
    %c0_24 = arith.constant 0 : index
    %c0_25 = arith.constant 0 : index
    %47 = vector.load %arg17[%c0_24, %c0_25] : memref<256x32xbf16, #tpu.memory_space<vmem>>, vector<256x32xbf16>
    tpu.vector_store %arg17[%c0_24, %c0_25], %46 {strides = array<i32>} : memref<256x32xbf16, #tpu.memory_space<vmem>>, vector<256x32xbf16>,
    %c0_26 = arith.constant 0 : index
    %c0_27 = arith.constant 0 : index
    %48 = vector.load %arg6[%c0_26, %c0_27] : memref<1x8xf32, #tpu.memory_space<vmem>>, vector<1x8xf32>
    %49 = vector.broadcast %48 : vector<1x8xf32> to vector<256x8xf32>
    %50 = arith.mulf %1, %49 : vector<256x8xf32>
    %c0_28 = arith.constant 0 : index
    %c0_29 = arith.constant 0 : index
    %51 = vector.load %arg7[%c0_28, %c0_29] : memref<1x8xf32, #tpu.memory_space<vmem>>, vector<1x8xf32>
    %52 = vector.broadcast %51 : vector<1x8xf32> to vector<256x8xf32>
    %53 = arith.addf %50, %52 : vector<256x8xf32>
    %cst_30 = arith.constant 0.000000e+00 : f32
    %54 = vector.broadcast %cst_30 : f32 to vector<256x8xf32>
    %55 = arith.maximumf %53, %54 : vector<256x8xf32>
    %56 = arith.truncf %55 : vector<256x8xf32> to vector<256x8xbf16>
    %c0_31 = arith.constant 0 : index
    %c0_32 = arith.constant 0 : index
    %57 = vector.load %arg8[%c0_31, %c0_32] : memref<8x32xbf16, #tpu.memory_space<vmem>>, vector<8x32xbf16>
    %cst_33 = arith.constant dense<0.000000e+00> : vector<256x32xf32>
    %58 = tpu.matmul %56, %57, %cst_33 {dimension_numbers = #tpu.dot_dimension_numbers<[1], [0], [0], [1], [0, 0, 1, 1], [], []>} : vector<256x8xbf16>, vector<8x32xbf16>, vector<256x32xf32> -> vector<256x32xf32>
    %c0_34 = arith.constant 0 : index
    %c0_35 = arith.constant 0 : index
    %59 = vector.load %arg13[%c0_34, %c0_35] : memref<1x32xf32, #tpu.memory_space<vmem>>, vector<1x32xf32>
    %c0_36 = arith.constant 0 : index
    %c0_37 = arith.constant 0 : index
    %60 = vector.load %arg14[%c0_36, %c0_37] : memref<1x32xf32, #tpu.memory_space<vmem>>, vector<1x32xf32>
    %cst_38 = arith.constant dense<0.000000e+00> : vector<256xf32>
    %61 = vector.multi_reduction <add>, %58, %cst_38 [1] : vector<256x32xf32> to vector<256xf32>
    %62 = vector.shape_cast %61 : vector<256xf32> to vector<256x1xf32>
    %cst_39 = arith.constant 3.200000e+01 : f32
    %63 = vector.broadcast %cst_39 : f32 to vector<256x1xf32>
    %64 = arith.divf %62, %63 : vector<256x1xf32>
    %65 = vector.broadcast %64 : vector<256x1xf32> to vector<256x32xf32>
    %66 = arith.subf %58, %65 : vector<256x32xf32>
    %67 = arith.mulf %66, %66 : vector<256x32xf32>
    %cst_40 = arith.constant dense<0.000000e+00> : vector<256xf32>
    %68 = vector.multi_reduction <add>, %67, %cst_40 [1] : vector<256x32xf32> to vector<256xf32>
    %69 = vector.shape_cast %68 : vector<256xf32> to vector<256x1xf32>
    %cst_41 = arith.constant 3.200000e+01 : f32
    %70 = vector.broadcast %cst_41 : f32 to vector<256x1xf32>
    %71 = arith.divf %69, %70 : vector<256x1xf32>
    %72 = vector.broadcast %64 : vector<256x1xf32> to vector<256x32xf32>
    %73 = arith.subf %58, %72 : vector<256x32xf32>
    %cst_42 = arith.constant 9.99999974E-6 : f32
    %74 = vector.broadcast %cst_42 : f32 to vector<256x1xf32>
    %75 = arith.addf %71, %74 : vector<256x1xf32>
    %76 = math.rsqrt %75 : vector<256x1xf32>
    %77 = vector.broadcast %76 : vector<256x1xf32> to vector<256x32xf32>
    %78 = arith.mulf %73, %77 : vector<256x32xf32>
    %79 = vector.broadcast %59 : vector<1x32xf32> to vector<256x32xf32>
    %80 = arith.mulf %78, %79 : vector<256x32xf32>
    %81 = vector.broadcast %60 : vector<1x32xf32> to vector<256x32xf32>
    %82 = arith.addf %80, %81 : vector<256x32xf32>
    %83 = arith.truncf %82 : vector<256x32xf32> to vector<256x32xbf16>
    %c0_43 = arith.constant 0 : index
    %c0_44 = arith.constant 0 : index
    %84 = vector.load %arg15[%c0_43, %c0_44] : memref<32x32xbf16, #tpu.memory_space<vmem>>, vector<32x32xbf16>
    %cst_45 = arith.constant dense<0.000000e+00> : vector<256x32xf32>
    %85 = tpu.matmul %83, %84, %cst_45 {dimension_numbers = #tpu.dot_dimension_numbers<[1], [0], [0], [1], [0, 0, 1, 1], [], []>} : vector<256x32xbf16>, vector<32x32xbf16>, vector<256x32xf32> -> vector<256x32xf32>
    %c0_46 = arith.constant 0 : index
    %c0_47 = arith.constant 0 : index
    %86 = vector.load %arg16[%c0_46, %c0_47] : memref<1x32xf32, #tpu.memory_space<vmem>>, vector<1x32xf32>
    %87 = vector.broadcast %86 : vector<1x32xf32> to vector<256x32xf32>
    %88 = arith.addf %85, %87 : vector<256x32xf32>
    %89 = arith.truncf %88 : vector<256x32xf32> to vector<256x32xbf16>
    %c0_48 = arith.constant 0 : index
    %c0_49 = arith.constant 0 : index
    %90 = vector.load %arg18[%c0_48, %c0_49] : memref<256x32xbf16, #tpu.memory_space<vmem>>, vector<256x32xbf16>
    tpu.vector_store %arg18[%c0_48, %c0_49], %89 {strides = array<i32>} : memref<256x32xbf16, #tpu.memory_space<vmem>>, vector<256x32xbf16>,
    return
  }
  func.func @transform_0(%arg0: i32) -> (i32, i32) {
    %c0_i32 = arith.constant 0 : i32
    %c0_i32_0 = arith.constant 0 : i32
    return %arg0, %c0_i32 : i32, i32
  }
  func.func @transform_1(%arg0: i32) -> (i32, i32) {
    %c0_i32 = arith.constant 0 : i32
    %c0_i32_0 = arith.constant 0 : i32
    return %arg0, %c0_i32 : i32, i32
  }
  func.func @transform_2(%arg0: i32) -> (i32, i32) {
    %c0_i32 = arith.constant 0 : i32
    %c0_i32_0 = arith.constant 0 : i32
    %c0_i32_1 = arith.constant 0 : i32
    return %c0_i32, %c0_i32_0 : i32, i32
  }
  func.func @transform_3(%arg0: i32) -> (i32, i32) {
    %c0_i32 = arith.constant 0 : i32
    %c0_i32_0 = arith.constant 0 : i32
    %c0_i32_1 = arith.constant 0 : i32
    return %c0_i32, %c0_i32_0 : i32, i32
  }
  func.func @transform_4(%arg0: i32) -> (i32, i32) {
    %c0_i32 = arith.constant 0 : i32
    %c0_i32_0 = arith.constant 0 : i32
    %c0_i32_1 = arith.constant 0 : i32
    return %c0_i32, %c0_i32_0 : i32, i32
  }
  func.func @transform_5(%arg0: i32) -> (i32, i32) {
    %c0_i32 = arith.constant 0 : i32
    %c0_i32_0 = arith.constant 0 : i32
    %c0_i32_1 = arith.constant 0 : i32
    return %c0_i32, %c0_i32_0 : i32, i32
  }
  func.func @transform_6(%arg0: i32) -> (i32, i32) {
    %c0_i32 = arith.constant 0 : i32
    %c0_i32_0 = arith.constant 0 : i32
    %c0_i32_1 = arith.constant 0 : i32
    return %c0_i32, %c0_i32_0 : i32, i32
  }
  func.func @transform_7(%arg0: i32) -> (i32, i32) {
    %c0_i32 = arith.constant 0 : i32
    %c0_i32_0 = arith.constant 0 : i32
    %c0_i32_1 = arith.constant 0 : i32
    return %c0_i32, %c0_i32_0 : i32, i32
  }
  func.func @transform_8(%arg0: i32) -> (i32, i32) {
    %c0_i32 = arith.constant 0 : i32
    %c0_i32_0 = arith.constant 0 : i32
    %c0_i32_1 = arith.constant 0 : i32
    return %c0_i32, %c0_i32_0 : i32, i32
  }
  func.func @transform_9(%arg0: i32) -> (i32, i32) {
    %c0_i32 = arith.constant 0 : i32
    %c0_i32_0 = arith.constant 0 : i32
    %c0_i32_1 = arith.constant 0 : i32
    return %c0_i32, %c0_i32_0 : i32, i32
  }
  func.func @transform_10(%arg0: i32) -> (i32, i32) {
    %c0_i32 = arith.constant 0 : i32
    %c0_i32_0 = arith.constant 0 : i32
    %c0_i32_1 = arith.constant 0 : i32
    return %c0_i32, %c0_i32_0 : i32, i32
  }
  func.func @transform_11(%arg0: i32) -> (i32, i32) {
    %c0_i32 = arith.constant 0 : i32
    %c0_i32_0 = arith.constant 0 : i32
    %c0_i32_1 = arith.constant 0 : i32
    return %c0_i32, %c0_i32_0 : i32, i32
  }
  func.func @transform_12(%arg0: i32) -> (i32, i32) {
    %c0_i32 = arith.constant 0 : i32
    %c0_i32_0 = arith.constant 0 : i32
    %c0_i32_1 = arith.constant 0 : i32
    return %c0_i32, %c0_i32_0 : i32, i32
  }
  func.func @transform_13(%arg0: i32) -> (i32, i32) {
    %c0_i32 = arith.constant 0 : i32
    %c0_i32_0 = arith.constant 0 : i32
    %c0_i32_1 = arith.constant 0 : i32
    return %c0_i32, %c0_i32_0 : i32, i32
  }
  func.func @transform_14(%arg0: i32) -> (i32, i32) {
    %c0_i32 = arith.constant 0 : i32
    %c0_i32_0 = arith.constant 0 : i32
    %c0_i32_1 = arith.constant 0 : i32
    return %c0_i32, %c0_i32_0 : i32, i32
  }
  func.func @transform_15(%arg0: i32) -> (i32, i32) {
    %c0_i32 = arith.constant 0 : i32
    %c0_i32_0 = arith.constant 0 : i32
    %c0_i32_1 = arith.constant 0 : i32
    return %c0_i32, %c0_i32_0 : i32, i32
  }
  func.func @transform_16(%arg0: i32) -> (i32, i32) {
    %c0_i32 = arith.constant 0 : i32
    %c0_i32_0 = arith.constant 0 : i32
    return %arg0, %c0_i32 : i32, i32
  }
  func.func @transform_17(%arg0: i32) -> (i32, i32) {
    %c0_i32 = arith.constant 0 : i32
    %c0_i32_0 = arith.constant 0 : i32
    return %arg0, %c0_i32 : i32, i32
  }
}

module attributes {stable_mosaic.version = 11 : i64} {
  func.func @_ln_linear_kernel(%arg0: i32, %arg1: memref<256x32xbf16, #tpu.memory_space<vmem>>, %arg2: memref<1x32xf32, #tpu.memory_space<vmem>>, %arg3: memref<1x32xf32, #tpu.memory_space<vmem>>, %arg4: memref<32x32xbf16, #tpu.memory_space<vmem>>, %arg5: memref<1x32xf32, #tpu.memory_space<vmem>>, %arg6: memref<256x32xbf16, #tpu.memory_space<vmem>>) attributes {dimension_semantics = [#tpu.dimension_semantics<parallel>], iteration_bounds = array<i64: 1>, scalar_prefetch = 0 : i64, scratch_operands = 0 : i64, tpu.core_type = #tpu.core_type<tc>, window_params = [{transform_indices = @transform_0, window_bounds = array<i64: 256, 32>}, {pipeline_mode = #tpu.pipeline_mode<synchronous>, transform_indices = @transform_1, window_bounds = array<i64: 1, 32>}, {pipeline_mode = #tpu.pipeline_mode<synchronous>, transform_indices = @transform_2, window_bounds = array<i64: 1, 32>}, {pipeline_mode = #tpu.pipeline_mode<synchronous>, transform_indices = @transform_3, window_bounds = array<i64: 32, 32>}, {pipeline_mode = #tpu.pipeline_mode<synchronous>, transform_indices = @transform_4, window_bounds = array<i64: 1, 32>}, {transform_indices = @transform_5, window_bounds = array<i64: 256, 32>}]} {
    %c0 = arith.constant 0 : index
    %c0_0 = arith.constant 0 : index
    %0 = vector.load %arg1[%c0, %c0_0] : memref<256x32xbf16, #tpu.memory_space<vmem>>, vector<256x32xbf16>
    %1 = arith.extf %0 : vector<256x32xbf16> to vector<256x32xf32>
    %c0_1 = arith.constant 0 : index
    %c0_2 = arith.constant 0 : index
    %2 = vector.load %arg2[%c0_1, %c0_2] : memref<1x32xf32, #tpu.memory_space<vmem>>, vector<1x32xf32>
    %c0_3 = arith.constant 0 : index
    %c0_4 = arith.constant 0 : index
    %3 = vector.load %arg3[%c0_3, %c0_4] : memref<1x32xf32, #tpu.memory_space<vmem>>, vector<1x32xf32>
    %cst = arith.constant dense<0.000000e+00> : vector<256xf32>
    %4 = vector.multi_reduction <add>, %1, %cst [1] : vector<256x32xf32> to vector<256xf32>
    %5 = vector.shape_cast %4 : vector<256xf32> to vector<256x1xf32>
    %cst_5 = arith.constant 3.200000e+01 : f32
    %6 = vector.broadcast %cst_5 : f32 to vector<256x1xf32>
    %7 = arith.divf %5, %6 : vector<256x1xf32>
    %8 = vector.broadcast %7 : vector<256x1xf32> to vector<256x32xf32>
    %9 = arith.subf %1, %8 : vector<256x32xf32>
    %10 = arith.mulf %9, %9 : vector<256x32xf32>
    %cst_6 = arith.constant dense<0.000000e+00> : vector<256xf32>
    %11 = vector.multi_reduction <add>, %10, %cst_6 [1] : vector<256x32xf32> to vector<256xf32>
    %12 = vector.shape_cast %11 : vector<256xf32> to vector<256x1xf32>
    %cst_7 = arith.constant 3.200000e+01 : f32
    %13 = vector.broadcast %cst_7 : f32 to vector<256x1xf32>
    %14 = arith.divf %12, %13 : vector<256x1xf32>
    %15 = vector.broadcast %7 : vector<256x1xf32> to vector<256x32xf32>
    %16 = arith.subf %1, %15 : vector<256x32xf32>
    %cst_8 = arith.constant 9.99999974E-6 : f32
    %17 = vector.broadcast %cst_8 : f32 to vector<256x1xf32>
    %18 = arith.addf %14, %17 : vector<256x1xf32>
    %19 = math.rsqrt %18 : vector<256x1xf32>
    %20 = vector.broadcast %19 : vector<256x1xf32> to vector<256x32xf32>
    %21 = arith.mulf %16, %20 : vector<256x32xf32>
    %22 = vector.broadcast %2 : vector<1x32xf32> to vector<256x32xf32>
    %23 = arith.mulf %21, %22 : vector<256x32xf32>
    %24 = vector.broadcast %3 : vector<1x32xf32> to vector<256x32xf32>
    %25 = arith.addf %23, %24 : vector<256x32xf32>
    %26 = arith.truncf %25 : vector<256x32xf32> to vector<256x32xbf16>
    %c0_9 = arith.constant 0 : index
    %c0_10 = arith.constant 0 : index
    %27 = vector.load %arg4[%c0_9, %c0_10] : memref<32x32xbf16, #tpu.memory_space<vmem>>, vector<32x32xbf16>
    %cst_11 = arith.constant dense<0.000000e+00> : vector<256x32xf32>
    %28 = tpu.matmul %26, %27, %cst_11 {dimension_numbers = #tpu.dot_dimension_numbers<[1], [0], [0], [1], [0, 0, 1, 1], [], []>} : vector<256x32xbf16>, vector<32x32xbf16>, vector<256x32xf32> -> vector<256x32xf32>
    %c0_12 = arith.constant 0 : index
    %c0_13 = arith.constant 0 : index
    %29 = vector.load %arg5[%c0_12, %c0_13] : memref<1x32xf32, #tpu.memory_space<vmem>>, vector<1x32xf32>
    %30 = vector.broadcast %29 : vector<1x32xf32> to vector<256x32xf32>
    %31 = arith.addf %28, %30 : vector<256x32xf32>
    %32 = arith.truncf %31 : vector<256x32xf32> to vector<256x32xbf16>
    %c0_14 = arith.constant 0 : index
    %c0_15 = arith.constant 0 : index
    %33 = vector.load %arg6[%c0_14, %c0_15] : memref<256x32xbf16, #tpu.memory_space<vmem>>, vector<256x32xbf16>
    tpu.vector_store %arg6[%c0_14, %c0_15], %32 {strides = array<i32>} : memref<256x32xbf16, #tpu.memory_space<vmem>>, vector<256x32xbf16>,
    return
  }
  func.func @transform_0(%arg0: i32) -> (i32, i32) {
    %c0_i32 = arith.constant 0 : i32
    %c0_i32_0 = arith.constant 0 : i32
    return %arg0, %c0_i32 : i32, i32
  }
  func.func @transform_1(%arg0: i32) -> (i32, i32) {
    %c0_i32 = arith.constant 0 : i32
    %c0_i32_0 = arith.constant 0 : i32
    %c0_i32_1 = arith.constant 0 : i32
    return %c0_i32, %c0_i32_0 : i32, i32
  }
  func.func @transform_2(%arg0: i32) -> (i32, i32) {
    %c0_i32 = arith.constant 0 : i32
    %c0_i32_0 = arith.constant 0 : i32
    %c0_i32_1 = arith.constant 0 : i32
    return %c0_i32, %c0_i32_0 : i32, i32
  }
  func.func @transform_3(%arg0: i32) -> (i32, i32) {
    %c0_i32 = arith.constant 0 : i32
    %c0_i32_0 = arith.constant 0 : i32
    %c0_i32_1 = arith.constant 0 : i32
    return %c0_i32, %c0_i32_0 : i32, i32
  }
  func.func @transform_4(%arg0: i32) -> (i32, i32) {
    %c0_i32 = arith.constant 0 : i32
    %c0_i32_0 = arith.constant 0 : i32
    %c0_i32_1 = arith.constant 0 : i32
    return %c0_i32, %c0_i32_0 : i32, i32
  }
  func.func @transform_5(%arg0: i32) -> (i32, i32) {
    %c0_i32 = arith.constant 0 : i32
    %c0_i32_0 = arith.constant 0 : i32
    return %arg0, %c0_i32 : i32, i32
  }
}

module attributes {stable_mosaic.version = 11 : i64} {
  func.func @_attn_kernel(%arg0: i32, %arg1: i32, %arg2: i32, %arg3: memref<1x1x2x64x8xbf16, #tpu.memory_space<vmem>>, %arg4: memref<1x1x2x64x8xbf16, #tpu.memory_space<vmem>>, %arg5: memref<1x1x2x64x8xbf16, #tpu.memory_space<vmem>>, %arg6: memref<1x1x64x8xbf16, #tpu.memory_space<vmem>>, %arg7: memref<1x1x64x128xbf16, #tpu.memory_space<vmem>>) attributes {dimension_semantics = [#tpu.dimension_semantics<parallel>, #tpu.dimension_semantics<parallel>, #tpu.dimension_semantics<parallel>], iteration_bounds = array<i64: 2, 4, 1>, scalar_prefetch = 0 : i64, scratch_operands = 0 : i64, tpu.core_type = #tpu.core_type<tc>, window_params = [{transform_indices = @transform_0, window_bounds = array<i64: 1, 1, 2, 64, 8>}, {transform_indices = @transform_1, window_bounds = array<i64: 1, 1, 2, 64, 8>}, {transform_indices = @transform_2, window_bounds = array<i64: 1, 1, 2, 64, 8>}, {transform_indices = @transform_3, window_bounds = array<i64: 1, 1, 64, 8>}, {transform_indices = @transform_4, window_bounds = array<i64: 1, 1, 64, 128>}]} {
    %c0 = arith.constant 0 : index
    %c0_0 = arith.constant 0 : index
    %c0_1 = arith.constant 0 : index
    %c0_2 = arith.constant 0 : index
    %c0_3 = arith.constant 0 : index
    %0 = vector.load %arg3[%c0, %c0_0, %c0_1, %c0_2, %c0_3] : memref<1x1x2x64x8xbf16, #tpu.memory_space<vmem>>, vector<1x1x2x64x8xbf16>
    %1 = vector.shape_cast %0 : vector<1x1x2x64x8xbf16> to vector<2x64x8xbf16>
    %c0_4 = arith.constant 0 : index
    %c0_5 = arith.constant 0 : index
    %c0_6 = arith.constant 0 : index
    %c0_7 = arith.constant 0 : index
    %c0_8 = arith.constant 0 : index
    %2 = vector.load %arg4[%c0_4, %c0_5, %c0_6, %c0_7, %c0_8] : memref<1x1x2x64x8xbf16, #tpu.memory_space<vmem>>, vector<1x1x2x64x8xbf16>
    %3 = vector.shape_cast %2 : vector<1x1x2x64x8xbf16> to vector<2x64x8xbf16>
    %c0_9 = arith.constant 0 : index
    %c0_10 = arith.constant 0 : index
    %c0_11 = arith.constant 0 : index
    %c0_12 = arith.constant 0 : index
    %c0_13 = arith.constant 0 : index
    %4 = vector.load %arg5[%c0_9, %c0_10, %c0_11, %c0_12, %c0_13] : memref<1x1x2x64x8xbf16, #tpu.memory_space<vmem>>, vector<1x1x2x64x8xbf16>
    %5 = vector.shape_cast %4 : vector<1x1x2x64x8xbf16> to vector<2x64x8xbf16>
    %cst = arith.constant dense<0.000000e+00> : vector<2x64x64xf32>
    %6 = tpu.matmul %1, %3, %cst {dimension_numbers = #tpu.dot_dimension_numbers<[2], [2], [1], [1], [0, 0, 0, 1, 1, 1], [0], [0]>} : vector<2x64x8xbf16>, vector<2x64x8xbf16>, vector<2x64x64xf32> -> vector<2x64x64xf32>
    %cst_14 = arith.constant dense<0xFF800000> : vector<2x64xf32>
    %7 = vector.multi_reduction <maximumf>, %6, %cst_14 [2] : vector<2x64x64xf32> to vector<2x64xf32>
    %8 = vector.shape_cast %7 : vector<2x64xf32> to vector<2x64x1xf32>
    %cst_15 = arith.constant dense<0xFF800000> : vector<64x1xf32>
    %9 = vector.multi_reduction <maximumf>, %8, %cst_15 [0] : vector<2x64x1xf32> to vector<64x1xf32>
    %10 = vector.shape_cast %9 : vector<64x1xf32> to vector<1x64x1xf32>
    %11 = vector.broadcast %10 : vector<1x64x1xf32> to vector<2x64x64xf32>
    %12 = arith.subf %6, %11 : vector<2x64x64xf32>
    %13 = math.exp %12 : vector<2x64x64xf32>
    %cst_16 = arith.constant dense<0.000000e+00> : vector<2x64xf32>
    %14 = vector.multi_reduction <add>, %13, %cst_16 [2] : vector<2x64x64xf32> to vector<2x64xf32>
    %15 = vector.shape_cast %14 : vector<2x64xf32> to vector<2x64x1xf32>
    %cst_17 = arith.constant dense<0.000000e+00> : vector<64x1xf32>
    %16 = vector.multi_reduction <add>, %15, %cst_17 [0] : vector<2x64x1xf32> to vector<64x1xf32>
    %17 = vector.shape_cast %16 : vector<64x1xf32> to vector<1x64x1xf32>
    %cst_18 = arith.constant 1.000000e+00 : f32
    %18 = vector.broadcast %cst_18 : f32 to vector<1x64x1xf32>
    %19 = arith.divf %18, %17 : vector<1x64x1xf32>
    %20 = vector.broadcast %19 : vector<1x64x1xf32> to vector<2x64x64xf32>
    %21 = arith.mulf %13, %20 : vector<2x64x64xf32>
    %22 = arith.truncf %21 : vector<2x64x64xf32> to vector<2x64x64xbf16>
    %cst_19 = arith.constant dense<0.000000e+00> : vector<2x64x8xf32>
    %23 = tpu.matmul %22, %5, %cst_19 {dimension_numbers = #tpu.dot_dimension_numbers<[2], [1], [1], [2], [0, 0, 0, 1, 1, 2], [0], [0]>} : vector<2x64x64xbf16>, vector<2x64x8xbf16>, vector<2x64x8xf32> -> vector<2x64x8xf32>
    %cst_20 = arith.constant dense<0.000000e+00> : vector<64x8xf32>
    %24 = vector.multi_reduction <add>, %23, %cst_20 [0] : vector<2x64x8xf32> to vector<64x8xf32>
    %25 = arith.truncf %24 : vector<64x8xf32> to vector<64x8xbf16>
    %c0_21 = arith.constant 0 : index
    %c0_22 = arith.constant 0 : index
    %c0_23 = arith.constant 0 : index
    %c0_24 = arith.constant 0 : index
    %26 = vector.load %arg6[%c0_21, %c0_22, %c0_23, %c0_24] : memref<1x1x64x8xbf16, #tpu.memory_space<vmem>>, vector<1x1x64x8xbf16>
    %27 = vector.shape_cast %26 : vector<1x1x64x8xbf16> to vector<64x8xbf16>
    %28 = vector.shape_cast %25 : vector<64x8xbf16> to vector<1x1x64x8xbf16>
    tpu.vector_store %arg6[%c0_21, %c0_22, %c0_23, %c0_24], %28 {strides = array<i32>} : memref<1x1x64x8xbf16, #tpu.memory_space<vmem>>, vector<1x1x64x8xbf16>,
    %29 = vector.extract_strided_slice %21 {offsets = [0, 0, 0], sizes = [1, 64, 64], strides = [1, 1, 1]} : vector<2x64x64xf32> to vector<1x64x64xf32>
    %30 = vector.shape_cast %29 : vector<1x64x64xf32> to vector<64x64xf32>
    %31 = arith.truncf %30 : vector<64x64xf32> to vector<64x64xbf16>
    %c0_25 = arith.constant 0 : index
    %c0_26 = arith.constant 0 : index
    %c0_27 = arith.constant 0 : index
    %c0_28 = arith.constant 0 : index
    %32 = vector.load %arg7[%c0_25, %c0_26, %c0_27, %c0_28] : memref<1x1x64x128xbf16, #tpu.memory_space<vmem>>, vector<1x1x64x64xbf16>
    %33 = vector.shape_cast %32 : vector<1x1x64x64xbf16> to vector<64x64xbf16>
    %34 = vector.shape_cast %31 : vector<64x64xbf16> to vector<1x1x64x64xbf16>
    tpu.vector_store %arg7[%c0_25, %c0_26, %c0_27, %c0_28], %34 {strides = array<i32>} : memref<1x1x64x128xbf16, #tpu.memory_space<vmem>>, vector<1x1x64x64xbf16>,
    %35 = vector.extract_strided_slice %21 {offsets = [1, 0, 0], sizes = [1, 64, 64], strides = [1, 1, 1]} : vector<2x64x64xf32> to vector<1x64x64xf32>
    %36 = vector.shape_cast %35 : vector<1x64x64xf32> to vector<64x64xf32>
    %37 = arith.truncf %36 : vector<64x64xf32> to vector<64x64xbf16>
    %c0_29 = arith.constant 0 : index
    %c0_30 = arith.constant 0 : index
    %c0_31 = arith.constant 0 : index
    %c64 = arith.constant 64 : index
    %38 = vector.load %arg7[%c0_29, %c0_30, %c0_31, %c64] : memref<1x1x64x128xbf16, #tpu.memory_space<vmem>>, vector<1x1x64x64xbf16>
    %39 = vector.shape_cast %38 : vector<1x1x64x64xbf16> to vector<64x64xbf16>
    %40 = vector.shape_cast %37 : vector<64x64xbf16> to vector<1x1x64x64xbf16>
    tpu.vector_store %arg7[%c0_29, %c0_30, %c0_31, %c64], %40 {strides = array<i32>} : memref<1x1x64x128xbf16, #tpu.memory_space<vmem>>, vector<1x1x64x64xbf16>,
    return
  }
  func.func @transform_0(%arg0: i32, %arg1: i32, %arg2: i32) -> (i32, i32, i32, i32, i32) {
    %c0_i32 = arith.constant 0 : i32
    %c0_i32_0 = arith.constant 0 : i32
    %c0_i32_1 = arith.constant 0 : i32
    return %arg0, %arg1, %c0_i32, %arg2, %c0_i32_0 : i32, i32, i32, i32, i32
  }
  func.func @transform_1(%arg0: i32, %arg1: i32, %arg2: i32) -> (i32, i32, i32, i32, i32) {
    %c0_i32 = arith.constant 0 : i32
    %c0_i32_0 = arith.constant 0 : i32
    %c0_i32_1 = arith.constant 0 : i32
    %c0_i32_2 = arith.constant 0 : i32
    return %arg0, %arg1, %c0_i32, %c0_i32_0, %c0_i32_1 : i32, i32, i32, i32, i32
  }
  func.func @transform_2(%arg0: i32, %arg1: i32, %arg2: i32) -> (i32, i32, i32, i32, i32) {
    %c0_i32 = arith.constant 0 : i32
    %c0_i32_0 = arith.constant 0 : i32
    %c0_i32_1 = arith.constant 0 : i32
    %c0_i32_2 = arith.constant 0 : i32
    return %arg0, %arg1, %c0_i32, %c0_i32_0, %c0_i32_1 : i32, i32, i32, i32, i32
  }
  func.func @transform_3(%arg0: i32, %arg1: i32, %arg2: i32) -> (i32, i32, i32, i32) {
    %c0_i32 = arith.constant 0 : i32
    %c0_i32_0 = arith.constant 0 : i32
    return %arg0, %arg1, %arg2, %c0_i32 : i32, i32, i32, i32
  }
  func.func @transform_4(%arg0: i32, %arg1: i32, %arg2: i32) -> (i32, i32, i32, i32) {
    %c0_i32 = arith.constant 0 : i32
    %c0_i32_0 = arith.constant 0 : i32
    return %arg0, %arg1, %arg2, %c0_i32 : i32, i32, i32, i32
  }
}

module attributes {stable_mosaic.version = 11 : i64} {
  func.func @_ffn_kernel(%arg0: i32, %arg1: memref<128x32xbf16, #tpu.memory_space<vmem>>, %arg2: memref<128x32xbf16, #tpu.memory_space<vmem>>, %arg3: memref<32x32xbf16, #tpu.memory_space<vmem>>, %arg4: memref<1x32xf32, #tpu.memory_space<vmem>>, %arg5: memref<1x32xf32, #tpu.memory_space<vmem>>, %arg6: memref<1x32xf32, #tpu.memory_space<vmem>>, %arg7: memref<32x64xbf16, #tpu.memory_space<vmem>>, %arg8: memref<1x64xf32, #tpu.memory_space<vmem>>, %arg9: memref<64x32xbf16, #tpu.memory_space<vmem>>, %arg10: memref<1x32xf32, #tpu.memory_space<vmem>>, %arg11: memref<1x32xf32, #tpu.memory_space<vmem>>, %arg12: memref<1x32xf32, #tpu.memory_space<vmem>>, %arg13: memref<128x32xf32, #tpu.memory_space<vmem>>) attributes {dimension_semantics = [#tpu.dimension_semantics<parallel>], iteration_bounds = array<i64: 1>, scalar_prefetch = 0 : i64, scratch_operands = 0 : i64, tpu.core_type = #tpu.core_type<tc>, window_params = [{transform_indices = @transform_0, window_bounds = array<i64: 128, 32>}, {transform_indices = @transform_1, window_bounds = array<i64: 128, 32>}, {pipeline_mode = #tpu.pipeline_mode<synchronous>, transform_indices = @transform_2, window_bounds = array<i64: 32, 32>}, {pipeline_mode = #tpu.pipeline_mode<synchronous>, transform_indices = @transform_3, window_bounds = array<i64: 1, 32>}, {pipeline_mode = #tpu.pipeline_mode<synchronous>, transform_indices = @transform_4, window_bounds = array<i64: 1, 32>}, {pipeline_mode = #tpu.pipeline_mode<synchronous>, transform_indices = @transform_5, window_bounds = array<i64: 1, 32>}, {pipeline_mode = #tpu.pipeline_mode<synchronous>, transform_indices = @transform_6, window_bounds = array<i64: 32, 64>}, {pipeline_mode = #tpu.pipeline_mode<synchronous>, transform_indices = @transform_7, window_bounds = array<i64: 1, 64>}, {pipeline_mode = #tpu.pipeline_mode<synchronous>, transform_indices = @transform_8, window_bounds = array<i64: 64, 32>}, {pipeline_mode = #tpu.pipeline_mode<synchronous>, transform_indices = @transform_9, window_bounds = array<i64: 1, 32>}, {pipeline_mode = #tpu.pipeline_mode<synchronous>, transform_indices = @transform_10, window_bounds = array<i64: 1, 32>}, {pipeline_mode = #tpu.pipeline_mode<synchronous>, transform_indices = @transform_11, window_bounds = array<i64: 1, 32>}, {transform_indices = @transform_12, window_bounds = array<i64: 128, 32>}]} {
    %c0 = arith.constant 0 : index
    %c0_0 = arith.constant 0 : index
    %0 = vector.load %arg1[%c0, %c0_0] : memref<128x32xbf16, #tpu.memory_space<vmem>>, vector<128x32xbf16>
    %c0_1 = arith.constant 0 : index
    %c0_2 = arith.constant 0 : index
    %1 = vector.load %arg3[%c0_1, %c0_2] : memref<32x32xbf16, #tpu.memory_space<vmem>>, vector<32x32xbf16>
    %cst = arith.constant dense<0.000000e+00> : vector<128x32xf32>
    %2 = tpu.matmul %0, %1, %cst {dimension_numbers = #tpu.dot_dimension_numbers<[1], [0], [0], [1], [0, 0, 1, 1], [], []>} : vector<128x32xbf16>, vector<32x32xbf16>, vector<128x32xf32> -> vector<128x32xf32>
    %c0_3 = arith.constant 0 : index
    %c0_4 = arith.constant 0 : index
    %3 = vector.load %arg4[%c0_3, %c0_4] : memref<1x32xf32, #tpu.memory_space<vmem>>, vector<1x32xf32>
    %4 = vector.broadcast %3 : vector<1x32xf32> to vector<128x32xf32>
    %5 = arith.addf %2, %4 : vector<128x32xf32>
    %c0_5 = arith.constant 0 : index
    %c0_6 = arith.constant 0 : index
    %6 = vector.load %arg2[%c0_5, %c0_6] : memref<128x32xbf16, #tpu.memory_space<vmem>>, vector<128x32xbf16>
    %7 = arith.extf %6 : vector<128x32xbf16> to vector<128x32xf32>
    %8 = arith.addf %5, %7 : vector<128x32xf32>
    %c0_7 = arith.constant 0 : index
    %c0_8 = arith.constant 0 : index
    %9 = vector.load %arg5[%c0_7, %c0_8] : memref<1x32xf32, #tpu.memory_space<vmem>>, vector<1x32xf32>
    %c0_9 = arith.constant 0 : index
    %c0_10 = arith.constant 0 : index
    %10 = vector.load %arg6[%c0_9, %c0_10] : memref<1x32xf32, #tpu.memory_space<vmem>>, vector<1x32xf32>
    %cst_11 = arith.constant dense<0.000000e+00> : vector<128xf32>
    %11 = vector.multi_reduction <add>, %8, %cst_11 [1] : vector<128x32xf32> to vector<128xf32>
    %12 = vector.shape_cast %11 : vector<128xf32> to vector<128x1xf32>
    %cst_12 = arith.constant 3.200000e+01 : f32
    %13 = vector.broadcast %cst_12 : f32 to vector<128x1xf32>
    %14 = arith.divf %12, %13 : vector<128x1xf32>
    %15 = vector.broadcast %14 : vector<128x1xf32> to vector<128x32xf32>
    %16 = arith.subf %8, %15 : vector<128x32xf32>
    %17 = arith.mulf %16, %16 : vector<128x32xf32>
    %cst_13 = arith.constant dense<0.000000e+00> : vector<128xf32>
    %18 = vector.multi_reduction <add>, %17, %cst_13 [1] : vector<128x32xf32> to vector<128xf32>
    %19 = vector.shape_cast %18 : vector<128xf32> to vector<128x1xf32>
    %cst_14 = arith.constant 3.200000e+01 : f32
    %20 = vector.broadcast %cst_14 : f32 to vector<128x1xf32>
    %21 = arith.divf %19, %20 : vector<128x1xf32>
    %22 = vector.broadcast %14 : vector<128x1xf32> to vector<128x32xf32>
    %23 = arith.subf %8, %22 : vector<128x32xf32>
    %cst_15 = arith.constant 9.99999974E-6 : f32
    %24 = vector.broadcast %cst_15 : f32 to vector<128x1xf32>
    %25 = arith.addf %21, %24 : vector<128x1xf32>
    %26 = math.rsqrt %25 : vector<128x1xf32>
    %27 = vector.broadcast %26 : vector<128x1xf32> to vector<128x32xf32>
    %28 = arith.mulf %23, %27 : vector<128x32xf32>
    %29 = vector.broadcast %9 : vector<1x32xf32> to vector<128x32xf32>
    %30 = arith.mulf %28, %29 : vector<128x32xf32>
    %31 = vector.broadcast %10 : vector<1x32xf32> to vector<128x32xf32>
    %32 = arith.addf %30, %31 : vector<128x32xf32>
    %33 = arith.truncf %32 : vector<128x32xf32> to vector<128x32xbf16>
    %c0_16 = arith.constant 0 : index
    %c0_17 = arith.constant 0 : index
    %34 = vector.load %arg7[%c0_16, %c0_17] : memref<32x64xbf16, #tpu.memory_space<vmem>>, vector<32x64xbf16>
    %cst_18 = arith.constant dense<0.000000e+00> : vector<128x64xf32>
    %35 = tpu.matmul %33, %34, %cst_18 {dimension_numbers = #tpu.dot_dimension_numbers<[1], [0], [0], [1], [0, 0, 1, 1], [], []>} : vector<128x32xbf16>, vector<32x64xbf16>, vector<128x64xf32> -> vector<128x64xf32>
    %c0_19 = arith.constant 0 : index
    %c0_20 = arith.constant 0 : index
    %36 = vector.load %arg8[%c0_19, %c0_20] : memref<1x64xf32, #tpu.memory_space<vmem>>, vector<1x64xf32>
    %37 = vector.broadcast %36 : vector<1x64xf32> to vector<128x64xf32>
    %38 = arith.addf %35, %37 : vector<128x64xf32>
    %cst_21 = arith.constant 5.000000e-01 : f32
    %39 = vector.broadcast %cst_21 : f32 to vector<128x64xf32>
    %40 = arith.mulf %39, %38 : vector<128x64xf32>
    %cst_22 = arith.constant 4.471500e-02 : f32
    %41 = vector.broadcast %cst_22 : f32 to vector<128x64xf32>
    %42 = arith.mulf %41, %38 : vector<128x64xf32>
    %43 = arith.mulf %42, %38 : vector<128x64xf32>
    %44 = arith.mulf %43, %38 : vector<128x64xf32>
    %45 = arith.addf %38, %44 : vector<128x64xf32>
    %cst_23 = arith.constant 0.797884583 : f32
    %46 = vector.broadcast %cst_23 : f32 to vector<128x64xf32>
    %47 = arith.mulf %46, %45 : vector<128x64xf32>
    %48 = math.tanh %47 : vector<128x64xf32>
    %cst_24 = arith.constant 1.000000e+00 : f32
    %49 = vector.broadcast %cst_24 : f32 to vector<128x64xf32>
    %50 = arith.addf %49, %48 : vector<128x64xf32>
    %51 = arith.mulf %40, %50 : vector<128x64xf32>
    %52 = arith.truncf %51 : vector<128x64xf32> to vector<128x64xbf16>
    %c0_25 = arith.constant 0 : index
    %c0_26 = arith.constant 0 : index
    %53 = vector.load %arg9[%c0_25, %c0_26] : memref<64x32xbf16, #tpu.memory_space<vmem>>, vector<64x32xbf16>
    %cst_27 = arith.constant dense<0.000000e+00> : vector<128x32xf32>
    %54 = tpu.matmul %52, %53, %cst_27 {dimension_numbers = #tpu.dot_dimension_numbers<[1], [0], [0], [1], [0, 0, 1, 1], [], []>} : vector<128x64xbf16>, vector<64x32xbf16>, vector<128x32xf32> -> vector<128x32xf32>
    %c0_28 = arith.constant 0 : index
    %c0_29 = arith.constant 0 : index
    %55 = vector.load %arg10[%c0_28, %c0_29] : memref<1x32xf32, #tpu.memory_space<vmem>>, vector<1x32xf32>
    %56 = vector.broadcast %55 : vector<1x32xf32> to vector<128x32xf32>
    %57 = arith.addf %54, %56 : vector<128x32xf32>
    %58 = arith.addf %32, %57 : vector<128x32xf32>
    %c0_30 = arith.constant 0 : index
    %c0_31 = arith.constant 0 : index
    %59 = vector.load %arg11[%c0_30, %c0_31] : memref<1x32xf32, #tpu.memory_space<vmem>>, vector<1x32xf32>
    %c0_32 = arith.constant 0 : index
    %c0_33 = arith.constant 0 : index
    %60 = vector.load %arg12[%c0_32, %c0_33] : memref<1x32xf32, #tpu.memory_space<vmem>>, vector<1x32xf32>
    %cst_34 = arith.constant dense<0.000000e+00> : vector<128xf32>
    %61 = vector.multi_reduction <add>, %58, %cst_34 [1] : vector<128x32xf32> to vector<128xf32>
    %62 = vector.shape_cast %61 : vector<128xf32> to vector<128x1xf32>
    %cst_35 = arith.constant 3.200000e+01 : f32
    %63 = vector.broadcast %cst_35 : f32 to vector<128x1xf32>
    %64 = arith.divf %62, %63 : vector<128x1xf32>
    %65 = vector.broadcast %64 : vector<128x1xf32> to vector<128x32xf32>
    %66 = arith.subf %58, %65 : vector<128x32xf32>
    %67 = arith.mulf %66, %66 : vector<128x32xf32>
    %cst_36 = arith.constant dense<0.000000e+00> : vector<128xf32>
    %68 = vector.multi_reduction <add>, %67, %cst_36 [1] : vector<128x32xf32> to vector<128xf32>
    %69 = vector.shape_cast %68 : vector<128xf32> to vector<128x1xf32>
    %cst_37 = arith.constant 3.200000e+01 : f32
    %70 = vector.broadcast %cst_37 : f32 to vector<128x1xf32>
    %71 = arith.divf %69, %70 : vector<128x1xf32>
    %72 = vector.broadcast %64 : vector<128x1xf32> to vector<128x32xf32>
    %73 = arith.subf %58, %72 : vector<128x32xf32>
    %cst_38 = arith.constant 9.99999974E-6 : f32
    %74 = vector.broadcast %cst_38 : f32 to vector<128x1xf32>
    %75 = arith.addf %71, %74 : vector<128x1xf32>
    %76 = math.rsqrt %75 : vector<128x1xf32>
    %77 = vector.broadcast %76 : vector<128x1xf32> to vector<128x32xf32>
    %78 = arith.mulf %73, %77 : vector<128x32xf32>
    %79 = vector.broadcast %59 : vector<1x32xf32> to vector<128x32xf32>
    %80 = arith.mulf %78, %79 : vector<128x32xf32>
    %81 = vector.broadcast %60 : vector<1x32xf32> to vector<128x32xf32>
    %82 = arith.addf %80, %81 : vector<128x32xf32>
    %c0_39 = arith.constant 0 : index
    %c0_40 = arith.constant 0 : index
    %83 = vector.load %arg13[%c0_39, %c0_40] : memref<128x32xf32, #tpu.memory_space<vmem>>, vector<128x32xf32>
    tpu.vector_store %arg13[%c0_39, %c0_40], %82 {strides = array<i32>} : memref<128x32xf32, #tpu.memory_space<vmem>>, vector<128x32xf32>,
    return
  }
  func.func @transform_0(%arg0: i32) -> (i32, i32) {
    %c0_i32 = arith.constant 0 : i32
    %c0_i32_0 = arith.constant 0 : i32
    return %arg0, %c0_i32 : i32, i32
  }
  func.func @transform_1(%arg0: i32) -> (i32, i32) {
    %c0_i32 = arith.constant 0 : i32
    %c0_i32_0 = arith.constant 0 : i32
    return %arg0, %c0_i32 : i32, i32
  }
  func.func @transform_2(%arg0: i32) -> (i32, i32) {
    %c0_i32 = arith.constant 0 : i32
    %c0_i32_0 = arith.constant 0 : i32
    %c0_i32_1 = arith.constant 0 : i32
    return %c0_i32, %c0_i32_0 : i32, i32
  }
  func.func @transform_3(%arg0: i32) -> (i32, i32) {
    %c0_i32 = arith.constant 0 : i32
    %c0_i32_0 = arith.constant 0 : i32
    %c0_i32_1 = arith.constant 0 : i32
    return %c0_i32, %c0_i32_0 : i32, i32
  }
  func.func @transform_4(%arg0: i32) -> (i32, i32) {
    %c0_i32 = arith.constant 0 : i32
    %c0_i32_0 = arith.constant 0 : i32
    %c0_i32_1 = arith.constant 0 : i32
    return %c0_i32, %c0_i32_0 : i32, i32
  }
  func.func @transform_5(%arg0: i32) -> (i32, i32) {
    %c0_i32 = arith.constant 0 : i32
    %c0_i32_0 = arith.constant 0 : i32
    %c0_i32_1 = arith.constant 0 : i32
    return %c0_i32, %c0_i32_0 : i32, i32
  }
  func.func @transform_6(%arg0: i32) -> (i32, i32) {
    %c0_i32 = arith.constant 0 : i32
    %c0_i32_0 = arith.constant 0 : i32
    %c0_i32_1 = arith.constant 0 : i32
    return %c0_i32, %c0_i32_0 : i32, i32
  }
  func.func @transform_7(%arg0: i32) -> (i32, i32) {
    %c0_i32 = arith.constant 0 : i32
    %c0_i32_0 = arith.constant 0 : i32
    %c0_i32_1 = arith.constant 0 : i32
    return %c0_i32, %c0_i32_0 : i32, i32
  }
  func.func @transform_8(%arg0: i32) -> (i32, i32) {
    %c0_i32 = arith.constant 0 : i32
    %c0_i32_0 = arith.constant 0 : i32
    %c0_i32_1 = arith.constant 0 : i32
    return %c0_i32, %c0_i32_0 : i32, i32
  }
  func.func @transform_9(%arg0: i32) -> (i32, i32) {
    %c0_i32 = arith.constant 0 : i32
    %c0_i32_0 = arith.constant 0 : i32
    %c0_i32_1 = arith.constant 0 : i32
    return %c0_i32, %c0_i32_0 : i32, i32
  }
  func.func @transform_10(%arg0: i32) -> (i32, i32) {
    %c0_i32 = arith.constant 0 : i32
    %c0_i32_0 = arith.constant 0 : i32
    %c0_i32_1 = arith.constant 0 : i32
    return %c0_i32, %c0_i32_0 : i32, i32
  }
  func.func @transform_11(%arg0: i32) -> (i32, i32) {
    %c0_i32 = arith.constant 0 : i32
    %c0_i32_0 = arith.constant 0 : i32
    %c0_i32_1 = arith.constant 0 : i32
    return %c0_i32, %c0_i32_0 : i32, i32
  }
  func.func @transform_12(%arg0: i32) -> (i32, i32) {
    %c0_i32 = arith.constant 0 : i32
    %c0_i32_0 = arith.constant 0 : i32
    return %arg0, %c0_i32 : i32, i32
  }
}

</mosaic_0001>

<llo_original>
// kernel: cross_view_attention.5
$region0: #{cross_view_attention.5}
  #allocation0 [shape = 'u32[]', space=smem, size = 0x4, offset = 0x4, fixed_abs, tag = 'smem constant byte address 0x4 - core index']
  #allocation1 [shape = 'u32[144,128]{1,0:T(1,128)}', space=vmem, size = 0x12000, scoped, tag = 'internal scratch']
  %s0 = inlined_call_operand.vmem [shape: bf16[256,32], index: 0, kind: input, shape index: {}]
  %s1 = inlined_call_operand.vmem [shape: f32[1,32], index: 1, kind: input, shape index: {}]
  %s2 = inlined_call_operand.vmem [shape: f32[1,32], index: 2, kind: input, shape index: {}]
  %s3 = inlined_call_operand.vmem [shape: bf16[32,32], index: 3, kind: input, shape index: {}]
  %s4 = inlined_call_operand.vmem [shape: f32[1,32], index: 4, kind: input, shape index: {}]
  %s5 = inlined_call_operand.vmem [shape: bf16[256,32], index: 5, kind: output, shape index: {}]
  %s6 = sld [smem:[#allocation0]]
  $region30: #{cross_view_attention.5} parent=0
    _
  %s8 = ssub.s32 1, %s6
  %s9 = scalar_select 0, %s8, %s6
  // Predicated region
  $region2: #{cross_view_attention.5} parent=0 // pred_check
    _
  $region3: #{cross_view_attention.5} parent=0 // pred_check_branch
    %11 = sbr.rel (0) target = $region5
  $region4: #{cross_view_attention.5} parent=0 // pred_region
    _
  $region5: #{cross_view_attention.5} parent=0 // pred_fallthru
    _
  // Predicated region
  $region6: #{cross_view_attention.5} parent=0 // pred_check
    _
  $region7: #{cross_view_attention.5} parent=0 // pred_check_branch
    %13 = sbr.rel (0) target = $region9
  $region8: #{cross_view_attention.5} parent=0 // pred_region
    _
  $region9: #{cross_view_attention.5} parent=0 // pred_fallthru
    _
  // Predicated region
  $region10: #{cross_view_attention.5} parent=0 // pred_check
    _
  $region11: #{cross_view_attention.5} parent=0 // pred_check_branch
    %15 = sbr.rel (0) target = $region13
  $region12: #{cross_view_attention.5} parent=0 // pred_region
    _
  $region13: #{cross_view_attention.5} parent=0 // pred_fallthru
    _
  // Predicated region
  $region14: #{cross_view_attention.5} parent=0 // pred_check
    _
  $region15: #{cross_view_attention.5} parent=0 // pred_check_branch
    %17 = sbr.rel (0) target = $region17
  $region16: #{cross_view_attention.5} parent=0 // pred_region
    _
  $region17: #{cross_view_attention.5} parent=0 // pred_fallthru
    _
  // Predicated region
  $region18: #{cross_view_attention.5} parent=0 // pred_check
    _
  $region19: #{cross_view_attention.5} parent=0 // pred_check_branch
    %19 = sbr.rel (0) target = $region21
  $region20: #{cross_view_attention.5} parent=0 // pred_region
    _
  $region21: #{cross_view_attention.5} parent=0 // pred_fallthru
    _
  %v21 = vld [vmem:[%s0] sm:$0xf]
  %v22 = vld [vmem:[%s0 + $0x4] sm:$0xf]
  %v23 = vld [vmem:[%s0 + $0x8] sm:$0xf]
  %v24 = vld [vmem:[%s0 + $0xc] sm:$0xf]
  %v25 = vld [vmem:[%s0 + $0x10] sm:$0xf]
  %v26 = vld [vmem:[%s0 + $0x14] sm:$0xf]
  %v27 = vld [vmem:[%s0 + $0x18] sm:$0xf]
  %v28 = vld [vmem:[%s0 + $0x1c] sm:$0xf]
  %v29 = vld [vmem:[%s0 + $0x20] sm:$0xf]
  %v30 = vld [vmem:[%s0 + $0x24] sm:$0xf]
  %v31 = vld [vmem:[%s0 + $0x28] sm:$0xf]
  %v32 = vld [vmem:[%s0 + $0x2c] sm:$0xf]
  %v33 = vld [vmem:[%s0 + $0x30] sm:$0xf]
  %v34 = vld [vmem:[%s0 + $0x34] sm:$0xf]
  %v35 = vld [vmem:[%s0 + $0x38] sm:$0xf]
  %v36 = vld [vmem:[%s0 + $0x3c] sm:$0xf]
  %v37 = vld [vmem:[%s0 + $0x40] sm:$0xf]
  %v38 = vld [vmem:[%s0 + $0x44] sm:$0xf]
  %v39 = vld [vmem:[%s0 + $0x48] sm:$0xf]
  %v40 = vld [vmem:[%s0 + $0x4c] sm:$0xf]
  %v41 = vld [vmem:[%s0 + $0x50] sm:$0xf]
  %v42 = vld [vmem:[%s0 + $0x54] sm:$0xf]
  %v43 = vld [vmem:[%s0 + $0x58] sm:$0xf]
  %v44 = vld [vmem:[%s0 + $0x5c] sm:$0xf]
  %v45 = vld [vmem:[%s0 + $0x60] sm:$0xf]
  %v46 = vld [vmem:[%s0 + $0x64] sm:$0xf]
  %v47 = vld [vmem:[%s0 + $0x68] sm:$0xf]
  %v48 = vld [vmem:[%s0 + $0x6c] sm:$0xf]
  %v49 = vld [vmem:[%s0 + $0x70] sm:$0xf]
  %v50 = vld [vmem:[%s0 + $0x74] sm:$0xf]
  %v51 = vld [vmem:[%s0 + $0x78] sm:$0xf]
  %v52 = vld [vmem:[%s0 + $0x7c] sm:$0xf]
  %v53 = vunpack.c.l.bf16 %v21
  %v54 = vunpack.c.l.bf16 %v22
  %v55 = vunpack.c.l.bf16 %v23
  %v56 = vunpack.c.l.bf16 %v24
  %v57 = vunpack.c.l.bf16 %v25
  %v58 = vunpack.c.l.bf16 %v26
  %v59 = vunpack.c.l.bf16 %v27
  %v60 = vunpack.c.l.bf16 %v28
  %v61 = vunpack.c.l.bf16 %v29
  %v62 = vunpack.c.l.bf16 %v30
  %v63 = vunpack.c.l.bf16 %v31
  %v64 = vunpack.c.l.bf16 %v32
  %v65 = vunpack.c.l.bf16 %v33
  %v66 = vunpack.c.l.bf16 %v34
  %v67 = vunpack.c.l.bf16 %v35
  %v68 = vunpack.c.l.bf16 %v36
  %v69 = vunpack.c.l.bf16 %v37
  %v70 = vunpack.c.l.bf16 %v38
  %v71 = vunpack.c.l.bf16 %v39
  %v72 = vunpack.c.l.bf16 %v40
  %v73 = vunpack.c.l.bf16 %v41
  %v74 = vunpack.c.l.bf16 %v42
  %v75 = vunpack.c.l.bf16 %v43
  %v76 = vunpack.c.l.bf16 %v44
  %v77 = vunpack.c.l.bf16 %v45
  %v78 = vunpack.c.l.bf16 %v46
  %v79 = vunpack.c.l.bf16 %v47
  %v80 = vunpack.c.l.bf16 %v48
  %v81 = vunpack.c.l.bf16 %v49
  %v82 = vunpack.c.l.bf16 %v50
  %v83 = vunpack.c.l.bf16 %v51
  %v84 = vunpack.c.l.bf16 %v52
  %v85 = vld [vmem:[%s1] sm:$0x1]
  %v86 = vld [vmem:[%s2] sm:$0x1]
  %vm87 = vcmask 261120
  %v88 = vsel %vm87, %v53, 0.0
  %89 = vadd.xlane.f32.xlu0 %v88
  %v90 = vpop.xlane.xlu0 %89
  %v91 = vsel %vm87, %v54, 0.0
  %92 = vadd.xlane.f32.xlu0 %v91
  %v93 = vpop.xlane.xlu0 %92
  %v94 = vsel %vm87, %v55, 0.0
  %95 = vadd.xlane.f32.xlu0 %v94
  %v96 = vpop.xlane.xlu0 %95
  %v97 = vsel %vm87, %v56, 0.0
  %98 = vadd.xlane.f32.xlu0 %v97
  %v99 = vpop.xlane.xlu0 %98
  %v100 = vsel %vm87, %v57, 0.0
  %101 = vadd.xlane.f32.xlu0 %v100
  %v102 = vpop.xlane.xlu0 %101
  %v103 = vsel %vm87, %v58, 0.0
  %104 = vadd.xlane.f32.xlu0 %v103
  %v105 = vpop.xlane.xlu0 %104
  %v106 = vsel %vm87, %v59, 0.0
  %107 = vadd.xlane.f32.xlu0 %v106
  %v108 = vpop.xlane.xlu0 %107
  %v109 = vsel %vm87, %v60, 0.0
  %110 = vadd.xlane.f32.xlu0 %v109
  %v111 = vpop.xlane.xlu0 %110
  %v112 = vsel %vm87, %v61, 0.0
  %113 = vadd.xlane.f32.xlu0 %v112
  %v114 = vpop.xlane.xlu0 %113
  %v115 = vsel %vm87, %v62, 0.0
  %116 = vadd.xlane.f32.xlu0 %v115
  %v117 = vpop.xlane.xlu0 %116
  %v118 = vsel %vm87, %v63, 0.0
  %119 = vadd.xlane.f32.xlu0 %v118
  %v120 = vpop.xlane.xlu0 %119
  %v121 = vsel %vm87, %v64, 0.0
  %122 = vadd.xlane.f32.xlu0 %v121
  %v123 = vpop.xlane.xlu0 %122
  %v124 = vsel %vm87, %v65, 0.0
  %125 = vadd.xlane.f32.xlu0 %v124
  %v126 = vpop.xlane.xlu0 %125
  %v127 = vsel %vm87, %v66, 0.0
  %128 = vadd.xlane.f32.xlu0 %v127
  %v129 = vpop.xlane.xlu0 %128
  %v130 = vsel %vm87, %v67, 0.0
  %131 = vadd.xlane.f32.xlu0 %v130
  %v132 = vpop.xlane.xlu0 %131
  %v133 = vsel %vm87, %v68, 0.0
  %134 = vadd.xlane.f32.xlu0 %v133
  %v135 = vpop.xlane.xlu0 %134
  %v136 = vsel %vm87, %v69, 0.0
  %137 = vadd.xlane.f32.xlu0 %v136
  %v138 = vpop.xlane.xlu0 %137
  %v139 = vsel %vm87, %v70, 0.0
  %140 = vadd.xlane.f32.xlu0 %v139
  %v141 = vpop.xlane.xlu0 %140
  %v142 = vsel %vm87, %v71, 0.0
  %143 = vadd.xlane.f32.xlu0 %v142
  %v144 = vpop.xlane.xlu0 %143
  %v145 = vsel %vm87, %v72, 0.0
  %146 = vadd.xlane.f32.xlu0 %v145
  %v147 = vpop.xlane.xlu0 %146
  %v148 = vsel %vm87, %v73, 0.0
  %149 = vadd.xlane.f32.xlu0 %v148
  %v150 = vpop.xlane.xlu0 %149
  %v151 = vsel %vm87, %v74, 0.0
  %152 = vadd.xlane.f32.xlu0 %v151
  %v153 = vpop.xlane.xlu0 %152
  %v154 = vsel %vm87, %v75, 0.0
  %155 = vadd.xlane.f32.xlu0 %v154
  %v156 = vpop.xlane.xlu0 %155
  %v157 = vsel %vm87, %v76, 0.0
  %158 = vadd.xlane.f32.xlu0 %v157
  %v159 = vpop.xlane.xlu0 %158
  %v160 = vsel %vm87, %v77, 0.0
  %161 = vadd.xlane.f32.xlu0 %v160
  %v162 = vpop.xlane.xlu0 %161
  %v163 = vsel %vm87, %v78, 0.0
  %164 = vadd.xlane.f32.xlu0 %v163
  %v165 = vpop.xlane.xlu0 %164
  %v166 = vsel %vm87, %v79, 0.0
  %167 = vadd.xlane.f32.xlu0 %v166
  %v168 = vpop.xlane.xlu0 %167
  %v169 = vsel %vm87, %v80, 0.0
  %170 = vadd.xlane.f32.xlu0 %v169
  %v171 = vpop.xlane.xlu0 %170
  %v172 = vsel %vm87, %v81, 0.0
  %173 = vadd.xlane.f32.xlu0 %v172
  %v174 = vpop.xlane.xlu0 %173
  %v175 = vsel %vm87, %v82, 0.0
  %176 = vadd.xlane.f32.xlu0 %v175
  %v177 = vpop.xlane.xlu0 %176
  %v178 = vsel %vm87, %v83, 0.0
  %179 = vadd.xlane.f32.xlu0 %v178
  %v180 = vpop.xlane.xlu0 %179
  %v181 = vsel %vm87, %v84, 0.0
  %182 = vadd.xlane.f32.xlu0 %v181
  %v183 = vpop.xlane.xlu0 %182
  %v184 = vrcp.pop 32.0
  %v185 = vmul.f32 %v90, %v184
  %v186 = vmul.f32 %v93, %v184
  %v187 = vmul.f32 %v96, %v184
  %v188 = vmul.f32 %v99, %v184
  %v189 = vmul.f32 %v102, %v184
  %v190 = vmul.f32 %v105, %v184
  %v191 = vmul.f32 %v108, %v184
  %v192 = vmul.f32 %v111, %v184
  %v193 = vmul.f32 %v114, %v184
  %v194 = vmul.f32 %v117, %v184
  %v195 = vmul.f32 %v120, %v184
  %v196 = vmul.f32 %v123, %v184
  %v197 = vmul.f32 %v126, %v184
  %v198 = vmul.f32 %v129, %v184
  %v199 = vmul.f32 %v132, %v184
  %v200 = vmul.f32 %v135, %v184
  %v201 = vmul.f32 %v138, %v184
  %v202 = vmul.f32 %v141, %v184
  %v203 = vmul.f32 %v144, %v184
  %v204 = vmul.f32 %v147, %v184
  %v205 = vmul.f32 %v150, %v184
  %v206 = vmul.f32 %v153, %v184
  %v207 = vmul.f32 %v156, %v184
  %v208 = vmul.f32 %v159, %v184
  %v209 = vmul.f32 %v162, %v184
  %v210 = vmul.f32 %v165, %v184
  %v211 = vmul.f32 %v168, %v184
  %v212 = vmul.f32 %v171, %v184
  %v213 = vmul.f32 %v174, %v184
  %v214 = vmul.f32 %v177, %v184
  %v215 = vmul.f32 %v180, %v184
  %v216 = vmul.f32 %v183, %v184
  %v217 = vsub.f32 %v53, %v185
  %v218 = vsub.f32 %v54, %v186
  %v219 = vsub.f32 %v55, %v187
  %v220 = vsub.f32 %v56, %v188
  %v221 = vsub.f32 %v57, %v189
  %v222 = vsub.f32 %v58, %v190
  %v223 = vsub.f32 %v59, %v191
  %v224 = vsub.f32 %v60, %v192
  %v225 = vsub.f32 %v61, %v193
  %v226 = vsub.f32 %v62, %v194
  %v227 = vsub.f32 %v63, %v195
  %v228 = vsub.f32 %v64, %v196
  %v229 = vsub.f32 %v65, %v197
  %v230 = vsub.f32 %v66, %v198
  %v231 = vsub.f32 %v67, %v199
  %v232 = vsub.f32 %v68, %v200
  %v233 = vsub.f32 %v69, %v201
  %v234 = vsub.f32 %v70, %v202
  %v235 = vsub.f32 %v71, %v203
  %v236 = vsub.f32 %v72, %v204
  %v237 = vsub.f32 %v73, %v205
  %v238 = vsub.f32 %v74, %v206
  %v239 = vsub.f32 %v75, %v207
  %v240 = vsub.f32 %v76, %v208
  %v241 = vsub.f32 %v77, %v209
  %v242 = vsub.f32 %v78, %v210
  %v243 = vsub.f32 %v79, %v211
  %v244 = vsub.f32 %v80, %v212
  %v245 = vsub.f32 %v81, %v213
  %v246 = vsub.f32 %v82, %v214
  %v247 = vsub.f32 %v83, %v215
  %v248 = vsub.f32 %v84, %v216
  %v249 = vmul.f32 %v217, %v217
  %v250 = vmul.f32 %v218, %v218
  %v251 = vmul.f32 %v219, %v219
  %v252 = vmul.f32 %v220, %v220
  %v253 = vmul.f32 %v221, %v221
  %v254 = vmul.f32 %v222, %v222
  %v255 = vmul.f32 %v223, %v223
  %v256 = vmul.f32 %v224, %v224
  %v257 = vmul.f32 %v225, %v225
  %v258 = vmul.f32 %v226, %v226
  %v259 = vmul.f32 %v227, %v227
  %v260 = vmul.f32 %v228, %v228
  %v261 = vmul.f32 %v229, %v229
  %v262 = vmul.f32 %v230, %v230
  %v263 = vmul.f32 %v231, %v231
  %v264 = vmul.f32 %v232, %v232
  %v265 = vmul.f32 %v233, %v233
  %v266 = vmul.f32 %v234, %v234
  %v267 = vmul.f32 %v235, %v235
  %v268 = vmul.f32 %v236, %v236
  %v269 = vmul.f32 %v237, %v237
  %v270 = vmul.f32 %v238, %v238
  %v271 = vmul.f32 %v239, %v239
  %v272 = vmul.f32 %v240, %v240
  %v273 = vmul.f32 %v241, %v241
  %v274 = vmul.f32 %v242, %v242
  %v275 = vmul.f32 %v243, %v243
  %v276 = vmul.f32 %v244, %v244
  %v277 = vmul.f32 %v245, %v245
  %v278 = vmul.f32 %v246, %v246
  %v279 = vmul.f32 %v247, %v247
  %v280 = vmul.f32 %v248, %v248
  %v281 = vsel %vm87, %v249, 0.0
  %282 = vadd.xlane.f32.xlu0 %v281
  %v283 = vpop.xlane.xlu0 %282
  %v284 = vsel %vm87, %v250, 0.0
  %285 = vadd.xlane.f32.xlu0 %v284
  %v286 = vpop.xlane.xlu0 %285
  %v287 = vsel %vm87, %v251, 0.0
  %288 = vadd.xlane.f32.xlu0 %v287
  %v289 = vpop.xlane.xlu0 %288
  %v290 = vsel %vm87, %v252, 0.0
  %291 = vadd.xlane.f32.xlu0 %v290
  %v292 = vpop.xlane.xlu0 %291
  %v293 = vsel %vm87, %v253, 0.0
  %294 = vadd.xlane.f32.xlu0 %v293
  %v295 = vpop.xlane.xlu0 %294
  %v296 = vsel %vm87, %v254, 0.0
  %297 = vadd.xlane.f32.xlu0 %v296
  %v298 = vpop.xlane.xlu0 %297
  %v299 = vsel %vm87, %v255, 0.0
  %300 = vadd.xlane.f32.xlu0 %v299
  %v301 = vpop.xlane.xlu0 %300
  %v302 = vsel %vm87, %v256, 0.0
  %303 = vadd.xlane.f32.xlu0 %v302
  %v304 = vpop.xlane.xlu0 %303
  %v305 = vsel %vm87, %v257, 0.0
  %306 = vadd.xlane.f32.xlu0 %v305
  %v307 = vpop.xlane.xlu0 %306
  %v308 = vsel %vm87, %v258, 0.0
  %309 = vadd.xlane.f32.xlu0 %v308
  %v310 = vpop.xlane.xlu0 %309
  %v311 = vsel %vm87, %v259, 0.0
  %312 = vadd.xlane.f32.xlu0 %v311
  %v313 = vpop.xlane.xlu0 %312
  %v314 = vsel %vm87, %v260, 0.0
  %315 = vadd.xlane.f32.xlu0 %v314
  %v316 = vpop.xlane.xlu0 %315
  %v317 = vsel %vm87, %v261, 0.0
  %318 = vadd.xlane.f32.xlu0 %v317
  %v319 = vpop.xlane.xlu0 %318
  %v320 = vsel %vm87, %v262, 0.0
  %321 = vadd.xlane.f32.xlu0 %v320
  %v322 = vpop.xlane.xlu0 %321
  %v323 = vsel %vm87, %v263, 0.0
  %324 = vadd.xlane.f32.xlu0 %v323
  %v325 = vpop.xlane.xlu0 %324
  %v326 = vsel %vm87, %v264, 0.0
  %327 = vadd.xlane.f32.xlu0 %v326
  %v328 = vpop.xlane.xlu0 %327
  %v329 = vsel %vm87, %v265, 0.0
  %330 = vadd.xlane.f32.xlu0 %v329
  %v331 = vpop.xlane.xlu0 %330
  %v332 = vsel %vm87, %v266, 0.0
  %333 = vadd.xlane.f32.xlu0 %v332
  %v334 = vpop.xlane.xlu0 %333
  %v335 = vsel %vm87, %v267, 0.0
  %336 = vadd.xlane.f32.xlu0 %v335
  %v337 = vpop.xlane.xlu0 %336
  %v338 = vsel %vm87, %v268, 0.0
  %339 = vadd.xlane.f32.xlu0 %v338
  %v340 = vpop.xlane.xlu0 %339
  %v341 = vsel %vm87, %v269, 0.0
  %342 = vadd.xlane.f32.xlu0 %v341
  %v343 = vpop.xlane.xlu0 %342
  %v344 = vsel %vm87, %v270, 0.0
  %345 = vadd.xlane.f32.xlu0 %v344
  %v346 = vpop.xlane.xlu0 %345
  %v347 = vsel %vm87, %v271, 0.0
  %348 = vadd.xlane.f32.xlu0 %v347
  %v349 = vpop.xlane.xlu0 %348
  %v350 = vsel %vm87, %v272, 0.0
  %351 = vadd.xlane.f32.xlu0 %v350
  %v352 = vpop.xlane.xlu0 %351
  %v353 = vsel %vm87, %v273, 0.0
  %354 = vadd.xlane.f32.xlu0 %v353
  %v355 = vpop.xlane.xlu0 %354
  %v356 = vsel %vm87, %v274, 0.0
  %357 = vadd.xlane.f32.xlu0 %v356
  %v358 = vpop.xlane.xlu0 %357
  %v359 = vsel %vm87, %v275, 0.0
  %360 = vadd.xlane.f32.xlu0 %v359
  %v361 = vpop.xlane.xlu0 %360
  %v362 = vsel %vm87, %v276, 0.0
  %363 = vadd.xlane.f32.xlu0 %v362
  %v364 = vpop.xlane.xlu0 %363
  %v365 = vsel %vm87, %v277, 0.0
  %366 = vadd.xlane.f32.xlu0 %v365
  %v367 = vpop.xlane.xlu0 %366
  %v368 = vsel %vm87, %v278, 0.0
  %369 = vadd.xlane.f32.xlu0 %v368
  %v370 = vpop.xlane.xlu0 %369
  %v371 = vsel %vm87, %v279, 0.0
  %372 = vadd.xlane.f32.xlu0 %v371
  %v373 = vpop.xlane.xlu0 %372
  %v374 = vsel %vm87, %v280, 0.0
  %375 = vadd.xlane.f32.xlu0 %v374
  %v376 = vpop.xlane.xlu0 %375
  %v377 = vmul.f32 %v283, %v184
  %v378 = vmul.f32 %v286, %v184
  %v379 = vmul.f32 %v289, %v184
  %v380 = vmul.f32 %v292, %v184
  %v381 = vmul.f32 %v295, %v184
  %v382 = vmul.f32 %v298, %v184
  %v383 = vmul.f32 %v301, %v184
  %v384 = vmul.f32 %v304, %v184
  %v385 = vmul.f32 %v307, %v184
  %v386 = vmul.f32 %v310, %v184
  %v387 = vmul.f32 %v313, %v184
  %v388 = vmul.f32 %v316, %v184
  %v389 = vmul.f32 %v319, %v184
  %v390 = vmul.f32 %v322, %v184
  %v391 = vmul.f32 %v325, %v184
  %v392 = vmul.f32 %v328, %v184
  %v393 = vmul.f32 %v331, %v184
  %v394 = vmul.f32 %v334, %v184
  %v395 = vmul.f32 %v337, %v184
  %v396 = vmul.f32 %v340, %v184
  %v397 = vmul.f32 %v343, %v184
  %v398 = vmul.f32 %v346, %v184
  %v399 = vmul.f32 %v349, %v184
  %v400 = vmul.f32 %v352, %v184
  %v401 = vmul.f32 %v355, %v184
  %v402 = vmul.f32 %v358, %v184
  %v403 = vmul.f32 %v361, %v184
  %v404 = vmul.f32 %v364, %v184
  %v405 = vmul.f32 %v367, %v184
  %v406 = vmul.f32 %v370, %v184
  %v407 = vmul.f32 %v373, %v184
  %v408 = vmul.f32 %v376, %v184
  %v409 = vadd.f32 %v377, 1e-05
  %v410 = vadd.f32 %v378, 1e-05
  %v411 = vadd.f32 %v379, 1e-05
  %v412 = vadd.f32 %v380, 1e-05
  %v413 = vadd.f32 %v381, 1e-05
  %v414 = vadd.f32 %v382, 1e-05
  %v415 = vadd.f32 %v383, 1e-05
  %v416 = vadd.f32 %v384, 1e-05
  %v417 = vadd.f32 %v385, 1e-05
  %v418 = vadd.f32 %v386, 1e-05
  %v419 = vadd.f32 %v387, 1e-05
  %v420 = vadd.f32 %v388, 1e-05
  %v421 = vadd.f32 %v389, 1e-05
  %v422 = vadd.f32 %v390, 1e-05
  %v423 = vadd.f32 %v391, 1e-05
  %v424 = vadd.f32 %v392, 1e-05
  %v425 = vadd.f32 %v393, 1e-05
  %v426 = vadd.f32 %v394, 1e-05
  %v427 = vadd.f32 %v395, 1e-05
  %v428 = vadd.f32 %v396, 1e-05
  %v429 = vadd.f32 %v397, 1e-05
  %v430 = vadd.f32 %v398, 1e-05
  %v431 = vadd.f32 %v399, 1e-05
  %v432 = vadd.f32 %v400, 1e-05
  %v433 = vadd.f32 %v401, 1e-05
  %v434 = vadd.f32 %v402, 1e-05
  %v435 = vadd.f32 %v403, 1e-05
  %v436 = vadd.f32 %v404, 1e-05
  %v437 = vadd.f32 %v405, 1e-05
  %v438 = vadd.f32 %v406, 1e-05
  %v439 = vadd.f32 %v407, 1e-05
  %v440 = vadd.f32 %v408, 1e-05
  %v441 = vrsqrt.pop %v409
  %v442 = vrsqrt.pop %v410
  %v443 = vrsqrt.pop %v411
  %v444 = vrsqrt.pop %v412
  %v445 = vrsqrt.pop %v413
  %v446 = vrsqrt.pop %v414
  %v447 = vrsqrt.pop %v415
  %v448 = vrsqrt.pop %v416
  %v449 = vrsqrt.pop %v417
  %v450 = vrsqrt.pop %v418
  %v451 = vrsqrt.pop %v419
  %v452 = vrsqrt.pop %v420
  %v453 = vrsqrt.pop %v421
  %v454 = vrsqrt.pop %v422
  %v455 = vrsqrt.pop %v423
  %v456 = vrsqrt.pop %v424
  %v457 = vrsqrt.pop %v425
  %v458 = vrsqrt.pop %v426
  %v459 = vrsqrt.pop %v427
  %v460 = vrsqrt.pop %v428
  %v461 = vrsqrt.pop %v429
  %v462 = vrsqrt.pop %v430
  %v463 = vrsqrt.pop %v431
  %v464 = vrsqrt.pop %v432
  %v465 = vrsqrt.pop %v433
  %v466 = vrsqrt.pop %v434
  %v467 = vrsqrt.pop %v435
  %v468 = vrsqrt.pop %v436
  %v469 = vrsqrt.pop %v437
  %v470 = vrsqrt.pop %v438
  %v471 = vrsqrt.pop %v439
  %v472 = vrsqrt.pop %v440
  %v473 = vmul.f32 %v217, %v441
  %v474 = vmul.f32 %v218, %v442
  %v475 = vmul.f32 %v219, %v443
  %v476 = vmul.f32 %v220, %v444
  %v477 = vmul.f32 %v221, %v445
  %v478 = vmul.f32 %v222, %v446
  %v479 = vmul.f32 %v223, %v447
  %v480 = vmul.f32 %v224, %v448
  %v481 = vmul.f32 %v225, %v449
  %v482 = vmul.f32 %v226, %v450
  %v483 = vmul.f32 %v227, %v451
  %v484 = vmul.f32 %v228, %v452
  %v485 = vmul.f32 %v229, %v453
  %v486 = vmul.f32 %v230, %v454
  %v487 = vmul.f32 %v231, %v455
  %v488 = vmul.f32 %v232, %v456
  %v489 = vmul.f32 %v233, %v457
  %v490 = vmul.f32 %v234, %v458
  %v491 = vmul.f32 %v235, %v459
  %v492 = vmul.f32 %v236, %v460
  %v493 = vmul.f32 %v237, %v461
  %v494 = vmul.f32 %v238, %v462
  %v495 = vmul.f32 %v239, %v463
  %v496 = vmul.f32 %v240, %v464
  %v497 = vmul.f32 %v241, %v465
  %v498 = vmul.f32 %v242, %v466
  %v499 = vmul.f32 %v243, %v467
  %v500 = vmul.f32 %v244, %v468
  %v501 = vmul.f32 %v245, %v469
  %v502 = vmul.f32 %v246, %v470
  %v503 = vmul.f32 %v247, %v471
  %v504 = vmul.f32 %v248, %v472
  %v506 = vlaneseq
  %v507 = vshrl.u32 %v506, 7
  %v508 = vsub.s32 0, %v507
  %v509 = vrot.slane %v85, %v508
  %v511 = vmul.f32 %v473, %v509
  %v512 = vmul.f32 %v474, %v509
  %v513 = vmul.f32 %v475, %v509
  %v514 = vmul.f32 %v476, %v509
  %v515 = vmul.f32 %v477, %v509
  %v516 = vmul.f32 %v478, %v509
  %v517 = vmul.f32 %v479, %v509
  %v518 = vmul.f32 %v480, %v509
  %v519 = vmul.f32 %v481, %v509
  %v520 = vmul.f32 %v482, %v509
  %v521 = vmul.f32 %v483, %v509
  %v522 = vmul.f32 %v484, %v509
  %v523 = vmul.f32 %v485, %v509
  %v524 = vmul.f32 %v486, %v509
  %v525 = vmul.f32 %v487, %v509
  %v526 = vmul.f32 %v488, %v509
  %v527 = vmul.f32 %v489, %v509
  %v528 = vmul.f32 %v490, %v509
  %v529 = vmul.f32 %v491, %v509
  %v530 = vmul.f32 %v492, %v509
  %v531 = vmul.f32 %v493, %v509
  %v532 = vmul.f32 %v494, %v509
  %v533 = vmul.f32 %v495, %v509
  %v534 = vmul.f32 %v496, %v509
  %v535 = vmul.f32 %v497, %v509
  %v536 = vmul.f32 %v498, %v509
  %v537 = vmul.f32 %v499, %v509
  %v538 = vmul.f32 %v500, %v509
  %v539 = vmul.f32 %v501, %v509
  %v540 = vmul.f32 %v502, %v509
  %v541 = vmul.f32 %v503, %v509
  %v542 = vmul.f32 %v504, %v509
  %v544 = vlaneseq
  %v545 = vshrl.u32 %v544, 7
  %v546 = vsub.s32 0, %v545
  %v547 = vrot.slane %v86, %v546
  %v549 = vadd.f32 %v511, %v547
  %v550 = vadd.f32 %v512, %v547
  %v551 = vadd.f32 %v513, %v547
  %v552 = vadd.f32 %v514, %v547
  %v553 = vadd.f32 %v515, %v547
  %v554 = vadd.f32 %v516, %v547
  %v555 = vadd.f32 %v517, %v547
  %v556 = vadd.f32 %v518, %v547
  %v557 = vadd.f32 %v519, %v547
  %v558 = vadd.f32 %v520, %v547
  %v559 = vadd.f32 %v521, %v547
  %v560 = vadd.f32 %v522, %v547
  %v561 = vadd.f32 %v523, %v547
  %v562 = vadd.f32 %v524, %v547
  %v563 = vadd.f32 %v525, %v547
  %v564 = vadd.f32 %v526, %v547
  %v565 = vadd.f32 %v527, %v547
  %v566 = vadd.f32 %v528, %v547
  %v567 = vadd.f32 %v529, %v547
  %v568 = vadd.f32 %v530, %v547
  %v569 = vadd.f32 %v531, %v547
  %v570 = vadd.f32 %v532, %v547
  %v571 = vadd.f32 %v533, %v547
  %v572 = vadd.f32 %v534, %v547
  %v573 = vadd.f32 %v535, %v547
  %v574 = vadd.f32 %v536, %v547
  %v575 = vadd.f32 %v537, %v547
  %v576 = vadd.f32 %v538, %v547
  %v577 = vadd.f32 %v539, %v547
  %v578 = vadd.f32 %v540, %v547
  %v579 = vadd.f32 %v541, %v547
  %v580 = vadd.f32 %v542, %v547
  %v581 = vpack.c.bf16 %v550, %v549
  %v582 = vpack.c.bf16 %v552, %v551
  %v583 = vpack.c.bf16 %v554, %v553
  %v584 = vpack.c.bf16 %v556, %v555
  %v585 = vpack.c.bf16 %v558, %v557
  %v586 = vpack.c.bf16 %v560, %v559
  %v587 = vpack.c.bf16 %v562, %v561
  %v588 = vpack.c.bf16 %v564, %v563
  %v589 = vpack.c.bf16 %v566, %v565
  %v590 = vpack.c.bf16 %v568, %v567
  %v591 = vpack.c.bf16 %v570, %v569
  %v592 = vpack.c.bf16 %v572, %v571
  %v593 = vpack.c.bf16 %v574, %v573
  %v594 = vpack.c.bf16 %v576, %v575
  %v595 = vpack.c.bf16 %v578, %v577
  %v596 = vpack.c.bf16 %v580, %v579
  %v597 = vld [vmem:[%s3] sm:$0xf]
  %v598 = vld [vmem:[%s3 + $0x4] sm:$0xf]
  %v599 = vld [vmem:[%s3 + $0x8] sm:$0xf]
  %v600 = vld [vmem:[%s3 + $0xc] sm:$0xf]
  %v601 = vld [vmem:[%s4] sm:$0x1]
  %v603 = vlaneseq
  %v604 = vshrl.u32 %v603, 7
  %v605 = vsub.s32 0, %v604
  %v606 = vrot.slane %v601, %v605
  %v612 = vunpack.c.l.b16 %v597
  %v613 = vunpack.c.l.b16 %v598
  %v614 = vunpack.c.l.b16 %v599
  %v615 = vunpack.c.l.b16 %v600
  %v616 = vpack.c.b16 %v613, %v612
  %v617 = vpack.c.b16 %v615, %v614
  %v621 = vsel %vm87, %v581, 0
  %v624 = vsel %vm87, %v582, 0
  %v627 = vsel %vm87, %v583, 0
  %v630 = vsel %vm87, %v584, 0
  %v633 = vsel %vm87, %v585, 0
  %v636 = vsel %vm87, %v586, 0
  %v639 = vsel %vm87, %v587, 0
  %v642 = vsel %vm87, %v588, 0
  %v645 = vsel %vm87, %v589, 0
  %v648 = vsel %vm87, %v590, 0
  %v651 = vsel %vm87, %v591, 0
  %v654 = vsel %vm87, %v592, 0
  %v657 = vsel %vm87, %v593, 0
  %v660 = vsel %vm87, %v594, 0
  %v663 = vsel %vm87, %v595, 0
  %v666 = vsel %vm87, %v596, 0
  %668 = vmatprep.subr.bf16.mxu0 0
  %669 = vmatpush1.bf16.msra.mxu0 0
  %670 = vmatprep.subr.bf16.mxu0 0
  %671 = vmatpush1.bf16.msra.mxu0 0
  %672 = vmatprep.subr.bf16.mxu0 0
  %673 = vmatpush1.bf16.msra.mxu0 0
  %674 = vmatprep.subr.bf16.mxu0 0
  %675 = vmatpush1.bf16.msra.mxu0 0
  %676 = vmatprep.subr.bf16.mxu0 0
  %677 = vmatpush1.bf16.msra.mxu0 0
  %678 = vmatprep.subr.bf16.mxu0 0
  %679 = vmatpush1.bf16.msra.mxu0 0
  %680 = vmatprep.subr.bf16.mxu0 0
  %681 = vmatpush1.bf16.msra.mxu0 %v617
  %682 = vmatprep.subr.bf16.mxu0 0
  %683 = vmatpush1.bf16.msra.mxu0 %v616
  %684 = vmatprep.subr.bf16.mxu0 0
  %685 = vmatpush2.bf16.msra.mxu0 0
  %686 = vmatprep.subr.bf16.mxu0 0
  %687 = vmatpush2.bf16.msra.mxu0 0
  %688 = vmatprep.subr.bf16.mxu0 0
  %689 = vmatpush2.bf16.msra.mxu0 0
  %690 = vmatprep.subr.bf16.mxu0 0
  %691 = vmatpush2.bf16.msra.mxu0 0
  %692 = vmatprep.subr.bf16.mxu0 0
  %693 = vmatpush2.bf16.msra.mxu0 0
  %694 = vmatprep.subr.bf16.mxu0 0
  %695 = vmatpush2.bf16.msra.mxu0 0
  %696 = vmatprep.subr.bf16.mxu0 0
  %697 = vmatpush2.bf16.msra.mxu0 0
  %698 = vmatprep.subr.bf16.mxu0 0
  %699 = vmatpush2.bf16.msra.mxu0 0
  %700 = vmatprep.mubr.bf16.mxu0 0
  %701 = vmatmul.mubr.bf16.gmra.mxu0 %v621
  %v702 = vpop.f32.mrf.mxu0
  %v703 = vadd.f32 %v606, %v702
  %v704 = vpop.f32.mrf.mxu0
  %v705 = vpop.f32.mrf.mxu0
  %v706 = vadd.f32 %v606, %v705
  %v707 = vpop.f32.mrf.mxu0
  %708 = vmatprep.mubr.bf16.mxu0 0
  %709 = vmatmul.mubr.bf16.gmra.mxu0 %v624
  %v710 = vpop.f32.mrf.mxu0
  %v711 = vadd.f32 %v606, %v710
  %v712 = vpop.f32.mrf.mxu0
  %v713 = vpop.f32.mrf.mxu0
  %v714 = vadd.f32 %v606, %v713
  %v715 = vpop.f32.mrf.mxu0
  %716 = vmatprep.mubr.bf16.mxu0 0
  %717 = vmatmul.mubr.bf16.gmra.mxu0 %v627
  %v718 = vpop.f32.mrf.mxu0
  %v719 = vadd.f32 %v606, %v718
  %v720 = vpop.f32.mrf.mxu0
  %v721 = vpop.f32.mrf.mxu0
  %v722 = vadd.f32 %v606, %v721
  %v723 = vpop.f32.mrf.mxu0
  %724 = vmatprep.mubr.bf16.mxu0 0
  %725 = vmatmul.mubr.bf16.gmra.mxu0 %v630
  %v726 = vpop.f32.mrf.mxu0
  %v727 = vadd.f32 %v606, %v726
  %v728 = vpop.f32.mrf.mxu0
  %v729 = vpop.f32.mrf.mxu0
  %v730 = vadd.f32 %v606, %v729
  %v731 = vpop.f32.mrf.mxu0
  %732 = vmatprep.mubr.bf16.mxu0 0
  %733 = vmatmul.mubr.bf16.gmra.mxu0 %v633
  %v734 = vpop.f32.mrf.mxu0
  %v735 = vadd.f32 %v606, %v734
  %v736 = vpop.f32.mrf.mxu0
  %v737 = vpop.f32.mrf.mxu0
  %v738 = vadd.f32 %v606, %v737
  %v739 = vpop.f32.mrf.mxu0
  %740 = vmatprep.mubr.bf16.mxu0 0
  %741 = vmatmul.mubr.bf16.gmra.mxu0 %v636
  %v742 = vpop.f32.mrf.mxu0
  %v743 = vadd.f32 %v606, %v742
  %v744 = vpop.f32.mrf.mxu0
  %v745 = vpop.f32.mrf.mxu0
  %v746 = vadd.f32 %v606, %v745
  %v747 = vpop.f32.mrf.mxu0
  %748 = vmatprep.mubr.bf16.mxu0 0
  %749 = vmatmul.mubr.bf16.gmra.mxu0 %v639
  %v750 = vpop.f32.mrf.mxu0
  %v751 = vadd.f32 %v606, %v750
  %v752 = vpop.f32.mrf.mxu0
  %v753 = vpop.f32.mrf.mxu0
  %v754 = vadd.f32 %v606, %v753
  %v755 = vpop.f32.mrf.mxu0
  %756 = vmatprep.mubr.bf16.mxu0 0
  %757 = vmatmul.mubr.bf16.gmra.mxu0 %v642
  %v758 = vpop.f32.mrf.mxu0
  %v759 = vadd.f32 %v606, %v758
  %v760 = vpop.f32.mrf.mxu0
  %v761 = vpop.f32.mrf.mxu0
  %v762 = vadd.f32 %v606, %v761
  %v763 = vpop.f32.mrf.mxu0
  %764 = vmatprep.mubr.bf16.mxu0 0
  %765 = vmatmul.mubr.bf16.gmra.mxu0 %v645
  %v766 = vpop.f32.mrf.mxu0
  %v767 = vadd.f32 %v606, %v766
  %v768 = vpop.f32.mrf.mxu0
  %v769 = vpop.f32.mrf.mxu0
  %v770 = vadd.f32 %v606, %v769
  %v771 = vpop.f32.mrf.mxu0
  %772 = vmatprep.mubr.bf16.mxu0 0
  %773 = vmatmul.mubr.bf16.gmra.mxu0 %v648
  %v774 = vpop.f32.mrf.mxu0
  %v775 = vadd.f32 %v606, %v774
  %v776 = vpop.f32.mrf.mxu0
  %v777 = vpop.f32.mrf.mxu0
  %v778 = vadd.f32 %v606, %v777
  %v779 = vpop.f32.mrf.mxu0
  %780 = vmatprep.mubr.bf16.mxu0 0
  %781 = vmatmul.mubr.bf16.gmra.mxu0 %v651
  %v782 = vpop.f32.mrf.mxu0
  %v783 = vadd.f32 %v606, %v782
  %v784 = vpop.f32.mrf.mxu0
  %v785 = vpop.f32.mrf.mxu0
  %v786 = vadd.f32 %v606, %v785
  %v787 = vpop.f32.mrf.mxu0
  %788 = vmatprep.mubr.bf16.mxu0 0
  %789 = vmatmul.mubr.bf16.gmra.mxu0 %v654
  %v790 = vpop.f32.mrf.mxu0
  %v791 = vadd.f32 %v606, %v790
  %v792 = vpop.f32.mrf.mxu0
  %v793 = vpop.f32.mrf.mxu0
  %v794 = vadd.f32 %v606, %v793
  %v795 = vpop.f32.mrf.mxu0
  %796 = vmatprep.mubr.bf16.mxu0 0
  %797 = vmatmul.mubr.bf16.gmra.mxu0 %v657
  %v798 = vpop.f32.mrf.mxu0
  %v799 = vadd.f32 %v606, %v798
  %v800 = vpop.f32.mrf.mxu0
  %v801 = vpop.f32.mrf.mxu0
  %v802 = vadd.f32 %v606, %v801
  %v803 = vpop.f32.mrf.mxu0
  %804 = vmatprep.mubr.bf16.mxu0 0
  %805 = vmatmul.mubr.bf16.gmra.mxu0 %v660
  %v806 = vpop.f32.mrf.mxu0
  %v807 = vadd.f32 %v606, %v806
  %v808 = vpop.f32.mrf.mxu0
  %v809 = vpop.f32.mrf.mxu0
  %v810 = vadd.f32 %v606, %v809
  %v811 = vpop.f32.mrf.mxu0
  %812 = vmatprep.mubr.bf16.mxu0 0
  %813 = vmatmul.mubr.bf16.gmra.mxu0 %v663
  %v814 = vpop.f32.mrf.mxu0
  %v815 = vadd.f32 %v606, %v814
  %v816 = vpop.f32.mrf.mxu0
  %v817 = vpop.f32.mrf.mxu0
  %v818 = vadd.f32 %v606, %v817
  %v819 = vpop.f32.mrf.mxu0
  %820 = vmatprep.mubr.bf16.mxu0 0
  %821 = vmatmul.mubr.bf16.gmra.mxu0 %v666
  %v822 = vpop.f32.mrf.mxu0
  %v823 = vadd.f32 %v606, %v822
  %v824 = vpop.f32.mrf.mxu0
  %v825 = vpop.f32.mrf.mxu0
  %v826 = vadd.f32 %v606, %v825
  %v827 = vpop.f32.mrf.mxu0
  %828 = vdwg.mxu0
  %v829 = vpack.c.bf16 %v706, %v703
  %v830 = vpack.c.bf16 %v714, %v711
  %v831 = vpack.c.bf16 %v722, %v719
  %v832 = vpack.c.bf16 %v730, %v727
  %v833 = vpack.c.bf16 %v738, %v735
  %v834 = vpack.c.bf16 %v746, %v743
  %v835 = vpack.c.bf16 %v754, %v751
  %v836 = vpack.c.bf16 %v762, %v759
  %v837 = vpack.c.bf16 %v770, %v767
  %v838 = vpack.c.bf16 %v778, %v775
  %v839 = vpack.c.bf16 %v786, %v783
  %v840 = vpack.c.bf16 %v794, %v791
  %v841 = vpack.c.bf16 %v802, %v799
  %v842 = vpack.c.bf16 %v810, %v807
  %v843 = vpack.c.bf16 %v818, %v815
  %v844 = vpack.c.bf16 %v826, %v823
  %v861 = vunpack.c.l.b16 %v829
  %v862 = vunpack.c.h.b16 %v829
  %v863 = vunpack.c.l.b16 %v830
  %v864 = vunpack.c.h.b16 %v830
  %v865 = vunpack.c.l.b16 %v831
  %v866 = vunpack.c.h.b16 %v831
  %v867 = vunpack.c.l.b16 %v832
  %v868 = vunpack.c.h.b16 %v832
  %v869 = vunpack.c.l.b16 %v833
  %v870 = vunpack.c.h.b16 %v833
  %v871 = vunpack.c.l.b16 %v834
  %v872 = vunpack.c.h.b16 %v834
  %v873 = vunpack.c.l.b16 %v835
  %v874 = vunpack.c.h.b16 %v835
  %v875 = vunpack.c.l.b16 %v836
  %v876 = vunpack.c.h.b16 %v836
  %v877 = vunpack.c.l.b16 %v837
  %v878 = vunpack.c.h.b16 %v837
  %v879 = vunpack.c.l.b16 %v838
  %v880 = vunpack.c.h.b16 %v838
  %v881 = vunpack.c.l.b16 %v839
  %v882 = vunpack.c.h.b16 %v839
  %v883 = vunpack.c.l.b16 %v840
  %v884 = vunpack.c.h.b16 %v840
  %v885 = vunpack.c.l.b16 %v841
  %v886 = vunpack.c.h.b16 %v841
  %v887 = vunpack.c.l.b16 %v842
  %v888 = vunpack.c.h.b16 %v842
  %v889 = vunpack.c.l.b16 %v843
  %v890 = vunpack.c.h.b16 %v843
  %v891 = vunpack.c.l.b16 %v844
  %v892 = vunpack.c.h.b16 %v844
  %v893 = vpack.c.b16 %v861, %v861
  %v894 = vpack.c.b16 %v862, %v862
  %v895 = vpack.c.b16 %v863, %v863
  %v896 = vpack.c.b16 %v864, %v864
  %v897 = vpack.c.b16 %v865, %v865
  %v898 = vpack.c.b16 %v866, %v866
  %v899 = vpack.c.b16 %v867, %v867
  %v900 = vpack.c.b16 %v868, %v868
  %v901 = vpack.c.b16 %v869, %v869
  %v902 = vpack.c.b16 %v870, %v870
  %v903 = vpack.c.b16 %v871, %v871
  %v904 = vpack.c.b16 %v872, %v872
  %v905 = vpack.c.b16 %v873, %v873
  %v906 = vpack.c.b16 %v874, %v874
  %v907 = vpack.c.b16 %v875, %v875
  %v908 = vpack.c.b16 %v876, %v876
  %v909 = vpack.c.b16 %v877, %v877
  %v910 = vpack.c.b16 %v878, %v878
  %v911 = vpack.c.b16 %v879, %v879
  %v912 = vpack.c.b16 %v880, %v880
  %v913 = vpack.c.b16 %v881, %v881
  %v914 = vpack.c.b16 %v882, %v882
  %v915 = vpack.c.b16 %v883, %v883
  %v916 = vpack.c.b16 %v884, %v884
  %v917 = vpack.c.b16 %v885, %v885
  %v918 = vpack.c.b16 %v886, %v886
  %v919 = vpack.c.b16 %v887, %v887
  %v920 = vpack.c.b16 %v888, %v888
  %v921 = vpack.c.b16 %v889, %v889
  %v922 = vpack.c.b16 %v890, %v890
  %v923 = vpack.c.b16 %v891, %v891
  %v924 = vpack.c.b16 %v892, %v892
  %vm957 = vcmask 257024
  %958 = vst.msk [vmem:[%s5] sm:$0xf] %vm957, %v893
  %959 = vst.msk [vmem:[%s5 + $0x4] sm:$0xf] %vm957, %v894
  %960 = vst.msk [vmem:[%s5 + $0x8] sm:$0xf] %vm957, %v895
  %961 = vst.msk [vmem:[%s5 + $0xc] sm:$0xf] %vm957, %v896
  %962 = vst.msk [vmem:[%s5 + $0x10] sm:$0xf] %vm957, %v897
  %963 = vst.msk [vmem:[%s5 + $0x14] sm:$0xf] %vm957, %v898
  %964 = vst.msk [vmem:[%s5 + $0x18] sm:$0xf] %vm957, %v899
  %965 = vst.msk [vmem:[%s5 + $0x1c] sm:$0xf] %vm957, %v900
  %966 = vst.msk [vmem:[%s5 + $0x20] sm:$0xf] %vm957, %v901
  %967 = vst.msk [vmem:[%s5 + $0x24] sm:$0xf] %vm957, %v902
  %968 = vst.msk [vmem:[%s5 + $0x28] sm:$0xf] %vm957, %v903
  %969 = vst.msk [vmem:[%s5 + $0x2c] sm:$0xf] %vm957, %v904
  %970 = vst.msk [vmem:[%s5 + $0x30] sm:$0xf] %vm957, %v905
  %971 = vst.msk [vmem:[%s5 + $0x34] sm:$0xf] %vm957, %v906
  %972 = vst.msk [vmem:[%s5 + $0x38] sm:$0xf] %vm957, %v907
  %973 = vst.msk [vmem:[%s5 + $0x3c] sm:$0xf] %vm957, %v908
  %974 = vst.msk [vmem:[%s5 + $0x40] sm:$0xf] %vm957, %v909
  %975 = vst.msk [vmem:[%s5 + $0x44] sm:$0xf] %vm957, %v910
  %976 = vst.msk [vmem:[%s5 + $0x48] sm:$0xf] %vm957, %v911
  %977 = vst.msk [vmem:[%s5 + $0x4c] sm:$0xf] %vm957, %v912
  %978 = vst.msk [vmem:[%s5 + $0x50] sm:$0xf] %vm957, %v913
  %979 = vst.msk [vmem:[%s5 + $0x54] sm:$0xf] %vm957, %v914
  %980 = vst.msk [vmem:[%s5 + $0x58] sm:$0xf] %vm957, %v915
  %981 = vst.msk [vmem:[%s5 + $0x5c] sm:$0xf] %vm957, %v916
  %982 = vst.msk [vmem:[%s5 + $0x60] sm:$0xf] %vm957, %v917
  %983 = vst.msk [vmem:[%s5 + $0x64] sm:$0xf] %vm957, %v918
  %984 = vst.msk [vmem:[%s5 + $0x68] sm:$0xf] %vm957, %v919
  %985 = vst.msk [vmem:[%s5 + $0x6c] sm:$0xf] %vm957, %v920
  %986 = vst.msk [vmem:[%s5 + $0x70] sm:$0xf] %vm957, %v921
  %987 = vst.msk [vmem:[%s5 + $0x74] sm:$0xf] %vm957, %v922
  %988 = vst.msk [vmem:[%s5 + $0x78] sm:$0xf] %vm957, %v923
  %989 = vst.msk [vmem:[%s5 + $0x7c] sm:$0xf] %vm957, %v924
  // Predicated region
  $region22: #{cross_view_attention.5} parent=0 // pred_check
    _
  $region23: #{cross_view_attention.5} parent=0 // pred_check_branch
    %991 = sbr.rel (0) target = $region25
  $region24: #{cross_view_attention.5} parent=0 // pred_region
    _
  $region25: #{cross_view_attention.5} parent=0 // pred_fallthru
    _
  // Predicated region
  $region26: #{cross_view_attention.5} parent=0 // pred_check
    _
  $region27: #{cross_view_attention.5} parent=0 // pred_check_branch
    %993 = sbr.rel (0) target = $region29
  $region28: #{cross_view_attention.5} parent=0 // pred_region
    _
  $region29: #{cross_view_attention.5} parent=0 // pred_fallthru
    _

// kernel: cross_view_attention.6
$region0: #{cross_view_attention.6}
  #allocation0 [shape = 'u32[]', space=smem, size = 0x4, offset = 0x4, fixed_abs, tag = 'smem constant byte address 0x4 - core index']
  #allocation1 [shape = 'u32[144,128]{1,0:T(1,128)}', space=vmem, size = 0x12000, scoped, tag = 'internal scratch']
  %s0 = inlined_call_operand.vmem [shape: bf16[2,4,2,64,8], index: 0, kind: input, shape index: {}]
  %s1 = inlined_call_operand.vmem [shape: bf16[2,4,2,64,8], index: 1, kind: input, shape index: {}]
  %s2 = inlined_call_operand.vmem [shape: bf16[2,4,2,64,8], index: 2, kind: input, shape index: {}]
  %s3 = inlined_call_operand.vmem [shape: bf16[2,4,64,8], index: 3, kind: output, shape index: {0}]
  %s4 = inlined_call_operand.hbm [shape: bf16[2,4,64,128], index: 4, kind: output, shape index: {1}]
  %5 = xla_tuple %s3, %s4
  %s6 = sld [smem:[#allocation0]]
  $region53: #{cross_view_attention.6} parent=0
    _
  %s8 = ssub.s32 1, %s6
  %s9 = scalar_select 0, %s8, %s6
  $region1: #{cross_view_attention.6} parent=0
    #allocation2 [shape = 'u8[32768]{0}', space=vmem, size = 0x8000, scoped, tag = 'output window, operand 1']
    #allocation3 [shape = 's32[2]{0}', space=sflag, size = 0x8, scoped, tag = 'scoped memory for cross_view_attention.6']
    %10 = vsyncpa [#allocation3], 0
    %s11 = scalar_lea.sflag [#allocation3], 1
    %12 = vsyncpa %s11, 0
    loop: start=0, step=1, limit=10
    $region2: #{cross_view_attention.6} parent=1 // loop_pre_header
      _
    $region3: #{cross_view_attention.6} parent=1 // loop_header
      %s14 = sphi 0, %s18
      %p15 = scmp.ge.s32.totalorder %s14, 10
      %s21 = sphi 0, %s40
      %s22 = sphi 0, %s36
      %s23 = sphi 0, %s32
      %s24 = sphi 0, %s21
      %s25 = sphi 0, %s22
      %s26 = sphi 0, %s23
      %s27 = sphi 0, %s24
      %s28 = sphi 0, %s25
      %s29 = sphi 0, %s26
      %s47 = sphi 0, %s49
      %s50 = sphi 0, %s47
      %s51 = sphi 0, %s50
      %s67 = sphi 0, %s51
      %s75 = sphi 0, %s77
      %s78 = sphi 0, %s75
      %s79 = sphi 0, %s78
      %s95 = sphi 0, %s79
      %s103 = sphi 0, %s105
      %s106 = sphi 0, %s103
      %s107 = sphi 0, %s106
      %s123 = sphi 0, %s107
      %s133 = sphi 0, %s135
      %s136 = sphi 0, %s133
      %s137 = sphi 0, %s136
      %s153 = sphi 0, %s137
      %s163 = sphi 0, %s165
      %s166 = sphi 0, %s163
      %s167 = sphi 0, %s166
      %s183 = sphi 0, %s167
    $region4: #{cross_view_attention.6} parent=1 // loop_header_branch
      %17 = sbr.rel (%p15) target = $region8
    $region5: #{cross_view_attention.6} parent=1 // loop_body
      %s19 = ssub.s32 %s14, 1
      %s20 = ssub.s32 %s14, 2
      %s30 = sadd.s32 1, %s23
      %p31 = scmp.ge.s32.totalorder %s30, 1
      %s32 = scalar_select %p31, 0, %s30
      %s33 = sadd.s32 1, %s22
      %s34 = scalar_select %p31, %s33, %s22
      %p35 = scmp.ge.s32.totalorder %s34, 4
      %s36 = scalar_select %p35, 0, %s34
      %s37 = sadd.s32 1, %s21
      %s38 = scalar_select %p35, %s37, %s21
      %p39 = scmp.ge.s32.totalorder %s38, 2
      %s40 = scalar_select %p39, 0, %s38
      %s41 = ssub.s32 %s21, %s40
      %s42 = ssub.s32 %s22, %s36
      %s43 = sor.u32 %s41, %s42
      %s44 = ssub.s32 %s23, %s32
      %s45 = sor.u32 %s43, %s44
      %p46 = scmp.eq.s32.totalorder %s45, 0
      %s48 = sadd.s32 %s47, 1
      %s49 = scalar_select %p46, %s47, %s48
      %p52 = pneg %p46
      %p53 = scmp.eq.s32.totalorder %s14, 7
      %p54 = por %p52, %p53
      %p55 = scmp.ne.s32.totalorder %s47, %s50
      %p56 = scmp.eq.s32.totalorder %s14, 0
      %p57 = por %p55, %p56
      %p58 = scmp.ne.s32.totalorder %s47, %s50
      %p59 = scmp.eq.s32.totalorder %s19, 7
      %p60 = por %p58, %p59
      %p61 = scmp.ne.s32.totalorder %s50, %s51
      %p62 = scmp.eq.s32.totalorder %s19, 0
      %p63 = por %p61, %p62
      %p64 = scmp.ne.s32.totalorder %s50, %s51
      %p65 = scmp.eq.s32.totalorder %s20, 7
      %p66 = por %p64, %p65
      %p68 = scmp.ne.s32.totalorder %s51, %s67
      %p69 = scmp.eq.s32.totalorder %s20, 0
      %p70 = por %p68, %p69
      %s71 = ssub.s32 %s21, %s40
      %s72 = ssub.s32 %s22, %s36
      %s73 = sor.u32 %s71, %s72
      %p74 = scmp.eq.s32.totalorder %s73, 0
      %s76 = sadd.s32 %s75, 1
      %s77 = scalar_select %p74, %s75, %s76
      %p80 = pneg %p74
      %p81 = scmp.eq.s32.totalorder %s14, 7
      %p82 = por %p80, %p81
      %p83 = scmp.ne.s32.totalorder %s75, %s78
      %p84 = scmp.eq.s32.totalorder %s14, 0
      %p85 = por %p83, %p84
      %p86 = scmp.ne.s32.totalorder %s75, %s78
      %p87 = scmp.eq.s32.totalorder %s19, 7
      %p88 = por %p86, %p87
      %p89 = scmp.ne.s32.totalorder %s78, %s79
      %p90 = scmp.eq.s32.totalorder %s19, 0
      %p91 = por %p89, %p90
      %p92 = scmp.ne.s32.totalorder %s78, %s79
      %p93 = scmp.eq.s32.totalorder %s20, 7
      %p94 = por %p92, %p93
      %p96 = scmp.ne.s32.totalorder %s79, %s95
      %p97 = scmp.eq.s32.totalorder %s20, 0
      %p98 = por %p96, %p97
      %s99 = ssub.s32 %s21, %s40
      %s100 = ssub.s32 %s22, %s36
      %s101 = sor.u32 %s99, %s100
      %p102 = scmp.eq.s32.totalorder %s101, 0
      %s104 = sadd.s32 %s103, 1
      %s105 = scalar_select %p102, %s103, %s104
      %p108 = pneg %p102
      %p109 = scmp.eq.s32.totalorder %s14, 7
      %p110 = por %p108, %p109
      %p111 = scmp.ne.s32.totalorder %s103, %s106
      %p112 = scmp.eq.s32.totalorder %s14, 0
      %p113 = por %p111, %p112
      %p114 = scmp.ne.s32.totalorder %s103, %s106
      %p115 = scmp.eq.s32.totalorder %s19, 7
      %p116 = por %p114, %p115
      %p117 = scmp.ne.s32.totalorder %s106, %s107
      %p118 = scmp.eq.s32.totalorder %s19, 0
      %p119 = por %p117, %p118
      %p120 = scmp.ne.s32.totalorder %s106, %s107
      %p121 = scmp.eq.s32.totalorder %s20, 7
      %p122 = por %p120, %p121
      %p124 = scmp.ne.s32.totalorder %s107, %s123
      %p125 = scmp.eq.s32.totalorder %s20, 0
      %p126 = por %p124, %p125
      %s127 = ssub.s32 %s21, %s40
      %s128 = ssub.s32 %s22, %s36
      %s129 = sor.u32 %s127, %s128
      %s130 = ssub.s32 %s23, %s32
      %s131 = sor.u32 %s129, %s130
      %p132 = scmp.eq.s32.totalorder %s131, 0
      %s134 = sadd.s32 %s133, 1
      %s135 = scalar_select %p132, %s133, %s134
      %p138 = pneg %p132
      %p139 = scmp.eq.s32.totalorder %s14, 7
      %p140 = por %p138, %p139
      %p141 = scmp.ne.s32.totalorder %s133, %s136
      %p142 = scmp.eq.s32.totalorder %s14, 0
      %p143 = por %p141, %p142
      %p144 = scmp.ne.s32.totalorder %s133, %s136
      %p145 = scmp.eq.s32.totalorder %s19, 7
      %p146 = por %p144, %p145
      %p147 = scmp.ne.s32.totalorder %s136, %s137
      %p148 = scmp.eq.s32.totalorder %s19, 0
      %p149 = por %p147, %p148
      %p150 = scmp.ne.s32.totalorder %s136, %s137
      %p151 = scmp.eq.s32.totalorder %s20, 7
      %p152 = por %p150, %p151
      %p154 = scmp.ne.s32.totalorder %s137, %s153
      %p155 = scmp.eq.s32.totalorder %s20, 0
      %p156 = por %p154, %p155
      %s157 = ssub.s32 %s21, %s40
      %s158 = ssub.s32 %s22, %s36
      %s159 = sor.u32 %s157, %s158
      %s160 = ssub.s32 %s23, %s32
      %s161 = sor.u32 %s159, %s160
      %p162 = scmp.eq.s32.totalorder %s161, 0
      %s164 = sadd.s32 %s163, 1
      %s165 = scalar_select %p162, %s163, %s164
      %p168 = pneg %p162
      %p169 = scmp.eq.s32.totalorder %s14, 7
      %p170 = por %p168, %p169
      %p171 = scmp.ne.s32.totalorder %s163, %s166
      %p172 = scmp.eq.s32.totalorder %s14, 0
      %p173 = por %p171, %p172
      %p174 = scmp.ne.s32.totalorder %s163, %s166
      %p175 = scmp.eq.s32.totalorder %s19, 7
      %p176 = por %p174, %p175
      %p177 = scmp.ne.s32.totalorder %s166, %s167
      %p178 = scmp.eq.s32.totalorder %s19, 0
      %p179 = por %p177, %p178
      %p180 = scmp.ne.s32.totalorder %s166, %s167
      %p181 = scmp.eq.s32.totalorder %s20, 7
      %p182 = por %p180, %p181
      %p184 = scmp.ne.s32.totalorder %s167, %s183
      %p185 = scmp.eq.s32.totalorder %s20, 0
      %p186 = por %p184, %p185
      %p187 = scmp.le.s32.totalorder 1, %s14
      %p188 = scmp.lt.s32.totalorder %s14, 9
      %p189 = pnand %p187, %p188
      %p190 = pneg %p189
      // Predicated region
      $region9: #{cross_view_attention.6} parent=5 // pred_check
        _
      $region10: #{cross_view_attention.6} parent=5 // pred_check_branch
        %192 = sbr.rel (%p189) target = $region12
      $region11: #{cross_view_attention.6} parent=5 // pred_region
        %s193 = ssub.s32 %s14, 1
      $region12: #{cross_view_attention.6} parent=5 // pred_fallthru
        _
      %p194 = scmp.lt.s32.totalorder %s14, 8
      // Predicated region
      $region13: #{cross_view_attention.6} parent=5 // pred_check
        %p195 = pneg %p194
      $region14: #{cross_view_attention.6} parent=5 // pred_check_branch
        %197 = sbr.rel (%p195) target = $region16
      $region15: #{cross_view_attention.6} parent=5 // pred_region
        // Predicated region
        $region17: #{cross_view_attention.6} parent=15 // pred_check
          %p198 = pneg %p57
        $region18: #{cross_view_attention.6} parent=15 // pred_check_branch
          %200 = sbr.rel (%p198) target = $region20
        $region19: #{cross_view_attention.6} parent=15 // pred_region
          %s201 = smul.u32 8, %s23
          %p202 = scmp.lt.s32.totalorder %s21, 1
          %s203 = scalar_select %p202, %s21, 1
          %p204 = scmp.lt.s32.totalorder %s22, 3
          %s205 = scalar_select %p204, %s22, 3
          %p206 = scmp.lt.s32.totalorder %s201, 7
          %s207 = scalar_select %p206, %s201, 7
          %s208 = smul.addr %s205, 16
          %s209 = sadd.s32 %s207, %s208
          %s210 = smul.addr %s203, 64
          %s211 = sadd.s32 %s209, %s210
          %s212 = smul.addr %s211, 4
          %s213 = scalar_lea.vmem %s0, %s212
          %s214 = smul.u32 8, %s23
        $region20: #{cross_view_attention.6} parent=15 // pred_fallthru
          _
        // Predicated region
        $region21: #{cross_view_attention.6} parent=15 // pred_check
          %p215 = pneg %p85
        $region22: #{cross_view_attention.6} parent=15 // pred_check_branch
          %217 = sbr.rel (%p215) target = $region24
        $region23: #{cross_view_attention.6} parent=15 // pred_region
          %p218 = scmp.lt.s32.totalorder %s21, 1
          %s219 = scalar_select %p218, %s21, 1
          %p220 = scmp.lt.s32.totalorder %s22, 3
          %s221 = scalar_select %p220, %s22, 3
          %s222 = smul.addr %s221, 16
          %s223 = smul.addr %s219, 64
          %s224 = sadd.s32 %s222, %s223
          %s225 = smul.addr %s224, 4
          %s226 = scalar_lea.vmem %s1, %s225
        $region24: #{cross_view_attention.6} parent=15 // pred_fallthru
          _
        // Predicated region
        $region25: #{cross_view_attention.6} parent=15 // pred_check
          %p227 = pneg %p113
        $region26: #{cross_view_attention.6} parent=15 // pred_check_branch
          %229 = sbr.rel (%p227) target = $region28
        $region27: #{cross_view_attention.6} parent=15 // pred_region
          %p230 = scmp.lt.s32.totalorder %s21, 1
          %s231 = scalar_select %p230, %s21, 1
          %p232 = scmp.lt.s32.totalorder %s22, 3
          %s233 = scalar_select %p232, %s22, 3
          %s234 = smul.addr %s233, 16
          %s235 = smul.addr %s231, 64
          %s236 = sadd.s32 %s234, %s235
          %s237 = smul.addr %s236, 4
          %s238 = scalar_lea.vmem %s2, %s237
        $region28: #{cross_view_attention.6} parent=15 // pred_fallthru
          _
      $region16: #{cross_view_attention.6} parent=5 // pred_fallthru
        _
      %p239 = scmp.le.s32.totalorder 1, %s14
      %p240 = scmp.lt.s32.totalorder %s14, 9
      %p241 = pnand %p239, %p240
      %p242 = pneg %p241
      // Predicated region
      $region29: #{cross_view_attention.6} parent=5 // pred_check
        _
      $region30: #{cross_view_attention.6} parent=5 // pred_check_branch
        %244 = sbr.rel (%p241) target = $region32
      $region31: #{cross_view_attention.6} parent=5 // pred_region
        %s245 = ssub.s32 %s14, 1
        %s246 = smul.u32 8, %s26
        %p247 = scmp.lt.s32.totalorder %s24, 1
        %s248 = scalar_select %p247, %s24, 1
        %p249 = scmp.lt.s32.totalorder %s25, 3
        %s250 = scalar_select %p249, %s25, 3
        %p251 = scmp.lt.s32.totalorder %s246, 7
        %s252 = scalar_select %p251, %s246, 7
        %s253 = smul.addr %s250, 16
        %s254 = sadd.s32 %s252, %s253
        %s255 = smul.addr %s248, 64
        %s256 = sadd.s32 %s254, %s255
        %s257 = smul.addr %s256, 4
        %s258 = scalar_lea.vmem %s0, %s257
        %p259 = pneg %p63
        %p260 = pneg %p60
        %p261 = scmp.lt.s32.totalorder %s24, 1
        %s262 = scalar_select %p261, %s24, 1
        %p263 = scmp.lt.s32.totalorder %s25, 3
        %s264 = scalar_select %p263, %s25, 3
        %s265 = smul.addr %s264, 16
        %s266 = smul.addr %s262, 64
        %s267 = sadd.s32 %s265, %s266
        %s268 = smul.addr %s267, 4
        %s269 = scalar_lea.vmem %s1, %s268
        %p270 = pneg %p91
        %p271 = pneg %p88
        %p272 = scmp.lt.s32.totalorder %s24, 1
        %s273 = scalar_select %p272, %s24, 1
        %p274 = scmp.lt.s32.totalorder %s25, 3
        %s275 = scalar_select %p274, %s25, 3
        %s276 = smul.addr %s275, 16
        %s277 = smul.addr %s273, 64
        %s278 = sadd.s32 %s276, %s277
        %s279 = smul.addr %s278, 4
        %s280 = scalar_lea.vmem %s2, %s279
        %p281 = pneg %p119
        %p282 = pneg %p116
        %p283 = pneg %p149
        %p284 = pneg %p146
        %s285 = smul.u32 8, %s26
        %p286 = scmp.lt.s32.totalorder %s24, 1
        %s287 = scalar_select %p286, %s24, 1
        %p288 = scmp.lt.s32.totalorder %s25, 3
        %s289 = scalar_select %p288, %s25, 3
        %p290 = scmp.lt.s32.totalorder %s285, 7
        %s291 = scalar_select %p290, %s285, 7
        %s292 = smul.addr %s289, 8
        %s293 = sadd.s32 %s291, %s292
        %s294 = smul.addr %s287, 32
        %s295 = sadd.s32 %s293, %s294
        %s296 = smul.addr %s295, 4
        %s297 = scalar_lea.vmem %s3, %s296
        %p298 = pneg %p179
        %p299 = pneg %p176
        %s300 = sand.u32 %s166, 1
        %s301 = scalar_lea.sflag [#allocation3], %s300
        %s302 = sand.u32 %s166, 1
        %s303 = smul.addr %s302, 32
        %s304 = scalar_lea.vmem [#allocation2], %s303
        %s305 = smul.u32 8, %s26
        %p306 = scmp.lt.s32.totalorder %s24, 1
        %s307 = scalar_select %p306, %s24, 1
        %p308 = scmp.lt.s32.totalorder %s25, 3
        %s309 = scalar_select %p308, %s25, 3
        %p310 = scmp.lt.s32.totalorder %s305, 7
        %s311 = scalar_select %p310, %s305, 7
        %s312 = smul.addr %s309, 16
        %s313 = sadd.s32 %s311, %s312
        %s314 = smul.addr %s307, 64
        %s315 = sadd.s32 %s313, %s314
        %s316 = smul.addr %s315, 4
        %s317 = scalar_lea.vmem %s0, %s316
        %s318 = smul.u32 8, %s26
        %p319 = scmp.lt.s32.totalorder %s24, 1
        %s320 = scalar_select %p319, %s24, 1
        %p321 = scmp.lt.s32.totalorder %s25, 3
        %s322 = scalar_select %p321, %s25, 3
        %s323 = smul.addr %s322, 16
        %s324 = smul.addr %s320, 64
        %s325 = sadd.s32 %s323, %s324
        %s326 = smul.addr %s325, 4
        %s327 = scalar_lea.vmem %s1, %s326
        %p328 = scmp.lt.s32.totalorder %s24, 1
        %s329 = scalar_select %p328, %s24, 1
        %p330 = scmp.lt.s32.totalorder %s25, 3
        %s331 = scalar_select %p330, %s25, 3
        %s332 = smul.addr %s331, 16
        %s333 = smul.addr %s329, 64
        %s334 = sadd.s32 %s332, %s333
        %s335 = smul.addr %s334, 4
        %s336 = scalar_lea.vmem %s2, %s335
        %s337 = smul.u32 8, %s26
        %p338 = scmp.lt.s32.totalorder %s24, 1
        %s339 = scalar_select %p338, %s24, 1
        %p340 = scmp.lt.s32.totalorder %s25, 3
        %s341 = scalar_select %p340, %s25, 3
        %p342 = scmp.lt.s32.totalorder %s337, 7
        %s343 = scalar_select %p342, %s337, 7
        %s344 = smul.addr %s341, 8
        %s345 = sadd.s32 %s343, %s344
        %s346 = smul.addr %s339, 32
        %s347 = sadd.s32 %s345, %s346
        %s348 = smul.addr %s347, 4
        %s349 = scalar_lea.vmem %s3, %s348
        %s350 = smul.u32 8, %s26
        %s351 = smul.u32 8, %s26
        %v353 = vld [vmem:[%s317] sm:$0xf]
        %v354 = vld [vmem:[%s317 + $0x4] sm:$0xf]
        %v355 = vld [vmem:[%s317 + $0x8] sm:$0xf]
        %v356 = vld [vmem:[%s317 + $0xc] sm:$0xf]
        %v357 = vld [vmem:[%s317 + $0x10] sm:$0xf]
        %v358 = vld [vmem:[%s317 + $0x14] sm:$0xf]
        %v359 = vld [vmem:[%s317 + $0x18] sm:$0xf]
        %v360 = vld [vmem:[%s317 + $0x1c] sm:$0xf]
        %v361 = vld [vmem:[%s317 + $0x20] sm:$0xf]
        %v362 = vld [vmem:[%s317 + $0x24] sm:$0xf]
        %v363 = vld [vmem:[%s317 + $0x28] sm:$0xf]
        %v364 = vld [vmem:[%s317 + $0x2c] sm:$0xf]
        %v365 = vld [vmem:[%s317 + $0x30] sm:$0xf]
        %v366 = vld [vmem:[%s317 + $0x34] sm:$0xf]
        %v367 = vld [vmem:[%s317 + $0x38] sm:$0xf]
        %v368 = vld [vmem:[%s317 + $0x3c] sm:$0xf]
        %v369 = vld [vmem:[%s327] sm:$0xf]
        %v370 = vld [vmem:[%s327 + $0x4] sm:$0xf]
        %v371 = vld [vmem:[%s327 + $0x8] sm:$0xf]
        %v372 = vld [vmem:[%s327 + $0xc] sm:$0xf]
        %v373 = vld [vmem:[%s327 + $0x10] sm:$0xf]
        %v374 = vld [vmem:[%s327 + $0x14] sm:$0xf]
        %v375 = vld [vmem:[%s327 + $0x18] sm:$0xf]
        %v376 = vld [vmem:[%s327 + $0x1c] sm:$0xf]
        %v377 = vld [vmem:[%s327 + $0x20] sm:$0xf]
        %v378 = vld [vmem:[%s327 + $0x24] sm:$0xf]
        %v379 = vld [vmem:[%s327 + $0x28] sm:$0xf]
        %v380 = vld [vmem:[%s327 + $0x2c] sm:$0xf]
        %v381 = vld [vmem:[%s327 + $0x30] sm:$0xf]
        %v382 = vld [vmem:[%s327 + $0x34] sm:$0xf]
        %v383 = vld [vmem:[%s327 + $0x38] sm:$0xf]
        %v384 = vld [vmem:[%s327 + $0x3c] sm:$0xf]
        %v385 = vld [vmem:[%s336] sm:$0xf]
        %v386 = vld [vmem:[%s336 + $0x4] sm:$0xf]
        %v387 = vld [vmem:[%s336 + $0x8] sm:$0xf]
        %v388 = vld [vmem:[%s336 + $0xc] sm:$0xf]
        %v389 = vld [vmem:[%s336 + $0x10] sm:$0xf]
        %v390 = vld [vmem:[%s336 + $0x14] sm:$0xf]
        %v391 = vld [vmem:[%s336 + $0x18] sm:$0xf]
        %v392 = vld [vmem:[%s336 + $0x1c] sm:$0xf]
        %v393 = vld [vmem:[%s336 + $0x20] sm:$0xf]
        %v394 = vld [vmem:[%s336 + $0x24] sm:$0xf]
        %v395 = vld [vmem:[%s336 + $0x28] sm:$0xf]
        %v396 = vld [vmem:[%s336 + $0x2c] sm:$0xf]
        %v397 = vld [vmem:[%s336 + $0x30] sm:$0xf]
        %v398 = vld [vmem:[%s336 + $0x34] sm:$0xf]
        %v399 = vld [vmem:[%s336 + $0x38] sm:$0xf]
        %v400 = vld [vmem:[%s336 + $0x3c] sm:$0xf]
        %v409 = vunpack.c.l.b16 %v353
        %v410 = vunpack.c.l.b16 %v354
        %v411 = vunpack.c.l.b16 %v355
        %v412 = vunpack.c.l.b16 %v356
        %v413 = vunpack.c.l.b16 %v357
        %v414 = vunpack.c.l.b16 %v358
        %v415 = vunpack.c.l.b16 %v359
        %v416 = vunpack.c.l.b16 %v360
        %v417 = vpack.c.b16 %v410, %v409
        %v418 = vpack.c.b16 %v412, %v411
        %v419 = vpack.c.b16 %v414, %v413
        %v420 = vpack.c.b16 %v416, %v415
        %v429 = vunpack.c.l.b16 %v369
        %v430 = vunpack.c.l.b16 %v370
        %v431 = vunpack.c.l.b16 %v371
        %v432 = vunpack.c.l.b16 %v372
        %v433 = vunpack.c.l.b16 %v373
        %v434 = vunpack.c.l.b16 %v374
        %v435 = vunpack.c.l.b16 %v375
        %v436 = vunpack.c.l.b16 %v376
        %v437 = vpack.c.b16 %v430, %v429
        %v438 = vpack.c.b16 %v432, %v431
        %v439 = vpack.c.b16 %v434, %v433
        %v440 = vpack.c.b16 %v436, %v435
        %vm441 = vcmask 64512
        %v443 = vsel %vm441, %v417, 0
        %v446 = vsel %vm441, %v418, 0
        %v449 = vsel %vm441, %v419, 0
        %v452 = vsel %vm441, %v420, 0
        %v455 = vsel %vm441, %v437, 0
        %v458 = vsel %vm441, %v438, 0
        %v461 = vsel %vm441, %v439, 0
        %v464 = vsel %vm441, %v440, 0
        %466 = vmatprep.subr.bf16.mxu0 0
        %467 = vmatpush1.bf16.xpose.msra.mxu0 0
        %468 = vmatprep.subr.bf16.mxu0 0
        %469 = vmatpush1.bf16.xpose.msra.mxu0 0
        %470 = vmatprep.subr.bf16.mxu0 0
        %471 = vmatpush1.bf16.xpose.msra.mxu0 0
        %472 = vmatprep.subr.bf16.mxu0 0
        %473 = vmatpush1.bf16.xpose.msra.mxu0 0
        %474 = vmatprep.subr.bf16.mxu0 0
        %475 = vmatpush1.bf16.xpose.msra.mxu0 %v464
        %476 = vmatprep.subr.bf16.mxu0 0
        %477 = vmatpush1.bf16.xpose.msra.mxu0 %v461
        %478 = vmatprep.subr.bf16.mxu0 0
        %479 = vmatpush1.bf16.xpose.msra.mxu0 %v458
        %480 = vmatprep.subr.bf16.mxu0 0
        %481 = vmatpush1.bf16.xpose.msra.mxu0 %v455
        %482 = vmatprep.subr.bf16.mxu0 0
        %483 = vmatpush2.bf16.xpose.msra.mxu0 0
        %484 = vmatprep.subr.bf16.mxu0 0
        %485 = vmatpush2.bf16.xpose.msra.mxu0 0
        %486 = vmatprep.subr.bf16.mxu0 0
        %487 = vmatpush2.bf16.xpose.msra.mxu0 0
        %488 = vmatprep.subr.bf16.mxu0 0
        %489 = vmatpush2.bf16.xpose.msra.mxu0 0
        %490 = vmatprep.subr.bf16.mxu0 0
        %491 = vmatpush2.bf16.xpose.msra.mxu0 0
        %492 = vmatprep.subr.bf16.mxu0 0
        %493 = vmatpush2.bf16.xpose.msra.mxu0 0
        %494 = vmatprep.subr.bf16.mxu0 0
        %495 = vmatpush2.bf16.xpose.msra.mxu0 0
        %496 = vmatprep.subr.bf16.mxu0 0
        %497 = vmatpush2.bf16.xpose.msra.mxu0 0
        %498 = vmatprep.mubr.bf16.mxu0 0
        %499 = vmatmul.mubr.bf16.gmra.mxu0 %v443
        %v500 = vpop.f32.mrf.mxu0
        %v501 = vadd.f32 0.0, %v500
        %v502 = vpop.f32.mrf.mxu0
        %v503 = vpop.f32.mrf.mxu0
        %v504 = vadd.f32 0.0, %v503
        %v505 = vpop.f32.mrf.mxu0
        %506 = vmatprep.mubr.bf16.mxu0 0
        %507 = vmatmul.mubr.bf16.gmra.mxu0 %v446
        %v508 = vpop.f32.mrf.mxu0
        %v509 = vadd.f32 0.0, %v508
        %v510 = vpop.f32.mrf.mxu0
        %v511 = vpop.f32.mrf.mxu0
        %v512 = vadd.f32 0.0, %v511
        %v513 = vpop.f32.mrf.mxu0
        %514 = vmatprep.mubr.bf16.mxu0 0
        %515 = vmatmul.mubr.bf16.gmra.mxu0 %v449
        %v516 = vpop.f32.mrf.mxu0
        %v517 = vadd.f32 0.0, %v516
        %v518 = vpop.f32.mrf.mxu0
        %v519 = vpop.f32.mrf.mxu0
        %v520 = vadd.f32 0.0, %v519
        %v521 = vpop.f32.mrf.mxu0
        %522 = vmatprep.mubr.bf16.mxu0 0
        %523 = vmatmul.mubr.bf16.gmra.mxu0 %v452
        %v524 = vpop.f32.mrf.mxu0
        %v525 = vadd.f32 0.0, %v524
        %v526 = vpop.f32.mrf.mxu0
        %v527 = vpop.f32.mrf.mxu0
        %v528 = vadd.f32 0.0, %v527
        %v529 = vpop.f32.mrf.mxu0
        %530 = vdwg.mxu0
        %v539 = vunpack.c.l.b16 %v361
        %v540 = vunpack.c.l.b16 %v362
        %v541 = vunpack.c.l.b16 %v363
        %v542 = vunpack.c.l.b16 %v364
        %v543 = vunpack.c.l.b16 %v365
        %v544 = vunpack.c.l.b16 %v366
        %v545 = vunpack.c.l.b16 %v367
        %v546 = vunpack.c.l.b16 %v368
        %v547 = vpack.c.b16 %v540, %v539
        %v548 = vpack.c.b16 %v542, %v541
        %v549 = vpack.c.b16 %v544, %v543
        %v550 = vpack.c.b16 %v546, %v545
        %v559 = vunpack.c.l.b16 %v377
        %v560 = vunpack.c.l.b16 %v378
        %v561 = vunpack.c.l.b16 %v379
        %v562 = vunpack.c.l.b16 %v380
        %v563 = vunpack.c.l.b16 %v381
        %v564 = vunpack.c.l.b16 %v382
        %v565 = vunpack.c.l.b16 %v383
        %v566 = vunpack.c.l.b16 %v384
        %v567 = vpack.c.b16 %v560, %v559
        %v568 = vpack.c.b16 %v562, %v561
        %v569 = vpack.c.b16 %v564, %v563
        %v570 = vpack.c.b16 %v566, %v565
        %v572 = vsel %vm441, %v547, 0
        %v575 = vsel %vm441, %v548, 0
        %v578 = vsel %vm441, %v549, 0
        %v581 = vsel %vm441, %v550, 0
        %v584 = vsel %vm441, %v567, 0
        %v587 = vsel %vm441, %v568, 0
        %v590 = vsel %vm441, %v569, 0
        %v593 = vsel %vm441, %v570, 0
        %595 = vmatprep.subr.bf16.mxu0 0
        %596 = vmatpush1.bf16.xpose.msra.mxu0 0
        %597 = vmatprep.subr.bf16.mxu0 0
        %598 = vmatpush1.bf16.xpose.msra.mxu0 0
        %599 = vmatprep.subr.bf16.mxu0 0
        %600 = vmatpush1.bf16.xpose.msra.mxu0 0
        %601 = vmatprep.subr.bf16.mxu0 0
        %602 = vmatpush1.bf16.xpose.msra.mxu0 0
        %603 = vmatprep.subr.bf16.mxu0 0
        %604 = vmatpush1.bf16.xpose.msra.mxu0 %v593
        %605 = vmatprep.subr.bf16.mxu0 0
        %606 = vmatpush1.bf16.xpose.msra.mxu0 %v590
        %607 = vmatprep.subr.bf16.mxu0 0
        %608 = vmatpush1.bf16.xpose.msra.mxu0 %v587
        %609 = vmatprep.subr.bf16.mxu0 0
        %610 = vmatpush1.bf16.xpose.msra.mxu0 %v584
        %611 = vmatprep.subr.bf16.mxu0 0
        %612 = vmatpush2.bf16.xpose.msra.mxu0 0
        %613 = vmatprep.subr.bf16.mxu0 0
        %614 = vmatpush2.bf16.xpose.msra.mxu0 0
        %615 = vmatprep.subr.bf16.mxu0 0
        %616 = vmatpush2.bf16.xpose.msra.mxu0 0
        %617 = vmatprep.subr.bf16.mxu0 0
        %618 = vmatpush2.bf16.xpose.msra.mxu0 0
        %619 = vmatprep.subr.bf16.mxu0 0
        %620 = vmatpush2.bf16.xpose.msra.mxu0 0
        %621 = vmatprep.subr.bf16.mxu0 0
        %622 = vmatpush2.bf16.xpose.msra.mxu0 0
        %623 = vmatprep.subr.bf16.mxu0 0
        %624 = vmatpush2.bf16.xpose.msra.mxu0 0
        %625 = vmatprep.subr.bf16.mxu0 0
        %626 = vmatpush2.bf16.xpose.msra.mxu0 0
        %627 = vmatprep.mubr.bf16.mxu0 0
        %628 = vmatmul.mubr.bf16.gmra.mxu0 %v572
        %v629 = vpop.f32.mrf.mxu0
        %v630 = vadd.f32 0.0, %v629
        %v631 = vpop.f32.mrf.mxu0
        %v632 = vpop.f32.mrf.mxu0
        %v633 = vadd.f32 0.0, %v632
        %v634 = vpop.f32.mrf.mxu0
        %635 = vmatprep.mubr.bf16.mxu0 0
        %636 = vmatmul.mubr.bf16.gmra.mxu0 %v575
        %v637 = vpop.f32.mrf.mxu0
        %v638 = vadd.f32 0.0, %v637
        %v639 = vpop.f32.mrf.mxu0
        %v640 = vpop.f32.mrf.mxu0
        %v641 = vadd.f32 0.0, %v640
        %v642 = vpop.f32.mrf.mxu0
        %643 = vmatprep.mubr.bf16.mxu0 0
        %644 = vmatmul.mubr.bf16.gmra.mxu0 %v578
        %v645 = vpop.f32.mrf.mxu0
        %v646 = vadd.f32 0.0, %v645
        %v647 = vpop.f32.mrf.mxu0
        %v648 = vpop.f32.mrf.mxu0
        %v649 = vadd.f32 0.0, %v648
        %v650 = vpop.f32.mrf.mxu0
        %651 = vmatprep.mubr.bf16.mxu0 0
        %652 = vmatmul.mubr.bf16.gmra.mxu0 %v581
        %v653 = vpop.f32.mrf.mxu0
        %v654 = vadd.f32 0.0, %v653
        %v655 = vpop.f32.mrf.mxu0
        %v656 = vpop.f32.mrf.mxu0
        %v657 = vadd.f32 0.0, %v656
        %v658 = vpop.f32.mrf.mxu0
        %659 = vdwg.mxu0
        %vm660 = vcmask 523264
        %v661 = vsel %vm660, %v501, -inf
        %662 = vmax.xlane.f32.xlu0 %v661
        %v663 = vpop.xlane.xlu0 %662
        %v664 = vsel %vm660, %v504, -inf
        %665 = vmax.xlane.f32.xlu0 %v664
        %v666 = vpop.xlane.xlu0 %665
        %v667 = vsel %vm660, %v509, -inf
        %668 = vmax.xlane.f32.xlu0 %v667
        %v669 = vpop.xlane.xlu0 %668
        %v670 = vsel %vm660, %v512, -inf
        %671 = vmax.xlane.f32.xlu0 %v670
        %v672 = vpop.xlane.xlu0 %671
        %v673 = vsel %vm660, %v517, -inf
        %674 = vmax.xlane.f32.xlu0 %v673
        %v675 = vpop.xlane.xlu0 %674
        %v676 = vsel %vm660, %v520, -inf
        %677 = vmax.xlane.f32.xlu0 %v676
        %v678 = vpop.xlane.xlu0 %677
        %v679 = vsel %vm660, %v525, -inf
        %680 = vmax.xlane.f32.xlu0 %v679
        %v681 = vpop.xlane.xlu0 %680
        %v682 = vsel %vm660, %v528, -inf
        %683 = vmax.xlane.f32.xlu0 %v682
        %v684 = vpop.xlane.xlu0 %683
        %v685 = vsel %vm660, %v630, -inf
        %686 = vmax.xlane.f32.xlu0 %v685
        %v687 = vpop.xlane.xlu0 %686
        %v688 = vsel %vm660, %v633, -inf
        %689 = vmax.xlane.f32.xlu0 %v688
        %v690 = vpop.xlane.xlu0 %689
        %v691 = vsel %vm660, %v638, -inf
        %692 = vmax.xlane.f32.xlu0 %v691
        %v693 = vpop.xlane.xlu0 %692
        %v694 = vsel %vm660, %v641, -inf
        %695 = vmax.xlane.f32.xlu0 %v694
        %v696 = vpop.xlane.xlu0 %695
        %v697 = vsel %vm660, %v646, -inf
        %698 = vmax.xlane.f32.xlu0 %v697
        %v699 = vpop.xlane.xlu0 %698
        %v700 = vsel %vm660, %v649, -inf
        %701 = vmax.xlane.f32.xlu0 %v700
        %v702 = vpop.xlane.xlu0 %701
        %v703 = vsel %vm660, %v654, -inf
        %704 = vmax.xlane.f32.xlu0 %v703
        %v705 = vpop.xlane.xlu0 %704
        %v706 = vsel %vm660, %v657, -inf
        %707 = vmax.xlane.f32.xlu0 %v706
        %v708 = vpop.xlane.xlu0 %707
        %v709 = vmax.f32 %v663, %v687
        %v710 = vmax.f32 %v666, %v690
        %v711 = vmax.f32 %v669, %v693
        %v712 = vmax.f32 %v672, %v696
        %v713 = vmax.f32 %v675, %v699
        %v714 = vmax.f32 %v678, %v702
        %v715 = vmax.f32 %v681, %v705
        %v716 = vmax.f32 %v684, %v708
        %v717 = vsub.f32 %v501, %v709
        %v718 = vsub.f32 %v504, %v710
        %v719 = vsub.f32 %v509, %v711
        %v720 = vsub.f32 %v512, %v712
        %v721 = vsub.f32 %v517, %v713
        %v722 = vsub.f32 %v520, %v714
        %v723 = vsub.f32 %v525, %v715
        %v724 = vsub.f32 %v528, %v716
        %v725 = vsub.f32 %v630, %v709
        %v726 = vsub.f32 %v633, %v710
        %v727 = vsub.f32 %v638, %v711
        %v728 = vsub.f32 %v641, %v712
        %v729 = vsub.f32 %v646, %v713
        %v730 = vsub.f32 %v649, %v714
        %v731 = vsub.f32 %v654, %v715
        %v732 = vsub.f32 %v657, %v716
        %v733 = vmul.f32 %v717, 1.442695
        %v734 = vpow.pop %v733
        %v735 = vmul.f32 %v718, 1.442695
        %v736 = vpow.pop %v735
        %v737 = vmul.f32 %v719, 1.442695
        %v738 = vpow.pop %v737
        %v739 = vmul.f32 %v720, 1.442695
        %v740 = vpow.pop %v739
        %v741 = vmul.f32 %v721, 1.442695
        %v742 = vpow.pop %v741
        %v743 = vmul.f32 %v722, 1.442695
        %v744 = vpow.pop %v743
        %v745 = vmul.f32 %v723, 1.442695
        %v746 = vpow.pop %v745
        %v747 = vmul.f32 %v724, 1.442695
        %v748 = vpow.pop %v747
        %v749 = vmul.f32 %v725, 1.442695
        %v750 = vpow.pop %v749
        %v751 = vmul.f32 %v726, 1.442695
        %v752 = vpow.pop %v751
        %v753 = vmul.f32 %v727, 1.442695
        %v754 = vpow.pop %v753
        %v755 = vmul.f32 %v728, 1.442695
        %v756 = vpow.pop %v755
        %v757 = vmul.f32 %v729, 1.442695
        %v758 = vpow.pop %v757
        %v759 = vmul.f32 %v730, 1.442695
        %v760 = vpow.pop %v759
        %v761 = vmul.f32 %v731, 1.442695
        %v762 = vpow.pop %v761
        %v763 = vmul.f32 %v732, 1.442695
        %v764 = vpow.pop %v763
        %v765 = vsel %vm660, %v734, 0.0
        %766 = vadd.xlane.f32.xlu0 %v765
        %v767 = vpop.xlane.xlu0 %766
        %v768 = vsel %vm660, %v736, 0.0
        %769 = vadd.xlane.f32.xlu0 %v768
        %v770 = vpop.xlane.xlu0 %769
        %v771 = vsel %vm660, %v738, 0.0
        %772 = vadd.xlane.f32.xlu0 %v771
        %v773 = vpop.xlane.xlu0 %772
        %v774 = vsel %vm660, %v740, 0.0
        %775 = vadd.xlane.f32.xlu0 %v774
        %v776 = vpop.xlane.xlu0 %775
        %v777 = vsel %vm660, %v742, 0.0
        %778 = vadd.xlane.f32.xlu0 %v777
        %v779 = vpop.xlane.xlu0 %778
        %v780 = vsel %vm660, %v744, 0.0
        %781 = vadd.xlane.f32.xlu0 %v780
        %v782 = vpop.xlane.xlu0 %781
        %v783 = vsel %vm660, %v746, 0.0
        %784 = vadd.xlane.f32.xlu0 %v783
        %v785 = vpop.xlane.xlu0 %784
        %v786 = vsel %vm660, %v748, 0.0
        %787 = vadd.xlane.f32.xlu0 %v786
        %v788 = vpop.xlane.xlu0 %787
        %v789 = vsel %vm660, %v750, 0.0
        %790 = vadd.xlane.f32.xlu0 %v789
        %v791 = vpop.xlane.xlu0 %790
        %v792 = vsel %vm660, %v752, 0.0
        %793 = vadd.xlane.f32.xlu0 %v792
        %v794 = vpop.xlane.xlu0 %793
        %v795 = vsel %vm660, %v754, 0.0
        %796 = vadd.xlane.f32.xlu0 %v795
        %v797 = vpop.xlane.xlu0 %796
        %v798 = vsel %vm660, %v756, 0.0
        %799 = vadd.xlane.f32.xlu0 %v798
        %v800 = vpop.xlane.xlu0 %799
        %v801 = vsel %vm660, %v758, 0.0
        %802 = vadd.xlane.f32.xlu0 %v801
        %v803 = vpop.xlane.xlu0 %802
        %v804 = vsel %vm660, %v760, 0.0
        %805 = vadd.xlane.f32.xlu0 %v804
        %v806 = vpop.xlane.xlu0 %805
        %v807 = vsel %vm660, %v762, 0.0
        %808 = vadd.xlane.f32.xlu0 %v807
        %v809 = vpop.xlane.xlu0 %808
        %v810 = vsel %vm660, %v764, 0.0
        %811 = vadd.xlane.f32.xlu0 %v810
        %v812 = vpop.xlane.xlu0 %811
        %v813 = vadd.f32 %v767, %v791
        %v814 = vadd.f32 %v770, %v794
        %v815 = vadd.f32 %v773, %v797
        %v816 = vadd.f32 %v776, %v800
        %v817 = vadd.f32 %v779, %v803
        %v818 = vadd.f32 %v782, %v806
        %v819 = vadd.f32 %v785, %v809
        %v820 = vadd.f32 %v788, %v812
        %v821 = vrcp.pop %v813
        %v822 = vmul.f32 1.0, %v821
        %v823 = vrcp.pop %v814
        %v824 = vmul.f32 1.0, %v823
        %v825 = vrcp.pop %v815
        %v826 = vmul.f32 1.0, %v825
        %v827 = vrcp.pop %v816
        %v828 = vmul.f32 1.0, %v827
        %v829 = vrcp.pop %v817
        %v830 = vmul.f32 1.0, %v829
        %v831 = vrcp.pop %v818
        %v832 = vmul.f32 1.0, %v831
        %v833 = vrcp.pop %v819
        %v834 = vmul.f32 1.0, %v833
        %v835 = vrcp.pop %v820
        %v836 = vmul.f32 1.0, %v835
        %v837 = vmul.f32 %v734, %v822
        %v838 = vmul.f32 %v736, %v824
        %v839 = vmul.f32 %v738, %v826
        %v840 = vmul.f32 %v740, %v828
        %v841 = vmul.f32 %v742, %v830
        %v842 = vmul.f32 %v744, %v832
        %v843 = vmul.f32 %v746, %v834
        %v844 = vmul.f32 %v748, %v836
        %v845 = vmul.f32 %v750, %v822
        %v846 = vmul.f32 %v752, %v824
        %v847 = vmul.f32 %v754, %v826
        %v848 = vmul.f32 %v756, %v828
        %v849 = vmul.f32 %v758, %v830
        %v850 = vmul.f32 %v760, %v832
        %v851 = vmul.f32 %v762, %v834
        %v852 = vmul.f32 %v764, %v836
        %v853 = vpack.c.bf16 %v838, %v837
        %v854 = vpack.c.bf16 %v840, %v839
        %v855 = vpack.c.bf16 %v842, %v841
        %v856 = vpack.c.bf16 %v844, %v843
        %v857 = vpack.c.bf16 %v846, %v845
        %v858 = vpack.c.bf16 %v848, %v847
        %v859 = vpack.c.bf16 %v850, %v849
        %v860 = vpack.c.bf16 %v852, %v851
        %v869 = vunpack.c.l.b16 %v385
        %v870 = vunpack.c.l.b16 %v386
        %v871 = vunpack.c.l.b16 %v387
        %v872 = vunpack.c.l.b16 %v388
        %v873 = vunpack.c.l.b16 %v389
        %v874 = vunpack.c.l.b16 %v390
        %v875 = vunpack.c.l.b16 %v391
        %v876 = vunpack.c.l.b16 %v392
        %v877 = vpack.c.b16 %v870, %v869
        %v878 = vpack.c.b16 %v872, %v871
        %v879 = vpack.c.b16 %v874, %v873
        %v880 = vpack.c.b16 %v876, %v875
        %v886 = vsel %vm660, %v853, 0
        %v889 = vsel %vm660, %v854, 0
        %v892 = vsel %vm660, %v855, 0
        %v895 = vsel %vm660, %v856, 0
        %897 = vmatprep.subr.bf16.mxu0 0
        %898 = vmatpush1.bf16.msra.mxu0 0
        %899 = vmatprep.subr.bf16.mxu0 0
        %900 = vmatpush1.bf16.msra.mxu0 0
        %901 = vmatprep.subr.bf16.mxu0 0
        %902 = vmatpush1.bf16.msra.mxu0 0
        %903 = vmatprep.subr.bf16.mxu0 0
        %904 = vmatpush1.bf16.msra.mxu0 0
        %905 = vmatprep.subr.bf16.mxu0 0
        %906 = vmatpush1.bf16.msra.mxu0 %v880
        %907 = vmatprep.subr.bf16.mxu0 0
        %908 = vmatpush1.bf16.msra.mxu0 %v879
        %909 = vmatprep.subr.bf16.mxu0 0
        %910 = vmatpush1.bf16.msra.mxu0 %v878
        %911 = vmatprep.subr.bf16.mxu0 0
        %912 = vmatpush1.bf16.msra.mxu0 %v877
        %913 = vmatprep.subr.bf16.mxu0 0
        %914 = vmatpush2.bf16.msra.mxu0 0
        %915 = vmatprep.subr.bf16.mxu0 0
        %916 = vmatpush2.bf16.msra.mxu0 0
        %917 = vmatprep.subr.bf16.mxu0 0
        %918 = vmatpush2.bf16.msra.mxu0 0
        %919 = vmatprep.subr.bf16.mxu0 0
        %920 = vmatpush2.bf16.msra.mxu0 0
        %921 = vmatprep.subr.bf16.mxu0 0
        %922 = vmatpush2.bf16.msra.mxu0 0
        %923 = vmatprep.subr.bf16.mxu0 0
        %924 = vmatpush2.bf16.msra.mxu0 0
        %925 = vmatprep.subr.bf16.mxu0 0
        %926 = vmatpush2.bf16.msra.mxu0 0
        %927 = vmatprep.subr.bf16.mxu0 0
        %928 = vmatpush2.bf16.msra.mxu0 0
        %929 = vmatprep.mubr.bf16.mxu0 0
        %930 = vmatmul.mubr.bf16.gmra.mxu0 %v886
        %v931 = vpop.f32.mrf.mxu0
        %v932 = vadd.f32 0.0, %v931
        %v933 = vpop.f32.mrf.mxu0
        %v934 = vpop.f32.mrf.mxu0
        %v935 = vadd.f32 0.0, %v934
        %v936 = vpop.f32.mrf.mxu0
        %937 = vmatprep.mubr.bf16.mxu0 0
        %938 = vmatmul.mubr.bf16.gmra.mxu0 %v889
        %v939 = vpop.f32.mrf.mxu0
        %v940 = vadd.f32 0.0, %v939
        %v941 = vpop.f32.mrf.mxu0
        %v942 = vpop.f32.mrf.mxu0
        %v943 = vadd.f32 0.0, %v942
        %v944 = vpop.f32.mrf.mxu0
        %945 = vmatprep.mubr.bf16.mxu0 0
        %946 = vmatmul.mubr.bf16.gmra.mxu0 %v892
        %v947 = vpop.f32.mrf.mxu0
        %v948 = vadd.f32 0.0, %v947
        %v949 = vpop.f32.mrf.mxu0
        %v950 = vpop.f32.mrf.mxu0
        %v951 = vadd.f32 0.0, %v950
        %v952 = vpop.f32.mrf.mxu0
        %953 = vmatprep.mubr.bf16.mxu0 0
        %954 = vmatmul.mubr.bf16.gmra.mxu0 %v895
        %v955 = vpop.f32.mrf.mxu0
        %v956 = vadd.f32 0.0, %v955
        %v957 = vpop.f32.mrf.mxu0
        %v958 = vpop.f32.mrf.mxu0
        %v959 = vadd.f32 0.0, %v958
        %v960 = vpop.f32.mrf.mxu0
        %961 = vdwg.mxu0
        %v970 = vunpack.c.l.b16 %v393
        %v971 = vunpack.c.l.b16 %v394
        %v972 = vunpack.c.l.b16 %v395
        %v973 = vunpack.c.l.b16 %v396
        %v974 = vunpack.c.l.b16 %v397
        %v975 = vunpack.c.l.b16 %v398
        %v976 = vunpack.c.l.b16 %v399
        %v977 = vunpack.c.l.b16 %v400
        %v978 = vpack.c.b16 %v971, %v970
        %v979 = vpack.c.b16 %v973, %v972
        %v980 = vpack.c.b16 %v975, %v974
        %v981 = vpack.c.b16 %v977, %v976
        %v987 = vsel %vm660, %v857, 0
        %v990 = vsel %vm660, %v858, 0
        %v993 = vsel %vm660, %v859, 0
        %v996 = vsel %vm660, %v860, 0
        %998 = vmatprep.subr.bf16.mxu0 0
        %999 = vmatpush1.bf16.msra.mxu0 0
        %1000 = vmatprep.subr.bf16.mxu0 0
        %1001 = vmatpush1.bf16.msra.mxu0 0
        %1002 = vmatprep.subr.bf16.mxu0 0
        %1003 = vmatpush1.bf16.msra.mxu0 0
        %1004 = vmatprep.subr.bf16.mxu0 0
        %1005 = vmatpush1.bf16.msra.mxu0 0
        %1006 = vmatprep.subr.bf16.mxu0 0
        %1007 = vmatpush1.bf16.msra.mxu0 %v981
        %1008 = vmatprep.subr.bf16.mxu0 0
        %1009 = vmatpush1.bf16.msra.mxu0 %v980
        %1010 = vmatprep.subr.bf16.mxu0 0
        %1011 = vmatpush1.bf16.msra.mxu0 %v979
        %1012 = vmatprep.subr.bf16.mxu0 0
        %1013 = vmatpush1.bf16.msra.mxu0 %v978
        %1014 = vmatprep.subr.bf16.mxu0 0
        %1015 = vmatpush2.bf16.msra.mxu0 0
        %1016 = vmatprep.subr.bf16.mxu0 0
        %1017 = vmatpush2.bf16.msra.mxu0 0
        %1018 = vmatprep.subr.bf16.mxu0 0
        %1019 = vmatpush2.bf16.msra.mxu0 0
        %1020 = vmatprep.subr.bf16.mxu0 0
        %1021 = vmatpush2.bf16.msra.mxu0 0
        %1022 = vmatprep.subr.bf16.mxu0 0
        %1023 = vmatpush2.bf16.msra.mxu0 0
        %1024 = vmatprep.subr.bf16.mxu0 0
        %1025 = vmatpush2.bf16.msra.mxu0 0
        %1026 = vmatprep.subr.bf16.mxu0 0
        %1027 = vmatpush2.bf16.msra.mxu0 0
        %1028 = vmatprep.subr.bf16.mxu0 0
        %1029 = vmatpush2.bf16.msra.mxu0 0
        %1030 = vmatprep.mubr.bf16.mxu0 0
        %1031 = vmatmul.mubr.bf16.gmra.mxu0 %v987
        %v1032 = vpop.f32.mrf.mxu0
        %v1033 = vadd.f32 0.0, %v1032
        %v1034 = vpop.f32.mrf.mxu0
        %v1035 = vpop.f32.mrf.mxu0
        %v1036 = vadd.f32 0.0, %v1035
        %v1037 = vpop.f32.mrf.mxu0
        %1038 = vmatprep.mubr.bf16.mxu0 0
        %1039 = vmatmul.mubr.bf16.gmra.mxu0 %v990
        %v1040 = vpop.f32.mrf.mxu0
        %v1041 = vadd.f32 0.0, %v1040
        %v1042 = vpop.f32.mrf.mxu0
        %v1043 = vpop.f32.mrf.mxu0
        %v1044 = vadd.f32 0.0, %v1043
        %v1045 = vpop.f32.mrf.mxu0
        %1046 = vmatprep.mubr.bf16.mxu0 0
        %1047 = vmatmul.mubr.bf16.gmra.mxu0 %v993
        %v1048 = vpop.f32.mrf.mxu0
        %v1049 = vadd.f32 0.0, %v1048
        %v1050 = vpop.f32.mrf.mxu0
        %v1051 = vpop.f32.mrf.mxu0
        %v1052 = vadd.f32 0.0, %v1051
        %v1053 = vpop.f32.mrf.mxu0
        %1054 = vmatprep.mubr.bf16.mxu0 0
        %1055 = vmatmul.mubr.bf16.gmra.mxu0 %v996
        %v1056 = vpop.f32.mrf.mxu0
        %v1057 = vadd.f32 0.0, %v1056
        %v1058 = vpop.f32.mrf.mxu0
        %v1059 = vpop.f32.mrf.mxu0
        %v1060 = vadd.f32 0.0, %v1059
        %v1061 = vpop.f32.mrf.mxu0
        %1062 = vdwg.mxu0
        %v1063 = vsel %vm441, %v932, 0.0
        %v1064 = vsel %vm441, %v1033, 0.0
        %v1065 = vadd.f32 %v1063, %v1064
        %v1066 = vsel %vm441, %v935, 0.0
        %v1067 = vsel %vm441, %v1036, 0.0
        %v1068 = vadd.f32 %v1066, %v1067
        %v1069 = vsel %vm441, %v940, 0.0
        %v1070 = vsel %vm441, %v1041, 0.0
        %v1071 = vadd.f32 %v1069, %v1070
        %v1072 = vsel %vm441, %v943, 0.0
        %v1073 = vsel %vm441, %v1044, 0.0
        %v1074 = vadd.f32 %v1072, %v1073
        %v1075 = vsel %vm441, %v948, 0.0
        %v1076 = vsel %vm441, %v1049, 0.0
        %v1077 = vadd.f32 %v1075, %v1076
        %v1078 = vsel %vm441, %v951, 0.0
        %v1079 = vsel %vm441, %v1052, 0.0
        %v1080 = vadd.f32 %v1078, %v1079
        %v1081 = vsel %vm441, %v956, 0.0
        %v1082 = vsel %vm441, %v1057, 0.0
        %v1083 = vadd.f32 %v1081, %v1082
        %v1084 = vsel %vm441, %v959, 0.0
        %v1085 = vsel %vm441, %v1060, 0.0
        %v1086 = vadd.f32 %v1084, %v1085
        %v1087 = vpack.c.bf16 %v1068, %v1065
        %v1088 = vpack.c.bf16 %v1074, %v1071
        %v1089 = vpack.c.bf16 %v1080, %v1077
        %v1090 = vpack.c.bf16 %v1086, %v1083
        %v1095 = vunpack.c.l.b16 %v1087
        %v1096 = vunpack.c.h.b16 %v1087
        %v1097 = vunpack.c.l.b16 %v1088
        %v1098 = vunpack.c.h.b16 %v1088
        %v1099 = vunpack.c.l.b16 %v1089
        %v1100 = vunpack.c.h.b16 %v1089
        %v1101 = vunpack.c.l.b16 %v1090
        %v1102 = vunpack.c.h.b16 %v1090
        %v1103 = vpack.c.b16 %v1095, %v1095
        %v1104 = vpack.c.b16 %v1096, %v1096
        %v1105 = vpack.c.b16 %v1097, %v1097
        %v1106 = vpack.c.b16 %v1098, %v1098
        %v1107 = vpack.c.b16 %v1099, %v1099
        %v1108 = vpack.c.b16 %v1100, %v1100
        %v1109 = vpack.c.b16 %v1101, %v1101
        %v1110 = vpack.c.b16 %v1102, %v1102
        %vm1119 = vcmask 60416
        %1120 = vst.msk [vmem:[%s349] sm:$0xf] %vm1119, %v1103
        %1121 = vst.msk [vmem:[%s349 + $0x4] sm:$0xf] %vm1119, %v1104
        %1122 = vst.msk [vmem:[%s349 + $0x8] sm:$0xf] %vm1119, %v1105
        %1123 = vst.msk [vmem:[%s349 + $0xc] sm:$0xf] %vm1119, %v1106
        %1124 = vst.msk [vmem:[%s349 + $0x10] sm:$0xf] %vm1119, %v1107
        %1125 = vst.msk [vmem:[%s349 + $0x14] sm:$0xf] %vm1119, %v1108
        %1126 = vst.msk [vmem:[%s349 + $0x18] sm:$0xf] %vm1119, %v1109
        %1127 = vst.msk [vmem:[%s349 + $0x1c] sm:$0xf] %vm1119, %v1110
        %v1132 = vunpack.c.l.b16 %v853
        %v1133 = vunpack.c.h.b16 %v853
        %v1134 = vunpack.c.l.b16 %v854
        %v1135 = vunpack.c.h.b16 %v854
        %v1136 = vunpack.c.l.b16 %v855
        %v1137 = vunpack.c.h.b16 %v855
        %v1138 = vunpack.c.l.b16 %v856
        %v1139 = vunpack.c.h.b16 %v856
        %v1140 = vpack.c.b16 %v1132, %v1132
        %v1141 = vpack.c.b16 %v1133, %v1133
        %v1142 = vpack.c.b16 %v1134, %v1134
        %v1143 = vpack.c.b16 %v1135, %v1135
        %v1144 = vpack.c.b16 %v1136, %v1136
        %v1145 = vpack.c.b16 %v1137, %v1137
        %v1146 = vpack.c.b16 %v1138, %v1138
        %v1147 = vpack.c.b16 %v1139, %v1139
        %vm1156 = vcmask 519168
        %1157 = vst.msk [vmem:[%s304] sm:$0xf] %vm1156, %v1140
        %1158 = vst.msk [vmem:[%s304 + $0x4] sm:$0xf] %vm1156, %v1141
        %1159 = vst.msk [vmem:[%s304 + $0x8] sm:$0xf] %vm1156, %v1142
        %1160 = vst.msk [vmem:[%s304 + $0xc] sm:$0xf] %vm1156, %v1143
        %1161 = vst.msk [vmem:[%s304 + $0x10] sm:$0xf] %vm1156, %v1144
        %1162 = vst.msk [vmem:[%s304 + $0x14] sm:$0xf] %vm1156, %v1145
        %1163 = vst.msk [vmem:[%s304 + $0x18] sm:$0xf] %vm1156, %v1146
        %1164 = vst.msk [vmem:[%s304 + $0x1c] sm:$0xf] %vm1156, %v1147
        %v1169 = vunpack.c.l.b16 %v857
        %v1170 = vunpack.c.h.b16 %v857
        %v1171 = vunpack.c.l.b16 %v858
        %v1172 = vunpack.c.h.b16 %v858
        %v1173 = vunpack.c.l.b16 %v859
        %v1174 = vunpack.c.h.b16 %v859
        %v1175 = vunpack.c.l.b16 %v860
        %v1176 = vunpack.c.h.b16 %v860
        %v1177 = vpack.c.b16 %v1169, %v1169
        %v1178 = vpack.c.b16 %v1170, %v1170
        %v1179 = vpack.c.b16 %v1171, %v1171
        %v1180 = vpack.c.b16 %v1172, %v1172
        %v1181 = vpack.c.b16 %v1173, %v1173
        %v1182 = vpack.c.b16 %v1174, %v1174
        %v1183 = vpack.c.b16 %v1175, %v1175
        %v1184 = vpack.c.b16 %v1176, %v1176
        %1185 = vrot.lane.b32.xlu0 %v1177, 64
        %v1186 = vpop.permute.xlu0 %1185
        %1187 = vrot.lane.b32.xlu0 %v1178, 64
        %v1188 = vpop.permute.xlu0 %1187
        %1189 = vrot.lane.b32.xlu0 %v1179, 64
        %v1190 = vpop.permute.xlu0 %1189
        %1191 = vrot.lane.b32.xlu0 %v1180, 64
        %v1192 = vpop.permute.xlu0 %1191
        %1193 = vrot.lane.b32.xlu0 %v1181, 64
        %v1194 = vpop.permute.xlu0 %1193
        %1195 = vrot.lane.b32.xlu0 %v1182, 64
        %v1196 = vpop.permute.xlu0 %1195
        %1197 = vrot.lane.b32.xlu0 %v1183, 64
        %v1198 = vpop.permute.xlu0 %1197
        %1199 = vrot.lane.b32.xlu0 %v1184, 64
        %v1200 = vpop.permute.xlu0 %1199
        %vm1209 = vcmask 1043968
        %1210 = vst.msk [vmem:[%s304] sm:$0xf] %vm1209, %v1186
        %1211 = vst.msk [vmem:[%s304 + $0x4] sm:$0xf] %vm1209, %v1188
        %1212 = vst.msk [vmem:[%s304 + $0x8] sm:$0xf] %vm1209, %v1190
        %1213 = vst.msk [vmem:[%s304 + $0xc] sm:$0xf] %vm1209, %v1192
        %1214 = vst.msk [vmem:[%s304 + $0x10] sm:$0xf] %vm1209, %v1194
        %1215 = vst.msk [vmem:[%s304 + $0x14] sm:$0xf] %vm1209, %v1196
        %1216 = vst.msk [vmem:[%s304 + $0x18] sm:$0xf] %vm1209, %v1198
        %1217 = vst.msk [vmem:[%s304 + $0x1c] sm:$0xf] %vm1209, %v1200
        %s1218 = smul.u32 8, %s26
        %p1219 = scmp.lt.s32.totalorder %s24, 1
        %s1220 = scalar_select %p1219, %s24, 1
        %p1221 = scmp.lt.s32.totalorder %s25, 3
        %s1222 = scalar_select %p1221, %s25, 3
        %p1223 = scmp.lt.s32.totalorder %s1218, 7
        %s1224 = scalar_select %p1223, %s1218, 7
        %s1225 = smul.addr %s1222, 8
        %s1226 = sadd.s32 %s1224, %s1225
        %s1227 = smul.addr %s1220, 32
        %s1228 = sadd.s32 %s1226, %s1227
        %s1229 = smul.addr %s1228, 4
        %s1230 = scalar_lea.vmem %s3, %s1229
        %s1231 = sand.u32 %s166, 1
        %s1232 = scalar_lea.sflag [#allocation3], %s1231
        %s1233 = sand.u32 %s166, 1
        %s1234 = smul.addr %s1233, 32
        %s1235 = scalar_lea.vmem [#allocation2], %s1234
        // Predicated region
        $region33: #{cross_view_attention.6} parent=31 // pred_check
          %p1236 = pneg %p146
        $region34: #{cross_view_attention.6} parent=31 // pred_check_branch
          %1238 = sbr.rel (%p1236) target = $region36
        $region35: #{cross_view_attention.6} parent=31 // pred_region
          %s1239 = smul.u32 8, %s26
        $region36: #{cross_view_attention.6} parent=31 // pred_fallthru
          _
        // Predicated region
        $region37: #{cross_view_attention.6} parent=31 // pred_check
          %p1240 = pneg %p176
        $region38: #{cross_view_attention.6} parent=31 // pred_check_branch
          %1242 = sbr.rel (%p1240) target = $region40
        $region39: #{cross_view_attention.6} parent=31 // pred_region
          %s1243 = smul.u32 8, %s26
          %s1245 = ssub.s32 512, 512
          %1246 = vsyncadd %s1232, %s1245
          %s1247 = smul.addr %s25, 8
          %s1248 = sadd.s32 %s1243, %s1247
          %s1249 = smul.addr %s24, 32
          %s1250 = sadd.s32 %s1248, %s1249
          %s1251 = smul.addr %s1250, 64
          %s1252 = scalar_lea.hbm %s4, %s1251
          %s1253 = sshll.u32 %s1235, 4
          %s1254 = int_to_ptr.vmem [resolvable:$true] %s1253
          %1259 = dma.vmem_to_hbm [thread:$0]  %s1254, 512, %s1252, %s1232, 64, 64, 4
        $region40: #{cross_view_attention.6} parent=31 // pred_fallthru
          _
      $region32: #{cross_view_attention.6} parent=5 // pred_fallthru
        _
      %p1260 = scmp.le.s32.totalorder 2, %s14
      // Predicated region
      $region41: #{cross_view_attention.6} parent=5 // pred_check
        %p1261 = pneg %p1260
      $region42: #{cross_view_attention.6} parent=5 // pred_check_branch
        %1263 = sbr.rel (%p1261) target = $region44
      $region43: #{cross_view_attention.6} parent=5 // pred_region
        %s1264 = ssub.s32 %s14, 2
        // Predicated region
        $region45: #{cross_view_attention.6} parent=43 // pred_check
          %p1265 = pneg %p152
        $region46: #{cross_view_attention.6} parent=43 // pred_check_branch
          %1267 = sbr.rel (%p1265) target = $region48
        $region47: #{cross_view_attention.6} parent=43 // pred_region
          %s1268 = smul.u32 8, %s29
          %p1269 = scmp.lt.s32.totalorder %s27, 1
          %s1270 = scalar_select %p1269, %s27, 1
          %p1271 = scmp.lt.s32.totalorder %s28, 3
          %s1272 = scalar_select %p1271, %s28, 3
          %p1273 = scmp.lt.s32.totalorder %s1268, 7
          %s1274 = scalar_select %p1273, %s1268, 7
          %s1275 = smul.addr %s1272, 8
          %s1276 = sadd.s32 %s1274, %s1275
          %s1277 = smul.addr %s1270, 32
          %s1278 = sadd.s32 %s1276, %s1277
          %s1279 = smul.addr %s1278, 4
          %s1280 = scalar_lea.vmem %s3, %s1279
        $region48: #{cross_view_attention.6} parent=43 // pred_fallthru
          _
        // Predicated region
        $region49: #{cross_view_attention.6} parent=43 // pred_check
          %p1281 = pneg %p182
        $region50: #{cross_view_attention.6} parent=43 // pred_check_branch
          %1283 = sbr.rel (%p1281) target = $region52
        $region51: #{cross_view_attention.6} parent=43 // pred_region
          %s1284 = sand.u32 %s167, 1
          %s1285 = scalar_lea.sflag [#allocation3], %s1284
          %s1286 = sand.u32 %s167, 1
          %s1287 = smul.addr %s1286, 32
          %s1288 = scalar_lea.vmem [#allocation2], %s1287
          %1289 = dma.done %s1285, 512
        $region52: #{cross_view_attention.6} parent=43 // pred_fallthru
          _
      $region44: #{cross_view_attention.6} parent=5 // pred_fallthru
        _
    $region6: #{cross_view_attention.6} parent=1 // loop_footer
      %s18 = sadd.s32 1, %s14
    $region7: #{cross_view_attention.6} parent=1 // loop_footer_branch
      %13 = sbr.rel target = $region3
    $region8: #{cross_view_attention.6} parent=1 // loop_exit
      _
    %1290 = vsyncpa [#allocation3], 1
    %s1291 = scalar_lea.sflag [#allocation3], 1
    %1292 = vsyncpa %s1291, 1

// kernel: cross_view_attention.4
$region0: #{cross_view_attention.4}
  #allocation0 [shape = 'u32[]', space=smem, size = 0x4, offset = 0x4, fixed_abs, tag = 'smem constant byte address 0x4 - core index']
  #allocation1 [shape = 'u32[144,128]{1,0:T(1,128)}', space=vmem, size = 0x12000, scoped, tag = 'internal scratch']
  %s0 = inlined_call_operand.vmem [shape: bf16[256,8], index: 0, kind: input, shape index: {}]
  %s1 = inlined_call_operand.vmem [shape: bf16[256,32], index: 1, kind: input, shape index: {}]
  %s2 = inlined_call_operand.vmem [shape: f32[1,8], index: 2, kind: input, shape index: {}]
  %s3 = inlined_call_operand.vmem [shape: f32[1,8], index: 3, kind: input, shape index: {}]
  %s4 = inlined_call_operand.vmem [shape: bf16[8,32], index: 4, kind: input, shape index: {}]
  %s5 = inlined_call_operand.vmem [shape: f32[1,8], index: 5, kind: input, shape index: {}]
  %s6 = inlined_call_operand.vmem [shape: f32[1,8], index: 6, kind: input, shape index: {}]
  %s7 = inlined_call_operand.vmem [shape: bf16[8,32], index: 7, kind: input, shape index: {}]
  %s8 = inlined_call_operand.vmem [shape: f32[1,32], index: 8, kind: input, shape index: {}]
  %s9 = inlined_call_operand.vmem [shape: f32[1,32], index: 9, kind: input, shape index: {}]
  %s10 = inlined_call_operand.vmem [shape: bf16[32,32], index: 10, kind: input, shape index: {}]
  %s11 = inlined_call_operand.vmem [shape: f32[1,32], index: 11, kind: input, shape index: {}]
  %s12 = inlined_call_operand.vmem [shape: f32[1,32], index: 12, kind: input, shape index: {}]
  %s13 = inlined_call_operand.vmem [shape: f32[1,32], index: 13, kind: input, shape index: {}]
  %s14 = inlined_call_operand.vmem [shape: bf16[32,32], index: 14, kind: input, shape index: {}]
  %s15 = inlined_call_operand.vmem [shape: f32[1,32], index: 15, kind: input, shape index: {}]
  %s16 = inlined_call_operand.vmem [shape: bf16[256,32], index: 16, kind: output, shape index: {0}]
  %s17 = inlined_call_operand.vmem [shape: bf16[256,32], index: 17, kind: output, shape index: {1}]
  %18 = xla_tuple %s16, %s17
  %s19 = sld [smem:[#allocation0]]
  $region82: #{cross_view_attention.4} parent=0
    _
  %s21 = ssub.s32 1, %s19
  %s22 = scalar_select 0, %s21, %s19
  // Predicated region
  $region2: #{cross_view_attention.4} parent=0 // pred_check
    _
  $region3: #{cross_view_attention.4} parent=0 // pred_check_branch
    %24 = sbr.rel (0) target = $region5
  $region4: #{cross_view_attention.4} parent=0 // pred_region
    _
  $region5: #{cross_view_attention.4} parent=0 // pred_fallthru
    _
  // Predicated region
  $region6: #{cross_view_attention.4} parent=0 // pred_check
    _
  $region7: #{cross_view_attention.4} parent=0 // pred_check_branch
    %26 = sbr.rel (0) target = $region9
  $region8: #{cross_view_attention.4} parent=0 // pred_region
    _
  $region9: #{cross_view_attention.4} parent=0 // pred_fallthru
    _
  // Predicated region
  $region10: #{cross_view_attention.4} parent=0 // pred_check
    _
  $region11: #{cross_view_attention.4} parent=0 // pred_check_branch
    %28 = sbr.rel (0) target = $region13
  $region12: #{cross_view_attention.4} parent=0 // pred_region
    _
  $region13: #{cross_view_attention.4} parent=0 // pred_fallthru
    _
  // Predicated region
  $region14: #{cross_view_attention.4} parent=0 // pred_check
    _
  $region15: #{cross_view_attention.4} parent=0 // pred_check_branch
    %30 = sbr.rel (0) target = $region17
  $region16: #{cross_view_attention.4} parent=0 // pred_region
    _
  $region17: #{cross_view_attention.4} parent=0 // pred_fallthru
    _
  // Predicated region
  $region18: #{cross_view_attention.4} parent=0 // pred_check
    _
  $region19: #{cross_view_attention.4} parent=0 // pred_check_branch
    %32 = sbr.rel (0) target = $region21
  $region20: #{cross_view_attention.4} parent=0 // pred_region
    _
  $region21: #{cross_view_attention.4} parent=0 // pred_fallthru
    _
  // Predicated region
  $region22: #{cross_view_attention.4} parent=0 // pred_check
    _
  $region23: #{cross_view_attention.4} parent=0 // pred_check_branch
    %34 = sbr.rel (0) target = $region25
  $region24: #{cross_view_attention.4} parent=0 // pred_region
    _
  $region25: #{cross_view_attention.4} parent=0 // pred_fallthru
    _
  // Predicated region
  $region26: #{cross_view_attention.4} parent=0 // pred_check
    _
  $region27: #{cross_view_attention.4} parent=0 // pred_check_branch
    %36 = sbr.rel (0) target = $region29
  $region28: #{cross_view_attention.4} parent=0 // pred_region
    _
  $region29: #{cross_view_attention.4} parent=0 // pred_fallthru
    _
  // Predicated region
  $region30: #{cross_view_attention.4} parent=0 // pred_check
    _
  $region31: #{cross_view_attention.4} parent=0 // pred_check_branch
    %38 = sbr.rel (0) target = $region33
  $region32: #{cross_view_attention.4} parent=0 // pred_region
    _
  $region33: #{cross_view_attention.4} parent=0 // pred_fallthru
    _
  // Predicated region
  $region34: #{cross_view_attention.4} parent=0 // pred_check
    _
  $region35: #{cross_view_attention.4} parent=0 // pred_check_branch
    %40 = sbr.rel (0) target = $region37
  $region36: #{cross_view_attention.4} parent=0 // pred_region
    _
  $region37: #{cross_view_attention.4} parent=0 // pred_fallthru
    _
  // Predicated region
  $region38: #{cross_view_attention.4} parent=0 // pred_check
    _
  $region39: #{cross_view_attention.4} parent=0 // pred_check_branch
    %42 = sbr.rel (0) target = $region41
  $region40: #{cross_view_attention.4} parent=0 // pred_region
    _
  $region41: #{cross_view_attention.4} parent=0 // pred_fallthru
    _
  // Predicated region
  $region42: #{cross_view_attention.4} parent=0 // pred_check
    _
  $region43: #{cross_view_attention.4} parent=0 // pred_check_branch
    %44 = sbr.rel (0) target = $region45
  $region44: #{cross_view_attention.4} parent=0 // pred_region
    _
  $region45: #{cross_view_attention.4} parent=0 // pred_fallthru
    _
  // Predicated region
  $region46: #{cross_view_attention.4} parent=0 // pred_check
    _
  $region47: #{cross_view_attention.4} parent=0 // pred_check_branch
    %46 = sbr.rel (0) target = $region49
  $region48: #{cross_view_attention.4} parent=0 // pred_region
    _
  $region49: #{cross_view_attention.4} parent=0 // pred_fallthru
    _
  // Predicated region
  $region50: #{cross_view_attention.4} parent=0 // pred_check
    _
  $region51: #{cross_view_attention.4} parent=0 // pred_check_branch
    %48 = sbr.rel (0) target = $region53
  $region52: #{cross_view_attention.4} parent=0 // pred_region
    _
  $region53: #{cross_view_attention.4} parent=0 // pred_fallthru
    _
  // Predicated region
  $region54: #{cross_view_attention.4} parent=0 // pred_check
    _
  $region55: #{cross_view_attention.4} parent=0 // pred_check_branch
    %50 = sbr.rel (0) target = $region57
  $region56: #{cross_view_attention.4} parent=0 // pred_region
    _
  $region57: #{cross_view_attention.4} parent=0 // pred_fallthru
    _
  // Predicated region
  $region58: #{cross_view_attention.4} parent=0 // pred_check
    _
  $region59: #{cross_view_attention.4} parent=0 // pred_check_branch
    %52 = sbr.rel (0) target = $region61
  $region60: #{cross_view_attention.4} parent=0 // pred_region
    _
  $region61: #{cross_view_attention.4} parent=0 // pred_fallthru
    _
  // Predicated region
  $region62: #{cross_view_attention.4} parent=0 // pred_check
    _
  $region63: #{cross_view_attention.4} parent=0 // pred_check_branch
    %54 = sbr.rel (0) target = $region65
  $region64: #{cross_view_attention.4} parent=0 // pred_region
    _
  $region65: #{cross_view_attention.4} parent=0 // pred_fallthru
    _
  %v56 = vld [vmem:[%s0] sm:$0xf]
  %v57 = vld [vmem:[%s0 + $0x4] sm:$0xf]
  %v58 = vld [vmem:[%s0 + $0x8] sm:$0xf]
  %v59 = vld [vmem:[%s0 + $0xc] sm:$0xf]
  %v60 = vld [vmem:[%s0 + $0x10] sm:$0xf]
  %v61 = vld [vmem:[%s0 + $0x14] sm:$0xf]
  %v62 = vld [vmem:[%s0 + $0x18] sm:$0xf]
  %v63 = vld [vmem:[%s0 + $0x1c] sm:$0xf]
  %v64 = vld [vmem:[%s0 + $0x20] sm:$0xf]
  %v65 = vld [vmem:[%s0 + $0x24] sm:$0xf]
  %v66 = vld [vmem:[%s0 + $0x28] sm:$0xf]
  %v67 = vld [vmem:[%s0 + $0x2c] sm:$0xf]
  %v68 = vld [vmem:[%s0 + $0x30] sm:$0xf]
  %v69 = vld [vmem:[%s0 + $0x34] sm:$0xf]
  %v70 = vld [vmem:[%s0 + $0x38] sm:$0xf]
  %v71 = vld [vmem:[%s0 + $0x3c] sm:$0xf]
  %v72 = vld [vmem:[%s0 + $0x40] sm:$0xf]
  %v73 = vld [vmem:[%s0 + $0x44] sm:$0xf]
  %v74 = vld [vmem:[%s0 + $0x48] sm:$0xf]
  %v75 = vld [vmem:[%s0 + $0x4c] sm:$0xf]
  %v76 = vld [vmem:[%s0 + $0x50] sm:$0xf]
  %v77 = vld [vmem:[%s0 + $0x54] sm:$0xf]
  %v78 = vld [vmem:[%s0 + $0x58] sm:$0xf]
  %v79 = vld [vmem:[%s0 + $0x5c] sm:$0xf]
  %v80 = vld [vmem:[%s0 + $0x60] sm:$0xf]
  %v81 = vld [vmem:[%s0 + $0x64] sm:$0xf]
  %v82 = vld [vmem:[%s0 + $0x68] sm:$0xf]
  %v83 = vld [vmem:[%s0 + $0x6c] sm:$0xf]
  %v84 = vld [vmem:[%s0 + $0x70] sm:$0xf]
  %v85 = vld [vmem:[%s0 + $0x74] sm:$0xf]
  %v86 = vld [vmem:[%s0 + $0x78] sm:$0xf]
  %v87 = vld [vmem:[%s0 + $0x7c] sm:$0xf]
  %v88 = vunpack.c.l.bf16 %v56
  %v89 = vunpack.c.l.bf16 %v57
  %v90 = vunpack.c.l.bf16 %v58
  %v91 = vunpack.c.l.bf16 %v59
  %v92 = vunpack.c.l.bf16 %v60
  %v93 = vunpack.c.l.bf16 %v61
  %v94 = vunpack.c.l.bf16 %v62
  %v95 = vunpack.c.l.bf16 %v63
  %v96 = vunpack.c.l.bf16 %v64
  %v97 = vunpack.c.l.bf16 %v65
  %v98 = vunpack.c.l.bf16 %v66
  %v99 = vunpack.c.l.bf16 %v67
  %v100 = vunpack.c.l.bf16 %v68
  %v101 = vunpack.c.l.bf16 %v69
  %v102 = vunpack.c.l.bf16 %v70
  %v103 = vunpack.c.l.bf16 %v71
  %v104 = vunpack.c.l.bf16 %v72
  %v105 = vunpack.c.l.bf16 %v73
  %v106 = vunpack.c.l.bf16 %v74
  %v107 = vunpack.c.l.bf16 %v75
  %v108 = vunpack.c.l.bf16 %v76
  %v109 = vunpack.c.l.bf16 %v77
  %v110 = vunpack.c.l.bf16 %v78
  %v111 = vunpack.c.l.bf16 %v79
  %v112 = vunpack.c.l.bf16 %v80
  %v113 = vunpack.c.l.bf16 %v81
  %v114 = vunpack.c.l.bf16 %v82
  %v115 = vunpack.c.l.bf16 %v83
  %v116 = vunpack.c.l.bf16 %v84
  %v117 = vunpack.c.l.bf16 %v85
  %v118 = vunpack.c.l.bf16 %v86
  %v119 = vunpack.c.l.bf16 %v87
  %v120 = vld [vmem:[%s2] sm:$0x1]
  %v122 = vlaneseq
  %v123 = vshrl.u32 %v122, 7
  %v124 = vsub.s32 0, %v123
  %v125 = vrot.slane %v120, %v124
  %v127 = vmul.f32 %v88, %v125
  %v128 = vmul.f32 %v89, %v125
  %v129 = vmul.f32 %v90, %v125
  %v130 = vmul.f32 %v91, %v125
  %v131 = vmul.f32 %v92, %v125
  %v132 = vmul.f32 %v93, %v125
  %v133 = vmul.f32 %v94, %v125
  %v134 = vmul.f32 %v95, %v125
  %v135 = vmul.f32 %v96, %v125
  %v136 = vmul.f32 %v97, %v125
  %v137 = vmul.f32 %v98, %v125
  %v138 = vmul.f32 %v99, %v125
  %v139 = vmul.f32 %v100, %v125
  %v140 = vmul.f32 %v101, %v125
  %v141 = vmul.f32 %v102, %v125
  %v142 = vmul.f32 %v103, %v125
  %v143 = vmul.f32 %v104, %v125
  %v144 = vmul.f32 %v105, %v125
  %v145 = vmul.f32 %v106, %v125
  %v146 = vmul.f32 %v107, %v125
  %v147 = vmul.f32 %v108, %v125
  %v148 = vmul.f32 %v109, %v125
  %v149 = vmul.f32 %v110, %v125
  %v150 = vmul.f32 %v111, %v125
  %v151 = vmul.f32 %v112, %v125
  %v152 = vmul.f32 %v113, %v125
  %v153 = vmul.f32 %v114, %v125
  %v154 = vmul.f32 %v115, %v125
  %v155 = vmul.f32 %v116, %v125
  %v156 = vmul.f32 %v117, %v125
  %v157 = vmul.f32 %v118, %v125
  %v158 = vmul.f32 %v119, %v125
  %v159 = vld [vmem:[%s3] sm:$0x1]
  %v161 = vlaneseq
  %v162 = vshrl.u32 %v161, 7
  %v163 = vsub.s32 0, %v162
  %v164 = vrot.slane %v159, %v163
  %v166 = vadd.f32 %v127, %v164
  %v167 = vadd.f32 %v128, %v164
  %v168 = vadd.f32 %v129, %v164
  %v169 = vadd.f32 %v130, %v164
  %v170 = vadd.f32 %v131, %v164
  %v171 = vadd.f32 %v132, %v164
  %v172 = vadd.f32 %v133, %v164
  %v173 = vadd.f32 %v134, %v164
  %v174 = vadd.f32 %v135, %v164
  %v175 = vadd.f32 %v136, %v164
  %v176 = vadd.f32 %v137, %v164
  %v177 = vadd.f32 %v138, %v164
  %v178 = vadd.f32 %v139, %v164
  %v179 = vadd.f32 %v140, %v164
  %v180 = vadd.f32 %v141, %v164
  %v181 = vadd.f32 %v142, %v164
  %v182 = vadd.f32 %v143, %v164
  %v183 = vadd.f32 %v144, %v164
  %v184 = vadd.f32 %v145, %v164
  %v185 = vadd.f32 %v146, %v164
  %v186 = vadd.f32 %v147, %v164
  %v187 = vadd.f32 %v148, %v164
  %v188 = vadd.f32 %v149, %v164
  %v189 = vadd.f32 %v150, %v164
  %v190 = vadd.f32 %v151, %v164
  %v191 = vadd.f32 %v152, %v164
  %v192 = vadd.f32 %v153, %v164
  %v193 = vadd.f32 %v154, %v164
  %v194 = vadd.f32 %v155, %v164
  %v195 = vadd.f32 %v156, %v164
  %v196 = vadd.f32 %v157, %v164
  %v197 = vadd.f32 %v158, %v164
  %v198 = vmax.f32 %v166, 0.0
  %v199 = vmax.f32 %v167, 0.0
  %v200 = vmax.f32 %v168, 0.0
  %v201 = vmax.f32 %v169, 0.0
  %v202 = vmax.f32 %v170, 0.0
  %v203 = vmax.f32 %v171, 0.0
  %v204 = vmax.f32 %v172, 0.0
  %v205 = vmax.f32 %v173, 0.0
  %v206 = vmax.f32 %v174, 0.0
  %v207 = vmax.f32 %v175, 0.0
  %v208 = vmax.f32 %v176, 0.0
  %v209 = vmax.f32 %v177, 0.0
  %v210 = vmax.f32 %v178, 0.0
  %v211 = vmax.f32 %v179, 0.0
  %v212 = vmax.f32 %v180, 0.0
  %v213 = vmax.f32 %v181, 0.0
  %v214 = vmax.f32 %v182, 0.0
  %v215 = vmax.f32 %v183, 0.0
  %v216 = vmax.f32 %v184, 0.0
  %v217 = vmax.f32 %v185, 0.0
  %v218 = vmax.f32 %v186, 0.0
  %v219 = vmax.f32 %v187, 0.0
  %v220 = vmax.f32 %v188, 0.0
  %v221 = vmax.f32 %v189, 0.0
  %v222 = vmax.f32 %v190, 0.0
  %v223 = vmax.f32 %v191, 0.0
  %v224 = vmax.f32 %v192, 0.0
  %v225 = vmax.f32 %v193, 0.0
  %v226 = vmax.f32 %v194, 0.0
  %v227 = vmax.f32 %v195, 0.0
  %v228 = vmax.f32 %v196, 0.0
  %v229 = vmax.f32 %v197, 0.0
  %v230 = vpack.c.bf16 %v199, %v198
  %v231 = vpack.c.bf16 %v201, %v200
  %v232 = vpack.c.bf16 %v203, %v202
  %v233 = vpack.c.bf16 %v205, %v204
  %v234 = vpack.c.bf16 %v207, %v206
  %v235 = vpack.c.bf16 %v209, %v208
  %v236 = vpack.c.bf16 %v211, %v210
  %v237 = vpack.c.bf16 %v213, %v212
  %v238 = vpack.c.bf16 %v215, %v214
  %v239 = vpack.c.bf16 %v217, %v216
  %v240 = vpack.c.bf16 %v219, %v218
  %v241 = vpack.c.bf16 %v221, %v220
  %v242 = vpack.c.bf16 %v223, %v222
  %v243 = vpack.c.bf16 %v225, %v224
  %v244 = vpack.c.bf16 %v227, %v226
  %v245 = vpack.c.bf16 %v229, %v228
  %v246 = vld [vmem:[%s4] sm:$0xf]
  %v247 = vld [vmem:[%s1] sm:$0xf]
  %v248 = vld [vmem:[%s1 + $0x4] sm:$0xf]
  %v249 = vld [vmem:[%s1 + $0x8] sm:$0xf]
  %v250 = vld [vmem:[%s1 + $0xc] sm:$0xf]
  %v251 = vld [vmem:[%s1 + $0x10] sm:$0xf]
  %v252 = vld [vmem:[%s1 + $0x14] sm:$0xf]
  %v253 = vld [vmem:[%s1 + $0x18] sm:$0xf]
  %v254 = vld [vmem:[%s1 + $0x1c] sm:$0xf]
  %v255 = vld [vmem:[%s1 + $0x20] sm:$0xf]
  %v256 = vld [vmem:[%s1 + $0x24] sm:$0xf]
  %v257 = vld [vmem:[%s1 + $0x28] sm:$0xf]
  %v258 = vld [vmem:[%s1 + $0x2c] sm:$0xf]
  %v259 = vld [vmem:[%s1 + $0x30] sm:$0xf]
  %v260 = vld [vmem:[%s1 + $0x34] sm:$0xf]
  %v261 = vld [vmem:[%s1 + $0x38] sm:$0xf]
  %v262 = vld [vmem:[%s1 + $0x3c] sm:$0xf]
  %v263 = vld [vmem:[%s1 + $0x40] sm:$0xf]
  %v264 = vld [vmem:[%s1 + $0x44] sm:$0xf]
  %v265 = vld [vmem:[%s1 + $0x48] sm:$0xf]
  %v266 = vld [vmem:[%s1 + $0x4c] sm:$0xf]
  %v267 = vld [vmem:[%s1 + $0x50] sm:$0xf]
  %v268 = vld [vmem:[%s1 + $0x54] sm:$0xf]
  %v269 = vld [vmem:[%s1 + $0x58] sm:$0xf]
  %v270 = vld [vmem:[%s1 + $0x5c] sm:$0xf]
  %v271 = vld [vmem:[%s1 + $0x60] sm:$0xf]
  %v272 = vld [vmem:[%s1 + $0x64] sm:$0xf]
  %v273 = vld [vmem:[%s1 + $0x68] sm:$0xf]
  %v274 = vld [vmem:[%s1 + $0x6c] sm:$0xf]
  %v275 = vld [vmem:[%s1 + $0x70] sm:$0xf]
  %v276 = vld [vmem:[%s1 + $0x74] sm:$0xf]
  %v277 = vld [vmem:[%s1 + $0x78] sm:$0xf]
  %v278 = vld [vmem:[%s1 + $0x7c] sm:$0xf]
  %v279 = vunpack.c.l.bf16 %v247
  %v280 = vunpack.c.l.bf16 %v248
  %v281 = vunpack.c.l.bf16 %v249
  %v282 = vunpack.c.l.bf16 %v250
  %v283 = vunpack.c.l.bf16 %v251
  %v284 = vunpack.c.l.bf16 %v252
  %v285 = vunpack.c.l.bf16 %v253
  %v286 = vunpack.c.l.bf16 %v254
  %v287 = vunpack.c.l.bf16 %v255
  %v288 = vunpack.c.l.bf16 %v256
  %v289 = vunpack.c.l.bf16 %v257
  %v290 = vunpack.c.l.bf16 %v258
  %v291 = vunpack.c.l.bf16 %v259
  %v292 = vunpack.c.l.bf16 %v260
  %v293 = vunpack.c.l.bf16 %v261
  %v294 = vunpack.c.l.bf16 %v262
  %v295 = vunpack.c.l.bf16 %v263
  %v296 = vunpack.c.l.bf16 %v264
  %v297 = vunpack.c.l.bf16 %v265
  %v298 = vunpack.c.l.bf16 %v266
  %v299 = vunpack.c.l.bf16 %v267
  %v300 = vunpack.c.l.bf16 %v268
  %v301 = vunpack.c.l.bf16 %v269
  %v302 = vunpack.c.l.bf16 %v270
  %v303 = vunpack.c.l.bf16 %v271
  %v304 = vunpack.c.l.bf16 %v272
  %v305 = vunpack.c.l.bf16 %v273
  %v306 = vunpack.c.l.bf16 %v274
  %v307 = vunpack.c.l.bf16 %v275
  %v308 = vunpack.c.l.bf16 %v276
  %v309 = vunpack.c.l.bf16 %v277
  %v310 = vunpack.c.l.bf16 %v278
  %vm311 = vcmask 64512
  %v313 = vsel %vm311, %v230, 0
  %v316 = vsel %vm311, %v231, 0
  %v319 = vsel %vm311, %v232, 0
  %v322 = vsel %vm311, %v233, 0
  %v325 = vsel %vm311, %v234, 0
  %v328 = vsel %vm311, %v235, 0
  %v331 = vsel %vm311, %v236, 0
  %v334 = vsel %vm311, %v237, 0
  %v337 = vsel %vm311, %v238, 0
  %v340 = vsel %vm311, %v239, 0
  %v343 = vsel %vm311, %v240, 0
  %v346 = vsel %vm311, %v241, 0
  %v349 = vsel %vm311, %v242, 0
  %v352 = vsel %vm311, %v243, 0
  %v355 = vsel %vm311, %v244, 0
  %v358 = vsel %vm311, %v245, 0
  %vm360 = vcmask 1043456
  %v362 = vsel %vm360, %v246, 0
  %364 = vmatprep.subr.bf16.mxu0 0
  %365 = vmatpush1.bf16.msra.mxu0 0
  %366 = vmatprep.subr.bf16.mxu0 0
  %367 = vmatpush1.bf16.msra.mxu0 0
  %368 = vmatprep.subr.bf16.mxu0 0
  %369 = vmatpush1.bf16.msra.mxu0 0
  %370 = vmatprep.subr.bf16.mxu0 0
  %371 = vmatpush1.bf16.msra.mxu0 0
  %372 = vmatprep.subr.bf16.mxu0 0
  %373 = vmatpush1.bf16.msra.mxu0 0
  %374 = vmatprep.subr.bf16.mxu0 0
  %375 = vmatpush1.bf16.msra.mxu0 0
  %376 = vmatprep.subr.bf16.mxu0 0
  %377 = vmatpush1.bf16.msra.mxu0 0
  %378 = vmatprep.subr.bf16.mxu0 0
  %379 = vmatpush1.bf16.msra.mxu0 %v362
  %380 = vmatprep.subr.bf16.mxu0 0
  %381 = vmatpush2.bf16.msra.mxu0 0
  %382 = vmatprep.subr.bf16.mxu0 0
  %383 = vmatpush2.bf16.msra.mxu0 0
  %384 = vmatprep.subr.bf16.mxu0 0
  %385 = vmatpush2.bf16.msra.mxu0 0
  %386 = vmatprep.subr.bf16.mxu0 0
  %387 = vmatpush2.bf16.msra.mxu0 0
  %388 = vmatprep.subr.bf16.mxu0 0
  %389 = vmatpush2.bf16.msra.mxu0 0
  %390 = vmatprep.subr.bf16.mxu0 0
  %391 = vmatpush2.bf16.msra.mxu0 0
  %392 = vmatprep.subr.bf16.mxu0 0
  %393 = vmatpush2.bf16.msra.mxu0 0
  %394 = vmatprep.subr.bf16.mxu0 0
  %395 = vmatpush2.bf16.msra.mxu0 0
  %396 = vmatprep.mubr.bf16.mxu0 0
  %397 = vmatmul.mubr.bf16.gmra.mxu0 %v313
  %v398 = vpop.f32.mrf.mxu0
  %v399 = vadd.f32 %v279, %v398
  %v400 = vpop.f32.mrf.mxu0
  %v401 = vpop.f32.mrf.mxu0
  %v402 = vadd.f32 %v280, %v401
  %v403 = vpop.f32.mrf.mxu0
  %404 = vmatprep.mubr.bf16.mxu0 0
  %405 = vmatmul.mubr.bf16.gmra.mxu0 %v316
  %v406 = vpop.f32.mrf.mxu0
  %v407 = vadd.f32 %v281, %v406
  %v408 = vpop.f32.mrf.mxu0
  %v409 = vpop.f32.mrf.mxu0
  %v410 = vadd.f32 %v282, %v409
  %v411 = vpop.f32.mrf.mxu0
  %412 = vmatprep.mubr.bf16.mxu0 0
  %413 = vmatmul.mubr.bf16.gmra.mxu0 %v319
  %v414 = vpop.f32.mrf.mxu0
  %v415 = vadd.f32 %v283, %v414
  %v416 = vpop.f32.mrf.mxu0
  %v417 = vpop.f32.mrf.mxu0
  %v418 = vadd.f32 %v284, %v417
  %v419 = vpop.f32.mrf.mxu0
  %420 = vmatprep.mubr.bf16.mxu0 0
  %421 = vmatmul.mubr.bf16.gmra.mxu0 %v322
  %v422 = vpop.f32.mrf.mxu0
  %v423 = vadd.f32 %v285, %v422
  %v424 = vpop.f32.mrf.mxu0
  %v425 = vpop.f32.mrf.mxu0
  %v426 = vadd.f32 %v286, %v425
  %v427 = vpop.f32.mrf.mxu0
  %428 = vmatprep.mubr.bf16.mxu0 0
  %429 = vmatmul.mubr.bf16.gmra.mxu0 %v325
  %v430 = vpop.f32.mrf.mxu0
  %v431 = vadd.f32 %v287, %v430
  %v432 = vpop.f32.mrf.mxu0
  %v433 = vpop.f32.mrf.mxu0
  %v434 = vadd.f32 %v288, %v433
  %v435 = vpop.f32.mrf.mxu0
  %436 = vmatprep.mubr.bf16.mxu0 0
  %437 = vmatmul.mubr.bf16.gmra.mxu0 %v328
  %v438 = vpop.f32.mrf.mxu0
  %v439 = vadd.f32 %v289, %v438
  %v440 = vpop.f32.mrf.mxu0
  %v441 = vpop.f32.mrf.mxu0
  %v442 = vadd.f32 %v290, %v441
  %v443 = vpop.f32.mrf.mxu0
  %444 = vmatprep.mubr.bf16.mxu0 0
  %445 = vmatmul.mubr.bf16.gmra.mxu0 %v331
  %v446 = vpop.f32.mrf.mxu0
  %v447 = vadd.f32 %v291, %v446
  %v448 = vpop.f32.mrf.mxu0
  %v449 = vpop.f32.mrf.mxu0
  %v450 = vadd.f32 %v292, %v449
  %v451 = vpop.f32.mrf.mxu0
  %452 = vmatprep.mubr.bf16.mxu0 0
  %453 = vmatmul.mubr.bf16.gmra.mxu0 %v334
  %v454 = vpop.f32.mrf.mxu0
  %v455 = vadd.f32 %v293, %v454
  %v456 = vpop.f32.mrf.mxu0
  %v457 = vpop.f32.mrf.mxu0
  %v458 = vadd.f32 %v294, %v457
  %v459 = vpop.f32.mrf.mxu0
  %460 = vmatprep.mubr.bf16.mxu0 0
  %461 = vmatmul.mubr.bf16.gmra.mxu0 %v337
  %v462 = vpop.f32.mrf.mxu0
  %v463 = vadd.f32 %v295, %v462
  %v464 = vpop.f32.mrf.mxu0
  %v465 = vpop.f32.mrf.mxu0
  %v466 = vadd.f32 %v296, %v465
  %v467 = vpop.f32.mrf.mxu0
  %468 = vmatprep.mubr.bf16.mxu0 0
  %469 = vmatmul.mubr.bf16.gmra.mxu0 %v340
  %v470 = vpop.f32.mrf.mxu0
  %v471 = vadd.f32 %v297, %v470
  %v472 = vpop.f32.mrf.mxu0
  %v473 = vpop.f32.mrf.mxu0
  %v474 = vadd.f32 %v298, %v473
  %v475 = vpop.f32.mrf.mxu0
  %476 = vmatprep.mubr.bf16.mxu0 0
  %477 = vmatmul.mubr.bf16.gmra.mxu0 %v343
  %v478 = vpop.f32.mrf.mxu0
  %v479 = vadd.f32 %v299, %v478
  %v480 = vpop.f32.mrf.mxu0
  %v481 = vpop.f32.mrf.mxu0
  %v482 = vadd.f32 %v300, %v481
  %v483 = vpop.f32.mrf.mxu0
  %484 = vmatprep.mubr.bf16.mxu0 0
  %485 = vmatmul.mubr.bf16.gmra.mxu0 %v346
  %v486 = vpop.f32.mrf.mxu0
  %v487 = vadd.f32 %v301, %v486
  %v488 = vpop.f32.mrf.mxu0
  %v489 = vpop.f32.mrf.mxu0
  %v490 = vadd.f32 %v302, %v489
  %v491 = vpop.f32.mrf.mxu0
  %492 = vmatprep.mubr.bf16.mxu0 0
  %493 = vmatmul.mubr.bf16.gmra.mxu0 %v349
  %v494 = vpop.f32.mrf.mxu0
  %v495 = vadd.f32 %v303, %v494
  %v496 = vpop.f32.mrf.mxu0
  %v497 = vpop.f32.mrf.mxu0
  %v498 = vadd.f32 %v304, %v497
  %v499 = vpop.f32.mrf.mxu0
  %500 = vmatprep.mubr.bf16.mxu0 0
  %501 = vmatmul.mubr.bf16.gmra.mxu0 %v352
  %v502 = vpop.f32.mrf.mxu0
  %v503 = vadd.f32 %v305, %v502
  %v504 = vpop.f32.mrf.mxu0
  %v505 = vpop.f32.mrf.mxu0
  %v506 = vadd.f32 %v306, %v505
  %v507 = vpop.f32.mrf.mxu0
  %508 = vmatprep.mubr.bf16.mxu0 0
  %509 = vmatmul.mubr.bf16.gmra.mxu0 %v355
  %v510 = vpop.f32.mrf.mxu0
  %v511 = vadd.f32 %v307, %v510
  %v512 = vpop.f32.mrf.mxu0
  %v513 = vpop.f32.mrf.mxu0
  %v514 = vadd.f32 %v308, %v513
  %v515 = vpop.f32.mrf.mxu0
  %516 = vmatprep.mubr.bf16.mxu0 0
  %517 = vmatmul.mubr.bf16.gmra.mxu0 %v358
  %v518 = vpop.f32.mrf.mxu0
  %v519 = vadd.f32 %v309, %v518
  %v520 = vpop.f32.mrf.mxu0
  %v521 = vpop.f32.mrf.mxu0
  %v522 = vadd.f32 %v310, %v521
  %v523 = vpop.f32.mrf.mxu0
  %524 = vdwg.mxu0
  %v525 = vld [vmem:[%s8] sm:$0x1]
  %v526 = vld [vmem:[%s9] sm:$0x1]
  %vm527 = vcmask 261120
  %v528 = vsel %vm527, %v399, 0.0
  %529 = vadd.xlane.f32.xlu0 %v528
  %v530 = vpop.xlane.xlu0 %529
  %v531 = vsel %vm527, %v402, 0.0
  %532 = vadd.xlane.f32.xlu0 %v531
  %v533 = vpop.xlane.xlu0 %532
  %v534 = vsel %vm527, %v407, 0.0
  %535 = vadd.xlane.f32.xlu0 %v534
  %v536 = vpop.xlane.xlu0 %535
  %v537 = vsel %vm527, %v410, 0.0
  %538 = vadd.xlane.f32.xlu0 %v537
  %v539 = vpop.xlane.xlu0 %538
  %v540 = vsel %vm527, %v415, 0.0
  %541 = vadd.xlane.f32.xlu0 %v540
  %v542 = vpop.xlane.xlu0 %541
  %v543 = vsel %vm527, %v418, 0.0
  %544 = vadd.xlane.f32.xlu0 %v543
  %v545 = vpop.xlane.xlu0 %544
  %v546 = vsel %vm527, %v423, 0.0
  %547 = vadd.xlane.f32.xlu0 %v546
  %v548 = vpop.xlane.xlu0 %547
  %v549 = vsel %vm527, %v426, 0.0
  %550 = vadd.xlane.f32.xlu0 %v549
  %v551 = vpop.xlane.xlu0 %550
  %v552 = vsel %vm527, %v431, 0.0
  %553 = vadd.xlane.f32.xlu0 %v552
  %v554 = vpop.xlane.xlu0 %553
  %v555 = vsel %vm527, %v434, 0.0
  %556 = vadd.xlane.f32.xlu0 %v555
  %v557 = vpop.xlane.xlu0 %556
  %v558 = vsel %vm527, %v439, 0.0
  %559 = vadd.xlane.f32.xlu0 %v558
  %v560 = vpop.xlane.xlu0 %559
  %v561 = vsel %vm527, %v442, 0.0
  %562 = vadd.xlane.f32.xlu0 %v561
  %v563 = vpop.xlane.xlu0 %562
  %v564 = vsel %vm527, %v447, 0.0
  %565 = vadd.xlane.f32.xlu0 %v564
  %v566 = vpop.xlane.xlu0 %565
  %v567 = vsel %vm527, %v450, 0.0
  %568 = vadd.xlane.f32.xlu0 %v567
  %v569 = vpop.xlane.xlu0 %568
  %v570 = vsel %vm527, %v455, 0.0
  %571 = vadd.xlane.f32.xlu0 %v570
  %v572 = vpop.xlane.xlu0 %571
  %v573 = vsel %vm527, %v458, 0.0
  %574 = vadd.xlane.f32.xlu0 %v573
  %v575 = vpop.xlane.xlu0 %574
  %v576 = vsel %vm527, %v463, 0.0
  %577 = vadd.xlane.f32.xlu0 %v576
  %v578 = vpop.xlane.xlu0 %577
  %v579 = vsel %vm527, %v466, 0.0
  %580 = vadd.xlane.f32.xlu0 %v579
  %v581 = vpop.xlane.xlu0 %580
  %v582 = vsel %vm527, %v471, 0.0
  %583 = vadd.xlane.f32.xlu0 %v582
  %v584 = vpop.xlane.xlu0 %583
  %v585 = vsel %vm527, %v474, 0.0
  %586 = vadd.xlane.f32.xlu0 %v585
  %v587 = vpop.xlane.xlu0 %586
  %v588 = vsel %vm527, %v479, 0.0
  %589 = vadd.xlane.f32.xlu0 %v588
  %v590 = vpop.xlane.xlu0 %589
  %v591 = vsel %vm527, %v482, 0.0
  %592 = vadd.xlane.f32.xlu0 %v591
  %v593 = vpop.xlane.xlu0 %592
  %v594 = vsel %vm527, %v487, 0.0
  %595 = vadd.xlane.f32.xlu0 %v594
  %v596 = vpop.xlane.xlu0 %595
  %v597 = vsel %vm527, %v490, 0.0
  %598 = vadd.xlane.f32.xlu0 %v597
  %v599 = vpop.xlane.xlu0 %598
  %v600 = vsel %vm527, %v495, 0.0
  %601 = vadd.xlane.f32.xlu0 %v600
  %v602 = vpop.xlane.xlu0 %601
  %v603 = vsel %vm527, %v498, 0.0
  %604 = vadd.xlane.f32.xlu0 %v603
  %v605 = vpop.xlane.xlu0 %604
  %v606 = vsel %vm527, %v503, 0.0
  %607 = vadd.xlane.f32.xlu0 %v606
  %v608 = vpop.xlane.xlu0 %607
  %v609 = vsel %vm527, %v506, 0.0
  %610 = vadd.xlane.f32.xlu0 %v609
  %v611 = vpop.xlane.xlu0 %610
  %v612 = vsel %vm527, %v511, 0.0
  %613 = vadd.xlane.f32.xlu0 %v612
  %v614 = vpop.xlane.xlu0 %613
  %v615 = vsel %vm527, %v514, 0.0
  %616 = vadd.xlane.f32.xlu0 %v615
  %v617 = vpop.xlane.xlu0 %616
  %v618 = vsel %vm527, %v519, 0.0
  %619 = vadd.xlane.f32.xlu0 %v618
  %v620 = vpop.xlane.xlu0 %619
  %v621 = vsel %vm527, %v522, 0.0
  %622 = vadd.xlane.f32.xlu0 %v621
  %v623 = vpop.xlane.xlu0 %622
  %v624 = vrcp.pop 32.0
  %v625 = vmul.f32 %v530, %v624
  %v626 = vmul.f32 %v533, %v624
  %v627 = vmul.f32 %v536, %v624
  %v628 = vmul.f32 %v539, %v624
  %v629 = vmul.f32 %v542, %v624
  %v630 = vmul.f32 %v545, %v624
  %v631 = vmul.f32 %v548, %v624
  %v632 = vmul.f32 %v551, %v624
  %v633 = vmul.f32 %v554, %v624
  %v634 = vmul.f32 %v557, %v624
  %v635 = vmul.f32 %v560, %v624
  %v636 = vmul.f32 %v563, %v624
  %v637 = vmul.f32 %v566, %v624
  %v638 = vmul.f32 %v569, %v624
  %v639 = vmul.f32 %v572, %v624
  %v640 = vmul.f32 %v575, %v624
  %v641 = vmul.f32 %v578, %v624
  %v642 = vmul.f32 %v581, %v624
  %v643 = vmul.f32 %v584, %v624
  %v644 = vmul.f32 %v587, %v624
  %v645 = vmul.f32 %v590, %v624
  %v646 = vmul.f32 %v593, %v624
  %v647 = vmul.f32 %v596, %v624
  %v648 = vmul.f32 %v599, %v624
  %v649 = vmul.f32 %v602, %v624
  %v650 = vmul.f32 %v605, %v624
  %v651 = vmul.f32 %v608, %v624
  %v652 = vmul.f32 %v611, %v624
  %v653 = vmul.f32 %v614, %v624
  %v654 = vmul.f32 %v617, %v624
  %v655 = vmul.f32 %v620, %v624
  %v656 = vmul.f32 %v623, %v624
  %v657 = vsub.f32 %v399, %v625
  %v658 = vsub.f32 %v402, %v626
  %v659 = vsub.f32 %v407, %v627
  %v660 = vsub.f32 %v410, %v628
  %v661 = vsub.f32 %v415, %v629
  %v662 = vsub.f32 %v418, %v630
  %v663 = vsub.f32 %v423, %v631
  %v664 = vsub.f32 %v426, %v632
  %v665 = vsub.f32 %v431, %v633
  %v666 = vsub.f32 %v434, %v634
  %v667 = vsub.f32 %v439, %v635
  %v668 = vsub.f32 %v442, %v636
  %v669 = vsub.f32 %v447, %v637
  %v670 = vsub.f32 %v450, %v638
  %v671 = vsub.f32 %v455, %v639
  %v672 = vsub.f32 %v458, %v640
  %v673 = vsub.f32 %v463, %v641
  %v674 = vsub.f32 %v466, %v642
  %v675 = vsub.f32 %v471, %v643
  %v676 = vsub.f32 %v474, %v644
  %v677 = vsub.f32 %v479, %v645
  %v678 = vsub.f32 %v482, %v646
  %v679 = vsub.f32 %v487, %v647
  %v680 = vsub.f32 %v490, %v648
  %v681 = vsub.f32 %v495, %v649
  %v682 = vsub.f32 %v498, %v650
  %v683 = vsub.f32 %v503, %v651
  %v684 = vsub.f32 %v506, %v652
  %v685 = vsub.f32 %v511, %v653
  %v686 = vsub.f32 %v514, %v654
  %v687 = vsub.f32 %v519, %v655
  %v688 = vsub.f32 %v522, %v656
  %v689 = vmul.f32 %v657, %v657
  %v690 = vmul.f32 %v658, %v658
  %v691 = vmul.f32 %v659, %v659
  %v692 = vmul.f32 %v660, %v660
  %v693 = vmul.f32 %v661, %v661
  %v694 = vmul.f32 %v662, %v662
  %v695 = vmul.f32 %v663, %v663
  %v696 = vmul.f32 %v664, %v664
  %v697 = vmul.f32 %v665, %v665
  %v698 = vmul.f32 %v666, %v666
  %v699 = vmul.f32 %v667, %v667
  %v700 = vmul.f32 %v668, %v668
  %v701 = vmul.f32 %v669, %v669
  %v702 = vmul.f32 %v670, %v670
  %v703 = vmul.f32 %v671, %v671
  %v704 = vmul.f32 %v672, %v672
  %v705 = vmul.f32 %v673, %v673
  %v706 = vmul.f32 %v674, %v674
  %v707 = vmul.f32 %v675, %v675
  %v708 = vmul.f32 %v676, %v676
  %v709 = vmul.f32 %v677, %v677
  %v710 = vmul.f32 %v678, %v678
  %v711 = vmul.f32 %v679, %v679
  %v712 = vmul.f32 %v680, %v680
  %v713 = vmul.f32 %v681, %v681
  %v714 = vmul.f32 %v682, %v682
  %v715 = vmul.f32 %v683, %v683
  %v716 = vmul.f32 %v684, %v684
  %v717 = vmul.f32 %v685, %v685
  %v718 = vmul.f32 %v686, %v686
  %v719 = vmul.f32 %v687, %v687
  %v720 = vmul.f32 %v688, %v688
  %v721 = vsel %vm527, %v689, 0.0
  %722 = vadd.xlane.f32.xlu0 %v721
  %v723 = vpop.xlane.xlu0 %722
  %v724 = vsel %vm527, %v690, 0.0
  %725 = vadd.xlane.f32.xlu0 %v724
  %v726 = vpop.xlane.xlu0 %725
  %v727 = vsel %vm527, %v691, 0.0
  %728 = vadd.xlane.f32.xlu0 %v727
  %v729 = vpop.xlane.xlu0 %728
  %v730 = vsel %vm527, %v692, 0.0
  %731 = vadd.xlane.f32.xlu0 %v730
  %v732 = vpop.xlane.xlu0 %731
  %v733 = vsel %vm527, %v693, 0.0
  %734 = vadd.xlane.f32.xlu0 %v733
  %v735 = vpop.xlane.xlu0 %734
  %v736 = vsel %vm527, %v694, 0.0
  %737 = vadd.xlane.f32.xlu0 %v736
  %v738 = vpop.xlane.xlu0 %737
  %v739 = vsel %vm527, %v695, 0.0
  %740 = vadd.xlane.f32.xlu0 %v739
  %v741 = vpop.xlane.xlu0 %740
  %v742 = vsel %vm527, %v696, 0.0
  %743 = vadd.xlane.f32.xlu0 %v742
  %v744 = vpop.xlane.xlu0 %743
  %v745 = vsel %vm527, %v697, 0.0
  %746 = vadd.xlane.f32.xlu0 %v745
  %v747 = vpop.xlane.xlu0 %746
  %v748 = vsel %vm527, %v698, 0.0
  %749 = vadd.xlane.f32.xlu0 %v748
  %v750 = vpop.xlane.xlu0 %749
  %v751 = vsel %vm527, %v699, 0.0
  %752 = vadd.xlane.f32.xlu0 %v751
  %v753 = vpop.xlane.xlu0 %752
  %v754 = vsel %vm527, %v700, 0.0
  %755 = vadd.xlane.f32.xlu0 %v754
  %v756 = vpop.xlane.xlu0 %755
  %v757 = vsel %vm527, %v701, 0.0
  %758 = vadd.xlane.f32.xlu0 %v757
  %v759 = vpop.xlane.xlu0 %758
  %v760 = vsel %vm527, %v702, 0.0
  %761 = vadd.xlane.f32.xlu0 %v760
  %v762 = vpop.xlane.xlu0 %761
  %v763 = vsel %vm527, %v703, 0.0
  %764 = vadd.xlane.f32.xlu0 %v763
  %v765 = vpop.xlane.xlu0 %764
  %v766 = vsel %vm527, %v704, 0.0
  %767 = vadd.xlane.f32.xlu0 %v766
  %v768 = vpop.xlane.xlu0 %767
  %v769 = vsel %vm527, %v705, 0.0
  %770 = vadd.xlane.f32.xlu0 %v769
  %v771 = vpop.xlane.xlu0 %770
  %v772 = vsel %vm527, %v706, 0.0
  %773 = vadd.xlane.f32.xlu0 %v772
  %v774 = vpop.xlane.xlu0 %773
  %v775 = vsel %vm527, %v707, 0.0
  %776 = vadd.xlane.f32.xlu0 %v775
  %v777 = vpop.xlane.xlu0 %776
  %v778 = vsel %vm527, %v708, 0.0
  %779 = vadd.xlane.f32.xlu0 %v778
  %v780 = vpop.xlane.xlu0 %779
  %v781 = vsel %vm527, %v709, 0.0
  %782 = vadd.xlane.f32.xlu0 %v781
  %v783 = vpop.xlane.xlu0 %782
  %v784 = vsel %vm527, %v710, 0.0
  %785 = vadd.xlane.f32.xlu0 %v784
  %v786 = vpop.xlane.xlu0 %785
  %v787 = vsel %vm527, %v711, 0.0
  %788 = vadd.xlane.f32.xlu0 %v787
  %v789 = vpop.xlane.xlu0 %788
  %v790 = vsel %vm527, %v712, 0.0
  %791 = vadd.xlane.f32.xlu0 %v790
  %v792 = vpop.xlane.xlu0 %791
  %v793 = vsel %vm527, %v713, 0.0
  %794 = vadd.xlane.f32.xlu0 %v793
  %v795 = vpop.xlane.xlu0 %794
  %v796 = vsel %vm527, %v714, 0.0
  %797 = vadd.xlane.f32.xlu0 %v796
  %v798 = vpop.xlane.xlu0 %797
  %v799 = vsel %vm527, %v715, 0.0
  %800 = vadd.xlane.f32.xlu0 %v799
  %v801 = vpop.xlane.xlu0 %800
  %v802 = vsel %vm527, %v716, 0.0
  %803 = vadd.xlane.f32.xlu0 %v802
  %v804 = vpop.xlane.xlu0 %803
  %v805 = vsel %vm527, %v717, 0.0
  %806 = vadd.xlane.f32.xlu0 %v805
  %v807 = vpop.xlane.xlu0 %806
  %v808 = vsel %vm527, %v718, 0.0
  %809 = vadd.xlane.f32.xlu0 %v808
  %v810 = vpop.xlane.xlu0 %809
  %v811 = vsel %vm527, %v719, 0.0
  %812 = vadd.xlane.f32.xlu0 %v811
  %v813 = vpop.xlane.xlu0 %812
  %v814 = vsel %vm527, %v720, 0.0
  %815 = vadd.xlane.f32.xlu0 %v814
  %v816 = vpop.xlane.xlu0 %815
  %v817 = vmul.f32 %v723, %v624
  %v818 = vmul.f32 %v726, %v624
  %v819 = vmul.f32 %v729, %v624
  %v820 = vmul.f32 %v732, %v624
  %v821 = vmul.f32 %v735, %v624
  %v822 = vmul.f32 %v738, %v624
  %v823 = vmul.f32 %v741, %v624
  %v824 = vmul.f32 %v744, %v624
  %v825 = vmul.f32 %v747, %v624
  %v826 = vmul.f32 %v750, %v624
  %v827 = vmul.f32 %v753, %v624
  %v828 = vmul.f32 %v756, %v624
  %v829 = vmul.f32 %v759, %v624
  %v830 = vmul.f32 %v762, %v624
  %v831 = vmul.f32 %v765, %v624
  %v832 = vmul.f32 %v768, %v624
  %v833 = vmul.f32 %v771, %v624
  %v834 = vmul.f32 %v774, %v624
  %v835 = vmul.f32 %v777, %v624
  %v836 = vmul.f32 %v780, %v624
  %v837 = vmul.f32 %v783, %v624
  %v838 = vmul.f32 %v786, %v624
  %v839 = vmul.f32 %v789, %v624
  %v840 = vmul.f32 %v792, %v624
  %v841 = vmul.f32 %v795, %v624
  %v842 = vmul.f32 %v798, %v624
  %v843 = vmul.f32 %v801, %v624
  %v844 = vmul.f32 %v804, %v624
  %v845 = vmul.f32 %v807, %v624
  %v846 = vmul.f32 %v810, %v624
  %v847 = vmul.f32 %v813, %v624
  %v848 = vmul.f32 %v816, %v624
  %v849 = vadd.f32 %v817, 1e-05
  %v850 = vadd.f32 %v818, 1e-05
  %v851 = vadd.f32 %v819, 1e-05
  %v852 = vadd.f32 %v820, 1e-05
  %v853 = vadd.f32 %v821, 1e-05
  %v854 = vadd.f32 %v822, 1e-05
  %v855 = vadd.f32 %v823, 1e-05
  %v856 = vadd.f32 %v824, 1e-05
  %v857 = vadd.f32 %v825, 1e-05
  %v858 = vadd.f32 %v826, 1e-05
  %v859 = vadd.f32 %v827, 1e-05
  %v860 = vadd.f32 %v828, 1e-05
  %v861 = vadd.f32 %v829, 1e-05
  %v862 = vadd.f32 %v830, 1e-05
  %v863 = vadd.f32 %v831, 1e-05
  %v864 = vadd.f32 %v832, 1e-05
  %v865 = vadd.f32 %v833, 1e-05
  %v866 = vadd.f32 %v834, 1e-05
  %v867 = vadd.f32 %v835, 1e-05
  %v868 = vadd.f32 %v836, 1e-05
  %v869 = vadd.f32 %v837, 1e-05
  %v870 = vadd.f32 %v838, 1e-05
  %v871 = vadd.f32 %v839, 1e-05
  %v872 = vadd.f32 %v840, 1e-05
  %v873 = vadd.f32 %v841, 1e-05
  %v874 = vadd.f32 %v842, 1e-05
  %v875 = vadd.f32 %v843, 1e-05
  %v876 = vadd.f32 %v844, 1e-05
  %v877 = vadd.f32 %v845, 1e-05
  %v878 = vadd.f32 %v846, 1e-05
  %v879 = vadd.f32 %v847, 1e-05
  %v880 = vadd.f32 %v848, 1e-05
  %v881 = vrsqrt.pop %v849
  %v882 = vrsqrt.pop %v850
  %v883 = vrsqrt.pop %v851
  %v884 = vrsqrt.pop %v852
  %v885 = vrsqrt.pop %v853
  %v886 = vrsqrt.pop %v854
  %v887 = vrsqrt.pop %v855
  %v888 = vrsqrt.pop %v856
  %v889 = vrsqrt.pop %v857
  %v890 = vrsqrt.pop %v858
  %v891 = vrsqrt.pop %v859
  %v892 = vrsqrt.pop %v860
  %v893 = vrsqrt.pop %v861
  %v894 = vrsqrt.pop %v862
  %v895 = vrsqrt.pop %v863
  %v896 = vrsqrt.pop %v864
  %v897 = vrsqrt.pop %v865
  %v898 = vrsqrt.pop %v866
  %v899 = vrsqrt.pop %v867
  %v900 = vrsqrt.pop %v868
  %v901 = vrsqrt.pop %v869
  %v902 = vrsqrt.pop %v870
  %v903 = vrsqrt.pop %v871
  %v904 = vrsqrt.pop %v872
  %v905 = vrsqrt.pop %v873
  %v906 = vrsqrt.pop %v874
  %v907 = vrsqrt.pop %v875
  %v908 = vrsqrt.pop %v876
  %v909 = vrsqrt.pop %v877
  %v910 = vrsqrt.pop %v878
  %v911 = vrsqrt.pop %v879
  %v912 = vrsqrt.pop %v880
  %v913 = vmul.f32 %v657, %v881
  %v914 = vmul.f32 %v658, %v882
  %v915 = vmul.f32 %v659, %v883
  %v916 = vmul.f32 %v660, %v884
  %v917 = vmul.f32 %v661, %v885
  %v918 = vmul.f32 %v662, %v886
  %v919 = vmul.f32 %v663, %v887
  %v920 = vmul.f32 %v664, %v888
  %v921 = vmul.f32 %v665, %v889
  %v922 = vmul.f32 %v666, %v890
  %v923 = vmul.f32 %v667, %v891
  %v924 = vmul.f32 %v668, %v892
  %v925 = vmul.f32 %v669, %v893
  %v926 = vmul.f32 %v670, %v894
  %v927 = vmul.f32 %v671, %v895
  %v928 = vmul.f32 %v672, %v896
  %v929 = vmul.f32 %v673, %v897
  %v930 = vmul.f32 %v674, %v898
  %v931 = vmul.f32 %v675, %v899
  %v932 = vmul.f32 %v676, %v900
  %v933 = vmul.f32 %v677, %v901
  %v934 = vmul.f32 %v678, %v902
  %v935 = vmul.f32 %v679, %v903
  %v936 = vmul.f32 %v680, %v904
  %v937 = vmul.f32 %v681, %v905
  %v938 = vmul.f32 %v682, %v906
  %v939 = vmul.f32 %v683, %v907
  %v940 = vmul.f32 %v684, %v908
  %v941 = vmul.f32 %v685, %v909
  %v942 = vmul.f32 %v686, %v910
  %v943 = vmul.f32 %v687, %v911
  %v944 = vmul.f32 %v688, %v912
  %v946 = vlaneseq
  %v947 = vshrl.u32 %v946, 7
  %v948 = vsub.s32 0, %v947
  %v949 = vrot.slane %v525, %v948
  %v951 = vmul.f32 %v913, %v949
  %v952 = vmul.f32 %v914, %v949
  %v953 = vmul.f32 %v915, %v949
  %v954 = vmul.f32 %v916, %v949
  %v955 = vmul.f32 %v917, %v949
  %v956 = vmul.f32 %v918, %v949
  %v957 = vmul.f32 %v919, %v949
  %v958 = vmul.f32 %v920, %v949
  %v959 = vmul.f32 %v921, %v949
  %v960 = vmul.f32 %v922, %v949
  %v961 = vmul.f32 %v923, %v949
  %v962 = vmul.f32 %v924, %v949
  %v963 = vmul.f32 %v925, %v949
  %v964 = vmul.f32 %v926, %v949
  %v965 = vmul.f32 %v927, %v949
  %v966 = vmul.f32 %v928, %v949
  %v967 = vmul.f32 %v929, %v949
  %v968 = vmul.f32 %v930, %v949
  %v969 = vmul.f32 %v931, %v949
  %v970 = vmul.f32 %v932, %v949
  %v971 = vmul.f32 %v933, %v949
  %v972 = vmul.f32 %v934, %v949
  %v973 = vmul.f32 %v935, %v949
  %v974 = vmul.f32 %v936, %v949
  %v975 = vmul.f32 %v937, %v949
  %v976 = vmul.f32 %v938, %v949
  %v977 = vmul.f32 %v939, %v949
  %v978 = vmul.f32 %v940, %v949
  %v979 = vmul.f32 %v941, %v949
  %v980 = vmul.f32 %v942, %v949
  %v981 = vmul.f32 %v943, %v949
  %v982 = vmul.f32 %v944, %v949
  %v984 = vlaneseq
  %v985 = vshrl.u32 %v984, 7
  %v986 = vsub.s32 0, %v985
  %v987 = vrot.slane %v526, %v986
  %v989 = vadd.f32 %v951, %v987
  %v990 = vadd.f32 %v952, %v987
  %v991 = vadd.f32 %v953, %v987
  %v992 = vadd.f32 %v954, %v987
  %v993 = vadd.f32 %v955, %v987
  %v994 = vadd.f32 %v956, %v987
  %v995 = vadd.f32 %v957, %v987
  %v996 = vadd.f32 %v958, %v987
  %v997 = vadd.f32 %v959, %v987
  %v998 = vadd.f32 %v960, %v987
  %v999 = vadd.f32 %v961, %v987
  %v1000 = vadd.f32 %v962, %v987
  %v1001 = vadd.f32 %v963, %v987
  %v1002 = vadd.f32 %v964, %v987
  %v1003 = vadd.f32 %v965, %v987
  %v1004 = vadd.f32 %v966, %v987
  %v1005 = vadd.f32 %v967, %v987
  %v1006 = vadd.f32 %v968, %v987
  %v1007 = vadd.f32 %v969, %v987
  %v1008 = vadd.f32 %v970, %v987
  %v1009 = vadd.f32 %v971, %v987
  %v1010 = vadd.f32 %v972, %v987
  %v1011 = vadd.f32 %v973, %v987
  %v1012 = vadd.f32 %v974, %v987
  %v1013 = vadd.f32 %v975, %v987
  %v1014 = vadd.f32 %v976, %v987
  %v1015 = vadd.f32 %v977, %v987
  %v1016 = vadd.f32 %v978, %v987
  %v1017 = vadd.f32 %v979, %v987
  %v1018 = vadd.f32 %v980, %v987
  %v1019 = vadd.f32 %v981, %v987
  %v1020 = vadd.f32 %v982, %v987
  %v1021 = vpack.c.bf16 %v990, %v989
  %v1022 = vpack.c.bf16 %v992, %v991
  %v1023 = vpack.c.bf16 %v994, %v993
  %v1024 = vpack.c.bf16 %v996, %v995
  %v1025 = vpack.c.bf16 %v998, %v997
  %v1026 = vpack.c.bf16 %v1000, %v999
  %v1027 = vpack.c.bf16 %v1002, %v1001
  %v1028 = vpack.c.bf16 %v1004, %v1003
  %v1029 = vpack.c.bf16 %v1006, %v1005
  %v1030 = vpack.c.bf16 %v1008, %v1007
  %v1031 = vpack.c.bf16 %v1010, %v1009
  %v1032 = vpack.c.bf16 %v1012, %v1011
  %v1033 = vpack.c.bf16 %v1014, %v1013
  %v1034 = vpack.c.bf16 %v1016, %v1015
  %v1035 = vpack.c.bf16 %v1018, %v1017
  %v1036 = vpack.c.bf16 %v1020, %v1019
  %v1037 = vld [vmem:[%s10] sm:$0xf]
  %v1038 = vld [vmem:[%s10 + $0x4] sm:$0xf]
  %v1039 = vld [vmem:[%s10 + $0x8] sm:$0xf]
  %v1040 = vld [vmem:[%s10 + $0xc] sm:$0xf]
  %v1041 = vld [vmem:[%s11] sm:$0x1]
  %v1043 = vlaneseq
  %v1044 = vshrl.u32 %v1043, 7
  %v1045 = vsub.s32 0, %v1044
  %v1046 = vrot.slane %v1041, %v1045
  %v1052 = vunpack.c.l.b16 %v1037
  %v1053 = vunpack.c.l.b16 %v1038
  %v1054 = vunpack.c.l.b16 %v1039
  %v1055 = vunpack.c.l.b16 %v1040
  %v1056 = vpack.c.b16 %v1053, %v1052
  %v1057 = vpack.c.b16 %v1055, %v1054
  %v1061 = vsel %vm527, %v1021, 0
  %v1064 = vsel %vm527, %v1022, 0
  %v1067 = vsel %vm527, %v1023, 0
  %v1070 = vsel %vm527, %v1024, 0
  %v1073 = vsel %vm527, %v1025, 0
  %v1076 = vsel %vm527, %v1026, 0
  %v1079 = vsel %vm527, %v1027, 0
  %v1082 = vsel %vm527, %v1028, 0
  %v1085 = vsel %vm527, %v1029, 0
  %v1088 = vsel %vm527, %v1030, 0
  %v1091 = vsel %vm527, %v1031, 0
  %v1094 = vsel %vm527, %v1032, 0
  %v1097 = vsel %vm527, %v1033, 0
  %v1100 = vsel %vm527, %v1034, 0
  %v1103 = vsel %vm527, %v1035, 0
  %v1106 = vsel %vm527, %v1036, 0
  %1108 = vmatprep.subr.bf16.mxu0 0
  %1109 = vmatpush1.bf16.msra.mxu0 0
  %1110 = vmatprep.subr.bf16.mxu0 0
  %1111 = vmatpush1.bf16.msra.mxu0 0
  %1112 = vmatprep.subr.bf16.mxu0 0
  %1113 = vmatpush1.bf16.msra.mxu0 0
  %1114 = vmatprep.subr.bf16.mxu0 0
  %1115 = vmatpush1.bf16.msra.mxu0 0
  %1116 = vmatprep.subr.bf16.mxu0 0
  %1117 = vmatpush1.bf16.msra.mxu0 0
  %1118 = vmatprep.subr.bf16.mxu0 0
  %1119 = vmatpush1.bf16.msra.mxu0 0
  %1120 = vmatprep.subr.bf16.mxu0 0
  %1121 = vmatpush1.bf16.msra.mxu0 %v1057
  %1122 = vmatprep.subr.bf16.mxu0 0
  %1123 = vmatpush1.bf16.msra.mxu0 %v1056
  %1124 = vmatprep.subr.bf16.mxu0 0
  %1125 = vmatpush2.bf16.msra.mxu0 0
  %1126 = vmatprep.subr.bf16.mxu0 0
  %1127 = vmatpush2.bf16.msra.mxu0 0
  %1128 = vmatprep.subr.bf16.mxu0 0
  %1129 = vmatpush2.bf16.msra.mxu0 0
  %1130 = vmatprep.subr.bf16.mxu0 0
  %1131 = vmatpush2.bf16.msra.mxu0 0
  %1132 = vmatprep.subr.bf16.mxu0 0
  %1133 = vmatpush2.bf16.msra.mxu0 0
  %1134 = vmatprep.subr.bf16.mxu0 0
  %1135 = vmatpush2.bf16.msra.mxu0 0
  %1136 = vmatprep.subr.bf16.mxu0 0
  %1137 = vmatpush2.bf16.msra.mxu0 0
  %1138 = vmatprep.subr.bf16.mxu0 0
  %1139 = vmatpush2.bf16.msra.mxu0 0
  %1140 = vmatprep.mubr.bf16.mxu0 0
  %1141 = vmatmul.mubr.bf16.gmra.mxu0 %v1061
  %v1142 = vpop.f32.mrf.mxu0
  %v1143 = vadd.f32 %v1046, %v1142
  %v1144 = vpop.f32.mrf.mxu0
  %v1145 = vpop.f32.mrf.mxu0
  %v1146 = vadd.f32 %v1046, %v1145
  %v1147 = vpop.f32.mrf.mxu0
  %1148 = vmatprep.mubr.bf16.mxu0 0
  %1149 = vmatmul.mubr.bf16.gmra.mxu0 %v1064
  %v1150 = vpop.f32.mrf.mxu0
  %v1151 = vadd.f32 %v1046, %v1150
  %v1152 = vpop.f32.mrf.mxu0
  %v1153 = vpop.f32.mrf.mxu0
  %v1154 = vadd.f32 %v1046, %v1153
  %v1155 = vpop.f32.mrf.mxu0
  %1156 = vmatprep.mubr.bf16.mxu0 0
  %1157 = vmatmul.mubr.bf16.gmra.mxu0 %v1067
  %v1158 = vpop.f32.mrf.mxu0
  %v1159 = vadd.f32 %v1046, %v1158
  %v1160 = vpop.f32.mrf.mxu0
  %v1161 = vpop.f32.mrf.mxu0
  %v1162 = vadd.f32 %v1046, %v1161
  %v1163 = vpop.f32.mrf.mxu0
  %1164 = vmatprep.mubr.bf16.mxu0 0
  %1165 = vmatmul.mubr.bf16.gmra.mxu0 %v1070
  %v1166 = vpop.f32.mrf.mxu0
  %v1167 = vadd.f32 %v1046, %v1166
  %v1168 = vpop.f32.mrf.mxu0
  %v1169 = vpop.f32.mrf.mxu0
  %v1170 = vadd.f32 %v1046, %v1169
  %v1171 = vpop.f32.mrf.mxu0
  %1172 = vmatprep.mubr.bf16.mxu0 0
  %1173 = vmatmul.mubr.bf16.gmra.mxu0 %v1073
  %v1174 = vpop.f32.mrf.mxu0
  %v1175 = vadd.f32 %v1046, %v1174
  %v1176 = vpop.f32.mrf.mxu0
  %v1177 = vpop.f32.mrf.mxu0
  %v1178 = vadd.f32 %v1046, %v1177
  %v1179 = vpop.f32.mrf.mxu0
  %1180 = vmatprep.mubr.bf16.mxu0 0
  %1181 = vmatmul.mubr.bf16.gmra.mxu0 %v1076
  %v1182 = vpop.f32.mrf.mxu0
  %v1183 = vadd.f32 %v1046, %v1182
  %v1184 = vpop.f32.mrf.mxu0
  %v1185 = vpop.f32.mrf.mxu0
  %v1186 = vadd.f32 %v1046, %v1185
  %v1187 = vpop.f32.mrf.mxu0
  %1188 = vmatprep.mubr.bf16.mxu0 0
  %1189 = vmatmul.mubr.bf16.gmra.mxu0 %v1079
  %v1190 = vpop.f32.mrf.mxu0
  %v1191 = vadd.f32 %v1046, %v1190
  %v1192 = vpop.f32.mrf.mxu0
  %v1193 = vpop.f32.mrf.mxu0
  %v1194 = vadd.f32 %v1046, %v1193
  %v1195 = vpop.f32.mrf.mxu0
  %1196 = vmatprep.mubr.bf16.mxu0 0
  %1197 = vmatmul.mubr.bf16.gmra.mxu0 %v1082
  %v1198 = vpop.f32.mrf.mxu0
  %v1199 = vadd.f32 %v1046, %v1198
  %v1200 = vpop.f32.mrf.mxu0
  %v1201 = vpop.f32.mrf.mxu0
  %v1202 = vadd.f32 %v1046, %v1201
  %v1203 = vpop.f32.mrf.mxu0
  %1204 = vmatprep.mubr.bf16.mxu0 0
  %1205 = vmatmul.mubr.bf16.gmra.mxu0 %v1085
  %v1206 = vpop.f32.mrf.mxu0
  %v1207 = vadd.f32 %v1046, %v1206
  %v1208 = vpop.f32.mrf.mxu0
  %v1209 = vpop.f32.mrf.mxu0
  %v1210 = vadd.f32 %v1046, %v1209
  %v1211 = vpop.f32.mrf.mxu0
  %1212 = vmatprep.mubr.bf16.mxu0 0
  %1213 = vmatmul.mubr.bf16.gmra.mxu0 %v1088
  %v1214 = vpop.f32.mrf.mxu0
  %v1215 = vadd.f32 %v1046, %v1214
  %v1216 = vpop.f32.mrf.mxu0
  %v1217 = vpop.f32.mrf.mxu0
  %v1218 = vadd.f32 %v1046, %v1217
  %v1219 = vpop.f32.mrf.mxu0
  %1220 = vmatprep.mubr.bf16.mxu0 0
  %1221 = vmatmul.mubr.bf16.gmra.mxu0 %v1091
  %v1222 = vpop.f32.mrf.mxu0
  %v1223 = vadd.f32 %v1046, %v1222
  %v1224 = vpop.f32.mrf.mxu0
  %v1225 = vpop.f32.mrf.mxu0
  %v1226 = vadd.f32 %v1046, %v1225
  %v1227 = vpop.f32.mrf.mxu0
  %1228 = vmatprep.mubr.bf16.mxu0 0
  %1229 = vmatmul.mubr.bf16.gmra.mxu0 %v1094
  %v1230 = vpop.f32.mrf.mxu0
  %v1231 = vadd.f32 %v1046, %v1230
  %v1232 = vpop.f32.mrf.mxu0
  %v1233 = vpop.f32.mrf.mxu0
  %v1234 = vadd.f32 %v1046, %v1233
  %v1235 = vpop.f32.mrf.mxu0
  %1236 = vmatprep.mubr.bf16.mxu0 0
  %1237 = vmatmul.mubr.bf16.gmra.mxu0 %v1097
  %v1238 = vpop.f32.mrf.mxu0
  %v1239 = vadd.f32 %v1046, %v1238
  %v1240 = vpop.f32.mrf.mxu0
  %v1241 = vpop.f32.mrf.mxu0
  %v1242 = vadd.f32 %v1046, %v1241
  %v1243 = vpop.f32.mrf.mxu0
  %1244 = vmatprep.mubr.bf16.mxu0 0
  %1245 = vmatmul.mubr.bf16.gmra.mxu0 %v1100
  %v1246 = vpop.f32.mrf.mxu0
  %v1247 = vadd.f32 %v1046, %v1246
  %v1248 = vpop.f32.mrf.mxu0
  %v1249 = vpop.f32.mrf.mxu0
  %v1250 = vadd.f32 %v1046, %v1249
  %v1251 = vpop.f32.mrf.mxu0
  %1252 = vmatprep.mubr.bf16.mxu0 0
  %1253 = vmatmul.mubr.bf16.gmra.mxu0 %v1103
  %v1254 = vpop.f32.mrf.mxu0
  %v1255 = vadd.f32 %v1046, %v1254
  %v1256 = vpop.f32.mrf.mxu0
  %v1257 = vpop.f32.mrf.mxu0
  %v1258 = vadd.f32 %v1046, %v1257
  %v1259 = vpop.f32.mrf.mxu0
  %1260 = vmatprep.mubr.bf16.mxu0 0
  %1261 = vmatmul.mubr.bf16.gmra.mxu0 %v1106
  %v1262 = vpop.f32.mrf.mxu0
  %v1263 = vadd.f32 %v1046, %v1262
  %v1264 = vpop.f32.mrf.mxu0
  %v1265 = vpop.f32.mrf.mxu0
  %v1266 = vadd.f32 %v1046, %v1265
  %v1267 = vpop.f32.mrf.mxu0
  %1268 = vdwg.mxu0
  %v1269 = vpack.c.bf16 %v1146, %v1143
  %v1270 = vpack.c.bf16 %v1154, %v1151
  %v1271 = vpack.c.bf16 %v1162, %v1159
  %v1272 = vpack.c.bf16 %v1170, %v1167
  %v1273 = vpack.c.bf16 %v1178, %v1175
  %v1274 = vpack.c.bf16 %v1186, %v1183
  %v1275 = vpack.c.bf16 %v1194, %v1191
  %v1276 = vpack.c.bf16 %v1202, %v1199
  %v1277 = vpack.c.bf16 %v1210, %v1207
  %v1278 = vpack.c.bf16 %v1218, %v1215
  %v1279 = vpack.c.bf16 %v1226, %v1223
  %v1280 = vpack.c.bf16 %v1234, %v1231
  %v1281 = vpack.c.bf16 %v1242, %v1239
  %v1282 = vpack.c.bf16 %v1250, %v1247
  %v1283 = vpack.c.bf16 %v1258, %v1255
  %v1284 = vpack.c.bf16 %v1266, %v1263
  %v1301 = vunpack.c.l.b16 %v1269
  %v1302 = vunpack.c.h.b16 %v1269
  %v1303 = vunpack.c.l.b16 %v1270
  %v1304 = vunpack.c.h.b16 %v1270
  %v1305 = vunpack.c.l.b16 %v1271
  %v1306 = vunpack.c.h.b16 %v1271
  %v1307 = vunpack.c.l.b16 %v1272
  %v1308 = vunpack.c.h.b16 %v1272
  %v1309 = vunpack.c.l.b16 %v1273
  %v1310 = vunpack.c.h.b16 %v1273
  %v1311 = vunpack.c.l.b16 %v1274
  %v1312 = vunpack.c.h.b16 %v1274
  %v1313 = vunpack.c.l.b16 %v1275
  %v1314 = vunpack.c.h.b16 %v1275
  %v1315 = vunpack.c.l.b16 %v1276
  %v1316 = vunpack.c.h.b16 %v1276
  %v1317 = vunpack.c.l.b16 %v1277
  %v1318 = vunpack.c.h.b16 %v1277
  %v1319 = vunpack.c.l.b16 %v1278
  %v1320 = vunpack.c.h.b16 %v1278
  %v1321 = vunpack.c.l.b16 %v1279
  %v1322 = vunpack.c.h.b16 %v1279
  %v1323 = vunpack.c.l.b16 %v1280
  %v1324 = vunpack.c.h.b16 %v1280
  %v1325 = vunpack.c.l.b16 %v1281
  %v1326 = vunpack.c.h.b16 %v1281
  %v1327 = vunpack.c.l.b16 %v1282
  %v1328 = vunpack.c.h.b16 %v1282
  %v1329 = vunpack.c.l.b16 %v1283
  %v1330 = vunpack.c.h.b16 %v1283
  %v1331 = vunpack.c.l.b16 %v1284
  %v1332 = vunpack.c.h.b16 %v1284
  %v1333 = vpack.c.b16 %v1301, %v1301
  %v1334 = vpack.c.b16 %v1302, %v1302
  %v1335 = vpack.c.b16 %v1303, %v1303
  %v1336 = vpack.c.b16 %v1304, %v1304
  %v1337 = vpack.c.b16 %v1305, %v1305
  %v1338 = vpack.c.b16 %v1306, %v1306
  %v1339 = vpack.c.b16 %v1307, %v1307
  %v1340 = vpack.c.b16 %v1308, %v1308
  %v1341 = vpack.c.b16 %v1309, %v1309
  %v1342 = vpack.c.b16 %v1310, %v1310
  %v1343 = vpack.c.b16 %v1311, %v1311
  %v1344 = vpack.c.b16 %v1312, %v1312
  %v1345 = vpack.c.b16 %v1313, %v1313
  %v1346 = vpack.c.b16 %v1314, %v1314
  %v1347 = vpack.c.b16 %v1315, %v1315
  %v1348 = vpack.c.b16 %v1316, %v1316
  %v1349 = vpack.c.b16 %v1317, %v1317
  %v1350 = vpack.c.b16 %v1318, %v1318
  %v1351 = vpack.c.b16 %v1319, %v1319
  %v1352 = vpack.c.b16 %v1320, %v1320
  %v1353 = vpack.c.b16 %v1321, %v1321
  %v1354 = vpack.c.b16 %v1322, %v1322
  %v1355 = vpack.c.b16 %v1323, %v1323
  %v1356 = vpack.c.b16 %v1324, %v1324
  %v1357 = vpack.c.b16 %v1325, %v1325
  %v1358 = vpack.c.b16 %v1326, %v1326
  %v1359 = vpack.c.b16 %v1327, %v1327
  %v1360 = vpack.c.b16 %v1328, %v1328
  %v1361 = vpack.c.b16 %v1329, %v1329
  %v1362 = vpack.c.b16 %v1330, %v1330
  %v1363 = vpack.c.b16 %v1331, %v1331
  %v1364 = vpack.c.b16 %v1332, %v1332
  %vm1397 = vcmask 257024
  %1398 = vst.msk [vmem:[%s16] sm:$0xf] %vm1397, %v1333
  %1399 = vst.msk [vmem:[%s16 + $0x4] sm:$0xf] %vm1397, %v1334
  %1400 = vst.msk [vmem:[%s16 + $0x8] sm:$0xf] %vm1397, %v1335
  %1401 = vst.msk [vmem:[%s16 + $0xc] sm:$0xf] %vm1397, %v1336
  %1402 = vst.msk [vmem:[%s16 + $0x10] sm:$0xf] %vm1397, %v1337
  %1403 = vst.msk [vmem:[%s16 + $0x14] sm:$0xf] %vm1397, %v1338
  %1404 = vst.msk [vmem:[%s16 + $0x18] sm:$0xf] %vm1397, %v1339
  %1405 = vst.msk [vmem:[%s16 + $0x1c] sm:$0xf] %vm1397, %v1340
  %1406 = vst.msk [vmem:[%s16 + $0x20] sm:$0xf] %vm1397, %v1341
  %1407 = vst.msk [vmem:[%s16 + $0x24] sm:$0xf] %vm1397, %v1342
  %1408 = vst.msk [vmem:[%s16 + $0x28] sm:$0xf] %vm1397, %v1343
  %1409 = vst.msk [vmem:[%s16 + $0x2c] sm:$0xf] %vm1397, %v1344
  %1410 = vst.msk [vmem:[%s16 + $0x30] sm:$0xf] %vm1397, %v1345
  %1411 = vst.msk [vmem:[%s16 + $0x34] sm:$0xf] %vm1397, %v1346
  %1412 = vst.msk [vmem:[%s16 + $0x38] sm:$0xf] %vm1397, %v1347
  %1413 = vst.msk [vmem:[%s16 + $0x3c] sm:$0xf] %vm1397, %v1348
  %1414 = vst.msk [vmem:[%s16 + $0x40] sm:$0xf] %vm1397, %v1349
  %1415 = vst.msk [vmem:[%s16 + $0x44] sm:$0xf] %vm1397, %v1350
  %1416 = vst.msk [vmem:[%s16 + $0x48] sm:$0xf] %vm1397, %v1351
  %1417 = vst.msk [vmem:[%s16 + $0x4c] sm:$0xf] %vm1397, %v1352
  %1418 = vst.msk [vmem:[%s16 + $0x50] sm:$0xf] %vm1397, %v1353
  %1419 = vst.msk [vmem:[%s16 + $0x54] sm:$0xf] %vm1397, %v1354
  %1420 = vst.msk [vmem:[%s16 + $0x58] sm:$0xf] %vm1397, %v1355
  %1421 = vst.msk [vmem:[%s16 + $0x5c] sm:$0xf] %vm1397, %v1356
  %1422 = vst.msk [vmem:[%s16 + $0x60] sm:$0xf] %vm1397, %v1357
  %1423 = vst.msk [vmem:[%s16 + $0x64] sm:$0xf] %vm1397, %v1358
  %1424 = vst.msk [vmem:[%s16 + $0x68] sm:$0xf] %vm1397, %v1359
  %1425 = vst.msk [vmem:[%s16 + $0x6c] sm:$0xf] %vm1397, %v1360
  %1426 = vst.msk [vmem:[%s16 + $0x70] sm:$0xf] %vm1397, %v1361
  %1427 = vst.msk [vmem:[%s16 + $0x74] sm:$0xf] %vm1397, %v1362
  %1428 = vst.msk [vmem:[%s16 + $0x78] sm:$0xf] %vm1397, %v1363
  %1429 = vst.msk [vmem:[%s16 + $0x7c] sm:$0xf] %vm1397, %v1364
  %v1430 = vld [vmem:[%s5] sm:$0x1]
  %v1432 = vlaneseq
  %v1433 = vshrl.u32 %v1432, 7
  %v1434 = vsub.s32 0, %v1433
  %v1435 = vrot.slane %v1430, %v1434
  %v1437 = vmul.f32 %v88, %v1435
  %v1438 = vmul.f32 %v89, %v1435
  %v1439 = vmul.f32 %v90, %v1435
  %v1440 = vmul.f32 %v91, %v1435
  %v1441 = vmul.f32 %v92, %v1435
  %v1442 = vmul.f32 %v93, %v1435
  %v1443 = vmul.f32 %v94, %v1435
  %v1444 = vmul.f32 %v95, %v1435
  %v1445 = vmul.f32 %v96, %v1435
  %v1446 = vmul.f32 %v97, %v1435
  %v1447 = vmul.f32 %v98, %v1435
  %v1448 = vmul.f32 %v99, %v1435
  %v1449 = vmul.f32 %v100, %v1435
  %v1450 = vmul.f32 %v101, %v1435
  %v1451 = vmul.f32 %v102, %v1435
  %v1452 = vmul.f32 %v103, %v1435
  %v1453 = vmul.f32 %v104, %v1435
  %v1454 = vmul.f32 %v105, %v1435
  %v1455 = vmul.f32 %v106, %v1435
  %v1456 = vmul.f32 %v107, %v1435
  %v1457 = vmul.f32 %v108, %v1435
  %v1458 = vmul.f32 %v109, %v1435
  %v1459 = vmul.f32 %v110, %v1435
  %v1460 = vmul.f32 %v111, %v1435
  %v1461 = vmul.f32 %v112, %v1435
  %v1462 = vmul.f32 %v113, %v1435
  %v1463 = vmul.f32 %v114, %v1435
  %v1464 = vmul.f32 %v115, %v1435
  %v1465 = vmul.f32 %v116, %v1435
  %v1466 = vmul.f32 %v117, %v1435
  %v1467 = vmul.f32 %v118, %v1435
  %v1468 = vmul.f32 %v119, %v1435
  %v1469 = vld [vmem:[%s6] sm:$0x1]
  %v1471 = vlaneseq
  %v1472 = vshrl.u32 %v1471, 7
  %v1473 = vsub.s32 0, %v1472
  %v1474 = vrot.slane %v1469, %v1473
  %v1476 = vadd.f32 %v1437, %v1474
  %v1477 = vadd.f32 %v1438, %v1474
  %v1478 = vadd.f32 %v1439, %v1474
  %v1479 = vadd.f32 %v1440, %v1474
  %v1480 = vadd.f32 %v1441, %v1474
  %v1481 = vadd.f32 %v1442, %v1474
  %v1482 = vadd.f32 %v1443, %v1474
  %v1483 = vadd.f32 %v1444, %v1474
  %v1484 = vadd.f32 %v1445, %v1474
  %v1485 = vadd.f32 %v1446, %v1474
  %v1486 = vadd.f32 %v1447, %v1474
  %v1487 = vadd.f32 %v1448, %v1474
  %v1488 = vadd.f32 %v1449, %v1474
  %v1489 = vadd.f32 %v1450, %v1474
  %v1490 = vadd.f32 %v1451, %v1474
  %v1491 = vadd.f32 %v1452, %v1474
  %v1492 = vadd.f32 %v1453, %v1474
  %v1493 = vadd.f32 %v1454, %v1474
  %v1494 = vadd.f32 %v1455, %v1474
  %v1495 = vadd.f32 %v1456, %v1474
  %v1496 = vadd.f32 %v1457, %v1474
  %v1497 = vadd.f32 %v1458, %v1474
  %v1498 = vadd.f32 %v1459, %v1474
  %v1499 = vadd.f32 %v1460, %v1474
  %v1500 = vadd.f32 %v1461, %v1474
  %v1501 = vadd.f32 %v1462, %v1474
  %v1502 = vadd.f32 %v1463, %v1474
  %v1503 = vadd.f32 %v1464, %v1474
  %v1504 = vadd.f32 %v1465, %v1474
  %v1505 = vadd.f32 %v1466, %v1474
  %v1506 = vadd.f32 %v1467, %v1474
  %v1507 = vadd.f32 %v1468, %v1474
  %v1508 = vmax.f32 %v1476, 0.0
  %v1509 = vmax.f32 %v1477, 0.0
  %v1510 = vmax.f32 %v1478, 0.0
  %v1511 = vmax.f32 %v1479, 0.0
  %v1512 = vmax.f32 %v1480, 0.0
  %v1513 = vmax.f32 %v1481, 0.0
  %v1514 = vmax.f32 %v1482, 0.0
  %v1515 = vmax.f32 %v1483, 0.0
  %v1516 = vmax.f32 %v1484, 0.0
  %v1517 = vmax.f32 %v1485, 0.0
  %v1518 = vmax.f32 %v1486, 0.0
  %v1519 = vmax.f32 %v1487, 0.0
  %v1520 = vmax.f32 %v1488, 0.0
  %v1521 = vmax.f32 %v1489, 0.0
  %v1522 = vmax.f32 %v1490, 0.0
  %v1523 = vmax.f32 %v1491, 0.0
  %v1524 = vmax.f32 %v1492, 0.0
  %v1525 = vmax.f32 %v1493, 0.0
  %v1526 = vmax.f32 %v1494, 0.0
  %v1527 = vmax.f32 %v1495, 0.0
  %v1528 = vmax.f32 %v1496, 0.0
  %v1529 = vmax.f32 %v1497, 0.0
  %v1530 = vmax.f32 %v1498, 0.0
  %v1531 = vmax.f32 %v1499, 0.0
  %v1532 = vmax.f32 %v1500, 0.0
  %v1533 = vmax.f32 %v1501, 0.0
  %v1534 = vmax.f32 %v1502, 0.0
  %v1535 = vmax.f32 %v1503, 0.0
  %v1536 = vmax.f32 %v1504, 0.0
  %v1537 = vmax.f32 %v1505, 0.0
  %v1538 = vmax.f32 %v1506, 0.0
  %v1539 = vmax.f32 %v1507, 0.0
  %v1540 = vpack.c.bf16 %v1509, %v1508
  %v1541 = vpack.c.bf16 %v1511, %v1510
  %v1542 = vpack.c.bf16 %v1513, %v1512
  %v1543 = vpack.c.bf16 %v1515, %v1514
  %v1544 = vpack.c.bf16 %v1517, %v1516
  %v1545 = vpack.c.bf16 %v1519, %v1518
  %v1546 = vpack.c.bf16 %v1521, %v1520
  %v1547 = vpack.c.bf16 %v1523, %v1522
  %v1548 = vpack.c.bf16 %v1525, %v1524
  %v1549 = vpack.c.bf16 %v1527, %v1526
  %v1550 = vpack.c.bf16 %v1529, %v1528
  %v1551 = vpack.c.bf16 %v1531, %v1530
  %v1552 = vpack.c.bf16 %v1533, %v1532
  %v1553 = vpack.c.bf16 %v1535, %v1534
  %v1554 = vpack.c.bf16 %v1537, %v1536
  %v1555 = vpack.c.bf16 %v1539, %v1538
  %v1556 = vld [vmem:[%s7] sm:$0xf]
  %v1558 = vsel %vm311, %v1540, 0
  %v1561 = vsel %vm311, %v1541, 0
  %v1564 = vsel %vm311, %v1542, 0
  %v1567 = vsel %vm311, %v1543, 0
  %v1570 = vsel %vm311, %v1544, 0
  %v1573 = vsel %vm311, %v1545, 0
  %v1576 = vsel %vm311, %v1546, 0
  %v1579 = vsel %vm311, %v1547, 0
  %v1582 = vsel %vm311, %v1548, 0
  %v1585 = vsel %vm311, %v1549, 0
  %v1588 = vsel %vm311, %v1550, 0
  %v1591 = vsel %vm311, %v1551, 0
  %v1594 = vsel %vm311, %v1552, 0
  %v1597 = vsel %vm311, %v1553, 0
  %v1600 = vsel %vm311, %v1554, 0
  %v1603 = vsel %vm311, %v1555, 0
  %v1606 = vsel %vm360, %v1556, 0
  %1608 = vmatprep.subr.bf16.mxu0 0
  %1609 = vmatpush1.bf16.msra.mxu0 0
  %1610 = vmatprep.subr.bf16.mxu0 0
  %1611 = vmatpush1.bf16.msra.mxu0 0
  %1612 = vmatprep.subr.bf16.mxu0 0
  %1613 = vmatpush1.bf16.msra.mxu0 0
  %1614 = vmatprep.subr.bf16.mxu0 0
  %1615 = vmatpush1.bf16.msra.mxu0 0
  %1616 = vmatprep.subr.bf16.mxu0 0
  %1617 = vmatpush1.bf16.msra.mxu0 0
  %1618 = vmatprep.subr.bf16.mxu0 0
  %1619 = vmatpush1.bf16.msra.mxu0 0
  %1620 = vmatprep.subr.bf16.mxu0 0
  %1621 = vmatpush1.bf16.msra.mxu0 0
  %1622 = vmatprep.subr.bf16.mxu0 0
  %1623 = vmatpush1.bf16.msra.mxu0 %v1606
  %1624 = vmatprep.subr.bf16.mxu0 0
  %1625 = vmatpush2.bf16.msra.mxu0 0
  %1626 = vmatprep.subr.bf16.mxu0 0
  %1627 = vmatpush2.bf16.msra.mxu0 0
  %1628 = vmatprep.subr.bf16.mxu0 0
  %1629 = vmatpush2.bf16.msra.mxu0 0
  %1630 = vmatprep.subr.bf16.mxu0 0
  %1631 = vmatpush2.bf16.msra.mxu0 0
  %1632 = vmatprep.subr.bf16.mxu0 0
  %1633 = vmatpush2.bf16.msra.mxu0 0
  %1634 = vmatprep.subr.bf16.mxu0 0
  %1635 = vmatpush2.bf16.msra.mxu0 0
  %1636 = vmatprep.subr.bf16.mxu0 0
  %1637 = vmatpush2.bf16.msra.mxu0 0
  %1638 = vmatprep.subr.bf16.mxu0 0
  %1639 = vmatpush2.bf16.msra.mxu0 0
  %1640 = vmatprep.mubr.bf16.mxu0 0
  %1641 = vmatmul.mubr.bf16.gmra.mxu0 %v1558
  %v1642 = vpop.f32.mrf.mxu0
  %v1643 = vadd.f32 0.0, %v1642
  %v1644 = vpop.f32.mrf.mxu0
  %v1645 = vpop.f32.mrf.mxu0
  %v1646 = vadd.f32 0.0, %v1645
  %v1647 = vpop.f32.mrf.mxu0
  %1648 = vmatprep.mubr.bf16.mxu0 0
  %1649 = vmatmul.mubr.bf16.gmra.mxu0 %v1561
  %v1650 = vpop.f32.mrf.mxu0
  %v1651 = vadd.f32 0.0, %v1650
  %v1652 = vpop.f32.mrf.mxu0
  %v1653 = vpop.f32.mrf.mxu0
  %v1654 = vadd.f32 0.0, %v1653
  %v1655 = vpop.f32.mrf.mxu0
  %1656 = vmatprep.mubr.bf16.mxu0 0
  %1657 = vmatmul.mubr.bf16.gmra.mxu0 %v1564
  %v1658 = vpop.f32.mrf.mxu0
  %v1659 = vadd.f32 0.0, %v1658
  %v1660 = vpop.f32.mrf.mxu0
  %v1661 = vpop.f32.mrf.mxu0
  %v1662 = vadd.f32 0.0, %v1661
  %v1663 = vpop.f32.mrf.mxu0
  %1664 = vmatprep.mubr.bf16.mxu0 0
  %1665 = vmatmul.mubr.bf16.gmra.mxu0 %v1567
  %v1666 = vpop.f32.mrf.mxu0
  %v1667 = vadd.f32 0.0, %v1666
  %v1668 = vpop.f32.mrf.mxu0
  %v1669 = vpop.f32.mrf.mxu0
  %v1670 = vadd.f32 0.0, %v1669
  %v1671 = vpop.f32.mrf.mxu0
  %1672 = vmatprep.mubr.bf16.mxu0 0
  %1673 = vmatmul.mubr.bf16.gmra.mxu0 %v1570
  %v1674 = vpop.f32.mrf.mxu0
  %v1675 = vadd.f32 0.0, %v1674
  %v1676 = vpop.f32.mrf.mxu0
  %v1677 = vpop.f32.mrf.mxu0
  %v1678 = vadd.f32 0.0, %v1677
  %v1679 = vpop.f32.mrf.mxu0
  %1680 = vmatprep.mubr.bf16.mxu0 0
  %1681 = vmatmul.mubr.bf16.gmra.mxu0 %v1573
  %v1682 = vpop.f32.mrf.mxu0
  %v1683 = vadd.f32 0.0, %v1682
  %v1684 = vpop.f32.mrf.mxu0
  %v1685 = vpop.f32.mrf.mxu0
  %v1686 = vadd.f32 0.0, %v1685
  %v1687 = vpop.f32.mrf.mxu0
  %1688 = vmatprep.mubr.bf16.mxu0 0
  %1689 = vmatmul.mubr.bf16.gmra.mxu0 %v1576
  %v1690 = vpop.f32.mrf.mxu0
  %v1691 = vadd.f32 0.0, %v1690
  %v1692 = vpop.f32.mrf.mxu0
  %v1693 = vpop.f32.mrf.mxu0
  %v1694 = vadd.f32 0.0, %v1693
  %v1695 = vpop.f32.mrf.mxu0
  %1696 = vmatprep.mubr.bf16.mxu0 0
  %1697 = vmatmul.mubr.bf16.gmra.mxu0 %v1579
  %v1698 = vpop.f32.mrf.mxu0
  %v1699 = vadd.f32 0.0, %v1698
  %v1700 = vpop.f32.mrf.mxu0
  %v1701 = vpop.f32.mrf.mxu0
  %v1702 = vadd.f32 0.0, %v1701
  %v1703 = vpop.f32.mrf.mxu0
  %1704 = vmatprep.mubr.bf16.mxu0 0
  %1705 = vmatmul.mubr.bf16.gmra.mxu0 %v1582
  %v1706 = vpop.f32.mrf.mxu0
  %v1707 = vadd.f32 0.0, %v1706
  %v1708 = vpop.f32.mrf.mxu0
  %v1709 = vpop.f32.mrf.mxu0
  %v1710 = vadd.f32 0.0, %v1709
  %v1711 = vpop.f32.mrf.mxu0
  %1712 = vmatprep.mubr.bf16.mxu0 0
  %1713 = vmatmul.mubr.bf16.gmra.mxu0 %v1585
  %v1714 = vpop.f32.mrf.mxu0
  %v1715 = vadd.f32 0.0, %v1714
  %v1716 = vpop.f32.mrf.mxu0
  %v1717 = vpop.f32.mrf.mxu0
  %v1718 = vadd.f32 0.0, %v1717
  %v1719 = vpop.f32.mrf.mxu0
  %1720 = vmatprep.mubr.bf16.mxu0 0
  %1721 = vmatmul.mubr.bf16.gmra.mxu0 %v1588
  %v1722 = vpop.f32.mrf.mxu0
  %v1723 = vadd.f32 0.0, %v1722
  %v1724 = vpop.f32.mrf.mxu0
  %v1725 = vpop.f32.mrf.mxu0
  %v1726 = vadd.f32 0.0, %v1725
  %v1727 = vpop.f32.mrf.mxu0
  %1728 = vmatprep.mubr.bf16.mxu0 0
  %1729 = vmatmul.mubr.bf16.gmra.mxu0 %v1591
  %v1730 = vpop.f32.mrf.mxu0
  %v1731 = vadd.f32 0.0, %v1730
  %v1732 = vpop.f32.mrf.mxu0
  %v1733 = vpop.f32.mrf.mxu0
  %v1734 = vadd.f32 0.0, %v1733
  %v1735 = vpop.f32.mrf.mxu0
  %1736 = vmatprep.mubr.bf16.mxu0 0
  %1737 = vmatmul.mubr.bf16.gmra.mxu0 %v1594
  %v1738 = vpop.f32.mrf.mxu0
  %v1739 = vadd.f32 0.0, %v1738
  %v1740 = vpop.f32.mrf.mxu0
  %v1741 = vpop.f32.mrf.mxu0
  %v1742 = vadd.f32 0.0, %v1741
  %v1743 = vpop.f32.mrf.mxu0
  %1744 = vmatprep.mubr.bf16.mxu0 0
  %1745 = vmatmul.mubr.bf16.gmra.mxu0 %v1597
  %v1746 = vpop.f32.mrf.mxu0
  %v1747 = vadd.f32 0.0, %v1746
  %v1748 = vpop.f32.mrf.mxu0
  %v1749 = vpop.f32.mrf.mxu0
  %v1750 = vadd.f32 0.0, %v1749
  %v1751 = vpop.f32.mrf.mxu0
  %1752 = vmatprep.mubr.bf16.mxu0 0
  %1753 = vmatmul.mubr.bf16.gmra.mxu0 %v1600
  %v1754 = vpop.f32.mrf.mxu0
  %v1755 = vadd.f32 0.0, %v1754
  %v1756 = vpop.f32.mrf.mxu0
  %v1757 = vpop.f32.mrf.mxu0
  %v1758 = vadd.f32 0.0, %v1757
  %v1759 = vpop.f32.mrf.mxu0
  %1760 = vmatprep.mubr.bf16.mxu0 0
  %1761 = vmatmul.mubr.bf16.gmra.mxu0 %v1603
  %v1762 = vpop.f32.mrf.mxu0
  %v1763 = vadd.f32 0.0, %v1762
  %v1764 = vpop.f32.mrf.mxu0
  %v1765 = vpop.f32.mrf.mxu0
  %v1766 = vadd.f32 0.0, %v1765
  %v1767 = vpop.f32.mrf.mxu0
  %1768 = vdwg.mxu0
  %v1769 = vld [vmem:[%s12] sm:$0x1]
  %v1770 = vld [vmem:[%s13] sm:$0x1]
  %v1771 = vsel %vm527, %v1643, 0.0
  %1772 = vadd.xlane.f32.xlu0 %v1771
  %v1773 = vpop.xlane.xlu0 %1772
  %v1774 = vsel %vm527, %v1646, 0.0
  %1775 = vadd.xlane.f32.xlu0 %v1774
  %v1776 = vpop.xlane.xlu0 %1775
  %v1777 = vsel %vm527, %v1651, 0.0
  %1778 = vadd.xlane.f32.xlu0 %v1777
  %v1779 = vpop.xlane.xlu0 %1778
  %v1780 = vsel %vm527, %v1654, 0.0
  %1781 = vadd.xlane.f32.xlu0 %v1780
  %v1782 = vpop.xlane.xlu0 %1781
  %v1783 = vsel %vm527, %v1659, 0.0
  %1784 = vadd.xlane.f32.xlu0 %v1783
  %v1785 = vpop.xlane.xlu0 %1784
  %v1786 = vsel %vm527, %v1662, 0.0
  %1787 = vadd.xlane.f32.xlu0 %v1786
  %v1788 = vpop.xlane.xlu0 %1787
  %v1789 = vsel %vm527, %v1667, 0.0
  %1790 = vadd.xlane.f32.xlu0 %v1789
  %v1791 = vpop.xlane.xlu0 %1790
  %v1792 = vsel %vm527, %v1670, 0.0
  %1793 = vadd.xlane.f32.xlu0 %v1792
  %v1794 = vpop.xlane.xlu0 %1793
  %v1795 = vsel %vm527, %v1675, 0.0
  %1796 = vadd.xlane.f32.xlu0 %v1795
  %v1797 = vpop.xlane.xlu0 %1796
  %v1798 = vsel %vm527, %v1678, 0.0
  %1799 = vadd.xlane.f32.xlu0 %v1798
  %v1800 = vpop.xlane.xlu0 %1799
  %v1801 = vsel %vm527, %v1683, 0.0
  %1802 = vadd.xlane.f32.xlu0 %v1801
  %v1803 = vpop.xlane.xlu0 %1802
  %v1804 = vsel %vm527, %v1686, 0.0
  %1805 = vadd.xlane.f32.xlu0 %v1804
  %v1806 = vpop.xlane.xlu0 %1805
  %v1807 = vsel %vm527, %v1691, 0.0
  %1808 = vadd.xlane.f32.xlu0 %v1807
  %v1809 = vpop.xlane.xlu0 %1808
  %v1810 = vsel %vm527, %v1694, 0.0
  %1811 = vadd.xlane.f32.xlu0 %v1810
  %v1812 = vpop.xlane.xlu0 %1811
  %v1813 = vsel %vm527, %v1699, 0.0
  %1814 = vadd.xlane.f32.xlu0 %v1813
  %v1815 = vpop.xlane.xlu0 %1814
  %v1816 = vsel %vm527, %v1702, 0.0
  %1817 = vadd.xlane.f32.xlu0 %v1816
  %v1818 = vpop.xlane.xlu0 %1817
  %v1819 = vsel %vm527, %v1707, 0.0
  %1820 = vadd.xlane.f32.xlu0 %v1819
  %v1821 = vpop.xlane.xlu0 %1820
  %v1822 = vsel %vm527, %v1710, 0.0
  %1823 = vadd.xlane.f32.xlu0 %v1822
  %v1824 = vpop.xlane.xlu0 %1823
  %v1825 = vsel %vm527, %v1715, 0.0
  %1826 = vadd.xlane.f32.xlu0 %v1825
  %v1827 = vpop.xlane.xlu0 %1826
  %v1828 = vsel %vm527, %v1718, 0.0
  %1829 = vadd.xlane.f32.xlu0 %v1828
  %v1830 = vpop.xlane.xlu0 %1829
  %v1831 = vsel %vm527, %v1723, 0.0
  %1832 = vadd.xlane.f32.xlu0 %v1831
  %v1833 = vpop.xlane.xlu0 %1832
  %v1834 = vsel %vm527, %v1726, 0.0
  %1835 = vadd.xlane.f32.xlu0 %v1834
  %v1836 = vpop.xlane.xlu0 %1835
  %v1837 = vsel %vm527, %v1731, 0.0
  %1838 = vadd.xlane.f32.xlu0 %v1837
  %v1839 = vpop.xlane.xlu0 %1838
  %v1840 = vsel %vm527, %v1734, 0.0
  %1841 = vadd.xlane.f32.xlu0 %v1840
  %v1842 = vpop.xlane.xlu0 %1841
  %v1843 = vsel %vm527, %v1739, 0.0
  %1844 = vadd.xlane.f32.xlu0 %v1843
  %v1845 = vpop.xlane.xlu0 %1844
  %v1846 = vsel %vm527, %v1742, 0.0
  %1847 = vadd.xlane.f32.xlu0 %v1846
  %v1848 = vpop.xlane.xlu0 %1847
  %v1849 = vsel %vm527, %v1747, 0.0
  %1850 = vadd.xlane.f32.xlu0 %v1849
  %v1851 = vpop.xlane.xlu0 %1850
  %v1852 = vsel %vm527, %v1750, 0.0
  %1853 = vadd.xlane.f32.xlu0 %v1852
  %v1854 = vpop.xlane.xlu0 %1853
  %v1855 = vsel %vm527, %v1755, 0.0
  %1856 = vadd.xlane.f32.xlu0 %v1855
  %v1857 = vpop.xlane.xlu0 %1856
  %v1858 = vsel %vm527, %v1758, 0.0
  %1859 = vadd.xlane.f32.xlu0 %v1858
  %v1860 = vpop.xlane.xlu0 %1859
  %v1861 = vsel %vm527, %v1763, 0.0
  %1862 = vadd.xlane.f32.xlu0 %v1861
  %v1863 = vpop.xlane.xlu0 %1862
  %v1864 = vsel %vm527, %v1766, 0.0
  %1865 = vadd.xlane.f32.xlu0 %v1864
  %v1866 = vpop.xlane.xlu0 %1865
  %v1867 = vmul.f32 %v1773, %v624
  %v1868 = vmul.f32 %v1776, %v624
  %v1869 = vmul.f32 %v1779, %v624
  %v1870 = vmul.f32 %v1782, %v624
  %v1871 = vmul.f32 %v1785, %v624
  %v1872 = vmul.f32 %v1788, %v624
  %v1873 = vmul.f32 %v1791, %v624
  %v1874 = vmul.f32 %v1794, %v624
  %v1875 = vmul.f32 %v1797, %v624
  %v1876 = vmul.f32 %v1800, %v624
  %v1877 = vmul.f32 %v1803, %v624
  %v1878 = vmul.f32 %v1806, %v624
  %v1879 = vmul.f32 %v1809, %v624
  %v1880 = vmul.f32 %v1812, %v624
  %v1881 = vmul.f32 %v1815, %v624
  %v1882 = vmul.f32 %v1818, %v624
  %v1883 = vmul.f32 %v1821, %v624
  %v1884 = vmul.f32 %v1824, %v624
  %v1885 = vmul.f32 %v1827, %v624
  %v1886 = vmul.f32 %v1830, %v624
  %v1887 = vmul.f32 %v1833, %v624
  %v1888 = vmul.f32 %v1836, %v624
  %v1889 = vmul.f32 %v1839, %v624
  %v1890 = vmul.f32 %v1842, %v624
  %v1891 = vmul.f32 %v1845, %v624
  %v1892 = vmul.f32 %v1848, %v624
  %v1893 = vmul.f32 %v1851, %v624
  %v1894 = vmul.f32 %v1854, %v624
  %v1895 = vmul.f32 %v1857, %v624
  %v1896 = vmul.f32 %v1860, %v624
  %v1897 = vmul.f32 %v1863, %v624
  %v1898 = vmul.f32 %v1866, %v624
  %v1899 = vsub.f32 %v1643, %v1867
  %v1900 = vsub.f32 %v1646, %v1868
  %v1901 = vsub.f32 %v1651, %v1869
  %v1902 = vsub.f32 %v1654, %v1870
  %v1903 = vsub.f32 %v1659, %v1871
  %v1904 = vsub.f32 %v1662, %v1872
  %v1905 = vsub.f32 %v1667, %v1873
  %v1906 = vsub.f32 %v1670, %v1874
  %v1907 = vsub.f32 %v1675, %v1875
  %v1908 = vsub.f32 %v1678, %v1876
  %v1909 = vsub.f32 %v1683, %v1877
  %v1910 = vsub.f32 %v1686, %v1878
  %v1911 = vsub.f32 %v1691, %v1879
  %v1912 = vsub.f32 %v1694, %v1880
  %v1913 = vsub.f32 %v1699, %v1881
  %v1914 = vsub.f32 %v1702, %v1882
  %v1915 = vsub.f32 %v1707, %v1883
  %v1916 = vsub.f32 %v1710, %v1884
  %v1917 = vsub.f32 %v1715, %v1885
  %v1918 = vsub.f32 %v1718, %v1886
  %v1919 = vsub.f32 %v1723, %v1887
  %v1920 = vsub.f32 %v1726, %v1888
  %v1921 = vsub.f32 %v1731, %v1889
  %v1922 = vsub.f32 %v1734, %v1890
  %v1923 = vsub.f32 %v1739, %v1891
  %v1924 = vsub.f32 %v1742, %v1892
  %v1925 = vsub.f32 %v1747, %v1893
  %v1926 = vsub.f32 %v1750, %v1894
  %v1927 = vsub.f32 %v1755, %v1895
  %v1928 = vsub.f32 %v1758, %v1896
  %v1929 = vsub.f32 %v1763, %v1897
  %v1930 = vsub.f32 %v1766, %v1898
  %v1931 = vmul.f32 %v1899, %v1899
  %v1932 = vmul.f32 %v1900, %v1900
  %v1933 = vmul.f32 %v1901, %v1901
  %v1934 = vmul.f32 %v1902, %v1902
  %v1935 = vmul.f32 %v1903, %v1903
  %v1936 = vmul.f32 %v1904, %v1904
  %v1937 = vmul.f32 %v1905, %v1905
  %v1938 = vmul.f32 %v1906, %v1906
  %v1939 = vmul.f32 %v1907, %v1907
  %v1940 = vmul.f32 %v1908, %v1908
  %v1941 = vmul.f32 %v1909, %v1909
  %v1942 = vmul.f32 %v1910, %v1910
  %v1943 = vmul.f32 %v1911, %v1911
  %v1944 = vmul.f32 %v1912, %v1912
  %v1945 = vmul.f32 %v1913, %v1913
  %v1946 = vmul.f32 %v1914, %v1914
  %v1947 = vmul.f32 %v1915, %v1915
  %v1948 = vmul.f32 %v1916, %v1916
  %v1949 = vmul.f32 %v1917, %v1917
  %v1950 = vmul.f32 %v1918, %v1918
  %v1951 = vmul.f32 %v1919, %v1919
  %v1952 = vmul.f32 %v1920, %v1920
  %v1953 = vmul.f32 %v1921, %v1921
  %v1954 = vmul.f32 %v1922, %v1922
  %v1955 = vmul.f32 %v1923, %v1923
  %v1956 = vmul.f32 %v1924, %v1924
  %v1957 = vmul.f32 %v1925, %v1925
  %v1958 = vmul.f32 %v1926, %v1926
  %v1959 = vmul.f32 %v1927, %v1927
  %v1960 = vmul.f32 %v1928, %v1928
  %v1961 = vmul.f32 %v1929, %v1929
  %v1962 = vmul.f32 %v1930, %v1930
  %v1963 = vsel %vm527, %v1931, 0.0
  %1964 = vadd.xlane.f32.xlu0 %v1963
  %v1965 = vpop.xlane.xlu0 %1964
  %v1966 = vsel %vm527, %v1932, 0.0
  %1967 = vadd.xlane.f32.xlu0 %v1966
  %v1968 = vpop.xlane.xlu0 %1967
  %v1969 = vsel %vm527, %v1933, 0.0
  %1970 = vadd.xlane.f32.xlu0 %v1969
  %v1971 = vpop.xlane.xlu0 %1970
  %v1972 = vsel %vm527, %v1934, 0.0
  %1973 = vadd.xlane.f32.xlu0 %v1972
  %v1974 = vpop.xlane.xlu0 %1973
  %v1975 = vsel %vm527, %v1935, 0.0
  %1976 = vadd.xlane.f32.xlu0 %v1975
  %v1977 = vpop.xlane.xlu0 %1976
  %v1978 = vsel %vm527, %v1936, 0.0
  %1979 = vadd.xlane.f32.xlu0 %v1978
  %v1980 = vpop.xlane.xlu0 %1979
  %v1981 = vsel %vm527, %v1937, 0.0
  %1982 = vadd.xlane.f32.xlu0 %v1981
  %v1983 = vpop.xlane.xlu0 %1982
  %v1984 = vsel %vm527, %v1938, 0.0
  %1985 = vadd.xlane.f32.xlu0 %v1984
  %v1986 = vpop.xlane.xlu0 %1985
  %v1987 = vsel %vm527, %v1939, 0.0
  %1988 = vadd.xlane.f32.xlu0 %v1987
  %v1989 = vpop.xlane.xlu0 %1988
  %v1990 = vsel %vm527, %v1940, 0.0
  %1991 = vadd.xlane.f32.xlu0 %v1990
  %v1992 = vpop.xlane.xlu0 %1991
  %v1993 = vsel %vm527, %v1941, 0.0
  %1994 = vadd.xlane.f32.xlu0 %v1993
  %v1995 = vpop.xlane.xlu0 %1994
  %v1996 = vsel %vm527, %v1942, 0.0
  %1997 = vadd.xlane.f32.xlu0 %v1996
  %v1998 = vpop.xlane.xlu0 %1997
  %v1999 = vsel %vm527, %v1943, 0.0
  %2000 = vadd.xlane.f32.xlu0 %v1999
  %v2001 = vpop.xlane.xlu0 %2000
  %v2002 = vsel %vm527, %v1944, 0.0
  %2003 = vadd.xlane.f32.xlu0 %v2002
  %v2004 = vpop.xlane.xlu0 %2003
  %v2005 = vsel %vm527, %v1945, 0.0
  %2006 = vadd.xlane.f32.xlu0 %v2005
  %v2007 = vpop.xlane.xlu0 %2006
  %v2008 = vsel %vm527, %v1946, 0.0
  %2009 = vadd.xlane.f32.xlu0 %v2008
  %v2010 = vpop.xlane.xlu0 %2009
  %v2011 = vsel %vm527, %v1947, 0.0
  %2012 = vadd.xlane.f32.xlu0 %v2011
  %v2013 = vpop.xlane.xlu0 %2012
  %v2014 = vsel %vm527, %v1948, 0.0
  %2015 = vadd.xlane.f32.xlu0 %v2014
  %v2016 = vpop.xlane.xlu0 %2015
  %v2017 = vsel %vm527, %v1949, 0.0
  %2018 = vadd.xlane.f32.xlu0 %v2017
  %v2019 = vpop.xlane.xlu0 %2018
  %v2020 = vsel %vm527, %v1950, 0.0
  %2021 = vadd.xlane.f32.xlu0 %v2020
  %v2022 = vpop.xlane.xlu0 %2021
  %v2023 = vsel %vm527, %v1951, 0.0
  %2024 = vadd.xlane.f32.xlu0 %v2023
  %v2025 = vpop.xlane.xlu0 %2024
  %v2026 = vsel %vm527, %v1952, 0.0
  %2027 = vadd.xlane.f32.xlu0 %v2026
  %v2028 = vpop.xlane.xlu0 %2027
  %v2029 = vsel %vm527, %v1953, 0.0
  %2030 = vadd.xlane.f32.xlu0 %v2029
  %v2031 = vpop.xlane.xlu0 %2030
  %v2032 = vsel %vm527, %v1954, 0.0
  %2033 = vadd.xlane.f32.xlu0 %v2032
  %v2034 = vpop.xlane.xlu0 %2033
  %v2035 = vsel %vm527, %v1955, 0.0
  %2036 = vadd.xlane.f32.xlu0 %v2035
  %v2037 = vpop.xlane.xlu0 %2036
  %v2038 = vsel %vm527, %v1956, 0.0
  %2039 = vadd.xlane.f32.xlu0 %v2038
  %v2040 = vpop.xlane.xlu0 %2039
  %v2041 = vsel %vm527, %v1957, 0.0
  %2042 = vadd.xlane.f32.xlu0 %v2041
  %v2043 = vpop.xlane.xlu0 %2042
  %v2044 = vsel %vm527, %v1958, 0.0
  %2045 = vadd.xlane.f32.xlu0 %v2044
  %v2046 = vpop.xlane.xlu0 %2045
  %v2047 = vsel %vm527, %v1959, 0.0
  %2048 = vadd.xlane.f32.xlu0 %v2047
  %v2049 = vpop.xlane.xlu0 %2048
  %v2050 = vsel %vm527, %v1960, 0.0
  %2051 = vadd.xlane.f32.xlu0 %v2050
  %v2052 = vpop.xlane.xlu0 %2051
  %v2053 = vsel %vm527, %v1961, 0.0
  %2054 = vadd.xlane.f32.xlu0 %v2053
  %v2055 = vpop.xlane.xlu0 %2054
  %v2056 = vsel %vm527, %v1962, 0.0
  %2057 = vadd.xlane.f32.xlu0 %v2056
  %v2058 = vpop.xlane.xlu0 %2057
  %v2059 = vmul.f32 %v1965, %v624
  %v2060 = vmul.f32 %v1968, %v624
  %v2061 = vmul.f32 %v1971, %v624
  %v2062 = vmul.f32 %v1974, %v624
  %v2063 = vmul.f32 %v1977, %v624
  %v2064 = vmul.f32 %v1980, %v624
  %v2065 = vmul.f32 %v1983, %v624
  %v2066 = vmul.f32 %v1986, %v624
  %v2067 = vmul.f32 %v1989, %v624
  %v2068 = vmul.f32 %v1992, %v624
  %v2069 = vmul.f32 %v1995, %v624
  %v2070 = vmul.f32 %v1998, %v624
  %v2071 = vmul.f32 %v2001, %v624
  %v2072 = vmul.f32 %v2004, %v624
  %v2073 = vmul.f32 %v2007, %v624
  %v2074 = vmul.f32 %v2010, %v624
  %v2075 = vmul.f32 %v2013, %v624
  %v2076 = vmul.f32 %v2016, %v624
  %v2077 = vmul.f32 %v2019, %v624
  %v2078 = vmul.f32 %v2022, %v624
  %v2079 = vmul.f32 %v2025, %v624
  %v2080 = vmul.f32 %v2028, %v624
  %v2081 = vmul.f32 %v2031, %v624
  %v2082 = vmul.f32 %v2034, %v624
  %v2083 = vmul.f32 %v2037, %v624
  %v2084 = vmul.f32 %v2040, %v624
  %v2085 = vmul.f32 %v2043, %v624
  %v2086 = vmul.f32 %v2046, %v624
  %v2087 = vmul.f32 %v2049, %v624
  %v2088 = vmul.f32 %v2052, %v624
  %v2089 = vmul.f32 %v2055, %v624
  %v2090 = vmul.f32 %v2058, %v624
  %v2091 = vadd.f32 %v2059, 1e-05
  %v2092 = vadd.f32 %v2060, 1e-05
  %v2093 = vadd.f32 %v2061, 1e-05
  %v2094 = vadd.f32 %v2062, 1e-05
  %v2095 = vadd.f32 %v2063, 1e-05
  %v2096 = vadd.f32 %v2064, 1e-05
  %v2097 = vadd.f32 %v2065, 1e-05
  %v2098 = vadd.f32 %v2066, 1e-05
  %v2099 = vadd.f32 %v2067, 1e-05
  %v2100 = vadd.f32 %v2068, 1e-05
  %v2101 = vadd.f32 %v2069, 1e-05
  %v2102 = vadd.f32 %v2070, 1e-05
  %v2103 = vadd.f32 %v2071, 1e-05
  %v2104 = vadd.f32 %v2072, 1e-05
  %v2105 = vadd.f32 %v2073, 1e-05
  %v2106 = vadd.f32 %v2074, 1e-05
  %v2107 = vadd.f32 %v2075, 1e-05
  %v2108 = vadd.f32 %v2076, 1e-05
  %v2109 = vadd.f32 %v2077, 1e-05
  %v2110 = vadd.f32 %v2078, 1e-05
  %v2111 = vadd.f32 %v2079, 1e-05
  %v2112 = vadd.f32 %v2080, 1e-05
  %v2113 = vadd.f32 %v2081, 1e-05
  %v2114 = vadd.f32 %v2082, 1e-05
  %v2115 = vadd.f32 %v2083, 1e-05
  %v2116 = vadd.f32 %v2084, 1e-05
  %v2117 = vadd.f32 %v2085, 1e-05
  %v2118 = vadd.f32 %v2086, 1e-05
  %v2119 = vadd.f32 %v2087, 1e-05
  %v2120 = vadd.f32 %v2088, 1e-05
  %v2121 = vadd.f32 %v2089, 1e-05
  %v2122 = vadd.f32 %v2090, 1e-05
  %v2123 = vrsqrt.pop %v2091
  %v2124 = vrsqrt.pop %v2092
  %v2125 = vrsqrt.pop %v2093
  %v2126 = vrsqrt.pop %v2094
  %v2127 = vrsqrt.pop %v2095
  %v2128 = vrsqrt.pop %v2096
  %v2129 = vrsqrt.pop %v2097
  %v2130 = vrsqrt.pop %v2098
  %v2131 = vrsqrt.pop %v2099
  %v2132 = vrsqrt.pop %v2100
  %v2133 = vrsqrt.pop %v2101
  %v2134 = vrsqrt.pop %v2102
  %v2135 = vrsqrt.pop %v2103
  %v2136 = vrsqrt.pop %v2104
  %v2137 = vrsqrt.pop %v2105
  %v2138 = vrsqrt.pop %v2106
  %v2139 = vrsqrt.pop %v2107
  %v2140 = vrsqrt.pop %v2108
  %v2141 = vrsqrt.pop %v2109
  %v2142 = vrsqrt.pop %v2110
  %v2143 = vrsqrt.pop %v2111
  %v2144 = vrsqrt.pop %v2112
  %v2145 = vrsqrt.pop %v2113
  %v2146 = vrsqrt.pop %v2114
  %v2147 = vrsqrt.pop %v2115
  %v2148 = vrsqrt.pop %v2116
  %v2149 = vrsqrt.pop %v2117
  %v2150 = vrsqrt.pop %v2118
  %v2151 = vrsqrt.pop %v2119
  %v2152 = vrsqrt.pop %v2120
  %v2153 = vrsqrt.pop %v2121
  %v2154 = vrsqrt.pop %v2122
  %v2155 = vmul.f32 %v1899, %v2123
  %v2156 = vmul.f32 %v1900, %v2124
  %v2157 = vmul.f32 %v1901, %v2125
  %v2158 = vmul.f32 %v1902, %v2126
  %v2159 = vmul.f32 %v1903, %v2127
  %v2160 = vmul.f32 %v1904, %v2128
  %v2161 = vmul.f32 %v1905, %v2129
  %v2162 = vmul.f32 %v1906, %v2130
  %v2163 = vmul.f32 %v1907, %v2131
  %v2164 = vmul.f32 %v1908, %v2132
  %v2165 = vmul.f32 %v1909, %v2133
  %v2166 = vmul.f32 %v1910, %v2134
  %v2167 = vmul.f32 %v1911, %v2135
  %v2168 = vmul.f32 %v1912, %v2136
  %v2169 = vmul.f32 %v1913, %v2137
  %v2170 = vmul.f32 %v1914, %v2138
  %v2171 = vmul.f32 %v1915, %v2139
  %v2172 = vmul.f32 %v1916, %v2140
  %v2173 = vmul.f32 %v1917, %v2141
  %v2174 = vmul.f32 %v1918, %v2142
  %v2175 = vmul.f32 %v1919, %v2143
  %v2176 = vmul.f32 %v1920, %v2144
  %v2177 = vmul.f32 %v1921, %v2145
  %v2178 = vmul.f32 %v1922, %v2146
  %v2179 = vmul.f32 %v1923, %v2147
  %v2180 = vmul.f32 %v1924, %v2148
  %v2181 = vmul.f32 %v1925, %v2149
  %v2182 = vmul.f32 %v1926, %v2150
  %v2183 = vmul.f32 %v1927, %v2151
  %v2184 = vmul.f32 %v1928, %v2152
  %v2185 = vmul.f32 %v1929, %v2153
  %v2186 = vmul.f32 %v1930, %v2154
  %v2188 = vlaneseq
  %v2189 = vshrl.u32 %v2188, 7
  %v2190 = vsub.s32 0, %v2189
  %v2191 = vrot.slane %v1769, %v2190
  %v2193 = vmul.f32 %v2155, %v2191
  %v2194 = vmul.f32 %v2156, %v2191
  %v2195 = vmul.f32 %v2157, %v2191
  %v2196 = vmul.f32 %v2158, %v2191
  %v2197 = vmul.f32 %v2159, %v2191
  %v2198 = vmul.f32 %v2160, %v2191
  %v2199 = vmul.f32 %v2161, %v2191
  %v2200 = vmul.f32 %v2162, %v2191
  %v2201 = vmul.f32 %v2163, %v2191
  %v2202 = vmul.f32 %v2164, %v2191
  %v2203 = vmul.f32 %v2165, %v2191
  %v2204 = vmul.f32 %v2166, %v2191
  %v2205 = vmul.f32 %v2167, %v2191
  %v2206 = vmul.f32 %v2168, %v2191
  %v2207 = vmul.f32 %v2169, %v2191
  %v2208 = vmul.f32 %v2170, %v2191
  %v2209 = vmul.f32 %v2171, %v2191
  %v2210 = vmul.f32 %v2172, %v2191
  %v2211 = vmul.f32 %v2173, %v2191
  %v2212 = vmul.f32 %v2174, %v2191
  %v2213 = vmul.f32 %v2175, %v2191
  %v2214 = vmul.f32 %v2176, %v2191
  %v2215 = vmul.f32 %v2177, %v2191
  %v2216 = vmul.f32 %v2178, %v2191
  %v2217 = vmul.f32 %v2179, %v2191
  %v2218 = vmul.f32 %v2180, %v2191
  %v2219 = vmul.f32 %v2181, %v2191
  %v2220 = vmul.f32 %v2182, %v2191
  %v2221 = vmul.f32 %v2183, %v2191
  %v2222 = vmul.f32 %v2184, %v2191
  %v2223 = vmul.f32 %v2185, %v2191
  %v2224 = vmul.f32 %v2186, %v2191
  %v2226 = vlaneseq
  %v2227 = vshrl.u32 %v2226, 7
  %v2228 = vsub.s32 0, %v2227
  %v2229 = vrot.slane %v1770, %v2228
  %v2231 = vadd.f32 %v2193, %v2229
  %v2232 = vadd.f32 %v2194, %v2229
  %v2233 = vadd.f32 %v2195, %v2229
  %v2234 = vadd.f32 %v2196, %v2229
  %v2235 = vadd.f32 %v2197, %v2229
  %v2236 = vadd.f32 %v2198, %v2229
  %v2237 = vadd.f32 %v2199, %v2229
  %v2238 = vadd.f32 %v2200, %v2229
  %v2239 = vadd.f32 %v2201, %v2229
  %v2240 = vadd.f32 %v2202, %v2229
  %v2241 = vadd.f32 %v2203, %v2229
  %v2242 = vadd.f32 %v2204, %v2229
  %v2243 = vadd.f32 %v2205, %v2229
  %v2244 = vadd.f32 %v2206, %v2229
  %v2245 = vadd.f32 %v2207, %v2229
  %v2246 = vadd.f32 %v2208, %v2229
  %v2247 = vadd.f32 %v2209, %v2229
  %v2248 = vadd.f32 %v2210, %v2229
  %v2249 = vadd.f32 %v2211, %v2229
  %v2250 = vadd.f32 %v2212, %v2229
  %v2251 = vadd.f32 %v2213, %v2229
  %v2252 = vadd.f32 %v2214, %v2229
  %v2253 = vadd.f32 %v2215, %v2229
  %v2254 = vadd.f32 %v2216, %v2229
  %v2255 = vadd.f32 %v2217, %v2229
  %v2256 = vadd.f32 %v2218, %v2229
  %v2257 = vadd.f32 %v2219, %v2229
  %v2258 = vadd.f32 %v2220, %v2229
  %v2259 = vadd.f32 %v2221, %v2229
  %v2260 = vadd.f32 %v2222, %v2229
  %v2261 = vadd.f32 %v2223, %v2229
  %v2262 = vadd.f32 %v2224, %v2229
  %v2263 = vpack.c.bf16 %v2232, %v2231
  %v2264 = vpack.c.bf16 %v2234, %v2233
  %v2265 = vpack.c.bf16 %v2236, %v2235
  %v2266 = vpack.c.bf16 %v2238, %v2237
  %v2267 = vpack.c.bf16 %v2240, %v2239
  %v2268 = vpack.c.bf16 %v2242, %v2241
  %v2269 = vpack.c.bf16 %v2244, %v2243
  %v2270 = vpack.c.bf16 %v2246, %v2245
  %v2271 = vpack.c.bf16 %v2248, %v2247
  %v2272 = vpack.c.bf16 %v2250, %v2249
  %v2273 = vpack.c.bf16 %v2252, %v2251
  %v2274 = vpack.c.bf16 %v2254, %v2253
  %v2275 = vpack.c.bf16 %v2256, %v2255
  %v2276 = vpack.c.bf16 %v2258, %v2257
  %v2277 = vpack.c.bf16 %v2260, %v2259
  %v2278 = vpack.c.bf16 %v2262, %v2261
  %v2279 = vld [vmem:[%s14] sm:$0xf]
  %v2280 = vld [vmem:[%s14 + $0x4] sm:$0xf]
  %v2281 = vld [vmem:[%s14 + $0x8] sm:$0xf]
  %v2282 = vld [vmem:[%s14 + $0xc] sm:$0xf]
  %v2283 = vld [vmem:[%s15] sm:$0x1]
  %v2285 = vlaneseq
  %v2286 = vshrl.u32 %v2285, 7
  %v2287 = vsub.s32 0, %v2286
  %v2288 = vrot.slane %v2283, %v2287
  %v2294 = vunpack.c.l.b16 %v2279
  %v2295 = vunpack.c.l.b16 %v2280
  %v2296 = vunpack.c.l.b16 %v2281
  %v2297 = vunpack.c.l.b16 %v2282
  %v2298 = vpack.c.b16 %v2295, %v2294
  %v2299 = vpack.c.b16 %v2297, %v2296
  %v2303 = vsel %vm527, %v2263, 0
  %v2306 = vsel %vm527, %v2264, 0
  %v2309 = vsel %vm527, %v2265, 0
  %v2312 = vsel %vm527, %v2266, 0
  %v2315 = vsel %vm527, %v2267, 0
  %v2318 = vsel %vm527, %v2268, 0
  %v2321 = vsel %vm527, %v2269, 0
  %v2324 = vsel %vm527, %v2270, 0
  %v2327 = vsel %vm527, %v2271, 0
  %v2330 = vsel %vm527, %v2272, 0
  %v2333 = vsel %vm527, %v2273, 0
  %v2336 = vsel %vm527, %v2274, 0
  %v2339 = vsel %vm527, %v2275, 0
  %v2342 = vsel %vm527, %v2276, 0
  %v2345 = vsel %vm527, %v2277, 0
  %v2348 = vsel %vm527, %v2278, 0
  %2350 = vmatprep.subr.bf16.mxu0 0
  %2351 = vmatpush1.bf16.msra.mxu0 0
  %2352 = vmatprep.subr.bf16.mxu0 0
  %2353 = vmatpush1.bf16.msra.mxu0 0
  %2354 = vmatprep.subr.bf16.mxu0 0
  %2355 = vmatpush1.bf16.msra.mxu0 0
  %2356 = vmatprep.subr.bf16.mxu0 0
  %2357 = vmatpush1.bf16.msra.mxu0 0
  %2358 = vmatprep.subr.bf16.mxu0 0
  %2359 = vmatpush1.bf16.msra.mxu0 0
  %2360 = vmatprep.subr.bf16.mxu0 0
  %2361 = vmatpush1.bf16.msra.mxu0 0
  %2362 = vmatprep.subr.bf16.mxu0 0
  %2363 = vmatpush1.bf16.msra.mxu0 %v2299
  %2364 = vmatprep.subr.bf16.mxu0 0
  %2365 = vmatpush1.bf16.msra.mxu0 %v2298
  %2366 = vmatprep.subr.bf16.mxu0 0
  %2367 = vmatpush2.bf16.msra.mxu0 0
  %2368 = vmatprep.subr.bf16.mxu0 0
  %2369 = vmatpush2.bf16.msra.mxu0 0
  %2370 = vmatprep.subr.bf16.mxu0 0
  %2371 = vmatpush2.bf16.msra.mxu0 0
  %2372 = vmatprep.subr.bf16.mxu0 0
  %2373 = vmatpush2.bf16.msra.mxu0 0
  %2374 = vmatprep.subr.bf16.mxu0 0
  %2375 = vmatpush2.bf16.msra.mxu0 0
  %2376 = vmatprep.subr.bf16.mxu0 0
  %2377 = vmatpush2.bf16.msra.mxu0 0
  %2378 = vmatprep.subr.bf16.mxu0 0
  %2379 = vmatpush2.bf16.msra.mxu0 0
  %2380 = vmatprep.subr.bf16.mxu0 0
  %2381 = vmatpush2.bf16.msra.mxu0 0
  %2382 = vmatprep.mubr.bf16.mxu0 0
  %2383 = vmatmul.mubr.bf16.gmra.mxu0 %v2303
  %v2384 = vpop.f32.mrf.mxu0
  %v2385 = vadd.f32 %v2288, %v2384
  %v2386 = vpop.f32.mrf.mxu0
  %v2387 = vpop.f32.mrf.mxu0
  %v2388 = vadd.f32 %v2288, %v2387
  %v2389 = vpop.f32.mrf.mxu0
  %2390 = vmatprep.mubr.bf16.mxu0 0
  %2391 = vmatmul.mubr.bf16.gmra.mxu0 %v2306
  %v2392 = vpop.f32.mrf.mxu0
  %v2393 = vadd.f32 %v2288, %v2392
  %v2394 = vpop.f32.mrf.mxu0
  %v2395 = vpop.f32.mrf.mxu0
  %v2396 = vadd.f32 %v2288, %v2395
  %v2397 = vpop.f32.mrf.mxu0
  %2398 = vmatprep.mubr.bf16.mxu0 0
  %2399 = vmatmul.mubr.bf16.gmra.mxu0 %v2309
  %v2400 = vpop.f32.mrf.mxu0
  %v2401 = vadd.f32 %v2288, %v2400
  %v2402 = vpop.f32.mrf.mxu0
  %v2403 = vpop.f32.mrf.mxu0
  %v2404 = vadd.f32 %v2288, %v2403
  %v2405 = vpop.f32.mrf.mxu0
  %2406 = vmatprep.mubr.bf16.mxu0 0
  %2407 = vmatmul.mubr.bf16.gmra.mxu0 %v2312
  %v2408 = vpop.f32.mrf.mxu0
  %v2409 = vadd.f32 %v2288, %v2408
  %v2410 = vpop.f32.mrf.mxu0
  %v2411 = vpop.f32.mrf.mxu0
  %v2412 = vadd.f32 %v2288, %v2411
  %v2413 = vpop.f32.mrf.mxu0
  %2414 = vmatprep.mubr.bf16.mxu0 0
  %2415 = vmatmul.mubr.bf16.gmra.mxu0 %v2315
  %v2416 = vpop.f32.mrf.mxu0
  %v2417 = vadd.f32 %v2288, %v2416
  %v2418 = vpop.f32.mrf.mxu0
  %v2419 = vpop.f32.mrf.mxu0
  %v2420 = vadd.f32 %v2288, %v2419
  %v2421 = vpop.f32.mrf.mxu0
  %2422 = vmatprep.mubr.bf16.mxu0 0
  %2423 = vmatmul.mubr.bf16.gmra.mxu0 %v2318
  %v2424 = vpop.f32.mrf.mxu0
  %v2425 = vadd.f32 %v2288, %v2424
  %v2426 = vpop.f32.mrf.mxu0
  %v2427 = vpop.f32.mrf.mxu0
  %v2428 = vadd.f32 %v2288, %v2427
  %v2429 = vpop.f32.mrf.mxu0
  %2430 = vmatprep.mubr.bf16.mxu0 0
  %2431 = vmatmul.mubr.bf16.gmra.mxu0 %v2321
  %v2432 = vpop.f32.mrf.mxu0
  %v2433 = vadd.f32 %v2288, %v2432
  %v2434 = vpop.f32.mrf.mxu0
  %v2435 = vpop.f32.mrf.mxu0
  %v2436 = vadd.f32 %v2288, %v2435
  %v2437 = vpop.f32.mrf.mxu0
  %2438 = vmatprep.mubr.bf16.mxu0 0
  %2439 = vmatmul.mubr.bf16.gmra.mxu0 %v2324
  %v2440 = vpop.f32.mrf.mxu0
  %v2441 = vadd.f32 %v2288, %v2440
  %v2442 = vpop.f32.mrf.mxu0
  %v2443 = vpop.f32.mrf.mxu0
  %v2444 = vadd.f32 %v2288, %v2443
  %v2445 = vpop.f32.mrf.mxu0
  %2446 = vmatprep.mubr.bf16.mxu0 0
  %2447 = vmatmul.mubr.bf16.gmra.mxu0 %v2327
  %v2448 = vpop.f32.mrf.mxu0
  %v2449 = vadd.f32 %v2288, %v2448
  %v2450 = vpop.f32.mrf.mxu0
  %v2451 = vpop.f32.mrf.mxu0
  %v2452 = vadd.f32 %v2288, %v2451
  %v2453 = vpop.f32.mrf.mxu0
  %2454 = vmatprep.mubr.bf16.mxu0 0
  %2455 = vmatmul.mubr.bf16.gmra.mxu0 %v2330
  %v2456 = vpop.f32.mrf.mxu0
  %v2457 = vadd.f32 %v2288, %v2456
  %v2458 = vpop.f32.mrf.mxu0
  %v2459 = vpop.f32.mrf.mxu0
  %v2460 = vadd.f32 %v2288, %v2459
  %v2461 = vpop.f32.mrf.mxu0
  %2462 = vmatprep.mubr.bf16.mxu0 0
  %2463 = vmatmul.mubr.bf16.gmra.mxu0 %v2333
  %v2464 = vpop.f32.mrf.mxu0
  %v2465 = vadd.f32 %v2288, %v2464
  %v2466 = vpop.f32.mrf.mxu0
  %v2467 = vpop.f32.mrf.mxu0
  %v2468 = vadd.f32 %v2288, %v2467
  %v2469 = vpop.f32.mrf.mxu0
  %2470 = vmatprep.mubr.bf16.mxu0 0
  %2471 = vmatmul.mubr.bf16.gmra.mxu0 %v2336
  %v2472 = vpop.f32.mrf.mxu0
  %v2473 = vadd.f32 %v2288, %v2472
  %v2474 = vpop.f32.mrf.mxu0
  %v2475 = vpop.f32.mrf.mxu0
  %v2476 = vadd.f32 %v2288, %v2475
  %v2477 = vpop.f32.mrf.mxu0
  %2478 = vmatprep.mubr.bf16.mxu0 0
  %2479 = vmatmul.mubr.bf16.gmra.mxu0 %v2339
  %v2480 = vpop.f32.mrf.mxu0
  %v2481 = vadd.f32 %v2288, %v2480
  %v2482 = vpop.f32.mrf.mxu0
  %v2483 = vpop.f32.mrf.mxu0
  %v2484 = vadd.f32 %v2288, %v2483
  %v2485 = vpop.f32.mrf.mxu0
  %2486 = vmatprep.mubr.bf16.mxu0 0
  %2487 = vmatmul.mubr.bf16.gmra.mxu0 %v2342
  %v2488 = vpop.f32.mrf.mxu0
  %v2489 = vadd.f32 %v2288, %v2488
  %v2490 = vpop.f32.mrf.mxu0
  %v2491 = vpop.f32.mrf.mxu0
  %v2492 = vadd.f32 %v2288, %v2491
  %v2493 = vpop.f32.mrf.mxu0
  %2494 = vmatprep.mubr.bf16.mxu0 0
  %2495 = vmatmul.mubr.bf16.gmra.mxu0 %v2345
  %v2496 = vpop.f32.mrf.mxu0
  %v2497 = vadd.f32 %v2288, %v2496
  %v2498 = vpop.f32.mrf.mxu0
  %v2499 = vpop.f32.mrf.mxu0
  %v2500 = vadd.f32 %v2288, %v2499
  %v2501 = vpop.f32.mrf.mxu0
  %2502 = vmatprep.mubr.bf16.mxu0 0
  %2503 = vmatmul.mubr.bf16.gmra.mxu0 %v2348
  %v2504 = vpop.f32.mrf.mxu0
  %v2505 = vadd.f32 %v2288, %v2504
  %v2506 = vpop.f32.mrf.mxu0
  %v2507 = vpop.f32.mrf.mxu0
  %v2508 = vadd.f32 %v2288, %v2507
  %v2509 = vpop.f32.mrf.mxu0
  %2510 = vdwg.mxu0
  %v2511 = vpack.c.bf16 %v2388, %v2385
  %v2512 = vpack.c.bf16 %v2396, %v2393
  %v2513 = vpack.c.bf16 %v2404, %v2401
  %v2514 = vpack.c.bf16 %v2412, %v2409
  %v2515 = vpack.c.bf16 %v2420, %v2417
  %v2516 = vpack.c.bf16 %v2428, %v2425
  %v2517 = vpack.c.bf16 %v2436, %v2433
  %v2518 = vpack.c.bf16 %v2444, %v2441
  %v2519 = vpack.c.bf16 %v2452, %v2449
  %v2520 = vpack.c.bf16 %v2460, %v2457
  %v2521 = vpack.c.bf16 %v2468, %v2465
  %v2522 = vpack.c.bf16 %v2476, %v2473
  %v2523 = vpack.c.bf16 %v2484, %v2481
  %v2524 = vpack.c.bf16 %v2492, %v2489
  %v2525 = vpack.c.bf16 %v2500, %v2497
  %v2526 = vpack.c.bf16 %v2508, %v2505
  %v2543 = vunpack.c.l.b16 %v2511
  %v2544 = vunpack.c.h.b16 %v2511
  %v2545 = vunpack.c.l.b16 %v2512
  %v2546 = vunpack.c.h.b16 %v2512
  %v2547 = vunpack.c.l.b16 %v2513
  %v2548 = vunpack.c.h.b16 %v2513
  %v2549 = vunpack.c.l.b16 %v2514
  %v2550 = vunpack.c.h.b16 %v2514
  %v2551 = vunpack.c.l.b16 %v2515
  %v2552 = vunpack.c.h.b16 %v2515
  %v2553 = vunpack.c.l.b16 %v2516
  %v2554 = vunpack.c.h.b16 %v2516
  %v2555 = vunpack.c.l.b16 %v2517
  %v2556 = vunpack.c.h.b16 %v2517
  %v2557 = vunpack.c.l.b16 %v2518
  %v2558 = vunpack.c.h.b16 %v2518
  %v2559 = vunpack.c.l.b16 %v2519
  %v2560 = vunpack.c.h.b16 %v2519
  %v2561 = vunpack.c.l.b16 %v2520
  %v2562 = vunpack.c.h.b16 %v2520
  %v2563 = vunpack.c.l.b16 %v2521
  %v2564 = vunpack.c.h.b16 %v2521
  %v2565 = vunpack.c.l.b16 %v2522
  %v2566 = vunpack.c.h.b16 %v2522
  %v2567 = vunpack.c.l.b16 %v2523
  %v2568 = vunpack.c.h.b16 %v2523
  %v2569 = vunpack.c.l.b16 %v2524
  %v2570 = vunpack.c.h.b16 %v2524
  %v2571 = vunpack.c.l.b16 %v2525
  %v2572 = vunpack.c.h.b16 %v2525
  %v2573 = vunpack.c.l.b16 %v2526
  %v2574 = vunpack.c.h.b16 %v2526
  %v2575 = vpack.c.b16 %v2543, %v2543
  %v2576 = vpack.c.b16 %v2544, %v2544
  %v2577 = vpack.c.b16 %v2545, %v2545
  %v2578 = vpack.c.b16 %v2546, %v2546
  %v2579 = vpack.c.b16 %v2547, %v2547
  %v2580 = vpack.c.b16 %v2548, %v2548
  %v2581 = vpack.c.b16 %v2549, %v2549
  %v2582 = vpack.c.b16 %v2550, %v2550
  %v2583 = vpack.c.b16 %v2551, %v2551
  %v2584 = vpack.c.b16 %v2552, %v2552
  %v2585 = vpack.c.b16 %v2553, %v2553
  %v2586 = vpack.c.b16 %v2554, %v2554
  %v2587 = vpack.c.b16 %v2555, %v2555
  %v2588 = vpack.c.b16 %v2556, %v2556
  %v2589 = vpack.c.b16 %v2557, %v2557
  %v2590 = vpack.c.b16 %v2558, %v2558
  %v2591 = vpack.c.b16 %v2559, %v2559
  %v2592 = vpack.c.b16 %v2560, %v2560
  %v2593 = vpack.c.b16 %v2561, %v2561
  %v2594 = vpack.c.b16 %v2562, %v2562
  %v2595 = vpack.c.b16 %v2563, %v2563
  %v2596 = vpack.c.b16 %v2564, %v2564
  %v2597 = vpack.c.b16 %v2565, %v2565
  %v2598 = vpack.c.b16 %v2566, %v2566
  %v2599 = vpack.c.b16 %v2567, %v2567
  %v2600 = vpack.c.b16 %v2568, %v2568
  %v2601 = vpack.c.b16 %v2569, %v2569
  %v2602 = vpack.c.b16 %v2570, %v2570
  %v2603 = vpack.c.b16 %v2571, %v2571
  %v2604 = vpack.c.b16 %v2572, %v2572
  %v2605 = vpack.c.b16 %v2573, %v2573
  %v2606 = vpack.c.b16 %v2574, %v2574
  %2639 = vst.msk [vmem:[%s17] sm:$0xf] %vm1397, %v2575
  %2640 = vst.msk [vmem:[%s17 + $0x4] sm:$0xf] %vm1397, %v2576
  %2641 = vst.msk [vmem:[%s17 + $0x8] sm:$0xf] %vm1397, %v2577
  %2642 = vst.msk [vmem:[%s17 + $0xc] sm:$0xf] %vm1397, %v2578
  %2643 = vst.msk [vmem:[%s17 + $0x10] sm:$0xf] %vm1397, %v2579
  %2644 = vst.msk [vmem:[%s17 + $0x14] sm:$0xf] %vm1397, %v2580
  %2645 = vst.msk [vmem:[%s17 + $0x18] sm:$0xf] %vm1397, %v2581
  %2646 = vst.msk [vmem:[%s17 + $0x1c] sm:$0xf] %vm1397, %v2582
  %2647 = vst.msk [vmem:[%s17 + $0x20] sm:$0xf] %vm1397, %v2583
  %2648 = vst.msk [vmem:[%s17 + $0x24] sm:$0xf] %vm1397, %v2584
  %2649 = vst.msk [vmem:[%s17 + $0x28] sm:$0xf] %vm1397, %v2585
  %2650 = vst.msk [vmem:[%s17 + $0x2c] sm:$0xf] %vm1397, %v2586
  %2651 = vst.msk [vmem:[%s17 + $0x30] sm:$0xf] %vm1397, %v2587
  %2652 = vst.msk [vmem:[%s17 + $0x34] sm:$0xf] %vm1397, %v2588
  %2653 = vst.msk [vmem:[%s17 + $0x38] sm:$0xf] %vm1397, %v2589
  %2654 = vst.msk [vmem:[%s17 + $0x3c] sm:$0xf] %vm1397, %v2590
  %2655 = vst.msk [vmem:[%s17 + $0x40] sm:$0xf] %vm1397, %v2591
  %2656 = vst.msk [vmem:[%s17 + $0x44] sm:$0xf] %vm1397, %v2592
  %2657 = vst.msk [vmem:[%s17 + $0x48] sm:$0xf] %vm1397, %v2593
  %2658 = vst.msk [vmem:[%s17 + $0x4c] sm:$0xf] %vm1397, %v2594
  %2659 = vst.msk [vmem:[%s17 + $0x50] sm:$0xf] %vm1397, %v2595
  %2660 = vst.msk [vmem:[%s17 + $0x54] sm:$0xf] %vm1397, %v2596
  %2661 = vst.msk [vmem:[%s17 + $0x58] sm:$0xf] %vm1397, %v2597
  %2662 = vst.msk [vmem:[%s17 + $0x5c] sm:$0xf] %vm1397, %v2598
  %2663 = vst.msk [vmem:[%s17 + $0x60] sm:$0xf] %vm1397, %v2599
  %2664 = vst.msk [vmem:[%s17 + $0x64] sm:$0xf] %vm1397, %v2600
  %2665 = vst.msk [vmem:[%s17 + $0x68] sm:$0xf] %vm1397, %v2601
  %2666 = vst.msk [vmem:[%s17 + $0x6c] sm:$0xf] %vm1397, %v2602
  %2667 = vst.msk [vmem:[%s17 + $0x70] sm:$0xf] %vm1397, %v2603
  %2668 = vst.msk [vmem:[%s17 + $0x74] sm:$0xf] %vm1397, %v2604
  %2669 = vst.msk [vmem:[%s17 + $0x78] sm:$0xf] %vm1397, %v2605
  %2670 = vst.msk [vmem:[%s17 + $0x7c] sm:$0xf] %vm1397, %v2606
  // Predicated region
  $region66: #{cross_view_attention.4} parent=0 // pred_check
    _
  $region67: #{cross_view_attention.4} parent=0 // pred_check_branch
    %2672 = sbr.rel (0) target = $region69
  $region68: #{cross_view_attention.4} parent=0 // pred_region
    _
  $region69: #{cross_view_attention.4} parent=0 // pred_fallthru
    _
  // Predicated region
  $region70: #{cross_view_attention.4} parent=0 // pred_check
    _
  $region71: #{cross_view_attention.4} parent=0 // pred_check_branch
    %2674 = sbr.rel (0) target = $region73
  $region72: #{cross_view_attention.4} parent=0 // pred_region
    _
  $region73: #{cross_view_attention.4} parent=0 // pred_fallthru
    _
  // Predicated region
  $region74: #{cross_view_attention.4} parent=0 // pred_check
    _
  $region75: #{cross_view_attention.4} parent=0 // pred_check_branch
    %2676 = sbr.rel (0) target = $region77
  $region76: #{cross_view_attention.4} parent=0 // pred_region
    _
  $region77: #{cross_view_attention.4} parent=0 // pred_fallthru
    _
  // Predicated region
  $region78: #{cross_view_attention.4} parent=0 // pred_check
    _
  $region79: #{cross_view_attention.4} parent=0 // pred_check_branch
    %2678 = sbr.rel (0) target = $region81
  $region80: #{cross_view_attention.4} parent=0 // pred_region
    _
  $region81: #{cross_view_attention.4} parent=0 // pred_fallthru
    _

// kernel: cross_view_attention.7
$region0: #{cross_view_attention.7}
  #allocation0 [shape = 'u32[]', space=smem, size = 0x4, offset = 0x4, fixed_abs, tag = 'smem constant byte address 0x4 - core index']
  #allocation1 [shape = 'u32[144,128]{1,0:T(1,128)}', space=vmem, size = 0x12000, scoped, tag = 'internal scratch']
  %s0 = inlined_call_operand.vmem [shape: bf16[128,32], index: 0, kind: input, shape index: {}]
  %s1 = inlined_call_operand.vmem [shape: bf16[128,32], index: 1, kind: input, shape index: {}]
  %s2 = inlined_call_operand.vmem [shape: bf16[32,32], index: 2, kind: input, shape index: {}]
  %s3 = inlined_call_operand.vmem [shape: f32[1,32], index: 3, kind: input, shape index: {}]
  %s4 = inlined_call_operand.vmem [shape: f32[1,32], index: 4, kind: input, shape index: {}]
  %s5 = inlined_call_operand.vmem [shape: f32[1,32], index: 5, kind: input, shape index: {}]
  %s6 = inlined_call_operand.vmem [shape: bf16[32,64], index: 6, kind: input, shape index: {}]
  %s7 = inlined_call_operand.vmem [shape: f32[1,64], index: 7, kind: input, shape index: {}]
  %s8 = inlined_call_operand.vmem [shape: bf16[64,32], index: 8, kind: input, shape index: {}]
  %s9 = inlined_call_operand.vmem [shape: f32[1,32], index: 9, kind: input, shape index: {}]
  %s10 = inlined_call_operand.vmem [shape: f32[1,32], index: 10, kind: input, shape index: {}]
  %s11 = inlined_call_operand.vmem [shape: f32[1,32], index: 11, kind: input, shape index: {}]
  %s12 = inlined_call_operand.hbm [shape: f32[128,32], index: 12, kind: output, shape index: {}]
  %s13 = sld [smem:[#allocation0]]
  $region58: #{cross_view_attention.7} parent=0
    _
  %s15 = ssub.s32 1, %s13
  %s16 = scalar_select 0, %s15, %s13
  $region1: #{cross_view_attention.7} parent=0
    #allocation2 [shape = 'u8[65536]{0}', space=vmem, size = 0x10000, scoped, tag = 'output window, operand 0, single buffered']
    #allocation3 [shape = 's32[1]{0}', space=sflag, size = 0x4, scoped, tag = 'scoped memory for cross_view_attention.7']
    %17 = vsyncpa [#allocation3], 0
    // Predicated region
    $region2: #{cross_view_attention.7} parent=1 // pred_check
      _
    $region3: #{cross_view_attention.7} parent=1 // pred_check_branch
      %19 = sbr.rel (0) target = $region5
    $region4: #{cross_view_attention.7} parent=1 // pred_region
      _
    $region5: #{cross_view_attention.7} parent=1 // pred_fallthru
      _
    // Predicated region
    $region6: #{cross_view_attention.7} parent=1 // pred_check
      _
    $region7: #{cross_view_attention.7} parent=1 // pred_check_branch
      %21 = sbr.rel (0) target = $region9
    $region8: #{cross_view_attention.7} parent=1 // pred_region
      _
    $region9: #{cross_view_attention.7} parent=1 // pred_fallthru
      _
    // Predicated region
    $region10: #{cross_view_attention.7} parent=1 // pred_check
      _
    $region11: #{cross_view_attention.7} parent=1 // pred_check_branch
      %23 = sbr.rel (0) target = $region13
    $region12: #{cross_view_attention.7} parent=1 // pred_region
      _
    $region13: #{cross_view_attention.7} parent=1 // pred_fallthru
      _
    // Predicated region
    $region14: #{cross_view_attention.7} parent=1 // pred_check
      _
    $region15: #{cross_view_attention.7} parent=1 // pred_check_branch
      %25 = sbr.rel (0) target = $region17
    $region16: #{cross_view_attention.7} parent=1 // pred_region
      _
    $region17: #{cross_view_attention.7} parent=1 // pred_fallthru
      _
    // Predicated region
    $region18: #{cross_view_attention.7} parent=1 // pred_check
      _
    $region19: #{cross_view_attention.7} parent=1 // pred_check_branch
      %27 = sbr.rel (0) target = $region21
    $region20: #{cross_view_attention.7} parent=1 // pred_region
      _
    $region21: #{cross_view_attention.7} parent=1 // pred_fallthru
      _
    // Predicated region
    $region22: #{cross_view_attention.7} parent=1 // pred_check
      _
    $region23: #{cross_view_attention.7} parent=1 // pred_check_branch
      %29 = sbr.rel (0) target = $region25
    $region24: #{cross_view_attention.7} parent=1 // pred_region
      _
    $region25: #{cross_view_attention.7} parent=1 // pred_fallthru
      _
    // Predicated region
    $region26: #{cross_view_attention.7} parent=1 // pred_check
      _
    $region27: #{cross_view_attention.7} parent=1 // pred_check_branch
      %31 = sbr.rel (0) target = $region29
    $region28: #{cross_view_attention.7} parent=1 // pred_region
      _
    $region29: #{cross_view_attention.7} parent=1 // pred_fallthru
      _
    // Predicated region
    $region30: #{cross_view_attention.7} parent=1 // pred_check
      _
    $region31: #{cross_view_attention.7} parent=1 // pred_check_branch
      %33 = sbr.rel (0) target = $region33
    $region32: #{cross_view_attention.7} parent=1 // pred_region
      _
    $region33: #{cross_view_attention.7} parent=1 // pred_fallthru
      _
    // Predicated region
    $region34: #{cross_view_attention.7} parent=1 // pred_check
      _
    $region35: #{cross_view_attention.7} parent=1 // pred_check_branch
      %35 = sbr.rel (0) target = $region37
    $region36: #{cross_view_attention.7} parent=1 // pred_region
      _
    $region37: #{cross_view_attention.7} parent=1 // pred_fallthru
      _
    // Predicated region
    $region38: #{cross_view_attention.7} parent=1 // pred_check
      _
    $region39: #{cross_view_attention.7} parent=1 // pred_check_branch
      %37 = sbr.rel (0) target = $region41
    $region40: #{cross_view_attention.7} parent=1 // pred_region
      _
    $region41: #{cross_view_attention.7} parent=1 // pred_fallthru
      _
    // Predicated region
    $region42: #{cross_view_attention.7} parent=1 // pred_check
      _
    $region43: #{cross_view_attention.7} parent=1 // pred_check_branch
      %39 = sbr.rel (0) target = $region45
    $region44: #{cross_view_attention.7} parent=1 // pred_region
      _
    $region45: #{cross_view_attention.7} parent=1 // pred_fallthru
      _
    // Predicated region
    $region46: #{cross_view_attention.7} parent=1 // pred_check
      _
    $region47: #{cross_view_attention.7} parent=1 // pred_check_branch
      %41 = sbr.rel (0) target = $region49
    $region48: #{cross_view_attention.7} parent=1 // pred_region
      _
    $region49: #{cross_view_attention.7} parent=1 // pred_fallthru
      _
    %v43 = vld [vmem:[%s0] sm:$0xf]
    %v44 = vld [vmem:[%s0 + $0x4] sm:$0xf]
    %v45 = vld [vmem:[%s0 + $0x8] sm:$0xf]
    %v46 = vld [vmem:[%s0 + $0xc] sm:$0xf]
    %v47 = vld [vmem:[%s0 + $0x10] sm:$0xf]
    %v48 = vld [vmem:[%s0 + $0x14] sm:$0xf]
    %v49 = vld [vmem:[%s0 + $0x18] sm:$0xf]
    %v50 = vld [vmem:[%s0 + $0x1c] sm:$0xf]
    %v51 = vld [vmem:[%s0 + $0x20] sm:$0xf]
    %v52 = vld [vmem:[%s0 + $0x24] sm:$0xf]
    %v53 = vld [vmem:[%s0 + $0x28] sm:$0xf]
    %v54 = vld [vmem:[%s0 + $0x2c] sm:$0xf]
    %v55 = vld [vmem:[%s0 + $0x30] sm:$0xf]
    %v56 = vld [vmem:[%s0 + $0x34] sm:$0xf]
    %v57 = vld [vmem:[%s0 + $0x38] sm:$0xf]
    %v58 = vld [vmem:[%s0 + $0x3c] sm:$0xf]
    %v59 = vld [vmem:[%s2] sm:$0xf]
    %v60 = vld [vmem:[%s2 + $0x4] sm:$0xf]
    %v61 = vld [vmem:[%s2 + $0x8] sm:$0xf]
    %v62 = vld [vmem:[%s2 + $0xc] sm:$0xf]
    %v63 = vld [vmem:[%s3] sm:$0x1]
    %v65 = vlaneseq
    %v66 = vshrl.u32 %v65, 7
    %v67 = vsub.s32 0, %v66
    %v68 = vrot.slane %v63, %v67
    %v86 = vunpack.c.l.b16 %v43
    %v87 = vunpack.c.l.b16 %v44
    %v88 = vunpack.c.l.b16 %v45
    %v89 = vunpack.c.l.b16 %v46
    %v90 = vunpack.c.l.b16 %v47
    %v91 = vunpack.c.l.b16 %v48
    %v92 = vunpack.c.l.b16 %v49
    %v93 = vunpack.c.l.b16 %v50
    %v94 = vunpack.c.l.b16 %v51
    %v95 = vunpack.c.l.b16 %v52
    %v96 = vunpack.c.l.b16 %v53
    %v97 = vunpack.c.l.b16 %v54
    %v98 = vunpack.c.l.b16 %v55
    %v99 = vunpack.c.l.b16 %v56
    %v100 = vunpack.c.l.b16 %v57
    %v101 = vunpack.c.l.b16 %v58
    %v102 = vpack.c.b16 %v87, %v86
    %v103 = vpack.c.b16 %v89, %v88
    %v104 = vpack.c.b16 %v91, %v90
    %v105 = vpack.c.b16 %v93, %v92
    %v106 = vpack.c.b16 %v95, %v94
    %v107 = vpack.c.b16 %v97, %v96
    %v108 = vpack.c.b16 %v99, %v98
    %v109 = vpack.c.b16 %v101, %v100
    %v114 = vunpack.c.l.b16 %v59
    %v115 = vunpack.c.l.b16 %v60
    %v116 = vunpack.c.l.b16 %v61
    %v117 = vunpack.c.l.b16 %v62
    %v118 = vpack.c.b16 %v115, %v114
    %v119 = vpack.c.b16 %v117, %v116
    %vm122 = vcmask 261120
    %v124 = vsel %vm122, %v102, 0
    %v127 = vsel %vm122, %v103, 0
    %v130 = vsel %vm122, %v104, 0
    %v133 = vsel %vm122, %v105, 0
    %v136 = vsel %vm122, %v106, 0
    %v139 = vsel %vm122, %v107, 0
    %v142 = vsel %vm122, %v108, 0
    %v145 = vsel %vm122, %v109, 0
    %147 = vmatprep.subr.bf16.mxu0 0
    %148 = vmatpush1.bf16.msra.mxu0 0
    %149 = vmatprep.subr.bf16.mxu0 0
    %150 = vmatpush1.bf16.msra.mxu0 0
    %151 = vmatprep.subr.bf16.mxu0 0
    %152 = vmatpush1.bf16.msra.mxu0 0
    %153 = vmatprep.subr.bf16.mxu0 0
    %154 = vmatpush1.bf16.msra.mxu0 0
    %155 = vmatprep.subr.bf16.mxu0 0
    %156 = vmatpush1.bf16.msra.mxu0 0
    %157 = vmatprep.subr.bf16.mxu0 0
    %158 = vmatpush1.bf16.msra.mxu0 0
    %159 = vmatprep.subr.bf16.mxu0 0
    %160 = vmatpush1.bf16.msra.mxu0 %v119
    %161 = vmatprep.subr.bf16.mxu0 0
    %162 = vmatpush1.bf16.msra.mxu0 %v118
    %163 = vmatprep.subr.bf16.mxu0 0
    %164 = vmatpush2.bf16.msra.mxu0 0
    %165 = vmatprep.subr.bf16.mxu0 0
    %166 = vmatpush2.bf16.msra.mxu0 0
    %167 = vmatprep.subr.bf16.mxu0 0
    %168 = vmatpush2.bf16.msra.mxu0 0
    %169 = vmatprep.subr.bf16.mxu0 0
    %170 = vmatpush2.bf16.msra.mxu0 0
    %171 = vmatprep.subr.bf16.mxu0 0
    %172 = vmatpush2.bf16.msra.mxu0 0
    %173 = vmatprep.subr.bf16.mxu0 0
    %174 = vmatpush2.bf16.msra.mxu0 0
    %175 = vmatprep.subr.bf16.mxu0 0
    %176 = vmatpush2.bf16.msra.mxu0 0
    %177 = vmatprep.subr.bf16.mxu0 0
    %178 = vmatpush2.bf16.msra.mxu0 0
    %179 = vmatprep.mubr.bf16.mxu0 0
    %180 = vmatmul.mubr.bf16.gmra.mxu0 %v124
    %v181 = vpop.f32.mrf.mxu0
    %v182 = vadd.f32 %v68, %v181
    %v183 = vpop.f32.mrf.mxu0
    %v184 = vpop.f32.mrf.mxu0
    %v185 = vadd.f32 %v68, %v184
    %v186 = vpop.f32.mrf.mxu0
    %187 = vmatprep.mubr.bf16.mxu0 0
    %188 = vmatmul.mubr.bf16.gmra.mxu0 %v127
    %v189 = vpop.f32.mrf.mxu0
    %v190 = vadd.f32 %v68, %v189
    %v191 = vpop.f32.mrf.mxu0
    %v192 = vpop.f32.mrf.mxu0
    %v193 = vadd.f32 %v68, %v192
    %v194 = vpop.f32.mrf.mxu0
    %195 = vmatprep.mubr.bf16.mxu0 0
    %196 = vmatmul.mubr.bf16.gmra.mxu0 %v130
    %v197 = vpop.f32.mrf.mxu0
    %v198 = vadd.f32 %v68, %v197
    %v199 = vpop.f32.mrf.mxu0
    %v200 = vpop.f32.mrf.mxu0
    %v201 = vadd.f32 %v68, %v200
    %v202 = vpop.f32.mrf.mxu0
    %203 = vmatprep.mubr.bf16.mxu0 0
    %204 = vmatmul.mubr.bf16.gmra.mxu0 %v133
    %v205 = vpop.f32.mrf.mxu0
    %v206 = vadd.f32 %v68, %v205
    %v207 = vpop.f32.mrf.mxu0
    %v208 = vpop.f32.mrf.mxu0
    %v209 = vadd.f32 %v68, %v208
    %v210 = vpop.f32.mrf.mxu0
    %211 = vmatprep.mubr.bf16.mxu0 0
    %212 = vmatmul.mubr.bf16.gmra.mxu0 %v136
    %v213 = vpop.f32.mrf.mxu0
    %v214 = vadd.f32 %v68, %v213
    %v215 = vpop.f32.mrf.mxu0
    %v216 = vpop.f32.mrf.mxu0
    %v217 = vadd.f32 %v68, %v216
    %v218 = vpop.f32.mrf.mxu0
    %219 = vmatprep.mubr.bf16.mxu0 0
    %220 = vmatmul.mubr.bf16.gmra.mxu0 %v139
    %v221 = vpop.f32.mrf.mxu0
    %v222 = vadd.f32 %v68, %v221
    %v223 = vpop.f32.mrf.mxu0
    %v224 = vpop.f32.mrf.mxu0
    %v225 = vadd.f32 %v68, %v224
    %v226 = vpop.f32.mrf.mxu0
    %227 = vmatprep.mubr.bf16.mxu0 0
    %228 = vmatmul.mubr.bf16.gmra.mxu0 %v142
    %v229 = vpop.f32.mrf.mxu0
    %v230 = vadd.f32 %v68, %v229
    %v231 = vpop.f32.mrf.mxu0
    %v232 = vpop.f32.mrf.mxu0
    %v233 = vadd.f32 %v68, %v232
    %v234 = vpop.f32.mrf.mxu0
    %235 = vmatprep.mubr.bf16.mxu0 0
    %236 = vmatmul.mubr.bf16.gmra.mxu0 %v145
    %v237 = vpop.f32.mrf.mxu0
    %v238 = vadd.f32 %v68, %v237
    %v239 = vpop.f32.mrf.mxu0
    %v240 = vpop.f32.mrf.mxu0
    %v241 = vadd.f32 %v68, %v240
    %v242 = vpop.f32.mrf.mxu0
    %243 = vdwg.mxu0
    %v244 = vld [vmem:[%s1] sm:$0xf]
    %v245 = vld [vmem:[%s1 + $0x4] sm:$0xf]
    %v246 = vld [vmem:[%s1 + $0x8] sm:$0xf]
    %v247 = vld [vmem:[%s1 + $0xc] sm:$0xf]
    %v248 = vld [vmem:[%s1 + $0x10] sm:$0xf]
    %v249 = vld [vmem:[%s1 + $0x14] sm:$0xf]
    %v250 = vld [vmem:[%s1 + $0x18] sm:$0xf]
    %v251 = vld [vmem:[%s1 + $0x1c] sm:$0xf]
    %v252 = vld [vmem:[%s1 + $0x20] sm:$0xf]
    %v253 = vld [vmem:[%s1 + $0x24] sm:$0xf]
    %v254 = vld [vmem:[%s1 + $0x28] sm:$0xf]
    %v255 = vld [vmem:[%s1 + $0x2c] sm:$0xf]
    %v256 = vld [vmem:[%s1 + $0x30] sm:$0xf]
    %v257 = vld [vmem:[%s1 + $0x34] sm:$0xf]
    %v258 = vld [vmem:[%s1 + $0x38] sm:$0xf]
    %v259 = vld [vmem:[%s1 + $0x3c] sm:$0xf]
    %v260 = vunpack.c.l.bf16 %v244
    %v261 = vunpack.c.l.bf16 %v245
    %v262 = vunpack.c.l.bf16 %v246
    %v263 = vunpack.c.l.bf16 %v247
    %v264 = vunpack.c.l.bf16 %v248
    %v265 = vunpack.c.l.bf16 %v249
    %v266 = vunpack.c.l.bf16 %v250
    %v267 = vunpack.c.l.bf16 %v251
    %v268 = vunpack.c.l.bf16 %v252
    %v269 = vunpack.c.l.bf16 %v253
    %v270 = vunpack.c.l.bf16 %v254
    %v271 = vunpack.c.l.bf16 %v255
    %v272 = vunpack.c.l.bf16 %v256
    %v273 = vunpack.c.l.bf16 %v257
    %v274 = vunpack.c.l.bf16 %v258
    %v275 = vunpack.c.l.bf16 %v259
    %v276 = vadd.f32 %v182, %v260
    %v277 = vadd.f32 %v185, %v261
    %v278 = vadd.f32 %v190, %v262
    %v279 = vadd.f32 %v193, %v263
    %v280 = vadd.f32 %v198, %v264
    %v281 = vadd.f32 %v201, %v265
    %v282 = vadd.f32 %v206, %v266
    %v283 = vadd.f32 %v209, %v267
    %v284 = vadd.f32 %v214, %v268
    %v285 = vadd.f32 %v217, %v269
    %v286 = vadd.f32 %v222, %v270
    %v287 = vadd.f32 %v225, %v271
    %v288 = vadd.f32 %v230, %v272
    %v289 = vadd.f32 %v233, %v273
    %v290 = vadd.f32 %v238, %v274
    %v291 = vadd.f32 %v241, %v275
    %v292 = vld [vmem:[%s4] sm:$0x1]
    %v293 = vld [vmem:[%s5] sm:$0x1]
    %v294 = vsel %vm122, %v276, 0.0
    %295 = vadd.xlane.f32.xlu0 %v294
    %v296 = vpop.xlane.xlu0 %295
    %v297 = vsel %vm122, %v277, 0.0
    %298 = vadd.xlane.f32.xlu0 %v297
    %v299 = vpop.xlane.xlu0 %298
    %v300 = vsel %vm122, %v278, 0.0
    %301 = vadd.xlane.f32.xlu0 %v300
    %v302 = vpop.xlane.xlu0 %301
    %v303 = vsel %vm122, %v279, 0.0
    %304 = vadd.xlane.f32.xlu0 %v303
    %v305 = vpop.xlane.xlu0 %304
    %v306 = vsel %vm122, %v280, 0.0
    %307 = vadd.xlane.f32.xlu0 %v306
    %v308 = vpop.xlane.xlu0 %307
    %v309 = vsel %vm122, %v281, 0.0
    %310 = vadd.xlane.f32.xlu0 %v309
    %v311 = vpop.xlane.xlu0 %310
    %v312 = vsel %vm122, %v282, 0.0
    %313 = vadd.xlane.f32.xlu0 %v312
    %v314 = vpop.xlane.xlu0 %313
    %v315 = vsel %vm122, %v283, 0.0
    %316 = vadd.xlane.f32.xlu0 %v315
    %v317 = vpop.xlane.xlu0 %316
    %v318 = vsel %vm122, %v284, 0.0
    %319 = vadd.xlane.f32.xlu0 %v318
    %v320 = vpop.xlane.xlu0 %319
    %v321 = vsel %vm122, %v285, 0.0
    %322 = vadd.xlane.f32.xlu0 %v321
    %v323 = vpop.xlane.xlu0 %322
    %v324 = vsel %vm122, %v286, 0.0
    %325 = vadd.xlane.f32.xlu0 %v324
    %v326 = vpop.xlane.xlu0 %325
    %v327 = vsel %vm122, %v287, 0.0
    %328 = vadd.xlane.f32.xlu0 %v327
    %v329 = vpop.xlane.xlu0 %328
    %v330 = vsel %vm122, %v288, 0.0
    %331 = vadd.xlane.f32.xlu0 %v330
    %v332 = vpop.xlane.xlu0 %331
    %v333 = vsel %vm122, %v289, 0.0
    %334 = vadd.xlane.f32.xlu0 %v333
    %v335 = vpop.xlane.xlu0 %334
    %v336 = vsel %vm122, %v290, 0.0
    %337 = vadd.xlane.f32.xlu0 %v336
    %v338 = vpop.xlane.xlu0 %337
    %v339 = vsel %vm122, %v291, 0.0
    %340 = vadd.xlane.f32.xlu0 %v339
    %v341 = vpop.xlane.xlu0 %340
    %v342 = vrcp.pop 32.0
    %v343 = vmul.f32 %v296, %v342
    %v344 = vmul.f32 %v299, %v342
    %v345 = vmul.f32 %v302, %v342
    %v346 = vmul.f32 %v305, %v342
    %v347 = vmul.f32 %v308, %v342
    %v348 = vmul.f32 %v311, %v342
    %v349 = vmul.f32 %v314, %v342
    %v350 = vmul.f32 %v317, %v342
    %v351 = vmul.f32 %v320, %v342
    %v352 = vmul.f32 %v323, %v342
    %v353 = vmul.f32 %v326, %v342
    %v354 = vmul.f32 %v329, %v342
    %v355 = vmul.f32 %v332, %v342
    %v356 = vmul.f32 %v335, %v342
    %v357 = vmul.f32 %v338, %v342
    %v358 = vmul.f32 %v341, %v342
    %v359 = vsub.f32 %v276, %v343
    %v360 = vsub.f32 %v277, %v344
    %v361 = vsub.f32 %v278, %v345
    %v362 = vsub.f32 %v279, %v346
    %v363 = vsub.f32 %v280, %v347
    %v364 = vsub.f32 %v281, %v348
    %v365 = vsub.f32 %v282, %v349
    %v366 = vsub.f32 %v283, %v350
    %v367 = vsub.f32 %v284, %v351
    %v368 = vsub.f32 %v285, %v352
    %v369 = vsub.f32 %v286, %v353
    %v370 = vsub.f32 %v287, %v354
    %v371 = vsub.f32 %v288, %v355
    %v372 = vsub.f32 %v289, %v356
    %v373 = vsub.f32 %v290, %v357
    %v374 = vsub.f32 %v291, %v358
    %v375 = vmul.f32 %v359, %v359
    %v376 = vmul.f32 %v360, %v360
    %v377 = vmul.f32 %v361, %v361
    %v378 = vmul.f32 %v362, %v362
    %v379 = vmul.f32 %v363, %v363
    %v380 = vmul.f32 %v364, %v364
    %v381 = vmul.f32 %v365, %v365
    %v382 = vmul.f32 %v366, %v366
    %v383 = vmul.f32 %v367, %v367
    %v384 = vmul.f32 %v368, %v368
    %v385 = vmul.f32 %v369, %v369
    %v386 = vmul.f32 %v370, %v370
    %v387 = vmul.f32 %v371, %v371
    %v388 = vmul.f32 %v372, %v372
    %v389 = vmul.f32 %v373, %v373
    %v390 = vmul.f32 %v374, %v374
    %v391 = vsel %vm122, %v375, 0.0
    %392 = vadd.xlane.f32.xlu0 %v391
    %v393 = vpop.xlane.xlu0 %392
    %v394 = vsel %vm122, %v376, 0.0
    %395 = vadd.xlane.f32.xlu0 %v394
    %v396 = vpop.xlane.xlu0 %395
    %v397 = vsel %vm122, %v377, 0.0
    %398 = vadd.xlane.f32.xlu0 %v397
    %v399 = vpop.xlane.xlu0 %398
    %v400 = vsel %vm122, %v378, 0.0
    %401 = vadd.xlane.f32.xlu0 %v400
    %v402 = vpop.xlane.xlu0 %401
    %v403 = vsel %vm122, %v379, 0.0
    %404 = vadd.xlane.f32.xlu0 %v403
    %v405 = vpop.xlane.xlu0 %404
    %v406 = vsel %vm122, %v380, 0.0
    %407 = vadd.xlane.f32.xlu0 %v406
    %v408 = vpop.xlane.xlu0 %407
    %v409 = vsel %vm122, %v381, 0.0
    %410 = vadd.xlane.f32.xlu0 %v409
    %v411 = vpop.xlane.xlu0 %410
    %v412 = vsel %vm122, %v382, 0.0
    %413 = vadd.xlane.f32.xlu0 %v412
    %v414 = vpop.xlane.xlu0 %413
    %v415 = vsel %vm122, %v383, 0.0
    %416 = vadd.xlane.f32.xlu0 %v415
    %v417 = vpop.xlane.xlu0 %416
    %v418 = vsel %vm122, %v384, 0.0
    %419 = vadd.xlane.f32.xlu0 %v418
    %v420 = vpop.xlane.xlu0 %419
    %v421 = vsel %vm122, %v385, 0.0
    %422 = vadd.xlane.f32.xlu0 %v421
    %v423 = vpop.xlane.xlu0 %422
    %v424 = vsel %vm122, %v386, 0.0
    %425 = vadd.xlane.f32.xlu0 %v424
    %v426 = vpop.xlane.xlu0 %425
    %v427 = vsel %vm122, %v387, 0.0
    %428 = vadd.xlane.f32.xlu0 %v427
    %v429 = vpop.xlane.xlu0 %428
    %v430 = vsel %vm122, %v388, 0.0
    %431 = vadd.xlane.f32.xlu0 %v430
    %v432 = vpop.xlane.xlu0 %431
    %v433 = vsel %vm122, %v389, 0.0
    %434 = vadd.xlane.f32.xlu0 %v433
    %v435 = vpop.xlane.xlu0 %434
    %v436 = vsel %vm122, %v390, 0.0
    %437 = vadd.xlane.f32.xlu0 %v436
    %v438 = vpop.xlane.xlu0 %437
    %v439 = vmul.f32 %v393, %v342
    %v440 = vmul.f32 %v396, %v342
    %v441 = vmul.f32 %v399, %v342
    %v442 = vmul.f32 %v402, %v342
    %v443 = vmul.f32 %v405, %v342
    %v444 = vmul.f32 %v408, %v342
    %v445 = vmul.f32 %v411, %v342
    %v446 = vmul.f32 %v414, %v342
    %v447 = vmul.f32 %v417, %v342
    %v448 = vmul.f32 %v420, %v342
    %v449 = vmul.f32 %v423, %v342
    %v450 = vmul.f32 %v426, %v342
    %v451 = vmul.f32 %v429, %v342
    %v452 = vmul.f32 %v432, %v342
    %v453 = vmul.f32 %v435, %v342
    %v454 = vmul.f32 %v438, %v342
    %v455 = vadd.f32 %v439, 1e-05
    %v456 = vadd.f32 %v440, 1e-05
    %v457 = vadd.f32 %v441, 1e-05
    %v458 = vadd.f32 %v442, 1e-05
    %v459 = vadd.f32 %v443, 1e-05
    %v460 = vadd.f32 %v444, 1e-05
    %v461 = vadd.f32 %v445, 1e-05
    %v462 = vadd.f32 %v446, 1e-05
    %v463 = vadd.f32 %v447, 1e-05
    %v464 = vadd.f32 %v448, 1e-05
    %v465 = vadd.f32 %v449, 1e-05
    %v466 = vadd.f32 %v450, 1e-05
    %v467 = vadd.f32 %v451, 1e-05
    %v468 = vadd.f32 %v452, 1e-05
    %v469 = vadd.f32 %v453, 1e-05
    %v470 = vadd.f32 %v454, 1e-05
    %v471 = vrsqrt.pop %v455
    %v472 = vrsqrt.pop %v456
    %v473 = vrsqrt.pop %v457
    %v474 = vrsqrt.pop %v458
    %v475 = vrsqrt.pop %v459
    %v476 = vrsqrt.pop %v460
    %v477 = vrsqrt.pop %v461
    %v478 = vrsqrt.pop %v462
    %v479 = vrsqrt.pop %v463
    %v480 = vrsqrt.pop %v464
    %v481 = vrsqrt.pop %v465
    %v482 = vrsqrt.pop %v466
    %v483 = vrsqrt.pop %v467
    %v484 = vrsqrt.pop %v468
    %v485 = vrsqrt.pop %v469
    %v486 = vrsqrt.pop %v470
    %v487 = vmul.f32 %v359, %v471
    %v488 = vmul.f32 %v360, %v472
    %v489 = vmul.f32 %v361, %v473
    %v490 = vmul.f32 %v362, %v474
    %v491 = vmul.f32 %v363, %v475
    %v492 = vmul.f32 %v364, %v476
    %v493 = vmul.f32 %v365, %v477
    %v494 = vmul.f32 %v366, %v478
    %v495 = vmul.f32 %v367, %v479
    %v496 = vmul.f32 %v368, %v480
    %v497 = vmul.f32 %v369, %v481
    %v498 = vmul.f32 %v370, %v482
    %v499 = vmul.f32 %v371, %v483
    %v500 = vmul.f32 %v372, %v484
    %v501 = vmul.f32 %v373, %v485
    %v502 = vmul.f32 %v374, %v486
    %v504 = vlaneseq
    %v505 = vshrl.u32 %v504, 7
    %v506 = vsub.s32 0, %v505
    %v507 = vrot.slane %v292, %v506
    %v509 = vmul.f32 %v487, %v507
    %v510 = vmul.f32 %v488, %v507
    %v511 = vmul.f32 %v489, %v507
    %v512 = vmul.f32 %v490, %v507
    %v513 = vmul.f32 %v491, %v507
    %v514 = vmul.f32 %v492, %v507
    %v515 = vmul.f32 %v493, %v507
    %v516 = vmul.f32 %v494, %v507
    %v517 = vmul.f32 %v495, %v507
    %v518 = vmul.f32 %v496, %v507
    %v519 = vmul.f32 %v497, %v507
    %v520 = vmul.f32 %v498, %v507
    %v521 = vmul.f32 %v499, %v507
    %v522 = vmul.f32 %v500, %v507
    %v523 = vmul.f32 %v501, %v507
    %v524 = vmul.f32 %v502, %v507
    %v526 = vlaneseq
    %v527 = vshrl.u32 %v526, 7
    %v528 = vsub.s32 0, %v527
    %v529 = vrot.slane %v293, %v528
    %v531 = vadd.f32 %v509, %v529
    %v532 = vadd.f32 %v510, %v529
    %v533 = vadd.f32 %v511, %v529
    %v534 = vadd.f32 %v512, %v529
    %v535 = vadd.f32 %v513, %v529
    %v536 = vadd.f32 %v514, %v529
    %v537 = vadd.f32 %v515, %v529
    %v538 = vadd.f32 %v516, %v529
    %v539 = vadd.f32 %v517, %v529
    %v540 = vadd.f32 %v518, %v529
    %v541 = vadd.f32 %v519, %v529
    %v542 = vadd.f32 %v520, %v529
    %v543 = vadd.f32 %v521, %v529
    %v544 = vadd.f32 %v522, %v529
    %v545 = vadd.f32 %v523, %v529
    %v546 = vadd.f32 %v524, %v529
    %v547 = vpack.c.bf16 %v532, %v531
    %v548 = vpack.c.bf16 %v534, %v533
    %v549 = vpack.c.bf16 %v536, %v535
    %v550 = vpack.c.bf16 %v538, %v537
    %v551 = vpack.c.bf16 %v540, %v539
    %v552 = vpack.c.bf16 %v542, %v541
    %v553 = vpack.c.bf16 %v544, %v543
    %v554 = vpack.c.bf16 %v546, %v545
    %v555 = vld [vmem:[%s6] sm:$0xf]
    %v556 = vld [vmem:[%s6 + $0x4] sm:$0xf]
    %v557 = vld [vmem:[%s6 + $0x8] sm:$0xf]
    %v558 = vld [vmem:[%s6 + $0xc] sm:$0xf]
    %v559 = vld [vmem:[%s7] sm:$0x1]
    %v561 = vlaneseq
    %v562 = vshrl.u32 %v561, 7
    %v563 = vsub.s32 0, %v562
    %v564 = vrot.slane %v559, %v563
    %v570 = vunpack.c.l.b16 %v555
    %v571 = vunpack.c.l.b16 %v556
    %v572 = vunpack.c.l.b16 %v557
    %v573 = vunpack.c.l.b16 %v558
    %v574 = vpack.c.b16 %v571, %v570
    %v575 = vpack.c.b16 %v573, %v572
    %v579 = vsel %vm122, %v547, 0
    %v582 = vsel %vm122, %v548, 0
    %v585 = vsel %vm122, %v549, 0
    %v588 = vsel %vm122, %v550, 0
    %v591 = vsel %vm122, %v551, 0
    %v594 = vsel %vm122, %v552, 0
    %v597 = vsel %vm122, %v553, 0
    %v600 = vsel %vm122, %v554, 0
    %602 = vmatprep.subr.bf16.mxu0 0
    %603 = vmatpush1.bf16.msra.mxu0 0
    %604 = vmatprep.subr.bf16.mxu0 0
    %605 = vmatpush1.bf16.msra.mxu0 0
    %606 = vmatprep.subr.bf16.mxu0 0
    %607 = vmatpush1.bf16.msra.mxu0 0
    %608 = vmatprep.subr.bf16.mxu0 0
    %609 = vmatpush1.bf16.msra.mxu0 0
    %610 = vmatprep.subr.bf16.mxu0 0
    %611 = vmatpush1.bf16.msra.mxu0 0
    %612 = vmatprep.subr.bf16.mxu0 0
    %613 = vmatpush1.bf16.msra.mxu0 0
    %614 = vmatprep.subr.bf16.mxu0 0
    %615 = vmatpush1.bf16.msra.mxu0 %v575
    %616 = vmatprep.subr.bf16.mxu0 0
    %617 = vmatpush1.bf16.msra.mxu0 %v574
    %618 = vmatprep.subr.bf16.mxu0 0
    %619 = vmatpush2.bf16.msra.mxu0 0
    %620 = vmatprep.subr.bf16.mxu0 0
    %621 = vmatpush2.bf16.msra.mxu0 0
    %622 = vmatprep.subr.bf16.mxu0 0
    %623 = vmatpush2.bf16.msra.mxu0 0
    %624 = vmatprep.subr.bf16.mxu0 0
    %625 = vmatpush2.bf16.msra.mxu0 0
    %626 = vmatprep.subr.bf16.mxu0 0
    %627 = vmatpush2.bf16.msra.mxu0 0
    %628 = vmatprep.subr.bf16.mxu0 0
    %629 = vmatpush2.bf16.msra.mxu0 0
    %630 = vmatprep.subr.bf16.mxu0 0
    %631 = vmatpush2.bf16.msra.mxu0 0
    %632 = vmatprep.subr.bf16.mxu0 0
    %633 = vmatpush2.bf16.msra.mxu0 0
    %634 = vmatprep.mubr.bf16.mxu0 0
    %635 = vmatmul.mubr.bf16.gmra.mxu0 %v579
    %v636 = vpop.f32.mrf.mxu0
    %v637 = vadd.f32 %v564, %v636
    %v638 = vpop.f32.mrf.mxu0
    %v639 = vpop.f32.mrf.mxu0
    %v640 = vadd.f32 %v564, %v639
    %v641 = vpop.f32.mrf.mxu0
    %642 = vmatprep.mubr.bf16.mxu0 0
    %643 = vmatmul.mubr.bf16.gmra.mxu0 %v582
    %v644 = vpop.f32.mrf.mxu0
    %v645 = vadd.f32 %v564, %v644
    %v646 = vpop.f32.mrf.mxu0
    %v647 = vpop.f32.mrf.mxu0
    %v648 = vadd.f32 %v564, %v647
    %v649 = vpop.f32.mrf.mxu0
    %650 = vmatprep.mubr.bf16.mxu0 0
    %651 = vmatmul.mubr.bf16.gmra.mxu0 %v585
    %v652 = vpop.f32.mrf.mxu0
    %v653 = vadd.f32 %v564, %v652
    %v654 = vpop.f32.mrf.mxu0
    %v655 = vpop.f32.mrf.mxu0
    %v656 = vadd.f32 %v564, %v655
    %v657 = vpop.f32.mrf.mxu0
    %658 = vmatprep.mubr.bf16.mxu0 0
    %659 = vmatmul.mubr.bf16.gmra.mxu0 %v588
    %v660 = vpop.f32.mrf.mxu0
    %v661 = vadd.f32 %v564, %v660
    %v662 = vpop.f32.mrf.mxu0
    %v663 = vpop.f32.mrf.mxu0
    %v664 = vadd.f32 %v564, %v663
    %v665 = vpop.f32.mrf.mxu0
    %666 = vmatprep.mubr.bf16.mxu0 0
    %667 = vmatmul.mubr.bf16.gmra.mxu0 %v591
    %v668 = vpop.f32.mrf.mxu0
    %v669 = vadd.f32 %v564, %v668
    %v670 = vpop.f32.mrf.mxu0
    %v671 = vpop.f32.mrf.mxu0
    %v672 = vadd.f32 %v564, %v671
    %v673 = vpop.f32.mrf.mxu0
    %674 = vmatprep.mubr.bf16.mxu0 0
    %675 = vmatmul.mubr.bf16.gmra.mxu0 %v594
    %v676 = vpop.f32.mrf.mxu0
    %v677 = vadd.f32 %v564, %v676
    %v678 = vpop.f32.mrf.mxu0
    %v679 = vpop.f32.mrf.mxu0
    %v680 = vadd.f32 %v564, %v679
    %v681 = vpop.f32.mrf.mxu0
    %682 = vmatprep.mubr.bf16.mxu0 0
    %683 = vmatmul.mubr.bf16.gmra.mxu0 %v597
    %v684 = vpop.f32.mrf.mxu0
    %v685 = vadd.f32 %v564, %v684
    %v686 = vpop.f32.mrf.mxu0
    %v687 = vpop.f32.mrf.mxu0
    %v688 = vadd.f32 %v564, %v687
    %v689 = vpop.f32.mrf.mxu0
    %690 = vmatprep.mubr.bf16.mxu0 0
    %691 = vmatmul.mubr.bf16.gmra.mxu0 %v600
    %v692 = vpop.f32.mrf.mxu0
    %v693 = vadd.f32 %v564, %v692
    %v694 = vpop.f32.mrf.mxu0
    %v695 = vpop.f32.mrf.mxu0
    %v696 = vadd.f32 %v564, %v695
    %v697 = vpop.f32.mrf.mxu0
    %698 = vdwg.mxu0
    %v699 = vmul.f32 %v637, 0.5
    %v700 = vmul.f32 %v640, 0.5
    %v701 = vmul.f32 %v645, 0.5
    %v702 = vmul.f32 %v648, 0.5
    %v703 = vmul.f32 %v653, 0.5
    %v704 = vmul.f32 %v656, 0.5
    %v705 = vmul.f32 %v661, 0.5
    %v706 = vmul.f32 %v664, 0.5
    %v707 = vmul.f32 %v669, 0.5
    %v708 = vmul.f32 %v672, 0.5
    %v709 = vmul.f32 %v677, 0.5
    %v710 = vmul.f32 %v680, 0.5
    %v711 = vmul.f32 %v685, 0.5
    %v712 = vmul.f32 %v688, 0.5
    %v713 = vmul.f32 %v693, 0.5
    %v714 = vmul.f32 %v696, 0.5
    %v715 = vmul.f32 %v637, 0.044715
    %v716 = vmul.f32 %v640, 0.044715
    %v717 = vmul.f32 %v645, 0.044715
    %v718 = vmul.f32 %v648, 0.044715
    %v719 = vmul.f32 %v653, 0.044715
    %v720 = vmul.f32 %v656, 0.044715
    %v721 = vmul.f32 %v661, 0.044715
    %v722 = vmul.f32 %v664, 0.044715
    %v723 = vmul.f32 %v669, 0.044715
    %v724 = vmul.f32 %v672, 0.044715
    %v725 = vmul.f32 %v677, 0.044715
    %v726 = vmul.f32 %v680, 0.044715
    %v727 = vmul.f32 %v685, 0.044715
    %v728 = vmul.f32 %v688, 0.044715
    %v729 = vmul.f32 %v693, 0.044715
    %v730 = vmul.f32 %v696, 0.044715
    %v731 = vmul.f32 %v715, %v637
    %v732 = vmul.f32 %v716, %v640
    %v733 = vmul.f32 %v717, %v645
    %v734 = vmul.f32 %v718, %v648
    %v735 = vmul.f32 %v719, %v653
    %v736 = vmul.f32 %v720, %v656
    %v737 = vmul.f32 %v721, %v661
    %v738 = vmul.f32 %v722, %v664
    %v739 = vmul.f32 %v723, %v669
    %v740 = vmul.f32 %v724, %v672
    %v741 = vmul.f32 %v725, %v677
    %v742 = vmul.f32 %v726, %v680
    %v743 = vmul.f32 %v727, %v685
    %v744 = vmul.f32 %v728, %v688
    %v745 = vmul.f32 %v729, %v693
    %v746 = vmul.f32 %v730, %v696
    %v747 = vmul.f32 %v731, %v637
    %v748 = vmul.f32 %v732, %v640
    %v749 = vmul.f32 %v733, %v645
    %v750 = vmul.f32 %v734, %v648
    %v751 = vmul.f32 %v735, %v653
    %v752 = vmul.f32 %v736, %v656
    %v753 = vmul.f32 %v737, %v661
    %v754 = vmul.f32 %v738, %v664
    %v755 = vmul.f32 %v739, %v669
    %v756 = vmul.f32 %v740, %v672
    %v757 = vmul.f32 %v741, %v677
    %v758 = vmul.f32 %v742, %v680
    %v759 = vmul.f32 %v743, %v685
    %v760 = vmul.f32 %v744, %v688
    %v761 = vmul.f32 %v745, %v693
    %v762 = vmul.f32 %v746, %v696
    %v763 = vadd.f32 %v637, %v747
    %v764 = vadd.f32 %v640, %v748
    %v765 = vadd.f32 %v645, %v749
    %v766 = vadd.f32 %v648, %v750
    %v767 = vadd.f32 %v653, %v751
    %v768 = vadd.f32 %v656, %v752
    %v769 = vadd.f32 %v661, %v753
    %v770 = vadd.f32 %v664, %v754
    %v771 = vadd.f32 %v669, %v755
    %v772 = vadd.f32 %v672, %v756
    %v773 = vadd.f32 %v677, %v757
    %v774 = vadd.f32 %v680, %v758
    %v775 = vadd.f32 %v685, %v759
    %v776 = vadd.f32 %v688, %v760
    %v777 = vadd.f32 %v693, %v761
    %v778 = vadd.f32 %v696, %v762
    %v779 = vmul.f32 %v763, 0.7978846
    %v780 = vmul.f32 %v764, 0.7978846
    %v781 = vmul.f32 %v765, 0.7978846
    %v782 = vmul.f32 %v766, 0.7978846
    %v783 = vmul.f32 %v767, 0.7978846
    %v784 = vmul.f32 %v768, 0.7978846
    %v785 = vmul.f32 %v769, 0.7978846
    %v786 = vmul.f32 %v770, 0.7978846
    %v787 = vmul.f32 %v771, 0.7978846
    %v788 = vmul.f32 %v772, 0.7978846
    %v789 = vmul.f32 %v773, 0.7978846
    %v790 = vmul.f32 %v774, 0.7978846
    %v791 = vmul.f32 %v775, 0.7978846
    %v792 = vmul.f32 %v776, 0.7978846
    %v793 = vmul.f32 %v777, 0.7978846
    %v794 = vmul.f32 %v778, 0.7978846
    %v795 = vtanh.pop %v779
    %v796 = vtanh.pop %v780
    %v797 = vtanh.pop %v781
    %v798 = vtanh.pop %v782
    %v799 = vtanh.pop %v783
    %v800 = vtanh.pop %v784
    %v801 = vtanh.pop %v785
    %v802 = vtanh.pop %v786
    %v803 = vtanh.pop %v787
    %v804 = vtanh.pop %v788
    %v805 = vtanh.pop %v789
    %v806 = vtanh.pop %v790
    %v807 = vtanh.pop %v791
    %v808 = vtanh.pop %v792
    %v809 = vtanh.pop %v793
    %v810 = vtanh.pop %v794
    %v811 = vadd.f32 %v795, 1.0
    %v812 = vadd.f32 %v796, 1.0
    %v813 = vadd.f32 %v797, 1.0
    %v814 = vadd.f32 %v798, 1.0
    %v815 = vadd.f32 %v799, 1.0
    %v816 = vadd.f32 %v800, 1.0
    %v817 = vadd.f32 %v801, 1.0
    %v818 = vadd.f32 %v802, 1.0
    %v819 = vadd.f32 %v803, 1.0
    %v820 = vadd.f32 %v804, 1.0
    %v821 = vadd.f32 %v805, 1.0
    %v822 = vadd.f32 %v806, 1.0
    %v823 = vadd.f32 %v807, 1.0
    %v824 = vadd.f32 %v808, 1.0
    %v825 = vadd.f32 %v809, 1.0
    %v826 = vadd.f32 %v810, 1.0
    %v827 = vmul.f32 %v699, %v811
    %v828 = vmul.f32 %v700, %v812
    %v829 = vmul.f32 %v701, %v813
    %v830 = vmul.f32 %v702, %v814
    %v831 = vmul.f32 %v703, %v815
    %v832 = vmul.f32 %v704, %v816
    %v833 = vmul.f32 %v705, %v817
    %v834 = vmul.f32 %v706, %v818
    %v835 = vmul.f32 %v707, %v819
    %v836 = vmul.f32 %v708, %v820
    %v837 = vmul.f32 %v709, %v821
    %v838 = vmul.f32 %v710, %v822
    %v839 = vmul.f32 %v711, %v823
    %v840 = vmul.f32 %v712, %v824
    %v841 = vmul.f32 %v713, %v825
    %v842 = vmul.f32 %v714, %v826
    %v843 = vpack.c.bf16 %v828, %v827
    %v844 = vpack.c.bf16 %v830, %v829
    %v845 = vpack.c.bf16 %v832, %v831
    %v846 = vpack.c.bf16 %v834, %v833
    %v847 = vpack.c.bf16 %v836, %v835
    %v848 = vpack.c.bf16 %v838, %v837
    %v849 = vpack.c.bf16 %v840, %v839
    %v850 = vpack.c.bf16 %v842, %v841
    %v851 = vld [vmem:[%s8] sm:$0xf]
    %v852 = vld [vmem:[%s8 + $0x4] sm:$0xf]
    %v853 = vld [vmem:[%s8 + $0x8] sm:$0xf]
    %v854 = vld [vmem:[%s8 + $0xc] sm:$0xf]
    %v855 = vld [vmem:[%s8 + $0x10] sm:$0xf]
    %v856 = vld [vmem:[%s8 + $0x14] sm:$0xf]
    %v857 = vld [vmem:[%s8 + $0x18] sm:$0xf]
    %v858 = vld [vmem:[%s8 + $0x1c] sm:$0xf]
    %v859 = vld [vmem:[%s9] sm:$0x1]
    %v861 = vlaneseq
    %v862 = vshrl.u32 %v861, 7
    %v863 = vsub.s32 0, %v862
    %v864 = vrot.slane %v859, %v863
    %v874 = vunpack.c.l.b16 %v851
    %v875 = vunpack.c.l.b16 %v852
    %v876 = vunpack.c.l.b16 %v853
    %v877 = vunpack.c.l.b16 %v854
    %v878 = vunpack.c.l.b16 %v855
    %v879 = vunpack.c.l.b16 %v856
    %v880 = vunpack.c.l.b16 %v857
    %v881 = vunpack.c.l.b16 %v858
    %v882 = vpack.c.b16 %v875, %v874
    %v883 = vpack.c.b16 %v877, %v876
    %v884 = vpack.c.b16 %v879, %v878
    %v885 = vpack.c.b16 %v881, %v880
    %vm890 = vcmask 523264
    %v892 = vsel %vm890, %v843, 0
    %v895 = vsel %vm890, %v844, 0
    %v898 = vsel %vm890, %v845, 0
    %v901 = vsel %vm890, %v846, 0
    %v904 = vsel %vm890, %v847, 0
    %v907 = vsel %vm890, %v848, 0
    %v910 = vsel %vm890, %v849, 0
    %v913 = vsel %vm890, %v850, 0
    %915 = vmatprep.subr.bf16.mxu0 0
    %916 = vmatpush1.bf16.msra.mxu0 0
    %917 = vmatprep.subr.bf16.mxu0 0
    %918 = vmatpush1.bf16.msra.mxu0 0
    %919 = vmatprep.subr.bf16.mxu0 0
    %920 = vmatpush1.bf16.msra.mxu0 0
    %921 = vmatprep.subr.bf16.mxu0 0
    %922 = vmatpush1.bf16.msra.mxu0 0
    %923 = vmatprep.subr.bf16.mxu0 0
    %924 = vmatpush1.bf16.msra.mxu0 %v885
    %925 = vmatprep.subr.bf16.mxu0 0
    %926 = vmatpush1.bf16.msra.mxu0 %v884
    %927 = vmatprep.subr.bf16.mxu0 0
    %928 = vmatpush1.bf16.msra.mxu0 %v883
    %929 = vmatprep.subr.bf16.mxu0 0
    %930 = vmatpush1.bf16.msra.mxu0 %v882
    %931 = vmatprep.subr.bf16.mxu0 0
    %932 = vmatpush2.bf16.msra.mxu0 0
    %933 = vmatprep.subr.bf16.mxu0 0
    %934 = vmatpush2.bf16.msra.mxu0 0
    %935 = vmatprep.subr.bf16.mxu0 0
    %936 = vmatpush2.bf16.msra.mxu0 0
    %937 = vmatprep.subr.bf16.mxu0 0
    %938 = vmatpush2.bf16.msra.mxu0 0
    %939 = vmatprep.subr.bf16.mxu0 0
    %940 = vmatpush2.bf16.msra.mxu0 0
    %941 = vmatprep.subr.bf16.mxu0 0
    %942 = vmatpush2.bf16.msra.mxu0 0
    %943 = vmatprep.subr.bf16.mxu0 0
    %944 = vmatpush2.bf16.msra.mxu0 0
    %945 = vmatprep.subr.bf16.mxu0 0
    %946 = vmatpush2.bf16.msra.mxu0 0
    %947 = vmatprep.mubr.bf16.mxu0 0
    %948 = vmatmul.mubr.bf16.gmra.mxu0 %v892
    %v949 = vpop.f32.mrf.mxu0
    %v950 = vadd.f32 %v864, %v949
    %v951 = vpop.f32.mrf.mxu0
    %v952 = vpop.f32.mrf.mxu0
    %v953 = vadd.f32 %v864, %v952
    %v954 = vpop.f32.mrf.mxu0
    %955 = vmatprep.mubr.bf16.mxu0 0
    %956 = vmatmul.mubr.bf16.gmra.mxu0 %v895
    %v957 = vpop.f32.mrf.mxu0
    %v958 = vadd.f32 %v864, %v957
    %v959 = vpop.f32.mrf.mxu0
    %v960 = vpop.f32.mrf.mxu0
    %v961 = vadd.f32 %v864, %v960
    %v962 = vpop.f32.mrf.mxu0
    %963 = vmatprep.mubr.bf16.mxu0 0
    %964 = vmatmul.mubr.bf16.gmra.mxu0 %v898
    %v965 = vpop.f32.mrf.mxu0
    %v966 = vadd.f32 %v864, %v965
    %v967 = vpop.f32.mrf.mxu0
    %v968 = vpop.f32.mrf.mxu0
    %v969 = vadd.f32 %v864, %v968
    %v970 = vpop.f32.mrf.mxu0
    %971 = vmatprep.mubr.bf16.mxu0 0
    %972 = vmatmul.mubr.bf16.gmra.mxu0 %v901
    %v973 = vpop.f32.mrf.mxu0
    %v974 = vadd.f32 %v864, %v973
    %v975 = vpop.f32.mrf.mxu0
    %v976 = vpop.f32.mrf.mxu0
    %v977 = vadd.f32 %v864, %v976
    %v978 = vpop.f32.mrf.mxu0
    %979 = vmatprep.mubr.bf16.mxu0 0
    %980 = vmatmul.mubr.bf16.gmra.mxu0 %v904
    %v981 = vpop.f32.mrf.mxu0
    %v982 = vadd.f32 %v864, %v981
    %v983 = vpop.f32.mrf.mxu0
    %v984 = vpop.f32.mrf.mxu0
    %v985 = vadd.f32 %v864, %v984
    %v986 = vpop.f32.mrf.mxu0
    %987 = vmatprep.mubr.bf16.mxu0 0
    %988 = vmatmul.mubr.bf16.gmra.mxu0 %v907
    %v989 = vpop.f32.mrf.mxu0
    %v990 = vadd.f32 %v864, %v989
    %v991 = vpop.f32.mrf.mxu0
    %v992 = vpop.f32.mrf.mxu0
    %v993 = vadd.f32 %v864, %v992
    %v994 = vpop.f32.mrf.mxu0
    %995 = vmatprep.mubr.bf16.mxu0 0
    %996 = vmatmul.mubr.bf16.gmra.mxu0 %v910
    %v997 = vpop.f32.mrf.mxu0
    %v998 = vadd.f32 %v864, %v997
    %v999 = vpop.f32.mrf.mxu0
    %v1000 = vpop.f32.mrf.mxu0
    %v1001 = vadd.f32 %v864, %v1000
    %v1002 = vpop.f32.mrf.mxu0
    %1003 = vmatprep.mubr.bf16.mxu0 0
    %1004 = vmatmul.mubr.bf16.gmra.mxu0 %v913
    %v1005 = vpop.f32.mrf.mxu0
    %v1006 = vadd.f32 %v864, %v1005
    %v1007 = vpop.f32.mrf.mxu0
    %v1008 = vpop.f32.mrf.mxu0
    %v1009 = vadd.f32 %v864, %v1008
    %v1010 = vpop.f32.mrf.mxu0
    %1011 = vdwg.mxu0
    %v1012 = vadd.f32 %v531, %v950
    %v1013 = vadd.f32 %v532, %v953
    %v1014 = vadd.f32 %v533, %v958
    %v1015 = vadd.f32 %v534, %v961
    %v1016 = vadd.f32 %v535, %v966
    %v1017 = vadd.f32 %v536, %v969
    %v1018 = vadd.f32 %v537, %v974
    %v1019 = vadd.f32 %v538, %v977
    %v1020 = vadd.f32 %v539, %v982
    %v1021 = vadd.f32 %v540, %v985
    %v1022 = vadd.f32 %v541, %v990
    %v1023 = vadd.f32 %v542, %v993
    %v1024 = vadd.f32 %v543, %v998
    %v1025 = vadd.f32 %v544, %v1001
    %v1026 = vadd.f32 %v545, %v1006
    %v1027 = vadd.f32 %v546, %v1009
    %v1028 = vld [vmem:[%s10] sm:$0x1]
    %v1029 = vld [vmem:[%s11] sm:$0x1]
    %v1030 = vsel %vm122, %v1012, 0.0
    %1031 = vadd.xlane.f32.xlu0 %v1030
    %v1032 = vpop.xlane.xlu0 %1031
    %v1033 = vsel %vm122, %v1013, 0.0
    %1034 = vadd.xlane.f32.xlu0 %v1033
    %v1035 = vpop.xlane.xlu0 %1034
    %v1036 = vsel %vm122, %v1014, 0.0
    %1037 = vadd.xlane.f32.xlu0 %v1036
    %v1038 = vpop.xlane.xlu0 %1037
    %v1039 = vsel %vm122, %v1015, 0.0
    %1040 = vadd.xlane.f32.xlu0 %v1039
    %v1041 = vpop.xlane.xlu0 %1040
    %v1042 = vsel %vm122, %v1016, 0.0
    %1043 = vadd.xlane.f32.xlu0 %v1042
    %v1044 = vpop.xlane.xlu0 %1043
    %v1045 = vsel %vm122, %v1017, 0.0
    %1046 = vadd.xlane.f32.xlu0 %v1045
    %v1047 = vpop.xlane.xlu0 %1046
    %v1048 = vsel %vm122, %v1018, 0.0
    %1049 = vadd.xlane.f32.xlu0 %v1048
    %v1050 = vpop.xlane.xlu0 %1049
    %v1051 = vsel %vm122, %v1019, 0.0
    %1052 = vadd.xlane.f32.xlu0 %v1051
    %v1053 = vpop.xlane.xlu0 %1052
    %v1054 = vsel %vm122, %v1020, 0.0
    %1055 = vadd.xlane.f32.xlu0 %v1054
    %v1056 = vpop.xlane.xlu0 %1055
    %v1057 = vsel %vm122, %v1021, 0.0
    %1058 = vadd.xlane.f32.xlu0 %v1057
    %v1059 = vpop.xlane.xlu0 %1058
    %v1060 = vsel %vm122, %v1022, 0.0
    %1061 = vadd.xlane.f32.xlu0 %v1060
    %v1062 = vpop.xlane.xlu0 %1061
    %v1063 = vsel %vm122, %v1023, 0.0
    %1064 = vadd.xlane.f32.xlu0 %v1063
    %v1065 = vpop.xlane.xlu0 %1064
    %v1066 = vsel %vm122, %v1024, 0.0
    %1067 = vadd.xlane.f32.xlu0 %v1066
    %v1068 = vpop.xlane.xlu0 %1067
    %v1069 = vsel %vm122, %v1025, 0.0
    %1070 = vadd.xlane.f32.xlu0 %v1069
    %v1071 = vpop.xlane.xlu0 %1070
    %v1072 = vsel %vm122, %v1026, 0.0
    %1073 = vadd.xlane.f32.xlu0 %v1072
    %v1074 = vpop.xlane.xlu0 %1073
    %v1075 = vsel %vm122, %v1027, 0.0
    %1076 = vadd.xlane.f32.xlu0 %v1075
    %v1077 = vpop.xlane.xlu0 %1076
    %v1078 = vmul.f32 %v1032, %v342
    %v1079 = vmul.f32 %v1035, %v342
    %v1080 = vmul.f32 %v1038, %v342
    %v1081 = vmul.f32 %v1041, %v342
    %v1082 = vmul.f32 %v1044, %v342
    %v1083 = vmul.f32 %v1047, %v342
    %v1084 = vmul.f32 %v1050, %v342
    %v1085 = vmul.f32 %v1053, %v342
    %v1086 = vmul.f32 %v1056, %v342
    %v1087 = vmul.f32 %v1059, %v342
    %v1088 = vmul.f32 %v1062, %v342
    %v1089 = vmul.f32 %v1065, %v342
    %v1090 = vmul.f32 %v1068, %v342
    %v1091 = vmul.f32 %v1071, %v342
    %v1092 = vmul.f32 %v1074, %v342
    %v1093 = vmul.f32 %v1077, %v342
    %v1094 = vsub.f32 %v1012, %v1078
    %v1095 = vsub.f32 %v1013, %v1079
    %v1096 = vsub.f32 %v1014, %v1080
    %v1097 = vsub.f32 %v1015, %v1081
    %v1098 = vsub.f32 %v1016, %v1082
    %v1099 = vsub.f32 %v1017, %v1083
    %v1100 = vsub.f32 %v1018, %v1084
    %v1101 = vsub.f32 %v1019, %v1085
    %v1102 = vsub.f32 %v1020, %v1086
    %v1103 = vsub.f32 %v1021, %v1087
    %v1104 = vsub.f32 %v1022, %v1088
    %v1105 = vsub.f32 %v1023, %v1089
    %v1106 = vsub.f32 %v1024, %v1090
    %v1107 = vsub.f32 %v1025, %v1091
    %v1108 = vsub.f32 %v1026, %v1092
    %v1109 = vsub.f32 %v1027, %v1093
    %v1110 = vmul.f32 %v1094, %v1094
    %v1111 = vmul.f32 %v1095, %v1095
    %v1112 = vmul.f32 %v1096, %v1096
    %v1113 = vmul.f32 %v1097, %v1097
    %v1114 = vmul.f32 %v1098, %v1098
    %v1115 = vmul.f32 %v1099, %v1099
    %v1116 = vmul.f32 %v1100, %v1100
    %v1117 = vmul.f32 %v1101, %v1101
    %v1118 = vmul.f32 %v1102, %v1102
    %v1119 = vmul.f32 %v1103, %v1103
    %v1120 = vmul.f32 %v1104, %v1104
    %v1121 = vmul.f32 %v1105, %v1105
    %v1122 = vmul.f32 %v1106, %v1106
    %v1123 = vmul.f32 %v1107, %v1107
    %v1124 = vmul.f32 %v1108, %v1108
    %v1125 = vmul.f32 %v1109, %v1109
    %v1126 = vsel %vm122, %v1110, 0.0
    %1127 = vadd.xlane.f32.xlu0 %v1126
    %v1128 = vpop.xlane.xlu0 %1127
    %v1129 = vsel %vm122, %v1111, 0.0
    %1130 = vadd.xlane.f32.xlu0 %v1129
    %v1131 = vpop.xlane.xlu0 %1130
    %v1132 = vsel %vm122, %v1112, 0.0
    %1133 = vadd.xlane.f32.xlu0 %v1132
    %v1134 = vpop.xlane.xlu0 %1133
    %v1135 = vsel %vm122, %v1113, 0.0
    %1136 = vadd.xlane.f32.xlu0 %v1135
    %v1137 = vpop.xlane.xlu0 %1136
    %v1138 = vsel %vm122, %v1114, 0.0
    %1139 = vadd.xlane.f32.xlu0 %v1138
    %v1140 = vpop.xlane.xlu0 %1139
    %v1141 = vsel %vm122, %v1115, 0.0
    %1142 = vadd.xlane.f32.xlu0 %v1141
    %v1143 = vpop.xlane.xlu0 %1142
    %v1144 = vsel %vm122, %v1116, 0.0
    %1145 = vadd.xlane.f32.xlu0 %v1144
    %v1146 = vpop.xlane.xlu0 %1145
    %v1147 = vsel %vm122, %v1117, 0.0
    %1148 = vadd.xlane.f32.xlu0 %v1147
    %v1149 = vpop.xlane.xlu0 %1148
    %v1150 = vsel %vm122, %v1118, 0.0
    %1151 = vadd.xlane.f32.xlu0 %v1150
    %v1152 = vpop.xlane.xlu0 %1151
    %v1153 = vsel %vm122, %v1119, 0.0
    %1154 = vadd.xlane.f32.xlu0 %v1153
    %v1155 = vpop.xlane.xlu0 %1154
    %v1156 = vsel %vm122, %v1120, 0.0
    %1157 = vadd.xlane.f32.xlu0 %v1156
    %v1158 = vpop.xlane.xlu0 %1157
    %v1159 = vsel %vm122, %v1121, 0.0
    %1160 = vadd.xlane.f32.xlu0 %v1159
    %v1161 = vpop.xlane.xlu0 %1160
    %v1162 = vsel %vm122, %v1122, 0.0
    %1163 = vadd.xlane.f32.xlu0 %v1162
    %v1164 = vpop.xlane.xlu0 %1163
    %v1165 = vsel %vm122, %v1123, 0.0
    %1166 = vadd.xlane.f32.xlu0 %v1165
    %v1167 = vpop.xlane.xlu0 %1166
    %v1168 = vsel %vm122, %v1124, 0.0
    %1169 = vadd.xlane.f32.xlu0 %v1168
    %v1170 = vpop.xlane.xlu0 %1169
    %v1171 = vsel %vm122, %v1125, 0.0
    %1172 = vadd.xlane.f32.xlu0 %v1171
    %v1173 = vpop.xlane.xlu0 %1172
    %v1174 = vmul.f32 %v1128, %v342
    %v1175 = vmul.f32 %v1131, %v342
    %v1176 = vmul.f32 %v1134, %v342
    %v1177 = vmul.f32 %v1137, %v342
    %v1178 = vmul.f32 %v1140, %v342
    %v1179 = vmul.f32 %v1143, %v342
    %v1180 = vmul.f32 %v1146, %v342
    %v1181 = vmul.f32 %v1149, %v342
    %v1182 = vmul.f32 %v1152, %v342
    %v1183 = vmul.f32 %v1155, %v342
    %v1184 = vmul.f32 %v1158, %v342
    %v1185 = vmul.f32 %v1161, %v342
    %v1186 = vmul.f32 %v1164, %v342
    %v1187 = vmul.f32 %v1167, %v342
    %v1188 = vmul.f32 %v1170, %v342
    %v1189 = vmul.f32 %v1173, %v342
    %v1190 = vadd.f32 %v1174, 1e-05
    %v1191 = vadd.f32 %v1175, 1e-05
    %v1192 = vadd.f32 %v1176, 1e-05
    %v1193 = vadd.f32 %v1177, 1e-05
    %v1194 = vadd.f32 %v1178, 1e-05
    %v1195 = vadd.f32 %v1179, 1e-05
    %v1196 = vadd.f32 %v1180, 1e-05
    %v1197 = vadd.f32 %v1181, 1e-05
    %v1198 = vadd.f32 %v1182, 1e-05
    %v1199 = vadd.f32 %v1183, 1e-05
    %v1200 = vadd.f32 %v1184, 1e-05
    %v1201 = vadd.f32 %v1185, 1e-05
    %v1202 = vadd.f32 %v1186, 1e-05
    %v1203 = vadd.f32 %v1187, 1e-05
    %v1204 = vadd.f32 %v1188, 1e-05
    %v1205 = vadd.f32 %v1189, 1e-05
    %v1206 = vrsqrt.pop %v1190
    %v1207 = vrsqrt.pop %v1191
    %v1208 = vrsqrt.pop %v1192
    %v1209 = vrsqrt.pop %v1193
    %v1210 = vrsqrt.pop %v1194
    %v1211 = vrsqrt.pop %v1195
    %v1212 = vrsqrt.pop %v1196
    %v1213 = vrsqrt.pop %v1197
    %v1214 = vrsqrt.pop %v1198
    %v1215 = vrsqrt.pop %v1199
    %v1216 = vrsqrt.pop %v1200
    %v1217 = vrsqrt.pop %v1201
    %v1218 = vrsqrt.pop %v1202
    %v1219 = vrsqrt.pop %v1203
    %v1220 = vrsqrt.pop %v1204
    %v1221 = vrsqrt.pop %v1205
    %v1222 = vmul.f32 %v1094, %v1206
    %v1223 = vmul.f32 %v1095, %v1207
    %v1224 = vmul.f32 %v1096, %v1208
    %v1225 = vmul.f32 %v1097, %v1209
    %v1226 = vmul.f32 %v1098, %v1210
    %v1227 = vmul.f32 %v1099, %v1211
    %v1228 = vmul.f32 %v1100, %v1212
    %v1229 = vmul.f32 %v1101, %v1213
    %v1230 = vmul.f32 %v1102, %v1214
    %v1231 = vmul.f32 %v1103, %v1215
    %v1232 = vmul.f32 %v1104, %v1216
    %v1233 = vmul.f32 %v1105, %v1217
    %v1234 = vmul.f32 %v1106, %v1218
    %v1235 = vmul.f32 %v1107, %v1219
    %v1236 = vmul.f32 %v1108, %v1220
    %v1237 = vmul.f32 %v1109, %v1221
    %v1239 = vlaneseq
    %v1240 = vshrl.u32 %v1239, 7
    %v1241 = vsub.s32 0, %v1240
    %v1242 = vrot.slane %v1028, %v1241
    %v1244 = vmul.f32 %v1222, %v1242
    %v1245 = vmul.f32 %v1223, %v1242
    %v1246 = vmul.f32 %v1224, %v1242
    %v1247 = vmul.f32 %v1225, %v1242
    %v1248 = vmul.f32 %v1226, %v1242
    %v1249 = vmul.f32 %v1227, %v1242
    %v1250 = vmul.f32 %v1228, %v1242
    %v1251 = vmul.f32 %v1229, %v1242
    %v1252 = vmul.f32 %v1230, %v1242
    %v1253 = vmul.f32 %v1231, %v1242
    %v1254 = vmul.f32 %v1232, %v1242
    %v1255 = vmul.f32 %v1233, %v1242
    %v1256 = vmul.f32 %v1234, %v1242
    %v1257 = vmul.f32 %v1235, %v1242
    %v1258 = vmul.f32 %v1236, %v1242
    %v1259 = vmul.f32 %v1237, %v1242
    %v1261 = vlaneseq
    %v1262 = vshrl.u32 %v1261, 7
    %v1263 = vsub.s32 0, %v1262
    %v1264 = vrot.slane %v1029, %v1263
    %v1266 = vadd.f32 %v1244, %v1264
    %v1267 = vadd.f32 %v1245, %v1264
    %v1268 = vadd.f32 %v1246, %v1264
    %v1269 = vadd.f32 %v1247, %v1264
    %v1270 = vadd.f32 %v1248, %v1264
    %v1271 = vadd.f32 %v1249, %v1264
    %v1272 = vadd.f32 %v1250, %v1264
    %v1273 = vadd.f32 %v1251, %v1264
    %v1274 = vadd.f32 %v1252, %v1264
    %v1275 = vadd.f32 %v1253, %v1264
    %v1276 = vadd.f32 %v1254, %v1264
    %v1277 = vadd.f32 %v1255, %v1264
    %v1278 = vadd.f32 %v1256, %v1264
    %v1279 = vadd.f32 %v1257, %v1264
    %v1280 = vadd.f32 %v1258, %v1264
    %v1281 = vadd.f32 %v1259, %v1264
    %1282 = vst.msk [vmem:[#allocation2] sm:$0xff] %vm122, %v1266
    %1283 = vst.msk [vmem:[#allocation2 + $0x8] sm:$0xff] %vm122, %v1267
    %1284 = vst.msk [vmem:[#allocation2 + $0x10] sm:$0xff] %vm122, %v1268
    %1285 = vst.msk [vmem:[#allocation2 + $0x18] sm:$0xff] %vm122, %v1269
    %1286 = vst.msk [vmem:[#allocation2 + $0x20] sm:$0xff] %vm122, %v1270
    %1287 = vst.msk [vmem:[#allocation2 + $0x28] sm:$0xff] %vm122, %v1271
    %1288 = vst.msk [vmem:[#allocation2 + $0x30] sm:$0xff] %vm122, %v1272
    %1289 = vst.msk [vmem:[#allocation2 + $0x38] sm:$0xff] %vm122, %v1273
    %1290 = vst.msk [vmem:[#allocation2 + $0x40] sm:$0xff] %vm122, %v1274
    %1291 = vst.msk [vmem:[#allocation2 + $0x48] sm:$0xff] %vm122, %v1275
    %1292 = vst.msk [vmem:[#allocation2 + $0x50] sm:$0xff] %vm122, %v1276
    %1293 = vst.msk [vmem:[#allocation2 + $0x58] sm:$0xff] %vm122, %v1277
    %1294 = vst.msk [vmem:[#allocation2 + $0x60] sm:$0xff] %vm122, %v1278
    %1295 = vst.msk [vmem:[#allocation2 + $0x68] sm:$0xff] %vm122, %v1279
    %1296 = vst.msk [vmem:[#allocation2 + $0x70] sm:$0xff] %vm122, %v1280
    %1297 = vst.msk [vmem:[#allocation2 + $0x78] sm:$0xff] %vm122, %v1281
    // Predicated region
    $region50: #{cross_view_attention.7} parent=1 // pred_check
      _
    $region51: #{cross_view_attention.7} parent=1 // pred_check_branch
      %1299 = sbr.rel (0) target = $region53
    $region52: #{cross_view_attention.7} parent=1 // pred_region
      %s1301 = ssub.s32 2048, 2048
      %1302 = vsyncadd [#allocation3], %s1301
      %s1303 = sshll.u32 [#allocation2], 4
      %s1304 = int_to_ptr.vmem [resolvable:$true] %s1303
      %1309 = dma.vmem_to_hbm [thread:$0]  %s1304, 2048, %s12, [#allocation3], 128, 128, 8
    $region53: #{cross_view_attention.7} parent=1 // pred_fallthru
      _
    // Predicated region
    $region54: #{cross_view_attention.7} parent=1 // pred_check
      _
    $region55: #{cross_view_attention.7} parent=1 // pred_check_branch
      %1311 = sbr.rel (0) target = $region57
    $region56: #{cross_view_attention.7} parent=1 // pred_region
      %1312 = dma.done [#allocation3], 2048
    $region57: #{cross_view_attention.7} parent=1 // pred_fallthru
      _
    %1313 = vsyncpa [#allocation3], 1

</llo_original>
